<compile_context>
chip_gen: v7x
topology: tpu7x:2x2x1
jax: 0.10.0
libtpu: 0.0.40
codegen_flags: <defaults>
</compile_context>

<pallas_src>
import functools

import jax
import jax.numpy as jnp
from jax.experimental import pallas as pl
from jax.experimental.pallas import tpu as pltpu


_TILE_M = 512                       # row-tile cap for the matmul kernels
_VMEM_LIMIT = 48 * 1024 * 1024      # <= 48 MiB: safe on v7x (64 MiB/TC); raise on v5e/v6e


def _round_up(x, m):
    return ((x + m - 1) // m) * m


def _pick_tile_m(m, cap=_TILE_M):
    """Row tile: multiple of 8 (or full M) and >= 2 grid steps when possible."""
    if m < 16:
        return m
    return min(cap, _round_up((m + 1) // 2, 8))


# ----------------------------------------------------------------------------
# Kernels
# ----------------------------------------------------------------------------
def _apply_act(y, act):
    if act == "lrelu":
        return jnp.where(y >= 0.0, y, 0.1 * y)           # LeakyReLU(0.1)
    if act == "silu":
        # sigmoid via EUP exp + approx reciprocal (frees VALU slots)
        return y * pl.reciprocal(1.0 + jnp.exp(-y), approx=True)
    return y


def _matmul_bn_act_kernel(*refs, n_in, n_out, act):
    """out(s) = act( BN( concat_K(xs) @ W ) ) - single MXU dot per tile."""
    xs = refs[:n_in]
    w_ref, scale_ref, bias_ref = refs[n_in:n_in + 3]
    outs = refs[n_in + 3:]
    if n_in == 1:
        lhs = xs[0][...]
    else:
        lhs = jnp.concatenate([x[...] for x in xs], axis=-1)   # in-VMEM concat
    y = jnp.dot(lhs, w_ref[...], preferred_element_type=jnp.float32)
    y = y * scale_ref[...] + bias_ref[...]                     # folded BatchNorm
    y = _apply_act(y, act)
    if n_out == 1:
        outs[0][...] = y.astype(outs[0].dtype)
    else:                                                      # fused cv1|cv2 split
        c0 = outs[0].shape[-1]
        outs[0][...] = y[:, :c0].astype(outs[0].dtype)
        outs[1][...] = y[:, c0:].astype(outs[1].dtype)


def _conv3x3_direct_kernel(x_ref, w_ref, scale_ref, bias_ref, o_ref, *,
                           wp, n_rows, act):
    """Direct 3x3/s1 conv on one image's flat padded slab.

    x_ref: [Hp*Wp, Cin] (zero-padded, flattened row-major).  Each tap (di, dj)
    is the contiguous row slice starting at di*Wp + dj; output row m = r*Wp + c
    (columns c >= Wo are wrap-around garbage, dropped by the wrapper).
    """
    taps = [x_ref[di * wp + dj: di * wp + dj + n_rows, :]
            for di in range(3) for dj in range(3)]
    lhs = jnp.concatenate(taps, axis=-1)                       # [n_rows, 9*Cin]
    y = jnp.dot(lhs, w_ref[...], preferred_element_type=jnp.float32)
    y = y * scale_ref[...] + bias_ref[...]
    y = _apply_act(y, act)
    o_ref[...] = y.astype(o_ref.dtype)


def _maxpool_kernel(x_ref, o_ref):
    # x_ref: [tr, 2, Wo, 2C] (row parity, Wo, two C-wide lane halves)
    m = jnp.maximum(x_ref[:, 0, :, :], x_ref[:, 1, :, :])      # [tr, Wo, 2C]
    c = o_ref.shape[-1]
    o_ref[...] = jnp.maximum(m[:, :, :c], m[:, :, c:])


# ----------------------------------------------------------------------------
# pallas_call wrappers
# ----------------------------------------------------------------------------
def _matmul_bn_act(xs, w, scale, bias, *, act, out_dims=None,
                   out_dtype=jnp.bfloat16, tile_m=_TILE_M):
    n_in = len(xs)
    M = xs[0].shape[0]
    Cout = w.shape[1]
    tm = _pick_tile_m(M, tile_m)
    n_out = 1 if out_dims is None else len(out_dims)

    in_specs = [pl.BlockSpec((tm, x.shape[1]), lambda i: (i, 0)) for x in xs]
    in_specs += [pl.BlockSpec((w.shape[0], Cout), lambda i: (0, 0)),
                 pl.BlockSpec((1, Cout), lambda i: (0, 0)),
                 pl.BlockSpec((1, Cout), lambda i: (0, 0))]
    if n_out == 1:
        out_shape = jax.ShapeDtypeStruct((M, Cout), out_dtype)
        out_specs = pl.BlockSpec((tm, Cout), lambda i: (i, 0))
    else:
        out_shape = tuple(jax.ShapeDtypeStruct((M, c), out_dtype) for c in out_dims)
        out_specs = tuple(pl.BlockSpec((tm, c), lambda i: (i, 0)) for c in out_dims)

    return pl.pallas_call(
        functools.partial(_matmul_bn_act_kernel, n_in=n_in, n_out=n_out, act=act),
        out_shape=out_shape,
        grid=(pl.cdiv(M, tm),),
        in_specs=in_specs,
        out_specs=out_specs,
        compiler_params=pltpu.CompilerParams(
            dimension_semantics=("parallel",),
            vmem_limit_bytes=_VMEM_LIMIT),
    )(*xs, w, scale, bias)


def conv3x3_s1_bn_act(x_nhwc, p, *, act):
    """3x3 conv, stride 1, pad 1: direct kernel, padded input read once."""
    B, H, W, C = x_nhwc.shape
    Wp = W + 2
    # 1 row top + 2 rows bottom (1 real pad + 1 slack row so every tap's flat
    # slice stays in range), 1 col left/right.
    xp = jnp.pad(x_nhwc, ((0, 0), (1, 2), (1, 1), (0, 0)))
    Hp = H + 3
    xflat = xp.reshape(B, Hp * Wp, C)              # free row-major reshape
    n_rows = H * Wp                                # per-image rows incl. garbage cols
    Cout = p["w"].shape[1]

    out = pl.pallas_call(
        functools.partial(_conv3x3_direct_kernel, wp=Wp, n_rows=n_rows, act=act),
        out_shape=jax.ShapeDtypeStruct((B, n_rows, Cout), jnp.bfloat16),
        grid=(B,),
        in_specs=[pl.BlockSpec((None, Hp * Wp, C), lambda b: (b, 0, 0)),
                  pl.BlockSpec((9 * C, Cout), lambda b: (0, 0)),
                  pl.BlockSpec((1, Cout), lambda b: (0, 0)),
                  pl.BlockSpec((1, Cout), lambda b: (0, 0))],
        out_specs=pl.BlockSpec((None, n_rows, Cout), lambda b: (b, 0, 0)),
        compiler_params=pltpu.CompilerParams(
            dimension_semantics=("parallel",),
            vmem_limit_bytes=_VMEM_LIMIT),
    )(xflat, p["w"], p["scale"], p["bias"])
    # drop the 2 wrap-around columns of each output row
    return out.reshape(B, H, Wp, Cout)[:, :, :W, :]


def conv3x3_s2_bn_act(x_nhwc, p, *, act):
    """3x3 conv, stride 2, pad 1 (stem): XLA im2col + ONE fused Pallas matmul."""
    # TODO(synk): strided-slab direct kernel so the stem also reads HBM once.
    B, H, W, C = x_nhwc.shape
    xp = jnp.pad(x_nhwc, ((0, 0), (1, 1), (1, 1), (0, 0)))
    Ho = (H - 1) // 2 + 1
    Wo = (W - 1) // 2 + 1
    taps = [xp[:, di:di + 2 * Ho:2, dj:dj + 2 * Wo:2, :].reshape(B * Ho * Wo, C)
            for di in range(3) for dj in range(3)]
    col = jnp.concatenate(taps, axis=-1)           # [M, 9*Cin]
    out = _matmul_bn_act([col], p["w"], p["scale"], p["bias"], act=act)
    return out.reshape(B, Ho, Wo, -1)


def maxpool_2x2(x):
    """MaxPool2d((2,2), 2) with lane-dense (Wo, 2C) trailing block dims."""
    B, H, W, C = x.shape
    assert H % 2 == 0 and W % 2 == 0, "maxpool_2x2 expects even spatial dims"
    Ho, Wo = H // 2, W // 2
    xr = x.reshape(B * Ho, 2, Wo, 2 * C)           # free row-major reshape
    R = B * Ho
    tr = max(1, min(256, (R + 1) // 2))            # >= 2 grid steps when possible
    out = pl.pallas_call(
        _maxpool_kernel,
        out_shape=jax.ShapeDtypeStruct((R, Wo, C), x.dtype),
        grid=(pl.cdiv(R, tr),),
        in_specs=[pl.BlockSpec((tr, 2, Wo, 2 * C), lambda i: (i, 0, 0, 0))],
        out_specs=pl.BlockSpec((tr, Wo, C), lambda i: (i, 0, 0)),
        compiler_params=pltpu.CompilerParams(
            dimension_semantics=("parallel",),
            vmem_limit_bytes=_VMEM_LIMIT),
    )(xr)
    return out.reshape(B, Ho, Wo, C)


# ----------------------------------------------------------------------------
# Parameter construction (deterministic, synthetic, pre-folded, arrays only)
# ----------------------------------------------------------------------------
def _make_conv_params(key, c1, c2, k):
    kw, kg, kb, km, kv = jax.random.split(key, 5)
    w = 0.1 * jax.random.normal(kw, (c2, c1, k, k), jnp.float32)   # PyTorch layout
    gamma = 1.0 + 0.1 * jax.random.normal(kg, (c2,), jnp.float32)
    beta = 0.1 * jax.random.normal(kb, (c2,), jnp.float32)
    mean = 0.1 * jax.random.normal(km, (c2,), jnp.float32)
    var = 1.0 + 0.1 * jnp.abs(jax.random.normal(kv, (c2,), jnp.float32))
    scale = (gamma / jnp.sqrt(var + 1e-5)).reshape(1, c2)          # folded BN
    bias = beta.reshape(1, c2) - mean.reshape(1, c2) * scale
    if k == 1:
        wmat = jnp.transpose(w[:, :, 0, 0], (1, 0)).astype(jnp.bfloat16)   # [Cin, Cout]
    else:  # (kh, kw, cin, cout) -> [9*Cin, Cout], tap-major (di, dj) order
        wmat = jnp.transpose(w, (2, 3, 1, 0)).reshape(k * k * c1, c2).astype(jnp.bfloat16)
    return {"w": wmat, "scale": scale, "bias": bias}


def _make_elan_params(key, in_dim, out_dim, expand_ratio=0.5):
    inter = int(in_dim * expand_ratio)
    ks = jax.random.split(key, 5)
    cv1 = _make_conv_params(ks[0], in_dim, inter, 1)
    cv2 = _make_conv_params(ks[1], in_dim, inter, 1)
    cv3 = _make_conv_params(ks[2], inter, inter, 3)       # depth = 1 ('tiny')
    cv4 = _make_conv_params(ks[3], inter, inter, 3)
    out = _make_conv_params(ks[4], inter * 4, out_dim, 1)
    # fuse cv1 + cv2 (two 1x1 convs on the same input) into one matmul
    return {
        "w12": jnp.concatenate([cv1["w"], cv2["w"]], axis=1),        # [in, 2*inter]
        "scale12": jnp.concatenate([cv1["scale"], cv2["scale"]], axis=1),
        "bias12": jnp.concatenate([cv1["bias"], cv2["bias"]], axis=1),
        "cv3": cv3, "cv4": cv4,
        "out_w": out["w"],                                           # [4*inter, out]
        "out_scale": out["scale"], "out_bias": out["bias"],
    }


def make_elannet_tiny_params(key):
    ks = jax.random.split(key, 6)
    return {
        "layer1": _make_conv_params(ks[0], 3, 32, 3),
        "layer2_conv": _make_conv_params(ks[1], 32, 64, 3),
        "layer2_elan": _make_elan_params(ks[2], 64, 64),
        "layer3_elan": _make_elan_params(ks[3], 64, 128),
        "layer4_elan": _make_elan_params(ks[4], 128, 256),
        "layer5_elan": _make_elan_params(ks[5], 256, 512),
    }


# ----------------------------------------------------------------------------
# Forward pass
# ----------------------------------------------------------------------------
def elan_block(x_nhwc, p, act="lrelu"):
    B, H, W, C = x_nhwc.shape
    M = B * H * W
    inter = p["w12"].shape[1] // 2           # static (from weight shape)
    x_flat = x_nhwc.reshape(M, C)
    # fused cv1|cv2: one matmul, two separate lane-dense outputs (no slice copy)
    x1, x2 = _matmul_bn_act([x_flat], p["w12"], p["scale12"], p["bias12"],
                            act=act, out_dims=(inter, inter))
    x3 = conv3x3_s1_bn_act(x2.reshape(B, H, W, inter), p["cv3"], act=act)
    x4 = conv3x3_s1_bn_act(x3, p["cv4"], act=act)
    # ELAN 'out' 1x1 conv: [x1|x2|x3|x4] concat happens only in VMEM, one dot.
    # (the reference ELANBlock 'out' Conv uses the default act_type='silu')
    out = _matmul_bn_act(
        [x1, x2, x3.reshape(M, inter), x4.reshape(M, inter)],
        p["out_w"], p["out_scale"], p["out_bias"], act="silu")
    return out.reshape(B, H, W, -1)


def elannet_tiny_forward(x_nchw, params):
    """x_nchw: [B, 3, H, W] float32.  Returns dict of NCHW float32 feature maps."""
    x = jnp.transpose(x_nchw, (0, 2, 3, 1)).astype(jnp.bfloat16)   # NHWC bf16
    c1 = conv3x3_s2_bn_act(x, params["layer1"], act="lrelu")
    c2 = conv3x3_s2_bn_act(c1, params["layer2_conv"], act="lrelu")
    c2 = elan_block(c2, params["layer2_elan"], act="lrelu")
    c3 = elan_block(maxpool_2x2(c2), params["layer3_elan"], act="lrelu")
    c4 = elan_block(maxpool_2x2(c3), params["layer4_elan"], act="lrelu")
    c5 = elan_block(maxpool_2x2(c4), params["layer5_elan"], act="lrelu")
    # NCHW / f32 relayout kept outside the kernels to match the module interface
    to_nchw = lambda t: jnp.transpose(t.astype(jnp.float32), (0, 3, 1, 2))
    return {"layer2": to_nchw(c3), "layer3": to_nchw(c4), "layer4": to_nchw(c5)}


# ----------------------------------------------------------------------------
if __name__ == "__main__":
    key = jax.random.PRNGKey(0)
    kp, kx = jax.random.split(key)
    params = make_elannet_tiny_params(kp)

    # small input consistent with the module (total stride 32)
    x = jax.random.normal(kx, (2, 3, 32, 32), jnp.float32)

    outs = jax.jit(elannet_tiny_forward)(x, params)
    outs = jax.block_until_ready(outs)

    assert outs["layer2"].shape == (2, 128, 4, 4)
    assert outs["layer3"].shape == (2, 256, 2, 2)
    assert outs["layer4"].shape == (2, 512, 1, 1)
    assert all(bool(jnp.all(jnp.isfinite(v))) for v in outs.values())
    print("KERNEL_OK")
</pallas_src>

<mosaic_0001>
module attributes {stable_mosaic.version = 11 : i64} {
  func.func @_matmul_bn_act_kernel(%arg0: i32, %arg1: memref<256x27xbf16, #tpu.memory_space<vmem>>, %arg2: memref<27x32xbf16, #tpu.memory_space<vmem>>, %arg3: memref<1x32xf32, #tpu.memory_space<vmem>>, %arg4: memref<1x32xf32, #tpu.memory_space<vmem>>, %arg5: memref<256x32xbf16, #tpu.memory_space<vmem>>) attributes {dimension_semantics = [#tpu.dimension_semantics<parallel>], iteration_bounds = array<i64: 2>, scalar_prefetch = 0 : i64, scratch_operands = 0 : i64, tpu.core_type = #tpu.core_type<tc>, window_params = [{transform_indices = @transform_0, window_bounds = array<i64: 256, 27>}, {pipeline_mode = #tpu.pipeline_mode<synchronous>, transform_indices = @transform_1, window_bounds = array<i64: 27, 32>}, {pipeline_mode = #tpu.pipeline_mode<synchronous>, transform_indices = @transform_2, window_bounds = array<i64: 1, 32>}, {pipeline_mode = #tpu.pipeline_mode<synchronous>, transform_indices = @transform_3, window_bounds = array<i64: 1, 32>}, {transform_indices = @transform_4, window_bounds = array<i64: 256, 32>}]} {
    %c0 = arith.constant 0 : index
    %c0_0 = arith.constant 0 : index
    %0 = vector.load %arg1[%c0, %c0_0] : memref<256x27xbf16, #tpu.memory_space<vmem>>, vector<256x27xbf16>
    %c0_1 = arith.constant 0 : index
    %c0_2 = arith.constant 0 : index
    %1 = vector.load %arg2[%c0_1, %c0_2] : memref<27x32xbf16, #tpu.memory_space<vmem>>, vector<27x32xbf16>
    %cst = arith.constant dense<0.000000e+00> : vector<256x32xf32>
    %2 = tpu.matmul %0, %1, %cst {dimension_numbers = #tpu.dot_dimension_numbers<[1], [0], [0], [1], [0, 0, 1, 1], [], []>} : vector<256x27xbf16>, vector<27x32xbf16>, vector<256x32xf32> -> vector<256x32xf32>
    %c0_3 = arith.constant 0 : index
    %c0_4 = arith.constant 0 : index
    %3 = vector.load %arg3[%c0_3, %c0_4] : memref<1x32xf32, #tpu.memory_space<vmem>>, vector<1x32xf32>
    %4 = vector.broadcast %3 : vector<1x32xf32> to vector<256x32xf32>
    %5 = arith.mulf %2, %4 : vector<256x32xf32>
    %c0_5 = arith.constant 0 : index
    %c0_6 = arith.constant 0 : index
    %6 = vector.load %arg4[%c0_5, %c0_6] : memref<1x32xf32, #tpu.memory_space<vmem>>, vector<1x32xf32>
    %7 = vector.broadcast %6 : vector<1x32xf32> to vector<256x32xf32>
    %8 = arith.addf %5, %7 : vector<256x32xf32>
    %cst_7 = arith.constant 0.000000e+00 : f32
    %9 = vector.broadcast %cst_7 : f32 to vector<256x32xf32>
    %10 = arith.cmpf oge, %8, %9 : vector<256x32xf32>
    %cst_8 = arith.constant 1.000000e-01 : f32
    %11 = vector.broadcast %cst_8 : f32 to vector<256x32xf32>
    %12 = arith.mulf %11, %8 : vector<256x32xf32>
    %13 = arith.select %10, %8, %12 : vector<256x32xi1>, vector<256x32xf32>
    %14 = arith.truncf %13 : vector<256x32xf32> to vector<256x32xbf16>
    %c0_9 = arith.constant 0 : index
    %c0_10 = arith.constant 0 : index
    %15 = vector.load %arg5[%c0_9, %c0_10] : memref<256x32xbf16, #tpu.memory_space<vmem>>, vector<256x32xbf16>
    tpu.vector_store %arg5[%c0_9, %c0_10], %14 {strides = array<i32>} : memref<256x32xbf16, #tpu.memory_space<vmem>>, vector<256x32xbf16>,
    return
  }
  func.func @transform_0(%arg0: i32) -> (i32, i32) {
    %c0_i32 = arith.constant 0 : i32
    %c0_i32_0 = arith.constant 0 : i32
    return %arg0, %c0_i32 : i32, i32
  }
  func.func @transform_1(%arg0: i32) -> (i32, i32) {
    %c0_i32 = arith.constant 0 : i32
    %c0_i32_0 = arith.constant 0 : i32
    %c0_i32_1 = arith.constant 0 : i32
    return %c0_i32, %c0_i32_0 : i32, i32
  }
  func.func @transform_2(%arg0: i32) -> (i32, i32) {
    %c0_i32 = arith.constant 0 : i32
    %c0_i32_0 = arith.constant 0 : i32
    %c0_i32_1 = arith.constant 0 : i32
    return %c0_i32, %c0_i32_0 : i32, i32
  }
  func.func @transform_3(%arg0: i32) -> (i32, i32) {
    %c0_i32 = arith.constant 0 : i32
    %c0_i32_0 = arith.constant 0 : i32
    %c0_i32_1 = arith.constant 0 : i32
    return %c0_i32, %c0_i32_0 : i32, i32
  }
  func.func @transform_4(%arg0: i32) -> (i32, i32) {
    %c0_i32 = arith.constant 0 : i32
    %c0_i32_0 = arith.constant 0 : i32
    return %arg0, %c0_i32 : i32, i32
  }
}

module attributes {stable_mosaic.version = 11 : i64} {
  func.func @_matmul_bn_act_kernel(%arg0: i32, %arg1: memref<64x288xbf16, #tpu.memory_space<vmem>>, %arg2: memref<288x64xbf16, #tpu.memory_space<vmem>>, %arg3: memref<1x64xf32, #tpu.memory_space<vmem>>, %arg4: memref<1x64xf32, #tpu.memory_space<vmem>>, %arg5: memref<64x64xbf16, #tpu.memory_space<vmem>>) attributes {dimension_semantics = [#tpu.dimension_semantics<parallel>], iteration_bounds = array<i64: 2>, scalar_prefetch = 0 : i64, scratch_operands = 0 : i64, tpu.core_type = #tpu.core_type<tc>, window_params = [{transform_indices = @transform_0, window_bounds = array<i64: 64, 288>}, {pipeline_mode = #tpu.pipeline_mode<synchronous>, transform_indices = @transform_1, window_bounds = array<i64: 288, 64>}, {pipeline_mode = #tpu.pipeline_mode<synchronous>, transform_indices = @transform_2, window_bounds = array<i64: 1, 64>}, {pipeline_mode = #tpu.pipeline_mode<synchronous>, transform_indices = @transform_3, window_bounds = array<i64: 1, 64>}, {transform_indices = @transform_4, window_bounds = array<i64: 64, 64>}]} {
    %c0 = arith.constant 0 : index
    %c0_0 = arith.constant 0 : index
    %0 = vector.load %arg1[%c0, %c0_0] : memref<64x288xbf16, #tpu.memory_space<vmem>>, vector<64x288xbf16>
    %c0_1 = arith.constant 0 : index
    %c0_2 = arith.constant 0 : index
    %1 = vector.load %arg2[%c0_1, %c0_2] : memref<288x64xbf16, #tpu.memory_space<vmem>>, vector<288x64xbf16>
    %cst = arith.constant dense<0.000000e+00> : vector<64x64xf32>
    %2 = tpu.matmul %0, %1, %cst {dimension_numbers = #tpu.dot_dimension_numbers<[1], [0], [0], [1], [0, 0, 1, 1], [], []>} : vector<64x288xbf16>, vector<288x64xbf16>, vector<64x64xf32> -> vector<64x64xf32>
    %c0_3 = arith.constant 0 : index
    %c0_4 = arith.constant 0 : index
    %3 = vector.load %arg3[%c0_3, %c0_4] : memref<1x64xf32, #tpu.memory_space<vmem>>, vector<1x64xf32>
    %4 = vector.broadcast %3 : vector<1x64xf32> to vector<64x64xf32>
    %5 = arith.mulf %2, %4 : vector<64x64xf32>
    %c0_5 = arith.constant 0 : index
    %c0_6 = arith.constant 0 : index
    %6 = vector.load %arg4[%c0_5, %c0_6] : memref<1x64xf32, #tpu.memory_space<vmem>>, vector<1x64xf32>
    %7 = vector.broadcast %6 : vector<1x64xf32> to vector<64x64xf32>
    %8 = arith.addf %5, %7 : vector<64x64xf32>
    %cst_7 = arith.constant 0.000000e+00 : f32
    %9 = vector.broadcast %cst_7 : f32 to vector<64x64xf32>
    %10 = arith.cmpf oge, %8, %9 : vector<64x64xf32>
    %cst_8 = arith.constant 1.000000e-01 : f32
    %11 = vector.broadcast %cst_8 : f32 to vector<64x64xf32>
    %12 = arith.mulf %11, %8 : vector<64x64xf32>
    %13 = arith.select %10, %8, %12 : vector<64x64xi1>, vector<64x64xf32>
    %14 = arith.truncf %13 : vector<64x64xf32> to vector<64x64xbf16>
    %c0_9 = arith.constant 0 : index
    %c0_10 = arith.constant 0 : index
    %15 = vector.load %arg5[%c0_9, %c0_10] : memref<64x64xbf16, #tpu.memory_space<vmem>>, vector<64x64xbf16>
    tpu.vector_store %arg5[%c0_9, %c0_10], %14 {strides = array<i32>} : memref<64x64xbf16, #tpu.memory_space<vmem>>, vector<64x64xbf16>,
    return
  }
  func.func @transform_0(%arg0: i32) -> (i32, i32) {
    %c0_i32 = arith.constant 0 : i32
    %c0_i32_0 = arith.constant 0 : i32
    return %arg0, %c0_i32 : i32, i32
  }
  func.func @transform_1(%arg0: i32) -> (i32, i32) {
    %c0_i32 = arith.constant 0 : i32
    %c0_i32_0 = arith.constant 0 : i32
    %c0_i32_1 = arith.constant 0 : i32
    return %c0_i32, %c0_i32_0 : i32, i32
  }
  func.func @transform_2(%arg0: i32) -> (i32, i32) {
    %c0_i32 = arith.constant 0 : i32
    %c0_i32_0 = arith.constant 0 : i32
    %c0_i32_1 = arith.constant 0 : i32
    return %c0_i32, %c0_i32_0 : i32, i32
  }
  func.func @transform_3(%arg0: i32) -> (i32, i32) {
    %c0_i32 = arith.constant 0 : i32
    %c0_i32_0 = arith.constant 0 : i32
    %c0_i32_1 = arith.constant 0 : i32
    return %c0_i32, %c0_i32_0 : i32, i32
  }
  func.func @transform_4(%arg0: i32) -> (i32, i32) {
    %c0_i32 = arith.constant 0 : i32
    %c0_i32_0 = arith.constant 0 : i32
    return %arg0, %c0_i32 : i32, i32
  }
}

module attributes {stable_mosaic.version = 11 : i64} {
  func.func @_matmul_bn_act_kernel(%arg0: i32, %arg1: memref<64x64xbf16, #tpu.memory_space<vmem>>, %arg2: memref<64x64xbf16, #tpu.memory_space<vmem>>, %arg3: memref<1x64xf32, #tpu.memory_space<vmem>>, %arg4: memref<1x64xf32, #tpu.memory_space<vmem>>, %arg5: memref<64x32xbf16, #tpu.memory_space<vmem>>, %arg6: memref<64x32xbf16, #tpu.memory_space<vmem>>) attributes {dimension_semantics = [#tpu.dimension_semantics<parallel>], iteration_bounds = array<i64: 2>, scalar_prefetch = 0 : i64, scratch_operands = 0 : i64, tpu.core_type = #tpu.core_type<tc>, window_params = [{transform_indices = @transform_0, window_bounds = array<i64: 64, 64>}, {pipeline_mode = #tpu.pipeline_mode<synchronous>, transform_indices = @transform_1, window_bounds = array<i64: 64, 64>}, {pipeline_mode = #tpu.pipeline_mode<synchronous>, transform_indices = @transform_2, window_bounds = array<i64: 1, 64>}, {pipeline_mode = #tpu.pipeline_mode<synchronous>, transform_indices = @transform_3, window_bounds = array<i64: 1, 64>}, {transform_indices = @transform_4, window_bounds = array<i64: 64, 32>}, {transform_indices = @transform_5, window_bounds = array<i64: 64, 32>}]} {
    %c0 = arith.constant 0 : index
    %c0_0 = arith.constant 0 : index
    %0 = vector.load %arg1[%c0, %c0_0] : memref<64x64xbf16, #tpu.memory_space<vmem>>, vector<64x64xbf16>
    %c0_1 = arith.constant 0 : index
    %c0_2 = arith.constant 0 : index
    %1 = vector.load %arg2[%c0_1, %c0_2] : memref<64x64xbf16, #tpu.memory_space<vmem>>, vector<64x64xbf16>
    %cst = arith.constant dense<0.000000e+00> : vector<64x64xf32>
    %2 = tpu.matmul %0, %1, %cst {dimension_numbers = #tpu.dot_dimension_numbers<[1], [0], [0], [1], [0, 0, 1, 1], [], []>} : vector<64x64xbf16>, vector<64x64xbf16>, vector<64x64xf32> -> vector<64x64xf32>
    %c0_3 = arith.constant 0 : index
    %c0_4 = arith.constant 0 : index
    %3 = vector.load %arg3[%c0_3, %c0_4] : memref<1x64xf32, #tpu.memory_space<vmem>>, vector<1x64xf32>
    %4 = vector.broadcast %3 : vector<1x64xf32> to vector<64x64xf32>
    %5 = arith.mulf %2, %4 : vector<64x64xf32>
    %c0_5 = arith.constant 0 : index
    %c0_6 = arith.constant 0 : index
    %6 = vector.load %arg4[%c0_5, %c0_6] : memref<1x64xf32, #tpu.memory_space<vmem>>, vector<1x64xf32>
    %7 = vector.broadcast %6 : vector<1x64xf32> to vector<64x64xf32>
    %8 = arith.addf %5, %7 : vector<64x64xf32>
    %cst_7 = arith.constant 0.000000e+00 : f32
    %9 = vector.broadcast %cst_7 : f32 to vector<64x64xf32>
    %10 = arith.cmpf oge, %8, %9 : vector<64x64xf32>
    %cst_8 = arith.constant 1.000000e-01 : f32
    %11 = vector.broadcast %cst_8 : f32 to vector<64x64xf32>
    %12 = arith.mulf %11, %8 : vector<64x64xf32>
    %13 = arith.select %10, %8, %12 : vector<64x64xi1>, vector<64x64xf32>
    %14 = vector.extract_strided_slice %13 {offsets = [0, 0], sizes = [64, 32], strides = [1, 1]} : vector<64x64xf32> to vector<64x32xf32>
    %15 = arith.truncf %14 : vector<64x32xf32> to vector<64x32xbf16>
    %c0_9 = arith.constant 0 : index
    %c0_10 = arith.constant 0 : index
    %16 = vector.load %arg5[%c0_9, %c0_10] : memref<64x32xbf16, #tpu.memory_space<vmem>>, vector<64x32xbf16>
    tpu.vector_store %arg5[%c0_9, %c0_10], %15 {strides = array<i32>} : memref<64x32xbf16, #tpu.memory_space<vmem>>, vector<64x32xbf16>,
    %17 = vector.extract_strided_slice %13 {offsets = [0, 32], sizes = [64, 32], strides = [1, 1]} : vector<64x64xf32> to vector<64x32xf32>
    %18 = arith.truncf %17 : vector<64x32xf32> to vector<64x32xbf16>
    %c0_11 = arith.constant 0 : index
    %c0_12 = arith.constant 0 : index
    %19 = vector.load %arg6[%c0_11, %c0_12] : memref<64x32xbf16, #tpu.memory_space<vmem>>, vector<64x32xbf16>
    tpu.vector_store %arg6[%c0_11, %c0_12], %18 {strides = array<i32>} : memref<64x32xbf16, #tpu.memory_space<vmem>>, vector<64x32xbf16>,
    return
  }
  func.func @transform_0(%arg0: i32) -> (i32, i32) {
    %c0_i32 = arith.constant 0 : i32
    %c0_i32_0 = arith.constant 0 : i32
    return %arg0, %c0_i32 : i32, i32
  }
  func.func @transform_1(%arg0: i32) -> (i32, i32) {
    %c0_i32 = arith.constant 0 : i32
    %c0_i32_0 = arith.constant 0 : i32
    %c0_i32_1 = arith.constant 0 : i32
    return %c0_i32, %c0_i32_0 : i32, i32
  }
  func.func @transform_2(%arg0: i32) -> (i32, i32) {
    %c0_i32 = arith.constant 0 : i32
    %c0_i32_0 = arith.constant 0 : i32
    %c0_i32_1 = arith.constant 0 : i32
    return %c0_i32, %c0_i32_0 : i32, i32
  }
  func.func @transform_3(%arg0: i32) -> (i32, i32) {
    %c0_i32 = arith.constant 0 : i32
    %c0_i32_0 = arith.constant 0 : i32
    %c0_i32_1 = arith.constant 0 : i32
    return %c0_i32, %c0_i32_0 : i32, i32
  }
  func.func @transform_4(%arg0: i32) -> (i32, i32) {
    %c0_i32 = arith.constant 0 : i32
    %c0_i32_0 = arith.constant 0 : i32
    return %arg0, %c0_i32 : i32, i32
  }
  func.func @transform_5(%arg0: i32) -> (i32, i32) {
    %c0_i32 = arith.constant 0 : i32
    %c0_i32_0 = arith.constant 0 : i32
    return %arg0, %c0_i32 : i32, i32
  }
}

module attributes {stable_mosaic.version = 11 : i64} {
  func.func @_conv3x3_direct_kernel(%arg0: i32, %arg1: memref<1x110x32xbf16, #tpu.memory_space<vmem>>, %arg2: memref<288x32xbf16, #tpu.memory_space<vmem>>, %arg3: memref<1x32xf32, #tpu.memory_space<vmem>>, %arg4: memref<1x32xf32, #tpu.memory_space<vmem>>, %arg5: memref<1x80x32xbf16, #tpu.memory_space<vmem>>) attributes {dimension_semantics = [#tpu.dimension_semantics<parallel>], iteration_bounds = array<i64: 2>, scalar_prefetch = 0 : i64, scratch_operands = 0 : i64, tpu.core_type = #tpu.core_type<tc>, window_params = [{transform_indices = @transform_0, window_bounds = array<i64: 1, 110, 32>}, {pipeline_mode = #tpu.pipeline_mode<synchronous>, transform_indices = @transform_1, window_bounds = array<i64: 288, 32>}, {pipeline_mode = #tpu.pipeline_mode<synchronous>, transform_indices = @transform_2, window_bounds = array<i64: 1, 32>}, {pipeline_mode = #tpu.pipeline_mode<synchronous>, transform_indices = @transform_3, window_bounds = array<i64: 1, 32>}, {transform_indices = @transform_4, window_bounds = array<i64: 1, 80, 32>}]} {
    %c0 = arith.constant 0 : index
    %c0_0 = arith.constant 0 : index
    %c0_1 = arith.constant 0 : index
    %0 = vector.load %arg1[%c0, %c0_0, %c0_1] : memref<1x110x32xbf16, #tpu.memory_space<vmem>>, vector<1x80x32xbf16>
    %1 = vector.shape_cast %0 : vector<1x80x32xbf16> to vector<80x32xbf16>
    %c0_2 = arith.constant 0 : index
    %c1 = arith.constant 1 : index
    %c0_3 = arith.constant 0 : index
    %2 = vector.load %arg1[%c0_2, %c1, %c0_3] : memref<1x110x32xbf16, #tpu.memory_space<vmem>>, vector<1x80x32xbf16>
    %3 = vector.shape_cast %2 : vector<1x80x32xbf16> to vector<80x32xbf16>
    %c0_4 = arith.constant 0 : index
    %c2 = arith.constant 2 : index
    %c0_5 = arith.constant 0 : index
    %4 = vector.load %arg1[%c0_4, %c2, %c0_5] : memref<1x110x32xbf16, #tpu.memory_space<vmem>>, vector<1x80x32xbf16>
    %5 = vector.shape_cast %4 : vector<1x80x32xbf16> to vector<80x32xbf16>
    %c0_6 = arith.constant 0 : index
    %c10 = arith.constant 10 : index
    %c0_7 = arith.constant 0 : index
    %6 = vector.load %arg1[%c0_6, %c10, %c0_7] : memref<1x110x32xbf16, #tpu.memory_space<vmem>>, vector<1x80x32xbf16>
    %7 = vector.shape_cast %6 : vector<1x80x32xbf16> to vector<80x32xbf16>
    %c0_8 = arith.constant 0 : index
    %c11 = arith.constant 11 : index
    %c0_9 = arith.constant 0 : index
    %8 = vector.load %arg1[%c0_8, %c11, %c0_9] : memref<1x110x32xbf16, #tpu.memory_space<vmem>>, vector<1x80x32xbf16>
    %9 = vector.shape_cast %8 : vector<1x80x32xbf16> to vector<80x32xbf16>
    %c0_10 = arith.constant 0 : index
    %c12 = arith.constant 12 : index
    %c0_11 = arith.constant 0 : index
    %10 = vector.load %arg1[%c0_10, %c12, %c0_11] : memref<1x110x32xbf16, #tpu.memory_space<vmem>>, vector<1x80x32xbf16>
    %11 = vector.shape_cast %10 : vector<1x80x32xbf16> to vector<80x32xbf16>
    %c0_12 = arith.constant 0 : index
    %c20 = arith.constant 20 : index
    %c0_13 = arith.constant 0 : index
    %12 = vector.load %arg1[%c0_12, %c20, %c0_13] : memref<1x110x32xbf16, #tpu.memory_space<vmem>>, vector<1x80x32xbf16>
    %13 = vector.shape_cast %12 : vector<1x80x32xbf16> to vector<80x32xbf16>
    %c0_14 = arith.constant 0 : index
    %c21 = arith.constant 21 : index
    %c0_15 = arith.constant 0 : index
    %14 = vector.load %arg1[%c0_14, %c21, %c0_15] : memref<1x110x32xbf16, #tpu.memory_space<vmem>>, vector<1x80x32xbf16>
    %15 = vector.shape_cast %14 : vector<1x80x32xbf16> to vector<80x32xbf16>
    %c0_16 = arith.constant 0 : index
    %c22 = arith.constant 22 : index
    %c0_17 = arith.constant 0 : index
    %16 = vector.load %arg1[%c0_16, %c22, %c0_17] : memref<1x110x32xbf16, #tpu.memory_space<vmem>>, vector<1x80x32xbf16>
    %17 = vector.shape_cast %16 : vector<1x80x32xbf16> to vector<80x32xbf16>
    %18 = tpu.concatenate %1, %3, %5, %7, %9, %11, %13, %15, %17 in 1 : vector<80x32xbf16>, vector<80x32xbf16>, vector<80x32xbf16>, vector<80x32xbf16>, vector<80x32xbf16>, vector<80x32xbf16>, vector<80x32xbf16>, vector<80x32xbf16>, vector<80x32xbf16> -> vector<80x288xbf16>
    %c0_18 = arith.constant 0 : index
    %c0_19 = arith.constant 0 : index
    %19 = vector.load %arg2[%c0_18, %c0_19] : memref<288x32xbf16, #tpu.memory_space<vmem>>, vector<288x32xbf16>
    %cst = arith.constant dense<0.000000e+00> : vector<80x32xf32>
    %20 = tpu.matmul %18, %19, %cst {dimension_numbers = #tpu.dot_dimension_numbers<[1], [0], [0], [1], [0, 0, 1, 1], [], []>} : vector<80x288xbf16>, vector<288x32xbf16>, vector<80x32xf32> -> vector<80x32xf32>
    %c0_20 = arith.constant 0 : index
    %c0_21 = arith.constant 0 : index
    %21 = vector.load %arg3[%c0_20, %c0_21] : memref<1x32xf32, #tpu.memory_space<vmem>>, vector<1x32xf32>
    %22 = vector.broadcast %21 : vector<1x32xf32> to vector<80x32xf32>
    %23 = arith.mulf %20, %22 : vector<80x32xf32>
    %c0_22 = arith.constant 0 : index
    %c0_23 = arith.constant 0 : index
    %24 = vector.load %arg4[%c0_22, %c0_23] : memref<1x32xf32, #tpu.memory_space<vmem>>, vector<1x32xf32>
    %25 = vector.broadcast %24 : vector<1x32xf32> to vector<80x32xf32>
    %26 = arith.addf %23, %25 : vector<80x32xf32>
    %cst_24 = arith.constant 0.000000e+00 : f32
    %27 = vector.broadcast %cst_24 : f32 to vector<80x32xf32>
    %28 = arith.cmpf oge, %26, %27 : vector<80x32xf32>
    %cst_25 = arith.constant 1.000000e-01 : f32
    %29 = vector.broadcast %cst_25 : f32 to vector<80x32xf32>
    %30 = arith.mulf %29, %26 : vector<80x32xf32>
    %31 = arith.select %28, %26, %30 : vector<80x32xi1>, vector<80x32xf32>
    %32 = arith.truncf %31 : vector<80x32xf32> to vector<80x32xbf16>
    %c0_26 = arith.constant 0 : index
    %c0_27 = arith.constant 0 : index
    %c0_28 = arith.constant 0 : index
    %33 = vector.load %arg5[%c0_26, %c0_27, %c0_28] : memref<1x80x32xbf16, #tpu.memory_space<vmem>>, vector<1x80x32xbf16>
    %34 = vector.shape_cast %33 : vector<1x80x32xbf16> to vector<80x32xbf16>
    %35 = vector.shape_cast %32 : vector<80x32xbf16> to vector<1x80x32xbf16>
    tpu.vector_store %arg5[%c0_26, %c0_27, %c0_28], %35 {strides = array<i32>} : memref<1x80x32xbf16, #tpu.memory_space<vmem>>, vector<1x80x32xbf16>,
    return
  }
  func.func @transform_0(%arg0: i32) -> (i32, i32, i32) {
    %c0_i32 = arith.constant 0 : i32
    %c0_i32_0 = arith.constant 0 : i32
    %c0_i32_1 = arith.constant 0 : i32
    return %arg0, %c0_i32, %c0_i32_0 : i32, i32, i32
  }
  func.func @transform_1(%arg0: i32) -> (i32, i32) {
    %c0_i32 = arith.constant 0 : i32
    %c0_i32_0 = arith.constant 0 : i32
    %c0_i32_1 = arith.constant 0 : i32
    return %c0_i32, %c0_i32_0 : i32, i32
  }
  func.func @transform_2(%arg0: i32) -> (i32, i32) {
    %c0_i32 = arith.constant 0 : i32
    %c0_i32_0 = arith.constant 0 : i32
    %c0_i32_1 = arith.constant 0 : i32
    return %c0_i32, %c0_i32_0 : i32, i32
  }
  func.func @transform_3(%arg0: i32) -> (i32, i32) {
    %c0_i32 = arith.constant 0 : i32
    %c0_i32_0 = arith.constant 0 : i32
    %c0_i32_1 = arith.constant 0 : i32
    return %c0_i32, %c0_i32_0 : i32, i32
  }
  func.func @transform_4(%arg0: i32) -> (i32, i32, i32) {
    %c0_i32 = arith.constant 0 : i32
    %c0_i32_0 = arith.constant 0 : i32
    %c0_i32_1 = arith.constant 0 : i32
    return %arg0, %c0_i32, %c0_i32_0 : i32, i32, i32
  }
}

module attributes {stable_mosaic.version = 11 : i64} {
  func.func @_matmul_bn_act_kernel(%arg0: i32, %arg1: memref<64x32xbf16, #tpu.memory_space<vmem>>, %arg2: memref<64x32xbf16, #tpu.memory_space<vmem>>, %arg3: memref<64x32xbf16, #tpu.memory_space<vmem>>, %arg4: memref<64x32xbf16, #tpu.memory_space<vmem>>, %arg5: memref<128x64xbf16, #tpu.memory_space<vmem>>, %arg6: memref<1x64xf32, #tpu.memory_space<vmem>>, %arg7: memref<1x64xf32, #tpu.memory_space<vmem>>, %arg8: memref<64x64xbf16, #tpu.memory_space<vmem>>) attributes {dimension_semantics = [#tpu.dimension_semantics<parallel>], iteration_bounds = array<i64: 2>, scalar_prefetch = 0 : i64, scratch_operands = 0 : i64, tpu.core_type = #tpu.core_type<tc>, window_params = [{transform_indices = @transform_0, window_bounds = array<i64: 64, 32>}, {transform_indices = @transform_1, window_bounds = array<i64: 64, 32>}, {transform_indices = @transform_2, window_bounds = array<i64: 64, 32>}, {transform_indices = @transform_3, window_bounds = array<i64: 64, 32>}, {pipeline_mode = #tpu.pipeline_mode<synchronous>, transform_indices = @transform_4, window_bounds = array<i64: 128, 64>}, {pipeline_mode = #tpu.pipeline_mode<synchronous>, transform_indices = @transform_5, window_bounds = array<i64: 1, 64>}, {pipeline_mode = #tpu.pipeline_mode<synchronous>, transform_indices = @transform_6, window_bounds = array<i64: 1, 64>}, {transform_indices = @transform_7, window_bounds = array<i64: 64, 64>}]} {
    %c0 = arith.constant 0 : index
    %c0_0 = arith.constant 0 : index
    %0 = vector.load %arg1[%c0, %c0_0] : memref<64x32xbf16, #tpu.memory_space<vmem>>, vector<64x32xbf16>
    %c0_1 = arith.constant 0 : index
    %c0_2 = arith.constant 0 : index
    %1 = vector.load %arg2[%c0_1, %c0_2] : memref<64x32xbf16, #tpu.memory_space<vmem>>, vector<64x32xbf16>
    %c0_3 = arith.constant 0 : index
    %c0_4 = arith.constant 0 : index
    %2 = vector.load %arg3[%c0_3, %c0_4] : memref<64x32xbf16, #tpu.memory_space<vmem>>, vector<64x32xbf16>
    %c0_5 = arith.constant 0 : index
    %c0_6 = arith.constant 0 : index
    %3 = vector.load %arg4[%c0_5, %c0_6] : memref<64x32xbf16, #tpu.memory_space<vmem>>, vector<64x32xbf16>
    %4 = tpu.concatenate %0, %1, %2, %3 in 1 : vector<64x32xbf16>, vector<64x32xbf16>, vector<64x32xbf16>, vector<64x32xbf16> -> vector<64x128xbf16>
    %c0_7 = arith.constant 0 : index
    %c0_8 = arith.constant 0 : index
    %5 = vector.load %arg5[%c0_7, %c0_8] : memref<128x64xbf16, #tpu.memory_space<vmem>>, vector<128x64xbf16>
    %cst = arith.constant dense<0.000000e+00> : vector<64x64xf32>
    %6 = tpu.matmul %4, %5, %cst {dimension_numbers = #tpu.dot_dimension_numbers<[1], [0], [0], [1], [0, 0, 1, 1], [], []>} : vector<64x128xbf16>, vector<128x64xbf16>, vector<64x64xf32> -> vector<64x64xf32>
    %c0_9 = arith.constant 0 : index
    %c0_10 = arith.constant 0 : index
    %7 = vector.load %arg6[%c0_9, %c0_10] : memref<1x64xf32, #tpu.memory_space<vmem>>, vector<1x64xf32>
    %8 = vector.broadcast %7 : vector<1x64xf32> to vector<64x64xf32>
    %9 = arith.mulf %6, %8 : vector<64x64xf32>
    %c0_11 = arith.constant 0 : index
    %c0_12 = arith.constant 0 : index
    %10 = vector.load %arg7[%c0_11, %c0_12] : memref<1x64xf32, #tpu.memory_space<vmem>>, vector<1x64xf32>
    %11 = vector.broadcast %10 : vector<1x64xf32> to vector<64x64xf32>
    %12 = arith.addf %9, %11 : vector<64x64xf32>
    %cst_13 = arith.constant 0.000000e+00 : f32
    %13 = vector.broadcast %cst_13 : f32 to vector<64x64xf32>
    %14 = arith.subf %13, %12 : vector<64x64xf32>
    %15 = math.exp %14 : vector<64x64xf32>
    %cst_14 = arith.constant 1.000000e+00 : f32
    %16 = vector.broadcast %cst_14 : f32 to vector<64x64xf32>
    %17 = arith.addf %16, %15 : vector<64x64xf32>
    %18 = tpu.reciprocal %17 {approx = true} : vector<64x64xf32> -> vector<64x64xf32>
    %19 = arith.mulf %12, %18 : vector<64x64xf32>
    %20 = arith.truncf %19 : vector<64x64xf32> to vector<64x64xbf16>
    %c0_15 = arith.constant 0 : index
    %c0_16 = arith.constant 0 : index
    %21 = vector.load %arg8[%c0_15, %c0_16] : memref<64x64xbf16, #tpu.memory_space<vmem>>, vector<64x64xbf16>
    tpu.vector_store %arg8[%c0_15, %c0_16], %20 {strides = array<i32>} : memref<64x64xbf16, #tpu.memory_space<vmem>>, vector<64x64xbf16>,
    return
  }
  func.func @transform_0(%arg0: i32) -> (i32, i32) {
    %c0_i32 = arith.constant 0 : i32
    %c0_i32_0 = arith.constant 0 : i32
    return %arg0, %c0_i32 : i32, i32
  }
  func.func @transform_1(%arg0: i32) -> (i32, i32) {
    %c0_i32 = arith.constant 0 : i32
    %c0_i32_0 = arith.constant 0 : i32
    return %arg0, %c0_i32 : i32, i32
  }
  func.func @transform_2(%arg0: i32) -> (i32, i32) {
    %c0_i32 = arith.constant 0 : i32
    %c0_i32_0 = arith.constant 0 : i32
    return %arg0, %c0_i32 : i32, i32
  }
  func.func @transform_3(%arg0: i32) -> (i32, i32) {
    %c0_i32 = arith.constant 0 : i32
    %c0_i32_0 = arith.constant 0 : i32
    return %arg0, %c0_i32 : i32, i32
  }
  func.func @transform_4(%arg0: i32) -> (i32, i32) {
    %c0_i32 = arith.constant 0 : i32
    %c0_i32_0 = arith.constant 0 : i32
    %c0_i32_1 = arith.constant 0 : i32
    return %c0_i32, %c0_i32_0 : i32, i32
  }
  func.func @transform_5(%arg0: i32) -> (i32, i32) {
    %c0_i32 = arith.constant 0 : i32
    %c0_i32_0 = arith.constant 0 : i32
    %c0_i32_1 = arith.constant 0 : i32
    return %c0_i32, %c0_i32_0 : i32, i32
  }
  func.func @transform_6(%arg0: i32) -> (i32, i32) {
    %c0_i32 = arith.constant 0 : i32
    %c0_i32_0 = arith.constant 0 : i32
    %c0_i32_1 = arith.constant 0 : i32
    return %c0_i32, %c0_i32_0 : i32, i32
  }
  func.func @transform_7(%arg0: i32) -> (i32, i32) {
    %c0_i32 = arith.constant 0 : i32
    %c0_i32_0 = arith.constant 0 : i32
    return %arg0, %c0_i32 : i32, i32
  }
}

module attributes {stable_mosaic.version = 11 : i64} {
  func.func @_maxpool_kernel(%arg0: i32, %arg1: memref<4x2x4x128xbf16, #tpu.memory_space<vmem>>, %arg2: memref<4x4x64xbf16, #tpu.memory_space<vmem>>) attributes {dimension_semantics = [#tpu.dimension_semantics<parallel>], iteration_bounds = array<i64: 2>, scalar_prefetch = 0 : i64, scratch_operands = 0 : i64, tpu.core_type = #tpu.core_type<tc>, window_params = [{transform_indices = @transform_0, window_bounds = array<i64: 4, 2, 4, 128>}, {transform_indices = @transform_1, window_bounds = array<i64: 4, 4, 64>}]} {
    %c0 = arith.constant 0 : index
    %c0_0 = arith.constant 0 : index
    %c0_1 = arith.constant 0 : index
    %c0_2 = arith.constant 0 : index
    %0 = vector.load %arg1[%c0, %c0_0, %c0_1, %c0_2] : memref<4x2x4x128xbf16, #tpu.memory_space<vmem>>, vector<4x1x4x128xbf16>
    %1 = vector.shape_cast %0 : vector<4x1x4x128xbf16> to vector<4x4x128xbf16>
    %c0_3 = arith.constant 0 : index
    %c1 = arith.constant 1 : index
    %c0_4 = arith.constant 0 : index
    %c0_5 = arith.constant 0 : index
    %2 = vector.load %arg1[%c0_3, %c1, %c0_4, %c0_5] : memref<4x2x4x128xbf16, #tpu.memory_space<vmem>>, vector<4x1x4x128xbf16>
    %3 = vector.shape_cast %2 : vector<4x1x4x128xbf16> to vector<4x4x128xbf16>
    %4 = arith.maximumf %1, %3 : vector<4x4x128xbf16>
    %5 = vector.extract_strided_slice %4 {offsets = [0, 0, 0], sizes = [4, 4, 64], strides = [1, 1, 1]} : vector<4x4x128xbf16> to vector<4x4x64xbf16>
    %6 = vector.extract_strided_slice %4 {offsets = [0, 0, 64], sizes = [4, 4, 64], strides = [1, 1, 1]} : vector<4x4x128xbf16> to vector<4x4x64xbf16>
    %7 = arith.maximumf %5, %6 : vector<4x4x64xbf16>
    %c0_6 = arith.constant 0 : index
    %c0_7 = arith.constant 0 : index
    %c0_8 = arith.constant 0 : index
    %8 = vector.load %arg2[%c0_6, %c0_7, %c0_8] : memref<4x4x64xbf16, #tpu.memory_space<vmem>>, vector<4x4x64xbf16>
    tpu.vector_store %arg2[%c0_6, %c0_7, %c0_8], %7 {strides = array<i32>} : memref<4x4x64xbf16, #tpu.memory_space<vmem>>, vector<4x4x64xbf16>,
    return
  }
  func.func @transform_0(%arg0: i32) -> (i32, i32, i32, i32) {
    %c0_i32 = arith.constant 0 : i32
    %c0_i32_0 = arith.constant 0 : i32
    %c0_i32_1 = arith.constant 0 : i32
    %c0_i32_2 = arith.constant 0 : i32
    return %arg0, %c0_i32, %c0_i32_0, %c0_i32_1 : i32, i32, i32, i32
  }
  func.func @transform_1(%arg0: i32) -> (i32, i32, i32) {
    %c0_i32 = arith.constant 0 : i32
    %c0_i32_0 = arith.constant 0 : i32
    %c0_i32_1 = arith.constant 0 : i32
    return %arg0, %c0_i32, %c0_i32_0 : i32, i32, i32
  }
}

module attributes {stable_mosaic.version = 11 : i64} {
  func.func @_matmul_bn_act_kernel(%arg0: i32, %arg1: memref<16x64xbf16, #tpu.memory_space<vmem>>, %arg2: memref<64x64xbf16, #tpu.memory_space<vmem>>, %arg3: memref<1x64xf32, #tpu.memory_space<vmem>>, %arg4: memref<1x64xf32, #tpu.memory_space<vmem>>, %arg5: memref<16x32xbf16, #tpu.memory_space<vmem>>, %arg6: memref<16x32xbf16, #tpu.memory_space<vmem>>) attributes {dimension_semantics = [#tpu.dimension_semantics<parallel>], iteration_bounds = array<i64: 2>, scalar_prefetch = 0 : i64, scratch_operands = 0 : i64, tpu.core_type = #tpu.core_type<tc>, window_params = [{transform_indices = @transform_0, window_bounds = array<i64: 16, 64>}, {pipeline_mode = #tpu.pipeline_mode<synchronous>, transform_indices = @transform_1, window_bounds = array<i64: 64, 64>}, {pipeline_mode = #tpu.pipeline_mode<synchronous>, transform_indices = @transform_2, window_bounds = array<i64: 1, 64>}, {pipeline_mode = #tpu.pipeline_mode<synchronous>, transform_indices = @transform_3, window_bounds = array<i64: 1, 64>}, {transform_indices = @transform_4, window_bounds = array<i64: 16, 32>}, {transform_indices = @transform_5, window_bounds = array<i64: 16, 32>}]} {
    %c0 = arith.constant 0 : index
    %c0_0 = arith.constant 0 : index
    %0 = vector.load %arg1[%c0, %c0_0] : memref<16x64xbf16, #tpu.memory_space<vmem>>, vector<16x64xbf16>
    %c0_1 = arith.constant 0 : index
    %c0_2 = arith.constant 0 : index
    %1 = vector.load %arg2[%c0_1, %c0_2] : memref<64x64xbf16, #tpu.memory_space<vmem>>, vector<64x64xbf16>
    %cst = arith.constant dense<0.000000e+00> : vector<16x64xf32>
    %2 = tpu.matmul %0, %1, %cst {dimension_numbers = #tpu.dot_dimension_numbers<[1], [0], [0], [1], [0, 0, 1, 1], [], []>} : vector<16x64xbf16>, vector<64x64xbf16>, vector<16x64xf32> -> vector<16x64xf32>
    %c0_3 = arith.constant 0 : index
    %c0_4 = arith.constant 0 : index
    %3 = vector.load %arg3[%c0_3, %c0_4] : memref<1x64xf32, #tpu.memory_space<vmem>>, vector<1x64xf32>
    %4 = vector.broadcast %3 : vector<1x64xf32> to vector<16x64xf32>
    %5 = arith.mulf %2, %4 : vector<16x64xf32>
    %c0_5 = arith.constant 0 : index
    %c0_6 = arith.constant 0 : index
    %6 = vector.load %arg4[%c0_5, %c0_6] : memref<1x64xf32, #tpu.memory_space<vmem>>, vector<1x64xf32>
    %7 = vector.broadcast %6 : vector<1x64xf32> to vector<16x64xf32>
    %8 = arith.addf %5, %7 : vector<16x64xf32>
    %cst_7 = arith.constant 0.000000e+00 : f32
    %9 = vector.broadcast %cst_7 : f32 to vector<16x64xf32>
    %10 = arith.cmpf oge, %8, %9 : vector<16x64xf32>
    %cst_8 = arith.constant 1.000000e-01 : f32
    %11 = vector.broadcast %cst_8 : f32 to vector<16x64xf32>
    %12 = arith.mulf %11, %8 : vector<16x64xf32>
    %13 = arith.select %10, %8, %12 : vector<16x64xi1>, vector<16x64xf32>
    %14 = vector.extract_strided_slice %13 {offsets = [0, 0], sizes = [16, 32], strides = [1, 1]} : vector<16x64xf32> to vector<16x32xf32>
    %15 = arith.truncf %14 : vector<16x32xf32> to vector<16x32xbf16>
    %c0_9 = arith.constant 0 : index
    %c0_10 = arith.constant 0 : index
    %16 = vector.load %arg5[%c0_9, %c0_10] : memref<16x32xbf16, #tpu.memory_space<vmem>>, vector<16x32xbf16>
    tpu.vector_store %arg5[%c0_9, %c0_10], %15 {strides = array<i32>} : memref<16x32xbf16, #tpu.memory_space<vmem>>, vector<16x32xbf16>,
    %17 = vector.extract_strided_slice %13 {offsets = [0, 32], sizes = [16, 32], strides = [1, 1]} : vector<16x64xf32> to vector<16x32xf32>
    %18 = arith.truncf %17 : vector<16x32xf32> to vector<16x32xbf16>
    %c0_11 = arith.constant 0 : index
    %c0_12 = arith.constant 0 : index
    %19 = vector.load %arg6[%c0_11, %c0_12] : memref<16x32xbf16, #tpu.memory_space<vmem>>, vector<16x32xbf16>
    tpu.vector_store %arg6[%c0_11, %c0_12], %18 {strides = array<i32>} : memref<16x32xbf16, #tpu.memory_space<vmem>>, vector<16x32xbf16>,
    return
  }
  func.func @transform_0(%arg0: i32) -> (i32, i32) {
    %c0_i32 = arith.constant 0 : i32
    %c0_i32_0 = arith.constant 0 : i32
    return %arg0, %c0_i32 : i32, i32
  }
  func.func @transform_1(%arg0: i32) -> (i32, i32) {
    %c0_i32 = arith.constant 0 : i32
    %c0_i32_0 = arith.constant 0 : i32
    %c0_i32_1 = arith.constant 0 : i32
    return %c0_i32, %c0_i32_0 : i32, i32
  }
  func.func @transform_2(%arg0: i32) -> (i32, i32) {
    %c0_i32 = arith.constant 0 : i32
    %c0_i32_0 = arith.constant 0 : i32
    %c0_i32_1 = arith.constant 0 : i32
    return %c0_i32, %c0_i32_0 : i32, i32
  }
  func.func @transform_3(%arg0: i32) -> (i32, i32) {
    %c0_i32 = arith.constant 0 : i32
    %c0_i32_0 = arith.constant 0 : i32
    %c0_i32_1 = arith.constant 0 : i32
    return %c0_i32, %c0_i32_0 : i32, i32
  }
  func.func @transform_4(%arg0: i32) -> (i32, i32) {
    %c0_i32 = arith.constant 0 : i32
    %c0_i32_0 = arith.constant 0 : i32
    return %arg0, %c0_i32 : i32, i32
  }
  func.func @transform_5(%arg0: i32) -> (i32, i32) {
    %c0_i32 = arith.constant 0 : i32
    %c0_i32_0 = arith.constant 0 : i32
    return %arg0, %c0_i32 : i32, i32
  }
}

module attributes {stable_mosaic.version = 11 : i64} {
  func.func @_conv3x3_direct_kernel(%arg0: i32, %arg1: memref<1x42x32xbf16, #tpu.memory_space<vmem>>, %arg2: memref<288x32xbf16, #tpu.memory_space<vmem>>, %arg3: memref<1x32xf32, #tpu.memory_space<vmem>>, %arg4: memref<1x32xf32, #tpu.memory_space<vmem>>, %arg5: memref<1x24x32xbf16, #tpu.memory_space<vmem>>) attributes {dimension_semantics = [#tpu.dimension_semantics<parallel>], iteration_bounds = array<i64: 2>, scalar_prefetch = 0 : i64, scratch_operands = 0 : i64, tpu.core_type = #tpu.core_type<tc>, window_params = [{transform_indices = @transform_0, window_bounds = array<i64: 1, 42, 32>}, {pipeline_mode = #tpu.pipeline_mode<synchronous>, transform_indices = @transform_1, window_bounds = array<i64: 288, 32>}, {pipeline_mode = #tpu.pipeline_mode<synchronous>, transform_indices = @transform_2, window_bounds = array<i64: 1, 32>}, {pipeline_mode = #tpu.pipeline_mode<synchronous>, transform_indices = @transform_3, window_bounds = array<i64: 1, 32>}, {transform_indices = @transform_4, window_bounds = array<i64: 1, 24, 32>}]} {
    %c0 = arith.constant 0 : index
    %c0_0 = arith.constant 0 : index
    %c0_1 = arith.constant 0 : index
    %0 = vector.load %arg1[%c0, %c0_0, %c0_1] : memref<1x42x32xbf16, #tpu.memory_space<vmem>>, vector<1x24x32xbf16>
    %1 = vector.shape_cast %0 : vector<1x24x32xbf16> to vector<24x32xbf16>
    %c0_2 = arith.constant 0 : index
    %c1 = arith.constant 1 : index
    %c0_3 = arith.constant 0 : index
    %2 = vector.load %arg1[%c0_2, %c1, %c0_3] : memref<1x42x32xbf16, #tpu.memory_space<vmem>>, vector<1x24x32xbf16>
    %3 = vector.shape_cast %2 : vector<1x24x32xbf16> to vector<24x32xbf16>
    %c0_4 = arith.constant 0 : index
    %c2 = arith.constant 2 : index
    %c0_5 = arith.constant 0 : index
    %4 = vector.load %arg1[%c0_4, %c2, %c0_5] : memref<1x42x32xbf16, #tpu.memory_space<vmem>>, vector<1x24x32xbf16>
    %5 = vector.shape_cast %4 : vector<1x24x32xbf16> to vector<24x32xbf16>
    %c0_6 = arith.constant 0 : index
    %c6 = arith.constant 6 : index
    %c0_7 = arith.constant 0 : index
    %6 = vector.load %arg1[%c0_6, %c6, %c0_7] : memref<1x42x32xbf16, #tpu.memory_space<vmem>>, vector<1x24x32xbf16>
    %7 = vector.shape_cast %6 : vector<1x24x32xbf16> to vector<24x32xbf16>
    %c0_8 = arith.constant 0 : index
    %c7 = arith.constant 7 : index
    %c0_9 = arith.constant 0 : index
    %8 = vector.load %arg1[%c0_8, %c7, %c0_9] : memref<1x42x32xbf16, #tpu.memory_space<vmem>>, vector<1x24x32xbf16>
    %9 = vector.shape_cast %8 : vector<1x24x32xbf16> to vector<24x32xbf16>
    %c0_10 = arith.constant 0 : index
    %c8 = arith.constant 8 : index
    %c0_11 = arith.constant 0 : index
    %10 = vector.load %arg1[%c0_10, %c8, %c0_11] : memref<1x42x32xbf16, #tpu.memory_space<vmem>>, vector<1x24x32xbf16>
    %11 = vector.shape_cast %10 : vector<1x24x32xbf16> to vector<24x32xbf16>
    %c0_12 = arith.constant 0 : index
    %c12 = arith.constant 12 : index
    %c0_13 = arith.constant 0 : index
    %12 = vector.load %arg1[%c0_12, %c12, %c0_13] : memref<1x42x32xbf16, #tpu.memory_space<vmem>>, vector<1x24x32xbf16>
    %13 = vector.shape_cast %12 : vector<1x24x32xbf16> to vector<24x32xbf16>
    %c0_14 = arith.constant 0 : index
    %c13 = arith.constant 13 : index
    %c0_15 = arith.constant 0 : index
    %14 = vector.load %arg1[%c0_14, %c13, %c0_15] : memref<1x42x32xbf16, #tpu.memory_space<vmem>>, vector<1x24x32xbf16>
    %15 = vector.shape_cast %14 : vector<1x24x32xbf16> to vector<24x32xbf16>
    %c0_16 = arith.constant 0 : index
    %c14 = arith.constant 14 : index
    %c0_17 = arith.constant 0 : index
    %16 = vector.load %arg1[%c0_16, %c14, %c0_17] : memref<1x42x32xbf16, #tpu.memory_space<vmem>>, vector<1x24x32xbf16>
    %17 = vector.shape_cast %16 : vector<1x24x32xbf16> to vector<24x32xbf16>
    %18 = tpu.concatenate %1, %3, %5, %7, %9, %11, %13, %15, %17 in 1 : vector<24x32xbf16>, vector<24x32xbf16>, vector<24x32xbf16>, vector<24x32xbf16>, vector<24x32xbf16>, vector<24x32xbf16>, vector<24x32xbf16>, vector<24x32xbf16>, vector<24x32xbf16> -> vector<24x288xbf16>
    %c0_18 = arith.constant 0 : index
    %c0_19 = arith.constant 0 : index
    %19 = vector.load %arg2[%c0_18, %c0_19] : memref<288x32xbf16, #tpu.memory_space<vmem>>, vector<288x32xbf16>
    %cst = arith.constant dense<0.000000e+00> : vector<24x32xf32>
    %20 = tpu.matmul %18, %19, %cst {dimension_numbers = #tpu.dot_dimension_numbers<[1], [0], [0], [1], [0, 0, 1, 1], [], []>} : vector<24x288xbf16>, vector<288x32xbf16>, vector<24x32xf32> -> vector<24x32xf32>
    %c0_20 = arith.constant 0 : index
    %c0_21 = arith.constant 0 : index
    %21 = vector.load %arg3[%c0_20, %c0_21] : memref<1x32xf32, #tpu.memory_space<vmem>>, vector<1x32xf32>
    %22 = vector.broadcast %21 : vector<1x32xf32> to vector<24x32xf32>
    %23 = arith.mulf %20, %22 : vector<24x32xf32>
    %c0_22 = arith.constant 0 : index
    %c0_23 = arith.constant 0 : index
    %24 = vector.load %arg4[%c0_22, %c0_23] : memref<1x32xf32, #tpu.memory_space<vmem>>, vector<1x32xf32>
    %25 = vector.broadcast %24 : vector<1x32xf32> to vector<24x32xf32>
    %26 = arith.addf %23, %25 : vector<24x32xf32>
    %cst_24 = arith.constant 0.000000e+00 : f32
    %27 = vector.broadcast %cst_24 : f32 to vector<24x32xf32>
    %28 = arith.cmpf oge, %26, %27 : vector<24x32xf32>
    %cst_25 = arith.constant 1.000000e-01 : f32
    %29 = vector.broadcast %cst_25 : f32 to vector<24x32xf32>
    %30 = arith.mulf %29, %26 : vector<24x32xf32>
    %31 = arith.select %28, %26, %30 : vector<24x32xi1>, vector<24x32xf32>
    %32 = arith.truncf %31 : vector<24x32xf32> to vector<24x32xbf16>
    %c0_26 = arith.constant 0 : index
    %c0_27 = arith.constant 0 : index
    %c0_28 = arith.constant 0 : index
    %33 = vector.load %arg5[%c0_26, %c0_27, %c0_28] : memref<1x24x32xbf16, #tpu.memory_space<vmem>>, vector<1x24x32xbf16>
    %34 = vector.shape_cast %33 : vector<1x24x32xbf16> to vector<24x32xbf16>
    %35 = vector.shape_cast %32 : vector<24x32xbf16> to vector<1x24x32xbf16>
    tpu.vector_store %arg5[%c0_26, %c0_27, %c0_28], %35 {strides = array<i32>} : memref<1x24x32xbf16, #tpu.memory_space<vmem>>, vector<1x24x32xbf16>,
    return
  }
  func.func @transform_0(%arg0: i32) -> (i32, i32, i32) {
    %c0_i32 = arith.constant 0 : i32
    %c0_i32_0 = arith.constant 0 : i32
    %c0_i32_1 = arith.constant 0 : i32
    return %arg0, %c0_i32, %c0_i32_0 : i32, i32, i32
  }
  func.func @transform_1(%arg0: i32) -> (i32, i32) {
    %c0_i32 = arith.constant 0 : i32
    %c0_i32_0 = arith.constant 0 : i32
    %c0_i32_1 = arith.constant 0 : i32
    return %c0_i32, %c0_i32_0 : i32, i32
  }
  func.func @transform_2(%arg0: i32) -> (i32, i32) {
    %c0_i32 = arith.constant 0 : i32
    %c0_i32_0 = arith.constant 0 : i32
    %c0_i32_1 = arith.constant 0 : i32
    return %c0_i32, %c0_i32_0 : i32, i32
  }
  func.func @transform_3(%arg0: i32) -> (i32, i32) {
    %c0_i32 = arith.constant 0 : i32
    %c0_i32_0 = arith.constant 0 : i32
    %c0_i32_1 = arith.constant 0 : i32
    return %c0_i32, %c0_i32_0 : i32, i32
  }
  func.func @transform_4(%arg0: i32) -> (i32, i32, i32) {
    %c0_i32 = arith.constant 0 : i32
    %c0_i32_0 = arith.constant 0 : i32
    %c0_i32_1 = arith.constant 0 : i32
    return %arg0, %c0_i32, %c0_i32_0 : i32, i32, i32
  }
}

module attributes {stable_mosaic.version = 11 : i64} {
  func.func @_maxpool_kernel(%arg0: i32, %arg1: memref<2x2x2x256xbf16, #tpu.memory_space<vmem>>, %arg2: memref<2x2x128xbf16, #tpu.memory_space<vmem>>) attributes {dimension_semantics = [#tpu.dimension_semantics<parallel>], iteration_bounds = array<i64: 2>, scalar_prefetch = 0 : i64, scratch_operands = 0 : i64, tpu.core_type = #tpu.core_type<tc>, window_params = [{transform_indices = @transform_0, window_bounds = array<i64: 2, 2, 2, 256>}, {transform_indices = @transform_1, window_bounds = array<i64: 2, 2, 128>}]} {
    %c0 = arith.constant 0 : index
    %c0_0 = arith.constant 0 : index
    %c0_1 = arith.constant 0 : index
    %c0_2 = arith.constant 0 : index
    %0 = vector.load %arg1[%c0, %c0_0, %c0_1, %c0_2] : memref<2x2x2x256xbf16, #tpu.memory_space<vmem>>, vector<2x1x2x256xbf16>
    %1 = vector.shape_cast %0 : vector<2x1x2x256xbf16> to vector<2x2x256xbf16>
    %c0_3 = arith.constant 0 : index
    %c1 = arith.constant 1 : index
    %c0_4 = arith.constant 0 : index
    %c0_5 = arith.constant 0 : index
    %2 = vector.load %arg1[%c0_3, %c1, %c0_4, %c0_5] : memref<2x2x2x256xbf16, #tpu.memory_space<vmem>>, vector<2x1x2x256xbf16>
    %3 = vector.shape_cast %2 : vector<2x1x2x256xbf16> to vector<2x2x256xbf16>
    %4 = arith.maximumf %1, %3 : vector<2x2x256xbf16>
    %5 = vector.extract_strided_slice %4 {offsets = [0, 0, 0], sizes = [2, 2, 128], strides = [1, 1, 1]} : vector<2x2x256xbf16> to vector<2x2x128xbf16>
    %6 = vector.extract_strided_slice %4 {offsets = [0, 0, 128], sizes = [2, 2, 128], strides = [1, 1, 1]} : vector<2x2x256xbf16> to vector<2x2x128xbf16>
    %7 = arith.maximumf %5, %6 : vector<2x2x128xbf16>
    %c0_6 = arith.constant 0 : index
    %c0_7 = arith.constant 0 : index
    %c0_8 = arith.constant 0 : index
    %8 = vector.load %arg2[%c0_6, %c0_7, %c0_8] : memref<2x2x128xbf16, #tpu.memory_space<vmem>>, vector<2x2x128xbf16>
    tpu.vector_store %arg2[%c0_6, %c0_7, %c0_8], %7 {strides = array<i32>} : memref<2x2x128xbf16, #tpu.memory_space<vmem>>, vector<2x2x128xbf16>,
    return
  }
  func.func @transform_0(%arg0: i32) -> (i32, i32, i32, i32) {
    %c0_i32 = arith.constant 0 : i32
    %c0_i32_0 = arith.constant 0 : i32
    %c0_i32_1 = arith.constant 0 : i32
    %c0_i32_2 = arith.constant 0 : i32
    return %arg0, %c0_i32, %c0_i32_0, %c0_i32_1 : i32, i32, i32, i32
  }
  func.func @transform_1(%arg0: i32) -> (i32, i32, i32) {
    %c0_i32 = arith.constant 0 : i32
    %c0_i32_0 = arith.constant 0 : i32
    %c0_i32_1 = arith.constant 0 : i32
    return %arg0, %c0_i32, %c0_i32_0 : i32, i32, i32
  }
}

module attributes {stable_mosaic.version = 11 : i64} {
  func.func @_matmul_bn_act_kernel(%arg0: i32, %arg1: memref<16x32xbf16, #tpu.memory_space<vmem>>, %arg2: memref<16x32xbf16, #tpu.memory_space<vmem>>, %arg3: memref<16x32xbf16, #tpu.memory_space<vmem>>, %arg4: memref<16x32xbf16, #tpu.memory_space<vmem>>, %arg5: memref<128x128xbf16, #tpu.memory_space<vmem>>, %arg6: memref<1x128xf32, #tpu.memory_space<vmem>>, %arg7: memref<1x128xf32, #tpu.memory_space<vmem>>, %arg8: memref<16x128xbf16, #tpu.memory_space<vmem>>) attributes {dimension_semantics = [#tpu.dimension_semantics<parallel>], iteration_bounds = array<i64: 2>, scalar_prefetch = 0 : i64, scratch_operands = 0 : i64, tpu.core_type = #tpu.core_type<tc>, window_params = [{transform_indices = @transform_0, window_bounds = array<i64: 16, 32>}, {transform_indices = @transform_1, window_bounds = array<i64: 16, 32>}, {transform_indices = @transform_2, window_bounds = array<i64: 16, 32>}, {transform_indices = @transform_3, window_bounds = array<i64: 16, 32>}, {pipeline_mode = #tpu.pipeline_mode<synchronous>, transform_indices = @transform_4, window_bounds = array<i64: 128, 128>}, {pipeline_mode = #tpu.pipeline_mode<synchronous>, transform_indices = @transform_5, window_bounds = array<i64: 1, 128>}, {pipeline_mode = #tpu.pipeline_mode<synchronous>, transform_indices = @transform_6, window_bounds = array<i64: 1, 128>}, {transform_indices = @transform_7, window_bounds = array<i64: 16, 128>}]} {
    %c0 = arith.constant 0 : index
    %c0_0 = arith.constant 0 : index
    %0 = vector.load %arg1[%c0, %c0_0] : memref<16x32xbf16, #tpu.memory_space<vmem>>, vector<16x32xbf16>
    %c0_1 = arith.constant 0 : index
    %c0_2 = arith.constant 0 : index
    %1 = vector.load %arg2[%c0_1, %c0_2] : memref<16x32xbf16, #tpu.memory_space<vmem>>, vector<16x32xbf16>
    %c0_3 = arith.constant 0 : index
    %c0_4 = arith.constant 0 : index
    %2 = vector.load %arg3[%c0_3, %c0_4] : memref<16x32xbf16, #tpu.memory_space<vmem>>, vector<16x32xbf16>
    %c0_5 = arith.constant 0 : index
    %c0_6 = arith.constant 0 : index
    %3 = vector.load %arg4[%c0_5, %c0_6] : memref<16x32xbf16, #tpu.memory_space<vmem>>, vector<16x32xbf16>
    %4 = tpu.concatenate %0, %1, %2, %3 in 1 : vector<16x32xbf16>, vector<16x32xbf16>, vector<16x32xbf16>, vector<16x32xbf16> -> vector<16x128xbf16>
    %c0_7 = arith.constant 0 : index
    %c0_8 = arith.constant 0 : index
    %5 = vector.load %arg5[%c0_7, %c0_8] : memref<128x128xbf16, #tpu.memory_space<vmem>>, vector<128x128xbf16>
    %cst = arith.constant dense<0.000000e+00> : vector<16x128xf32>
    %6 = tpu.matmul %4, %5, %cst {dimension_numbers = #tpu.dot_dimension_numbers<[1], [0], [0], [1], [0, 0, 1, 1], [], []>} : vector<16x128xbf16>, vector<128x128xbf16>, vector<16x128xf32> -> vector<16x128xf32>
    %c0_9 = arith.constant 0 : index
    %c0_10 = arith.constant 0 : index
    %7 = vector.load %arg6[%c0_9, %c0_10] : memref<1x128xf32, #tpu.memory_space<vmem>>, vector<1x128xf32>
    %8 = vector.broadcast %7 : vector<1x128xf32> to vector<16x128xf32>
    %9 = arith.mulf %6, %8 : vector<16x128xf32>
    %c0_11 = arith.constant 0 : index
    %c0_12 = arith.constant 0 : index
    %10 = vector.load %arg7[%c0_11, %c0_12] : memref<1x128xf32, #tpu.memory_space<vmem>>, vector<1x128xf32>
    %11 = vector.broadcast %10 : vector<1x128xf32> to vector<16x128xf32>
    %12 = arith.addf %9, %11 : vector<16x128xf32>
    %cst_13 = arith.constant 0.000000e+00 : f32
    %13 = vector.broadcast %cst_13 : f32 to vector<16x128xf32>
    %14 = arith.subf %13, %12 : vector<16x128xf32>
    %15 = math.exp %14 : vector<16x128xf32>
    %cst_14 = arith.constant 1.000000e+00 : f32
    %16 = vector.broadcast %cst_14 : f32 to vector<16x128xf32>
    %17 = arith.addf %16, %15 : vector<16x128xf32>
    %18 = tpu.reciprocal %17 {approx = true} : vector<16x128xf32> -> vector<16x128xf32>
    %19 = arith.mulf %12, %18 : vector<16x128xf32>
    %20 = arith.truncf %19 : vector<16x128xf32> to vector<16x128xbf16>
    %c0_15 = arith.constant 0 : index
    %c0_16 = arith.constant 0 : index
    %21 = vector.load %arg8[%c0_15, %c0_16] : memref<16x128xbf16, #tpu.memory_space<vmem>>, vector<16x128xbf16>
    tpu.vector_store %arg8[%c0_15, %c0_16], %20 {strides = array<i32>} : memref<16x128xbf16, #tpu.memory_space<vmem>>, vector<16x128xbf16>,
    return
  }
  func.func @transform_0(%arg0: i32) -> (i32, i32) {
    %c0_i32 = arith.constant 0 : i32
    %c0_i32_0 = arith.constant 0 : i32
    return %arg0, %c0_i32 : i32, i32
  }
  func.func @transform_1(%arg0: i32) -> (i32, i32) {
    %c0_i32 = arith.constant 0 : i32
    %c0_i32_0 = arith.constant 0 : i32
    return %arg0, %c0_i32 : i32, i32
  }
  func.func @transform_2(%arg0: i32) -> (i32, i32) {
    %c0_i32 = arith.constant 0 : i32
    %c0_i32_0 = arith.constant 0 : i32
    return %arg0, %c0_i32 : i32, i32
  }
  func.func @transform_3(%arg0: i32) -> (i32, i32) {
    %c0_i32 = arith.constant 0 : i32
    %c0_i32_0 = arith.constant 0 : i32
    return %arg0, %c0_i32 : i32, i32
  }
  func.func @transform_4(%arg0: i32) -> (i32, i32) {
    %c0_i32 = arith.constant 0 : i32
    %c0_i32_0 = arith.constant 0 : i32
    %c0_i32_1 = arith.constant 0 : i32
    return %c0_i32, %c0_i32_0 : i32, i32
  }
  func.func @transform_5(%arg0: i32) -> (i32, i32) {
    %c0_i32 = arith.constant 0 : i32
    %c0_i32_0 = arith.constant 0 : i32
    %c0_i32_1 = arith.constant 0 : i32
    return %c0_i32, %c0_i32_0 : i32, i32
  }
  func.func @transform_6(%arg0: i32) -> (i32, i32) {
    %c0_i32 = arith.constant 0 : i32
    %c0_i32_0 = arith.constant 0 : i32
    %c0_i32_1 = arith.constant 0 : i32
    return %c0_i32, %c0_i32_0 : i32, i32
  }
  func.func @transform_7(%arg0: i32) -> (i32, i32) {
    %c0_i32 = arith.constant 0 : i32
    %c0_i32_0 = arith.constant 0 : i32
    return %arg0, %c0_i32 : i32, i32
  }
}

module attributes {stable_mosaic.version = 11 : i64} {
  func.func @_matmul_bn_act_kernel(%arg0: i32, %arg1: memref<8x128xbf16, #tpu.memory_space<vmem>>, %arg2: memref<128x128xbf16, #tpu.memory_space<vmem>>, %arg3: memref<1x128xf32, #tpu.memory_space<vmem>>, %arg4: memref<1x128xf32, #tpu.memory_space<vmem>>, %arg5: memref<8x64xbf16, #tpu.memory_space<vmem>>, %arg6: memref<8x64xbf16, #tpu.memory_space<vmem>>) attributes {dimension_semantics = [#tpu.dimension_semantics<parallel>], iteration_bounds = array<i64: 1>, scalar_prefetch = 0 : i64, scratch_operands = 0 : i64, tpu.core_type = #tpu.core_type<tc>, window_params = [{transform_indices = @transform_0, window_bounds = array<i64: 8, 128>}, {pipeline_mode = #tpu.pipeline_mode<synchronous>, transform_indices = @transform_1, window_bounds = array<i64: 128, 128>}, {pipeline_mode = #tpu.pipeline_mode<synchronous>, transform_indices = @transform_2, window_bounds = array<i64: 1, 128>}, {pipeline_mode = #tpu.pipeline_mode<synchronous>, transform_indices = @transform_3, window_bounds = array<i64: 1, 128>}, {transform_indices = @transform_4, window_bounds = array<i64: 8, 64>}, {transform_indices = @transform_5, window_bounds = array<i64: 8, 64>}]} {
    %c0 = arith.constant 0 : index
    %c0_0 = arith.constant 0 : index
    %0 = vector.load %arg1[%c0, %c0_0] : memref<8x128xbf16, #tpu.memory_space<vmem>>, vector<8x128xbf16>
    %c0_1 = arith.constant 0 : index
    %c0_2 = arith.constant 0 : index
    %1 = vector.load %arg2[%c0_1, %c0_2] : memref<128x128xbf16, #tpu.memory_space<vmem>>, vector<128x128xbf16>
    %cst = arith.constant dense<0.000000e+00> : vector<8x128xf32>
    %2 = tpu.matmul %0, %1, %cst {dimension_numbers = #tpu.dot_dimension_numbers<[1], [0], [0], [1], [0, 0, 1, 1], [], []>} : vector<8x128xbf16>, vector<128x128xbf16>, vector<8x128xf32> -> vector<8x128xf32>
    %c0_3 = arith.constant 0 : index
    %c0_4 = arith.constant 0 : index
    %3 = vector.load %arg3[%c0_3, %c0_4] : memref<1x128xf32, #tpu.memory_space<vmem>>, vector<1x128xf32>
    %4 = vector.broadcast %3 : vector<1x128xf32> to vector<8x128xf32>
    %5 = arith.mulf %2, %4 : vector<8x128xf32>
    %c0_5 = arith.constant 0 : index
    %c0_6 = arith.constant 0 : index
    %6 = vector.load %arg4[%c0_5, %c0_6] : memref<1x128xf32, #tpu.memory_space<vmem>>, vector<1x128xf32>
    %7 = vector.broadcast %6 : vector<1x128xf32> to vector<8x128xf32>
    %8 = arith.addf %5, %7 : vector<8x128xf32>
    %cst_7 = arith.constant 0.000000e+00 : f32
    %9 = vector.broadcast %cst_7 : f32 to vector<8x128xf32>
    %10 = arith.cmpf oge, %8, %9 : vector<8x128xf32>
    %cst_8 = arith.constant 1.000000e-01 : f32
    %11 = vector.broadcast %cst_8 : f32 to vector<8x128xf32>
    %12 = arith.mulf %11, %8 : vector<8x128xf32>
    %13 = arith.select %10, %8, %12 : vector<8x128xi1>, vector<8x128xf32>
    %14 = vector.extract_strided_slice %13 {offsets = [0, 0], sizes = [8, 64], strides = [1, 1]} : vector<8x128xf32> to vector<8x64xf32>
    %15 = arith.truncf %14 : vector<8x64xf32> to vector<8x64xbf16>
    %c0_9 = arith.constant 0 : index
    %c0_10 = arith.constant 0 : index
    %16 = vector.load %arg5[%c0_9, %c0_10] : memref<8x64xbf16, #tpu.memory_space<vmem>>, vector<8x64xbf16>
    tpu.vector_store %arg5[%c0_9, %c0_10], %15 {strides = array<i32>} : memref<8x64xbf16, #tpu.memory_space<vmem>>, vector<8x64xbf16>,
    %17 = vector.extract_strided_slice %13 {offsets = [0, 64], sizes = [8, 64], strides = [1, 1]} : vector<8x128xf32> to vector<8x64xf32>
    %18 = arith.truncf %17 : vector<8x64xf32> to vector<8x64xbf16>
    %c0_11 = arith.constant 0 : index
    %c0_12 = arith.constant 0 : index
    %19 = vector.load %arg6[%c0_11, %c0_12] : memref<8x64xbf16, #tpu.memory_space<vmem>>, vector<8x64xbf16>
    tpu.vector_store %arg6[%c0_11, %c0_12], %18 {strides = array<i32>} : memref<8x64xbf16, #tpu.memory_space<vmem>>, vector<8x64xbf16>,
    return
  }
  func.func @transform_0(%arg0: i32) -> (i32, i32) {
    %c0_i32 = arith.constant 0 : i32
    %c0_i32_0 = arith.constant 0 : i32
    return %arg0, %c0_i32 : i32, i32
  }
  func.func @transform_1(%arg0: i32) -> (i32, i32) {
    %c0_i32 = arith.constant 0 : i32
    %c0_i32_0 = arith.constant 0 : i32
    %c0_i32_1 = arith.constant 0 : i32
    return %c0_i32, %c0_i32_0 : i32, i32
  }
  func.func @transform_2(%arg0: i32) -> (i32, i32) {
    %c0_i32 = arith.constant 0 : i32
    %c0_i32_0 = arith.constant 0 : i32
    %c0_i32_1 = arith.constant 0 : i32
    return %c0_i32, %c0_i32_0 : i32, i32
  }
  func.func @transform_3(%arg0: i32) -> (i32, i32) {
    %c0_i32 = arith.constant 0 : i32
    %c0_i32_0 = arith.constant 0 : i32
    %c0_i32_1 = arith.constant 0 : i32
    return %c0_i32, %c0_i32_0 : i32, i32
  }
  func.func @transform_4(%arg0: i32) -> (i32, i32) {
    %c0_i32 = arith.constant 0 : i32
    %c0_i32_0 = arith.constant 0 : i32
    return %arg0, %c0_i32 : i32, i32
  }
  func.func @transform_5(%arg0: i32) -> (i32, i32) {
    %c0_i32 = arith.constant 0 : i32
    %c0_i32_0 = arith.constant 0 : i32
    return %arg0, %c0_i32 : i32, i32
  }
}

module attributes {stable_mosaic.version = 11 : i64} {
  func.func @_conv3x3_direct_kernel(%arg0: i32, %arg1: memref<1x20x64xbf16, #tpu.memory_space<vmem>>, %arg2: memref<576x64xbf16, #tpu.memory_space<vmem>>, %arg3: memref<1x64xf32, #tpu.memory_space<vmem>>, %arg4: memref<1x64xf32, #tpu.memory_space<vmem>>, %arg5: memref<1x8x64xbf16, #tpu.memory_space<vmem>>) attributes {dimension_semantics = [#tpu.dimension_semantics<parallel>], iteration_bounds = array<i64: 2>, scalar_prefetch = 0 : i64, scratch_operands = 0 : i64, tpu.core_type = #tpu.core_type<tc>, window_params = [{transform_indices = @transform_0, window_bounds = array<i64: 1, 20, 64>}, {pipeline_mode = #tpu.pipeline_mode<synchronous>, transform_indices = @transform_1, window_bounds = array<i64: 576, 64>}, {pipeline_mode = #tpu.pipeline_mode<synchronous>, transform_indices = @transform_2, window_bounds = array<i64: 1, 64>}, {pipeline_mode = #tpu.pipeline_mode<synchronous>, transform_indices = @transform_3, window_bounds = array<i64: 1, 64>}, {transform_indices = @transform_4, window_bounds = array<i64: 1, 8, 64>}]} {
    %c0 = arith.constant 0 : index
    %c0_0 = arith.constant 0 : index
    %c0_1 = arith.constant 0 : index
    %0 = vector.load %arg1[%c0, %c0_0, %c0_1] : memref<1x20x64xbf16, #tpu.memory_space<vmem>>, vector<1x8x64xbf16>
    %1 = vector.shape_cast %0 : vector<1x8x64xbf16> to vector<8x64xbf16>
    %c0_2 = arith.constant 0 : index
    %c1 = arith.constant 1 : index
    %c0_3 = arith.constant 0 : index
    %2 = vector.load %arg1[%c0_2, %c1, %c0_3] : memref<1x20x64xbf16, #tpu.memory_space<vmem>>, vector<1x8x64xbf16>
    %3 = vector.shape_cast %2 : vector<1x8x64xbf16> to vector<8x64xbf16>
    %c0_4 = arith.constant 0 : index
    %c2 = arith.constant 2 : index
    %c0_5 = arith.constant 0 : index
    %4 = vector.load %arg1[%c0_4, %c2, %c0_5] : memref<1x20x64xbf16, #tpu.memory_space<vmem>>, vector<1x8x64xbf16>
    %5 = vector.shape_cast %4 : vector<1x8x64xbf16> to vector<8x64xbf16>
    %c0_6 = arith.constant 0 : index
    %c4 = arith.constant 4 : index
    %c0_7 = arith.constant 0 : index
    %6 = vector.load %arg1[%c0_6, %c4, %c0_7] : memref<1x20x64xbf16, #tpu.memory_space<vmem>>, vector<1x8x64xbf16>
    %7 = vector.shape_cast %6 : vector<1x8x64xbf16> to vector<8x64xbf16>
    %c0_8 = arith.constant 0 : index
    %c5 = arith.constant 5 : index
    %c0_9 = arith.constant 0 : index
    %8 = vector.load %arg1[%c0_8, %c5, %c0_9] : memref<1x20x64xbf16, #tpu.memory_space<vmem>>, vector<1x8x64xbf16>
    %9 = vector.shape_cast %8 : vector<1x8x64xbf16> to vector<8x64xbf16>
    %c0_10 = arith.constant 0 : index
    %c6 = arith.constant 6 : index
    %c0_11 = arith.constant 0 : index
    %10 = vector.load %arg1[%c0_10, %c6, %c0_11] : memref<1x20x64xbf16, #tpu.memory_space<vmem>>, vector<1x8x64xbf16>
    %11 = vector.shape_cast %10 : vector<1x8x64xbf16> to vector<8x64xbf16>
    %c0_12 = arith.constant 0 : index
    %c8 = arith.constant 8 : index
    %c0_13 = arith.constant 0 : index
    %12 = vector.load %arg1[%c0_12, %c8, %c0_13] : memref<1x20x64xbf16, #tpu.memory_space<vmem>>, vector<1x8x64xbf16>
    %13 = vector.shape_cast %12 : vector<1x8x64xbf16> to vector<8x64xbf16>
    %c0_14 = arith.constant 0 : index
    %c9 = arith.constant 9 : index
    %c0_15 = arith.constant 0 : index
    %14 = vector.load %arg1[%c0_14, %c9, %c0_15] : memref<1x20x64xbf16, #tpu.memory_space<vmem>>, vector<1x8x64xbf16>
    %15 = vector.shape_cast %14 : vector<1x8x64xbf16> to vector<8x64xbf16>
    %c0_16 = arith.constant 0 : index
    %c10 = arith.constant 10 : index
    %c0_17 = arith.constant 0 : index
    %16 = vector.load %arg1[%c0_16, %c10, %c0_17] : memref<1x20x64xbf16, #tpu.memory_space<vmem>>, vector<1x8x64xbf16>
    %17 = vector.shape_cast %16 : vector<1x8x64xbf16> to vector<8x64xbf16>
    %18 = tpu.concatenate %1, %3, %5, %7, %9, %11, %13, %15, %17 in 1 : vector<8x64xbf16>, vector<8x64xbf16>, vector<8x64xbf16>, vector<8x64xbf16>, vector<8x64xbf16>, vector<8x64xbf16>, vector<8x64xbf16>, vector<8x64xbf16>, vector<8x64xbf16> -> vector<8x576xbf16>
    %c0_18 = arith.constant 0 : index
    %c0_19 = arith.constant 0 : index
    %19 = vector.load %arg2[%c0_18, %c0_19] : memref<576x64xbf16, #tpu.memory_space<vmem>>, vector<576x64xbf16>
    %cst = arith.constant dense<0.000000e+00> : vector<8x64xf32>
    %20 = tpu.matmul %18, %19, %cst {dimension_numbers = #tpu.dot_dimension_numbers<[1], [0], [0], [1], [0, 0, 1, 1], [], []>} : vector<8x576xbf16>, vector<576x64xbf16>, vector<8x64xf32> -> vector<8x64xf32>
    %c0_20 = arith.constant 0 : index
    %c0_21 = arith.constant 0 : index
    %21 = vector.load %arg3[%c0_20, %c0_21] : memref<1x64xf32, #tpu.memory_space<vmem>>, vector<1x64xf32>
    %22 = vector.broadcast %21 : vector<1x64xf32> to vector<8x64xf32>
    %23 = arith.mulf %20, %22 : vector<8x64xf32>
    %c0_22 = arith.constant 0 : index
    %c0_23 = arith.constant 0 : index
    %24 = vector.load %arg4[%c0_22, %c0_23] : memref<1x64xf32, #tpu.memory_space<vmem>>, vector<1x64xf32>
    %25 = vector.broadcast %24 : vector<1x64xf32> to vector<8x64xf32>
    %26 = arith.addf %23, %25 : vector<8x64xf32>
    %cst_24 = arith.constant 0.000000e+00 : f32
    %27 = vector.broadcast %cst_24 : f32 to vector<8x64xf32>
    %28 = arith.cmpf oge, %26, %27 : vector<8x64xf32>
    %cst_25 = arith.constant 1.000000e-01 : f32
    %29 = vector.broadcast %cst_25 : f32 to vector<8x64xf32>
    %30 = arith.mulf %29, %26 : vector<8x64xf32>
    %31 = arith.select %28, %26, %30 : vector<8x64xi1>, vector<8x64xf32>
    %32 = arith.truncf %31 : vector<8x64xf32> to vector<8x64xbf16>
    %c0_26 = arith.constant 0 : index
    %c0_27 = arith.constant 0 : index
    %c0_28 = arith.constant 0 : index
    %33 = vector.load %arg5[%c0_26, %c0_27, %c0_28] : memref<1x8x64xbf16, #tpu.memory_space<vmem>>, vector<1x8x64xbf16>
    %34 = vector.shape_cast %33 : vector<1x8x64xbf16> to vector<8x64xbf16>
    %35 = vector.shape_cast %32 : vector<8x64xbf16> to vector<1x8x64xbf16>
    tpu.vector_store %arg5[%c0_26, %c0_27, %c0_28], %35 {strides = array<i32>} : memref<1x8x64xbf16, #tpu.memory_space<vmem>>, vector<1x8x64xbf16>,
    return
  }
  func.func @transform_0(%arg0: i32) -> (i32, i32, i32) {
    %c0_i32 = arith.constant 0 : i32
    %c0_i32_0 = arith.constant 0 : i32
    %c0_i32_1 = arith.constant 0 : i32
    return %arg0, %c0_i32, %c0_i32_0 : i32, i32, i32
  }
  func.func @transform_1(%arg0: i32) -> (i32, i32) {
    %c0_i32 = arith.constant 0 : i32
    %c0_i32_0 = arith.constant 0 : i32
    %c0_i32_1 = arith.constant 0 : i32
    return %c0_i32, %c0_i32_0 : i32, i32
  }
  func.func @transform_2(%arg0: i32) -> (i32, i32) {
    %c0_i32 = arith.constant 0 : i32
    %c0_i32_0 = arith.constant 0 : i32
    %c0_i32_1 = arith.constant 0 : i32
    return %c0_i32, %c0_i32_0 : i32, i32
  }
  func.func @transform_3(%arg0: i32) -> (i32, i32) {
    %c0_i32 = arith.constant 0 : i32
    %c0_i32_0 = arith.constant 0 : i32
    %c0_i32_1 = arith.constant 0 : i32
    return %c0_i32, %c0_i32_0 : i32, i32
  }
  func.func @transform_4(%arg0: i32) -> (i32, i32, i32) {
    %c0_i32 = arith.constant 0 : i32
    %c0_i32_0 = arith.constant 0 : i32
    %c0_i32_1 = arith.constant 0 : i32
    return %arg0, %c0_i32, %c0_i32_0 : i32, i32, i32
  }
}

module attributes {stable_mosaic.version = 11 : i64} {
  func.func @_matmul_bn_act_kernel(%arg0: i32, %arg1: memref<8x64xbf16, #tpu.memory_space<vmem>>, %arg2: memref<8x64xbf16, #tpu.memory_space<vmem>>, %arg3: memref<8x64xbf16, #tpu.memory_space<vmem>>, %arg4: memref<8x64xbf16, #tpu.memory_space<vmem>>, %arg5: memref<256x256xbf16, #tpu.memory_space<vmem>>, %arg6: memref<1x256xf32, #tpu.memory_space<vmem>>, %arg7: memref<1x256xf32, #tpu.memory_space<vmem>>, %arg8: memref<8x256xbf16, #tpu.memory_space<vmem>>) attributes {dimension_semantics = [#tpu.dimension_semantics<parallel>], iteration_bounds = array<i64: 1>, scalar_prefetch = 0 : i64, scratch_operands = 0 : i64, tpu.core_type = #tpu.core_type<tc>, window_params = [{transform_indices = @transform_0, window_bounds = array<i64: 8, 64>}, {transform_indices = @transform_1, window_bounds = array<i64: 8, 64>}, {transform_indices = @transform_2, window_bounds = array<i64: 8, 64>}, {transform_indices = @transform_3, window_bounds = array<i64: 8, 64>}, {pipeline_mode = #tpu.pipeline_mode<synchronous>, transform_indices = @transform_4, window_bounds = array<i64: 256, 256>}, {pipeline_mode = #tpu.pipeline_mode<synchronous>, transform_indices = @transform_5, window_bounds = array<i64: 1, 256>}, {pipeline_mode = #tpu.pipeline_mode<synchronous>, transform_indices = @transform_6, window_bounds = array<i64: 1, 256>}, {transform_indices = @transform_7, window_bounds = array<i64: 8, 256>}]} {
    %c0 = arith.constant 0 : index
    %c0_0 = arith.constant 0 : index
    %0 = vector.load %arg1[%c0, %c0_0] : memref<8x64xbf16, #tpu.memory_space<vmem>>, vector<8x64xbf16>
    %c0_1 = arith.constant 0 : index
    %c0_2 = arith.constant 0 : index
    %1 = vector.load %arg2[%c0_1, %c0_2] : memref<8x64xbf16, #tpu.memory_space<vmem>>, vector<8x64xbf16>
    %c0_3 = arith.constant 0 : index
    %c0_4 = arith.constant 0 : index
    %2 = vector.load %arg3[%c0_3, %c0_4] : memref<8x64xbf16, #tpu.memory_space<vmem>>, vector<8x64xbf16>
    %c0_5 = arith.constant 0 : index
    %c0_6 = arith.constant 0 : index
    %3 = vector.load %arg4[%c0_5, %c0_6] : memref<8x64xbf16, #tpu.memory_space<vmem>>, vector<8x64xbf16>
    %4 = tpu.concatenate %0, %1, %2, %3 in 1 : vector<8x64xbf16>, vector<8x64xbf16>, vector<8x64xbf16>, vector<8x64xbf16> -> vector<8x256xbf16>
    %c0_7 = arith.constant 0 : index
    %c0_8 = arith.constant 0 : index
    %5 = vector.load %arg5[%c0_7, %c0_8] : memref<256x256xbf16, #tpu.memory_space<vmem>>, vector<256x256xbf16>
    %cst = arith.constant dense<0.000000e+00> : vector<8x256xf32>
    %6 = tpu.matmul %4, %5, %cst {dimension_numbers = #tpu.dot_dimension_numbers<[1], [0], [0], [1], [0, 0, 1, 1], [], []>} : vector<8x256xbf16>, vector<256x256xbf16>, vector<8x256xf32> -> vector<8x256xf32>
    %c0_9 = arith.constant 0 : index
    %c0_10 = arith.constant 0 : index
    %7 = vector.load %arg6[%c0_9, %c0_10] : memref<1x256xf32, #tpu.memory_space<vmem>>, vector<1x256xf32>
    %8 = vector.broadcast %7 : vector<1x256xf32> to vector<8x256xf32>
    %9 = arith.mulf %6, %8 : vector<8x256xf32>
    %c0_11 = arith.constant 0 : index
    %c0_12 = arith.constant 0 : index
    %10 = vector.load %arg7[%c0_11, %c0_12] : memref<1x256xf32, #tpu.memory_space<vmem>>, vector<1x256xf32>
    %11 = vector.broadcast %10 : vector<1x256xf32> to vector<8x256xf32>
    %12 = arith.addf %9, %11 : vector<8x256xf32>
    %cst_13 = arith.constant 0.000000e+00 : f32
    %13 = vector.broadcast %cst_13 : f32 to vector<8x256xf32>
    %14 = arith.subf %13, %12 : vector<8x256xf32>
    %15 = math.exp %14 : vector<8x256xf32>
    %cst_14 = arith.constant 1.000000e+00 : f32
    %16 = vector.broadcast %cst_14 : f32 to vector<8x256xf32>
    %17 = arith.addf %16, %15 : vector<8x256xf32>
    %18 = tpu.reciprocal %17 {approx = true} : vector<8x256xf32> -> vector<8x256xf32>
    %19 = arith.mulf %12, %18 : vector<8x256xf32>
    %20 = arith.truncf %19 : vector<8x256xf32> to vector<8x256xbf16>
    %c0_15 = arith.constant 0 : index
    %c0_16 = arith.constant 0 : index
    %21 = vector.load %arg8[%c0_15, %c0_16] : memref<8x256xbf16, #tpu.memory_space<vmem>>, vector<8x256xbf16>
    tpu.vector_store %arg8[%c0_15, %c0_16], %20 {strides = array<i32>} : memref<8x256xbf16, #tpu.memory_space<vmem>>, vector<8x256xbf16>,
    return
  }
  func.func @transform_0(%arg0: i32) -> (i32, i32) {
    %c0_i32 = arith.constant 0 : i32
    %c0_i32_0 = arith.constant 0 : i32
    return %arg0, %c0_i32 : i32, i32
  }
  func.func @transform_1(%arg0: i32) -> (i32, i32) {
    %c0_i32 = arith.constant 0 : i32
    %c0_i32_0 = arith.constant 0 : i32
    return %arg0, %c0_i32 : i32, i32
  }
  func.func @transform_2(%arg0: i32) -> (i32, i32) {
    %c0_i32 = arith.constant 0 : i32
    %c0_i32_0 = arith.constant 0 : i32
    return %arg0, %c0_i32 : i32, i32
  }
  func.func @transform_3(%arg0: i32) -> (i32, i32) {
    %c0_i32 = arith.constant 0 : i32
    %c0_i32_0 = arith.constant 0 : i32
    return %arg0, %c0_i32 : i32, i32
  }
  func.func @transform_4(%arg0: i32) -> (i32, i32) {
    %c0_i32 = arith.constant 0 : i32
    %c0_i32_0 = arith.constant 0 : i32
    %c0_i32_1 = arith.constant 0 : i32
    return %c0_i32, %c0_i32_0 : i32, i32
  }
  func.func @transform_5(%arg0: i32) -> (i32, i32) {
    %c0_i32 = arith.constant 0 : i32
    %c0_i32_0 = arith.constant 0 : i32
    %c0_i32_1 = arith.constant 0 : i32
    return %c0_i32, %c0_i32_0 : i32, i32
  }
  func.func @transform_6(%arg0: i32) -> (i32, i32) {
    %c0_i32 = arith.constant 0 : i32
    %c0_i32_0 = arith.constant 0 : i32
    %c0_i32_1 = arith.constant 0 : i32
    return %c0_i32, %c0_i32_0 : i32, i32
  }
  func.func @transform_7(%arg0: i32) -> (i32, i32) {
    %c0_i32 = arith.constant 0 : i32
    %c0_i32_0 = arith.constant 0 : i32
    return %arg0, %c0_i32 : i32, i32
  }
}

module attributes {stable_mosaic.version = 11 : i64} {
  func.func @_maxpool_kernel(%arg0: i32, %arg1: memref<1x2x1x512xbf16, #tpu.memory_space<vmem>>, %arg2: memref<1x1x256xbf16, #tpu.memory_space<vmem>>) attributes {dimension_semantics = [#tpu.dimension_semantics<parallel>], iteration_bounds = array<i64: 2>, scalar_prefetch = 0 : i64, scratch_operands = 0 : i64, tpu.core_type = #tpu.core_type<tc>, window_params = [{transform_indices = @transform_0, window_bounds = array<i64: 1, 2, 1, 512>}, {transform_indices = @transform_1, window_bounds = array<i64: 1, 1, 256>}]} {
    %c0 = arith.constant 0 : index
    %c0_0 = arith.constant 0 : index
    %c0_1 = arith.constant 0 : index
    %c0_2 = arith.constant 0 : index
    %0 = vector.load %arg1[%c0, %c0_0, %c0_1, %c0_2] : memref<1x2x1x512xbf16, #tpu.memory_space<vmem>>, vector<1x1x1x512xbf16>
    %1 = vector.shape_cast %0 : vector<1x1x1x512xbf16> to vector<1x1x512xbf16>
    %c0_3 = arith.constant 0 : index
    %c1 = arith.constant 1 : index
    %c0_4 = arith.constant 0 : index
    %c0_5 = arith.constant 0 : index
    %2 = vector.load %arg1[%c0_3, %c1, %c0_4, %c0_5] : memref<1x2x1x512xbf16, #tpu.memory_space<vmem>>, vector<1x1x1x512xbf16>
    %3 = vector.shape_cast %2 : vector<1x1x1x512xbf16> to vector<1x1x512xbf16>
    %4 = arith.maximumf %1, %3 : vector<1x1x512xbf16>
    %5 = vector.extract_strided_slice %4 {offsets = [0, 0, 0], sizes = [1, 1, 256], strides = [1, 1, 1]} : vector<1x1x512xbf16> to vector<1x1x256xbf16>
    %6 = vector.extract_strided_slice %4 {offsets = [0, 0, 256], sizes = [1, 1, 256], strides = [1, 1, 1]} : vector<1x1x512xbf16> to vector<1x1x256xbf16>
    %7 = arith.maximumf %5, %6 : vector<1x1x256xbf16>
    %c0_6 = arith.constant 0 : index
    %c0_7 = arith.constant 0 : index
    %c0_8 = arith.constant 0 : index
    %8 = vector.load %arg2[%c0_6, %c0_7, %c0_8] : memref<1x1x256xbf16, #tpu.memory_space<vmem>>, vector<1x1x256xbf16>
    tpu.vector_store %arg2[%c0_6, %c0_7, %c0_8], %7 {strides = array<i32>} : memref<1x1x256xbf16, #tpu.memory_space<vmem>>, vector<1x1x256xbf16>,
    return
  }
  func.func @transform_0(%arg0: i32) -> (i32, i32, i32, i32) {
    %c0_i32 = arith.constant 0 : i32
    %c0_i32_0 = arith.constant 0 : i32
    %c0_i32_1 = arith.constant 0 : i32
    %c0_i32_2 = arith.constant 0 : i32
    return %arg0, %c0_i32, %c0_i32_0, %c0_i32_1 : i32, i32, i32, i32
  }
  func.func @transform_1(%arg0: i32) -> (i32, i32, i32) {
    %c0_i32 = arith.constant 0 : i32
    %c0_i32_0 = arith.constant 0 : i32
    %c0_i32_1 = arith.constant 0 : i32
    return %arg0, %c0_i32, %c0_i32_0 : i32, i32, i32
  }
}

module attributes {stable_mosaic.version = 11 : i64} {
  func.func @_matmul_bn_act_kernel(%arg0: i32, %arg1: memref<2x256xbf16, #tpu.memory_space<vmem>>, %arg2: memref<256x256xbf16, #tpu.memory_space<vmem>>, %arg3: memref<1x256xf32, #tpu.memory_space<vmem>>, %arg4: memref<1x256xf32, #tpu.memory_space<vmem>>, %arg5: memref<2x128xbf16, #tpu.memory_space<vmem>>, %arg6: memref<2x128xbf16, #tpu.memory_space<vmem>>) attributes {dimension_semantics = [#tpu.dimension_semantics<parallel>], iteration_bounds = array<i64: 1>, scalar_prefetch = 0 : i64, scratch_operands = 0 : i64, tpu.core_type = #tpu.core_type<tc>, window_params = [{transform_indices = @transform_0, window_bounds = array<i64: 2, 256>}, {pipeline_mode = #tpu.pipeline_mode<synchronous>, transform_indices = @transform_1, window_bounds = array<i64: 256, 256>}, {pipeline_mode = #tpu.pipeline_mode<synchronous>, transform_indices = @transform_2, window_bounds = array<i64: 1, 256>}, {pipeline_mode = #tpu.pipeline_mode<synchronous>, transform_indices = @transform_3, window_bounds = array<i64: 1, 256>}, {transform_indices = @transform_4, window_bounds = array<i64: 2, 128>}, {transform_indices = @transform_5, window_bounds = array<i64: 2, 128>}]} {
    %c0 = arith.constant 0 : index
    %c0_0 = arith.constant 0 : index
    %0 = vector.load %arg1[%c0, %c0_0] : memref<2x256xbf16, #tpu.memory_space<vmem>>, vector<2x256xbf16>
    %c0_1 = arith.constant 0 : index
    %c0_2 = arith.constant 0 : index
    %1 = vector.load %arg2[%c0_1, %c0_2] : memref<256x256xbf16, #tpu.memory_space<vmem>>, vector<256x256xbf16>
    %cst = arith.constant dense<0.000000e+00> : vector<2x256xf32>
    %2 = tpu.matmul %0, %1, %cst {dimension_numbers = #tpu.dot_dimension_numbers<[1], [0], [0], [1], [0, 0, 1, 1], [], []>} : vector<2x256xbf16>, vector<256x256xbf16>, vector<2x256xf32> -> vector<2x256xf32>
    %c0_3 = arith.constant 0 : index
    %c0_4 = arith.constant 0 : index
    %3 = vector.load %arg3[%c0_3, %c0_4] : memref<1x256xf32, #tpu.memory_space<vmem>>, vector<1x256xf32>
    %4 = vector.broadcast %3 : vector<1x256xf32> to vector<2x256xf32>
    %5 = arith.mulf %2, %4 : vector<2x256xf32>
    %c0_5 = arith.constant 0 : index
    %c0_6 = arith.constant 0 : index
    %6 = vector.load %arg4[%c0_5, %c0_6] : memref<1x256xf32, #tpu.memory_space<vmem>>, vector<1x256xf32>
    %7 = vector.broadcast %6 : vector<1x256xf32> to vector<2x256xf32>
    %8 = arith.addf %5, %7 : vector<2x256xf32>
    %cst_7 = arith.constant 0.000000e+00 : f32
    %9 = vector.broadcast %cst_7 : f32 to vector<2x256xf32>
    %10 = arith.cmpf oge, %8, %9 : vector<2x256xf32>
    %cst_8 = arith.constant 1.000000e-01 : f32
    %11 = vector.broadcast %cst_8 : f32 to vector<2x256xf32>
    %12 = arith.mulf %11, %8 : vector<2x256xf32>
    %13 = arith.select %10, %8, %12 : vector<2x256xi1>, vector<2x256xf32>
    %14 = vector.extract_strided_slice %13 {offsets = [0, 0], sizes = [2, 128], strides = [1, 1]} : vector<2x256xf32> to vector<2x128xf32>
    %15 = arith.truncf %14 : vector<2x128xf32> to vector<2x128xbf16>
    %c0_9 = arith.constant 0 : index
    %c0_10 = arith.constant 0 : index
    %16 = vector.load %arg5[%c0_9, %c0_10] : memref<2x128xbf16, #tpu.memory_space<vmem>>, vector<2x128xbf16>
    tpu.vector_store %arg5[%c0_9, %c0_10], %15 {strides = array<i32>} : memref<2x128xbf16, #tpu.memory_space<vmem>>, vector<2x128xbf16>,
    %17 = vector.extract_strided_slice %13 {offsets = [0, 128], sizes = [2, 128], strides = [1, 1]} : vector<2x256xf32> to vector<2x128xf32>
    %18 = arith.truncf %17 : vector<2x128xf32> to vector<2x128xbf16>
    %c0_11 = arith.constant 0 : index
    %c0_12 = arith.constant 0 : index
    %19 = vector.load %arg6[%c0_11, %c0_12] : memref<2x128xbf16, #tpu.memory_space<vmem>>, vector<2x128xbf16>
    tpu.vector_store %arg6[%c0_11, %c0_12], %18 {strides = array<i32>} : memref<2x128xbf16, #tpu.memory_space<vmem>>, vector<2x128xbf16>,
    return
  }
  func.func @transform_0(%arg0: i32) -> (i32, i32) {
    %c0_i32 = arith.constant 0 : i32
    %c0_i32_0 = arith.constant 0 : i32
    return %arg0, %c0_i32 : i32, i32
  }
  func.func @transform_1(%arg0: i32) -> (i32, i32) {
    %c0_i32 = arith.constant 0 : i32
    %c0_i32_0 = arith.constant 0 : i32
    %c0_i32_1 = arith.constant 0 : i32
    return %c0_i32, %c0_i32_0 : i32, i32
  }
  func.func @transform_2(%arg0: i32) -> (i32, i32) {
    %c0_i32 = arith.constant 0 : i32
    %c0_i32_0 = arith.constant 0 : i32
    %c0_i32_1 = arith.constant 0 : i32
    return %c0_i32, %c0_i32_0 : i32, i32
  }
  func.func @transform_3(%arg0: i32) -> (i32, i32) {
    %c0_i32 = arith.constant 0 : i32
    %c0_i32_0 = arith.constant 0 : i32
    %c0_i32_1 = arith.constant 0 : i32
    return %c0_i32, %c0_i32_0 : i32, i32
  }
  func.func @transform_4(%arg0: i32) -> (i32, i32) {
    %c0_i32 = arith.constant 0 : i32
    %c0_i32_0 = arith.constant 0 : i32
    return %arg0, %c0_i32 : i32, i32
  }
  func.func @transform_5(%arg0: i32) -> (i32, i32) {
    %c0_i32 = arith.constant 0 : i32
    %c0_i32_0 = arith.constant 0 : i32
    return %arg0, %c0_i32 : i32, i32
  }
}

module attributes {stable_mosaic.version = 11 : i64} {
  func.func @_conv3x3_direct_kernel(%arg0: i32, %arg1: memref<1x12x128xbf16, #tpu.memory_space<vmem>>, %arg2: memref<1152x128xbf16, #tpu.memory_space<vmem>>, %arg3: memref<1x128xf32, #tpu.memory_space<vmem>>, %arg4: memref<1x128xf32, #tpu.memory_space<vmem>>, %arg5: memref<1x3x128xbf16, #tpu.memory_space<vmem>>) attributes {dimension_semantics = [#tpu.dimension_semantics<parallel>], iteration_bounds = array<i64: 2>, scalar_prefetch = 0 : i64, scratch_operands = 0 : i64, tpu.core_type = #tpu.core_type<tc>, window_params = [{transform_indices = @transform_0, window_bounds = array<i64: 1, 12, 128>}, {pipeline_mode = #tpu.pipeline_mode<synchronous>, transform_indices = @transform_1, window_bounds = array<i64: 1152, 128>}, {pipeline_mode = #tpu.pipeline_mode<synchronous>, transform_indices = @transform_2, window_bounds = array<i64: 1, 128>}, {pipeline_mode = #tpu.pipeline_mode<synchronous>, transform_indices = @transform_3, window_bounds = array<i64: 1, 128>}, {transform_indices = @transform_4, window_bounds = array<i64: 1, 3, 128>}]} {
    %c0 = arith.constant 0 : index
    %c0_0 = arith.constant 0 : index
    %c0_1 = arith.constant 0 : index
    %0 = vector.load %arg1[%c0, %c0_0, %c0_1] : memref<1x12x128xbf16, #tpu.memory_space<vmem>>, vector<1x3x128xbf16>
    %1 = vector.shape_cast %0 : vector<1x3x128xbf16> to vector<3x128xbf16>
    %c0_2 = arith.constant 0 : index
    %c1 = arith.constant 1 : index
    %c0_3 = arith.constant 0 : index
    %2 = vector.load %arg1[%c0_2, %c1, %c0_3] : memref<1x12x128xbf16, #tpu.memory_space<vmem>>, vector<1x3x128xbf16>
    %3 = vector.shape_cast %2 : vector<1x3x128xbf16> to vector<3x128xbf16>
    %c0_4 = arith.constant 0 : index
    %c2 = arith.constant 2 : index
    %c0_5 = arith.constant 0 : index
    %4 = vector.load %arg1[%c0_4, %c2, %c0_5] : memref<1x12x128xbf16, #tpu.memory_space<vmem>>, vector<1x3x128xbf16>
    %5 = vector.shape_cast %4 : vector<1x3x128xbf16> to vector<3x128xbf16>
    %c0_6 = arith.constant 0 : index
    %c3 = arith.constant 3 : index
    %c0_7 = arith.constant 0 : index
    %6 = vector.load %arg1[%c0_6, %c3, %c0_7] : memref<1x12x128xbf16, #tpu.memory_space<vmem>>, vector<1x3x128xbf16>
    %7 = vector.shape_cast %6 : vector<1x3x128xbf16> to vector<3x128xbf16>
    %c0_8 = arith.constant 0 : index
    %c4 = arith.constant 4 : index
    %c0_9 = arith.constant 0 : index
    %8 = vector.load %arg1[%c0_8, %c4, %c0_9] : memref<1x12x128xbf16, #tpu.memory_space<vmem>>, vector<1x3x128xbf16>
    %9 = vector.shape_cast %8 : vector<1x3x128xbf16> to vector<3x128xbf16>
    %c0_10 = arith.constant 0 : index
    %c5 = arith.constant 5 : index
    %c0_11 = arith.constant 0 : index
    %10 = vector.load %arg1[%c0_10, %c5, %c0_11] : memref<1x12x128xbf16, #tpu.memory_space<vmem>>, vector<1x3x128xbf16>
    %11 = vector.shape_cast %10 : vector<1x3x128xbf16> to vector<3x128xbf16>
    %c0_12 = arith.constant 0 : index
    %c6 = arith.constant 6 : index
    %c0_13 = arith.constant 0 : index
    %12 = vector.load %arg1[%c0_12, %c6, %c0_13] : memref<1x12x128xbf16, #tpu.memory_space<vmem>>, vector<1x3x128xbf16>
    %13 = vector.shape_cast %12 : vector<1x3x128xbf16> to vector<3x128xbf16>
    %c0_14 = arith.constant 0 : index
    %c7 = arith.constant 7 : index
    %c0_15 = arith.constant 0 : index
    %14 = vector.load %arg1[%c0_14, %c7, %c0_15] : memref<1x12x128xbf16, #tpu.memory_space<vmem>>, vector<1x3x128xbf16>
    %15 = vector.shape_cast %14 : vector<1x3x128xbf16> to vector<3x128xbf16>
    %c0_16 = arith.constant 0 : index
    %c8 = arith.constant 8 : index
    %c0_17 = arith.constant 0 : index
    %16 = vector.load %arg1[%c0_16, %c8, %c0_17] : memref<1x12x128xbf16, #tpu.memory_space<vmem>>, vector<1x3x128xbf16>
    %17 = vector.shape_cast %16 : vector<1x3x128xbf16> to vector<3x128xbf16>
    %18 = tpu.concatenate %1, %3, %5, %7, %9, %11, %13, %15, %17 in 1 : vector<3x128xbf16>, vector<3x128xbf16>, vector<3x128xbf16>, vector<3x128xbf16>, vector<3x128xbf16>, vector<3x128xbf16>, vector<3x128xbf16>, vector<3x128xbf16>, vector<3x128xbf16> -> vector<3x1152xbf16>
    %c0_18 = arith.constant 0 : index
    %c0_19 = arith.constant 0 : index
    %19 = vector.load %arg2[%c0_18, %c0_19] : memref<1152x128xbf16, #tpu.memory_space<vmem>>, vector<1152x128xbf16>
    %cst = arith.constant dense<0.000000e+00> : vector<3x128xf32>
    %20 = tpu.matmul %18, %19, %cst {dimension_numbers = #tpu.dot_dimension_numbers<[1], [0], [0], [1], [0, 0, 1, 1], [], []>} : vector<3x1152xbf16>, vector<1152x128xbf16>, vector<3x128xf32> -> vector<3x128xf32>
    %c0_20 = arith.constant 0 : index
    %c0_21 = arith.constant 0 : index
    %21 = vector.load %arg3[%c0_20, %c0_21] : memref<1x128xf32, #tpu.memory_space<vmem>>, vector<1x128xf32>
    %22 = vector.broadcast %21 : vector<1x128xf32> to vector<3x128xf32>
    %23 = arith.mulf %20, %22 : vector<3x128xf32>
    %c0_22 = arith.constant 0 : index
    %c0_23 = arith.constant 0 : index
    %24 = vector.load %arg4[%c0_22, %c0_23] : memref<1x128xf32, #tpu.memory_space<vmem>>, vector<1x128xf32>
    %25 = vector.broadcast %24 : vector<1x128xf32> to vector<3x128xf32>
    %26 = arith.addf %23, %25 : vector<3x128xf32>
    %cst_24 = arith.constant 0.000000e+00 : f32
    %27 = vector.broadcast %cst_24 : f32 to vector<3x128xf32>
    %28 = arith.cmpf oge, %26, %27 : vector<3x128xf32>
    %cst_25 = arith.constant 1.000000e-01 : f32
    %29 = vector.broadcast %cst_25 : f32 to vector<3x128xf32>
    %30 = arith.mulf %29, %26 : vector<3x128xf32>
    %31 = arith.select %28, %26, %30 : vector<3x128xi1>, vector<3x128xf32>
    %32 = arith.truncf %31 : vector<3x128xf32> to vector<3x128xbf16>
    %c0_26 = arith.constant 0 : index
    %c0_27 = arith.constant 0 : index
    %c0_28 = arith.constant 0 : index
    %33 = vector.load %arg5[%c0_26, %c0_27, %c0_28] : memref<1x3x128xbf16, #tpu.memory_space<vmem>>, vector<1x3x128xbf16>
    %34 = vector.shape_cast %33 : vector<1x3x128xbf16> to vector<3x128xbf16>
    %35 = vector.shape_cast %32 : vector<3x128xbf16> to vector<1x3x128xbf16>
    tpu.vector_store %arg5[%c0_26, %c0_27, %c0_28], %35 {strides = array<i32>} : memref<1x3x128xbf16, #tpu.memory_space<vmem>>, vector<1x3x128xbf16>,
    return
  }
  func.func @transform_0(%arg0: i32) -> (i32, i32, i32) {
    %c0_i32 = arith.constant 0 : i32
    %c0_i32_0 = arith.constant 0 : i32
    %c0_i32_1 = arith.constant 0 : i32
    return %arg0, %c0_i32, %c0_i32_0 : i32, i32, i32
  }
  func.func @transform_1(%arg0: i32) -> (i32, i32) {
    %c0_i32 = arith.constant 0 : i32
    %c0_i32_0 = arith.constant 0 : i32
    %c0_i32_1 = arith.constant 0 : i32
    return %c0_i32, %c0_i32_0 : i32, i32
  }
  func.func @transform_2(%arg0: i32) -> (i32, i32) {
    %c0_i32 = arith.constant 0 : i32
    %c0_i32_0 = arith.constant 0 : i32
    %c0_i32_1 = arith.constant 0 : i32
    return %c0_i32, %c0_i32_0 : i32, i32
  }
  func.func @transform_3(%arg0: i32) -> (i32, i32) {
    %c0_i32 = arith.constant 0 : i32
    %c0_i32_0 = arith.constant 0 : i32
    %c0_i32_1 = arith.constant 0 : i32
    return %c0_i32, %c0_i32_0 : i32, i32
  }
  func.func @transform_4(%arg0: i32) -> (i32, i32, i32) {
    %c0_i32 = arith.constant 0 : i32
    %c0_i32_0 = arith.constant 0 : i32
    %c0_i32_1 = arith.constant 0 : i32
    return %arg0, %c0_i32, %c0_i32_0 : i32, i32, i32
  }
}

module attributes {stable_mosaic.version = 11 : i64} {
  func.func @_matmul_bn_act_kernel(%arg0: i32, %arg1: memref<2x128xbf16, #tpu.memory_space<vmem>>, %arg2: memref<2x128xbf16, #tpu.memory_space<vmem>>, %arg3: memref<2x128xbf16, #tpu.memory_space<vmem>>, %arg4: memref<2x128xbf16, #tpu.memory_space<vmem>>, %arg5: memref<512x512xbf16, #tpu.memory_space<vmem>>, %arg6: memref<1x512xf32, #tpu.memory_space<vmem>>, %arg7: memref<1x512xf32, #tpu.memory_space<vmem>>, %arg8: memref<2x512xbf16, #tpu.memory_space<vmem>>) attributes {dimension_semantics = [#tpu.dimension_semantics<parallel>], iteration_bounds = array<i64: 1>, scalar_prefetch = 0 : i64, scratch_operands = 0 : i64, tpu.core_type = #tpu.core_type<tc>, window_params = [{transform_indices = @transform_0, window_bounds = array<i64: 2, 128>}, {transform_indices = @transform_1, window_bounds = array<i64: 2, 128>}, {transform_indices = @transform_2, window_bounds = array<i64: 2, 128>}, {transform_indices = @transform_3, window_bounds = array<i64: 2, 128>}, {pipeline_mode = #tpu.pipeline_mode<synchronous>, transform_indices = @transform_4, window_bounds = array<i64: 512, 512>}, {pipeline_mode = #tpu.pipeline_mode<synchronous>, transform_indices = @transform_5, window_bounds = array<i64: 1, 512>}, {pipeline_mode = #tpu.pipeline_mode<synchronous>, transform_indices = @transform_6, window_bounds = array<i64: 1, 512>}, {transform_indices = @transform_7, window_bounds = array<i64: 2, 512>}]} {
    %c0 = arith.constant 0 : index
    %c0_0 = arith.constant 0 : index
    %0 = vector.load %arg1[%c0, %c0_0] : memref<2x128xbf16, #tpu.memory_space<vmem>>, vector<2x128xbf16>
    %c0_1 = arith.constant 0 : index
    %c0_2 = arith.constant 0 : index
    %1 = vector.load %arg2[%c0_1, %c0_2] : memref<2x128xbf16, #tpu.memory_space<vmem>>, vector<2x128xbf16>
    %c0_3 = arith.constant 0 : index
    %c0_4 = arith.constant 0 : index
    %2 = vector.load %arg3[%c0_3, %c0_4] : memref<2x128xbf16, #tpu.memory_space<vmem>>, vector<2x128xbf16>
    %c0_5 = arith.constant 0 : index
    %c0_6 = arith.constant 0 : index
    %3 = vector.load %arg4[%c0_5, %c0_6] : memref<2x128xbf16, #tpu.memory_space<vmem>>, vector<2x128xbf16>
    %4 = tpu.concatenate %0, %1, %2, %3 in 1 : vector<2x128xbf16>, vector<2x128xbf16>, vector<2x128xbf16>, vector<2x128xbf16> -> vector<2x512xbf16>
    %c0_7 = arith.constant 0 : index
    %c0_8 = arith.constant 0 : index
    %5 = vector.load %arg5[%c0_7, %c0_8] : memref<512x512xbf16, #tpu.memory_space<vmem>>, vector<512x512xbf16>
    %cst = arith.constant dense<0.000000e+00> : vector<2x512xf32>
    %6 = tpu.matmul %4, %5, %cst {dimension_numbers = #tpu.dot_dimension_numbers<[1], [0], [0], [1], [0, 0, 1, 1], [], []>} : vector<2x512xbf16>, vector<512x512xbf16>, vector<2x512xf32> -> vector<2x512xf32>
    %c0_9 = arith.constant 0 : index
    %c0_10 = arith.constant 0 : index
    %7 = vector.load %arg6[%c0_9, %c0_10] : memref<1x512xf32, #tpu.memory_space<vmem>>, vector<1x512xf32>
    %8 = vector.broadcast %7 : vector<1x512xf32> to vector<2x512xf32>
    %9 = arith.mulf %6, %8 : vector<2x512xf32>
    %c0_11 = arith.constant 0 : index
    %c0_12 = arith.constant 0 : index
    %10 = vector.load %arg7[%c0_11, %c0_12] : memref<1x512xf32, #tpu.memory_space<vmem>>, vector<1x512xf32>
    %11 = vector.broadcast %10 : vector<1x512xf32> to vector<2x512xf32>
    %12 = arith.addf %9, %11 : vector<2x512xf32>
    %cst_13 = arith.constant 0.000000e+00 : f32
    %13 = vector.broadcast %cst_13 : f32 to vector<2x512xf32>
    %14 = arith.subf %13, %12 : vector<2x512xf32>
    %15 = math.exp %14 : vector<2x512xf32>
    %cst_14 = arith.constant 1.000000e+00 : f32
    %16 = vector.broadcast %cst_14 : f32 to vector<2x512xf32>
    %17 = arith.addf %16, %15 : vector<2x512xf32>
    %18 = tpu.reciprocal %17 {approx = true} : vector<2x512xf32> -> vector<2x512xf32>
    %19 = arith.mulf %12, %18 : vector<2x512xf32>
    %20 = arith.truncf %19 : vector<2x512xf32> to vector<2x512xbf16>
    %c0_15 = arith.constant 0 : index
    %c0_16 = arith.constant 0 : index
    %21 = vector.load %arg8[%c0_15, %c0_16] : memref<2x512xbf16, #tpu.memory_space<vmem>>, vector<2x512xbf16>
    tpu.vector_store %arg8[%c0_15, %c0_16], %20 {strides = array<i32>} : memref<2x512xbf16, #tpu.memory_space<vmem>>, vector<2x512xbf16>,
    return
  }
  func.func @transform_0(%arg0: i32) -> (i32, i32) {
    %c0_i32 = arith.constant 0 : i32
    %c0_i32_0 = arith.constant 0 : i32
    return %arg0, %c0_i32 : i32, i32
  }
  func.func @transform_1(%arg0: i32) -> (i32, i32) {
    %c0_i32 = arith.constant 0 : i32
    %c0_i32_0 = arith.constant 0 : i32
    return %arg0, %c0_i32 : i32, i32
  }
  func.func @transform_2(%arg0: i32) -> (i32, i32) {
    %c0_i32 = arith.constant 0 : i32
    %c0_i32_0 = arith.constant 0 : i32
    return %arg0, %c0_i32 : i32, i32
  }
  func.func @transform_3(%arg0: i32) -> (i32, i32) {
    %c0_i32 = arith.constant 0 : i32
    %c0_i32_0 = arith.constant 0 : i32
    return %arg0, %c0_i32 : i32, i32
  }
  func.func @transform_4(%arg0: i32) -> (i32, i32) {
    %c0_i32 = arith.constant 0 : i32
    %c0_i32_0 = arith.constant 0 : i32
    %c0_i32_1 = arith.constant 0 : i32
    return %c0_i32, %c0_i32_0 : i32, i32
  }
  func.func @transform_5(%arg0: i32) -> (i32, i32) {
    %c0_i32 = arith.constant 0 : i32
    %c0_i32_0 = arith.constant 0 : i32
    %c0_i32_1 = arith.constant 0 : i32
    return %c0_i32, %c0_i32_0 : i32, i32
  }
  func.func @transform_6(%arg0: i32) -> (i32, i32) {
    %c0_i32 = arith.constant 0 : i32
    %c0_i32_0 = arith.constant 0 : i32
    %c0_i32_1 = arith.constant 0 : i32
    return %c0_i32, %c0_i32_0 : i32, i32
  }
  func.func @transform_7(%arg0: i32) -> (i32, i32) {
    %c0_i32 = arith.constant 0 : i32
    %c0_i32_0 = arith.constant 0 : i32
    return %arg0, %c0_i32 : i32, i32
  }
}

</mosaic_0001>

<llo_original>
// kernel: elannet_tiny_forward.21
$region0: #{elannet_tiny_forward.21}
  #allocation0 [shape = 'u32[]', space=smem, size = 0x4, offset = 0x4, fixed_abs, tag = 'smem constant byte address 0x4 - core index']
  #allocation1 [shape = 'u32[144,128]{1,0:T(1,128)}', space=vmem, size = 0x12000, scoped, tag = 'internal scratch']
  %s0 = inlined_call_operand.vmem [shape: bf16[512,27], index: 0, kind: input, shape index: {}]
  %s1 = inlined_call_operand.vmem [shape: bf16[27,32], index: 1, kind: input, shape index: {}]
  %s2 = inlined_call_operand.vmem [shape: f32[1,32], index: 2, kind: input, shape index: {}]
  %s3 = inlined_call_operand.vmem [shape: f32[1,32], index: 3, kind: input, shape index: {}]
  %s4 = inlined_call_operand.vmem [shape: bf16[512,32], index: 4, kind: output, shape index: {}]
  %s5 = sld [smem:[#allocation0]]
  $region49: #{elannet_tiny_forward.21} parent=0
    _
  %s7 = ssub.s32 1, %s5
  %s8 = scalar_select 0, %s7, %s5
  loop: start=0, step=1, limit=4
  $region2: #{elannet_tiny_forward.21} parent=0 // loop_pre_header
    _
  $region3: #{elannet_tiny_forward.21} parent=0 // loop_header
    %s10 = sphi 0, %s14
    %p11 = scmp.ge.s32.totalorder %s10, 4
    %s20 = sphi 0, %s22
    %s23 = sphi 0, %s20
    %s24 = sphi 0, %s23
    %s40 = sphi 0, %s24
    %s44 = sphi 0, %s44
    %s46 = sphi 0, %s44
    %s47 = sphi 0, %s46
    %s61 = sphi 0, %s47
    %s65 = sphi 0, %s65
    %s67 = sphi 0, %s65
    %s68 = sphi 0, %s67
    %s82 = sphi 0, %s68
    %s86 = sphi 0, %s86
    %s88 = sphi 0, %s86
    %s89 = sphi 0, %s88
    %s103 = sphi 0, %s89
    %s109 = sphi 0, %s111
    %s112 = sphi 0, %s109
    %s113 = sphi 0, %s112
    %s129 = sphi 0, %s113
  $region4: #{elannet_tiny_forward.21} parent=0 // loop_header_branch
    %13 = sbr.rel (%p11) target = $region8
  $region5: #{elannet_tiny_forward.21} parent=0 // loop_body
    %s15 = ssub.s32 %s10, 1
    %s16 = ssub.s32 %s10, 2
    %s17 = sadd.s32 %s10, 1
    %s18 = ssub.s32 %s10, %s17
    %p19 = scmp.eq.s32.totalorder %s18, 0
    %s21 = sadd.s32 %s20, 1
    %s22 = scalar_select %p19, %s20, %s21
    %p25 = pneg %p19
    %p26 = scmp.eq.s32.totalorder %s10, 1
    %p27 = por %p25, %p26
    %p28 = scmp.ne.s32.totalorder %s20, %s23
    %p29 = scmp.eq.s32.totalorder %s10, 0
    %p30 = por %p28, %p29
    %p31 = scmp.ne.s32.totalorder %s20, %s23
    %p32 = scmp.eq.s32.totalorder %s15, 1
    %p33 = por %p31, %p32
    %p34 = scmp.ne.s32.totalorder %s23, %s24
    %p35 = scmp.eq.s32.totalorder %s15, 0
    %p36 = por %p34, %p35
    %p37 = scmp.ne.s32.totalorder %s23, %s24
    %p38 = scmp.eq.s32.totalorder %s16, 1
    %p39 = por %p37, %p38
    %p41 = scmp.ne.s32.totalorder %s24, %s40
    %p42 = scmp.eq.s32.totalorder %s16, 0
    %p43 = por %p41, %p42
    %s45 = sadd.s32 %s44, 1
    %p48 = scmp.eq.s32.totalorder %s10, 1
    %p49 = scmp.ne.s32.totalorder %s44, %s46
    %p50 = scmp.eq.s32.totalorder %s10, 0
    %p51 = por %p49, %p50
    %p52 = scmp.ne.s32.totalorder %s44, %s46
    %p53 = scmp.eq.s32.totalorder %s15, 1
    %p54 = por %p52, %p53
    %p55 = scmp.ne.s32.totalorder %s46, %s47
    %p56 = scmp.eq.s32.totalorder %s15, 0
    %p57 = por %p55, %p56
    %p58 = scmp.ne.s32.totalorder %s46, %s47
    %p59 = scmp.eq.s32.totalorder %s16, 1
    %p60 = por %p58, %p59
    %p62 = scmp.ne.s32.totalorder %s47, %s61
    %p63 = scmp.eq.s32.totalorder %s16, 0
    %p64 = por %p62, %p63
    %s66 = sadd.s32 %s65, 1
    %p69 = scmp.eq.s32.totalorder %s10, 1
    %p70 = scmp.ne.s32.totalorder %s65, %s67
    %p71 = scmp.eq.s32.totalorder %s10, 0
    %p72 = por %p70, %p71
    %p73 = scmp.ne.s32.totalorder %s65, %s67
    %p74 = scmp.eq.s32.totalorder %s15, 1
    %p75 = por %p73, %p74
    %p76 = scmp.ne.s32.totalorder %s67, %s68
    %p77 = scmp.eq.s32.totalorder %s15, 0
    %p78 = por %p76, %p77
    %p79 = scmp.ne.s32.totalorder %s67, %s68
    %p80 = scmp.eq.s32.totalorder %s16, 1
    %p81 = por %p79, %p80
    %p83 = scmp.ne.s32.totalorder %s68, %s82
    %p84 = scmp.eq.s32.totalorder %s16, 0
    %p85 = por %p83, %p84
    %s87 = sadd.s32 %s86, 1
    %p90 = scmp.eq.s32.totalorder %s10, 1
    %p91 = scmp.ne.s32.totalorder %s86, %s88
    %p92 = scmp.eq.s32.totalorder %s10, 0
    %p93 = por %p91, %p92
    %p94 = scmp.ne.s32.totalorder %s86, %s88
    %p95 = scmp.eq.s32.totalorder %s15, 1
    %p96 = por %p94, %p95
    %p97 = scmp.ne.s32.totalorder %s88, %s89
    %p98 = scmp.eq.s32.totalorder %s15, 0
    %p99 = por %p97, %p98
    %p100 = scmp.ne.s32.totalorder %s88, %s89
    %p101 = scmp.eq.s32.totalorder %s16, 1
    %p102 = por %p100, %p101
    %p104 = scmp.ne.s32.totalorder %s89, %s103
    %p105 = scmp.eq.s32.totalorder %s16, 0
    %p106 = por %p104, %p105
    %s107 = ssub.s32 %s10, %s17
    %p108 = scmp.eq.s32.totalorder %s107, 0
    %s110 = sadd.s32 %s109, 1
    %s111 = scalar_select %p108, %s109, %s110
    %p114 = pneg %p108
    %p115 = scmp.eq.s32.totalorder %s10, 1
    %p116 = por %p114, %p115
    %p117 = scmp.ne.s32.totalorder %s109, %s112
    %p118 = scmp.eq.s32.totalorder %s10, 0
    %p119 = por %p117, %p118
    %p120 = scmp.ne.s32.totalorder %s109, %s112
    %p121 = scmp.eq.s32.totalorder %s15, 1
    %p122 = por %p120, %p121
    %p123 = scmp.ne.s32.totalorder %s112, %s113
    %p124 = scmp.eq.s32.totalorder %s15, 0
    %p125 = por %p123, %p124
    %p126 = scmp.ne.s32.totalorder %s112, %s113
    %p127 = scmp.eq.s32.totalorder %s16, 1
    %p128 = por %p126, %p127
    %p130 = scmp.ne.s32.totalorder %s113, %s129
    %p131 = scmp.eq.s32.totalorder %s16, 0
    %p132 = por %p130, %p131
    %p133 = scmp.le.s32.totalorder 1, %s10
    %p134 = scmp.lt.s32.totalorder %s10, 3
    %p135 = pnand %p133, %p134
    %p136 = pneg %p135
    // Predicated region
    $region9: #{elannet_tiny_forward.21} parent=5 // pred_check
      _
    $region10: #{elannet_tiny_forward.21} parent=5 // pred_check_branch
      %138 = sbr.rel (%p135) target = $region12
    $region11: #{elannet_tiny_forward.21} parent=5 // pred_region
      %s139 = ssub.s32 %s10, 1
      // Predicated region
      $region13: #{elannet_tiny_forward.21} parent=11 // pred_check
        %p140 = pneg %p57
      $region14: #{elannet_tiny_forward.21} parent=11 // pred_check_branch
        %142 = sbr.rel (%p140) target = $region16
      $region15: #{elannet_tiny_forward.21} parent=11 // pred_region
        _
      $region16: #{elannet_tiny_forward.21} parent=11 // pred_fallthru
        _
      // Predicated region
      $region17: #{elannet_tiny_forward.21} parent=11 // pred_check
        %p143 = pneg %p78
      $region18: #{elannet_tiny_forward.21} parent=11 // pred_check_branch
        %145 = sbr.rel (%p143) target = $region20
      $region19: #{elannet_tiny_forward.21} parent=11 // pred_region
        _
      $region20: #{elannet_tiny_forward.21} parent=11 // pred_fallthru
        _
      // Predicated region
      $region21: #{elannet_tiny_forward.21} parent=11 // pred_check
        %p146 = pneg %p99
      $region22: #{elannet_tiny_forward.21} parent=11 // pred_check_branch
        %148 = sbr.rel (%p146) target = $region24
      $region23: #{elannet_tiny_forward.21} parent=11 // pred_region
        _
      $region24: #{elannet_tiny_forward.21} parent=11 // pred_fallthru
        _
    $region12: #{elannet_tiny_forward.21} parent=5 // pred_fallthru
      _
    %p149 = scmp.lt.s32.totalorder %s10, 2
    // Predicated region
    $region25: #{elannet_tiny_forward.21} parent=5 // pred_check
      %p150 = pneg %p149
    $region26: #{elannet_tiny_forward.21} parent=5 // pred_check_branch
      %152 = sbr.rel (%p150) target = $region28
    $region27: #{elannet_tiny_forward.21} parent=5 // pred_region
      // Predicated region
      $region29: #{elannet_tiny_forward.21} parent=27 // pred_check
        %p153 = pneg %p30
      $region30: #{elannet_tiny_forward.21} parent=27 // pred_check_branch
        %155 = sbr.rel (%p153) target = $region32
      $region31: #{elannet_tiny_forward.21} parent=27 // pred_region
        %s156 = smul.u32 32, %s10
        %p157 = scmp.lt.s32.totalorder %s156, 63
        %s158 = scalar_select %p157, %s156, 63
        %s159 = smul.addr %s158, 4
        %s160 = scalar_lea.vmem %s0, %s159
        %s161 = smul.u32 32, %s10
      $region32: #{elannet_tiny_forward.21} parent=27 // pred_fallthru
        _
    $region28: #{elannet_tiny_forward.21} parent=5 // pred_fallthru
      _
    %p162 = scmp.le.s32.totalorder 1, %s10
    %p163 = scmp.lt.s32.totalorder %s10, 3
    %p164 = pnand %p162, %p163
    %p165 = pneg %p164
    // Predicated region
    $region33: #{elannet_tiny_forward.21} parent=5 // pred_check
      _
    $region34: #{elannet_tiny_forward.21} parent=5 // pred_check_branch
      %167 = sbr.rel (%p164) target = $region36
    $region35: #{elannet_tiny_forward.21} parent=5 // pred_region
      %s168 = ssub.s32 %s10, 1
      %s169 = smul.u32 32, %s15
      %p170 = scmp.lt.s32.totalorder %s169, 63
      %s171 = scalar_select %p170, %s169, 63
      %s172 = smul.addr %s171, 4
      %s173 = scalar_lea.vmem %s0, %s172
      %p174 = pneg %p36
      %p175 = pneg %p33
      %p176 = pneg %p57
      %p177 = pneg %p54
      %p178 = pneg %p78
      %p179 = pneg %p75
      %p180 = pneg %p99
      %p181 = pneg %p96
      %p182 = pneg %p125
      %p183 = pneg %p122
      %s184 = smul.u32 32, %s15
      %p185 = scmp.lt.s32.totalorder %s184, 63
      %s186 = scalar_select %p185, %s184, 63
      %s187 = smul.addr %s186, 4
      %s188 = scalar_lea.vmem %s4, %s187
      %s189 = smul.u32 32, %s15
      %p190 = scmp.lt.s32.totalorder %s189, 63
      %s191 = scalar_select %p190, %s189, 63
      %s192 = smul.addr %s191, 4
      %s193 = scalar_lea.vmem %s0, %s192
      %s194 = smul.u32 32, %s15
      %s195 = smul.u32 32, %s15
      %p196 = scmp.lt.s32.totalorder %s195, 63
      %s197 = scalar_select %p196, %s195, 63
      %s198 = smul.addr %s197, 4
      %s199 = scalar_lea.vmem %s4, %s198
      %s200 = smul.u32 32, %s15
      %v202 = vld [vmem:[%s193] sm:$0xf]
      %v203 = vld [vmem:[%s193 + $0x4] sm:$0xf]
      %v204 = vld [vmem:[%s193 + $0x8] sm:$0xf]
      %v205 = vld [vmem:[%s193 + $0xc] sm:$0xf]
      %v206 = vld [vmem:[%s193 + $0x10] sm:$0xf]
      %v207 = vld [vmem:[%s193 + $0x14] sm:$0xf]
      %v208 = vld [vmem:[%s193 + $0x18] sm:$0xf]
      %v209 = vld [vmem:[%s193 + $0x1c] sm:$0xf]
      %v210 = vld [vmem:[%s193 + $0x20] sm:$0xf]
      %v211 = vld [vmem:[%s193 + $0x24] sm:$0xf]
      %v212 = vld [vmem:[%s193 + $0x28] sm:$0xf]
      %v213 = vld [vmem:[%s193 + $0x2c] sm:$0xf]
      %v214 = vld [vmem:[%s193 + $0x30] sm:$0xf]
      %v215 = vld [vmem:[%s193 + $0x34] sm:$0xf]
      %v216 = vld [vmem:[%s193 + $0x38] sm:$0xf]
      %v217 = vld [vmem:[%s193 + $0x3c] sm:$0xf]
      %v218 = vld [vmem:[%s193 + $0x40] sm:$0xf]
      %v219 = vld [vmem:[%s193 + $0x44] sm:$0xf]
      %v220 = vld [vmem:[%s193 + $0x48] sm:$0xf]
      %v221 = vld [vmem:[%s193 + $0x4c] sm:$0xf]
      %v222 = vld [vmem:[%s193 + $0x50] sm:$0xf]
      %v223 = vld [vmem:[%s193 + $0x54] sm:$0xf]
      %v224 = vld [vmem:[%s193 + $0x58] sm:$0xf]
      %v225 = vld [vmem:[%s193 + $0x5c] sm:$0xf]
      %v226 = vld [vmem:[%s193 + $0x60] sm:$0xf]
      %v227 = vld [vmem:[%s193 + $0x64] sm:$0xf]
      %v228 = vld [vmem:[%s193 + $0x68] sm:$0xf]
      %v229 = vld [vmem:[%s193 + $0x6c] sm:$0xf]
      %v230 = vld [vmem:[%s193 + $0x70] sm:$0xf]
      %v231 = vld [vmem:[%s193 + $0x74] sm:$0xf]
      %v232 = vld [vmem:[%s193 + $0x78] sm:$0xf]
      %v233 = vld [vmem:[%s193 + $0x7c] sm:$0xf]
      %v234 = vld [vmem:[%s1] sm:$0xf]
      %v235 = vld [vmem:[%s1 + $0x4] sm:$0xf]
      %v236 = vld [vmem:[%s1 + $0x8] sm:$0xf]
      %v237 = vld [vmem:[%s1 + $0xc] sm:$0x3]
      %v270 = vunpack.c.l.b16 %v202
      %v271 = vunpack.c.l.b16 %v203
      %v272 = vunpack.c.l.b16 %v204
      %v273 = vunpack.c.l.b16 %v205
      %v274 = vunpack.c.l.b16 %v206
      %v275 = vunpack.c.l.b16 %v207
      %v276 = vunpack.c.l.b16 %v208
      %v277 = vunpack.c.l.b16 %v209
      %v278 = vunpack.c.l.b16 %v210
      %v279 = vunpack.c.l.b16 %v211
      %v280 = vunpack.c.l.b16 %v212
      %v281 = vunpack.c.l.b16 %v213
      %v282 = vunpack.c.l.b16 %v214
      %v283 = vunpack.c.l.b16 %v215
      %v284 = vunpack.c.l.b16 %v216
      %v285 = vunpack.c.l.b16 %v217
      %v286 = vunpack.c.l.b16 %v218
      %v287 = vunpack.c.l.b16 %v219
      %v288 = vunpack.c.l.b16 %v220
      %v289 = vunpack.c.l.b16 %v221
      %v290 = vunpack.c.l.b16 %v222
      %v291 = vunpack.c.l.b16 %v223
      %v292 = vunpack.c.l.b16 %v224
      %v293 = vunpack.c.l.b16 %v225
      %v294 = vunpack.c.l.b16 %v226
      %v295 = vunpack.c.l.b16 %v227
      %v296 = vunpack.c.l.b16 %v228
      %v297 = vunpack.c.l.b16 %v229
      %v298 = vunpack.c.l.b16 %v230
      %v299 = vunpack.c.l.b16 %v231
      %v300 = vunpack.c.l.b16 %v232
      %v301 = vunpack.c.l.b16 %v233
      %v302 = vpack.c.b16 %v271, %v270
      %v303 = vpack.c.b16 %v273, %v272
      %v304 = vpack.c.b16 %v275, %v274
      %v305 = vpack.c.b16 %v277, %v276
      %v306 = vpack.c.b16 %v279, %v278
      %v307 = vpack.c.b16 %v281, %v280
      %v308 = vpack.c.b16 %v283, %v282
      %v309 = vpack.c.b16 %v285, %v284
      %v310 = vpack.c.b16 %v287, %v286
      %v311 = vpack.c.b16 %v289, %v288
      %v312 = vpack.c.b16 %v291, %v290
      %v313 = vpack.c.b16 %v293, %v292
      %v314 = vpack.c.b16 %v295, %v294
      %v315 = vpack.c.b16 %v297, %v296
      %v316 = vpack.c.b16 %v299, %v298
      %v317 = vpack.c.b16 %v301, %v300
      %v322 = vunpack.c.l.b16 %v234
      %v323 = vunpack.c.l.b16 %v235
      %v324 = vunpack.c.l.b16 %v236
      %v325 = vunpack.c.l.b16 %v237
      %v326 = vpack.c.b16 %v323, %v322
      %v327 = vpack.c.b16 %v325, %v324
      %vm329 = vcmask 220160
      %v331 = vsel %vm329, %v302, 0
      %v334 = vsel %vm329, %v303, 0
      %v337 = vsel %vm329, %v304, 0
      %v340 = vsel %vm329, %v305, 0
      %v343 = vsel %vm329, %v306, 0
      %v346 = vsel %vm329, %v307, 0
      %v349 = vsel %vm329, %v308, 0
      %v352 = vsel %vm329, %v309, 0
      %v355 = vsel %vm329, %v310, 0
      %v358 = vsel %vm329, %v311, 0
      %v361 = vsel %vm329, %v312, 0
      %v364 = vsel %vm329, %v313, 0
      %v367 = vsel %vm329, %v314, 0
      %v370 = vsel %vm329, %v315, 0
      %v373 = vsel %vm329, %v316, 0
      %v376 = vsel %vm329, %v317, 0
      %vm378 = vcmask 1044480
      %vm379 = vcmask 1045504
      %v380 = vsel %vm378, 4294967295, 65535
      %v381 = vsel %vm379, %v380, 0
      %v383 = vand.u32 %v327, %v381
      %385 = vmatprep.subr.bf16.mxu0 0
      %386 = vmatpush1.bf16.msra.mxu0 %v326
      %387 = vmatprep.subr.bf16.mxu0 0
      %388 = vmatpush1.bf16.msra.mxu0 %v383
      %389 = vmatprep.subr.bf16.mxu0 0
      %390 = vmatpush1.bf16.msra.mxu0 0
      %391 = vmatprep.subr.bf16.mxu0 0
      %392 = vmatpush1.bf16.msra.mxu0 0
      %393 = vmatprep.subr.bf16.mxu0 0
      %394 = vmatpush1.bf16.msra.mxu0 0
      %395 = vmatprep.subr.bf16.mxu0 0
      %396 = vmatpush1.bf16.msra.mxu0 0
      %397 = vmatprep.subr.bf16.mxu0 0
      %398 = vmatpush1.bf16.msra.mxu0 0
      %399 = vmatprep.subr.bf16.mxu0 0
      %400 = vmatpush1.bf16.msra.mxu0 0
      %401 = vmatprep.subr.bf16.mxu0 0
      %402 = vmatpush1.bf16.msra.mxu0 0
      %403 = vmatprep.subr.bf16.mxu0 0
      %404 = vmatpush1.bf16.msra.mxu0 0
      %405 = vmatprep.subr.bf16.mxu0 0
      %406 = vmatpush1.bf16.msra.mxu0 0
      %407 = vmatprep.subr.bf16.mxu0 0
      %408 = vmatpush1.bf16.msra.mxu0 0
      %409 = vmatprep.subr.bf16.mxu0 0
      %410 = vmatpush1.bf16.msra.mxu0 0
      %411 = vmatprep.subr.bf16.mxu0 0
      %412 = vmatpush1.bf16.msra.mxu0 0
      %413 = vmatprep.subr.bf16.mxu0 0
      %414 = vmatpush1.bf16.msra.mxu0 0
      %415 = vmatprep.subr.bf16.mxu0 0
      %416 = vmatpush1.bf16.msra.mxu0 0
      %417 = vmatprep.mubr.bf16.mxu0 0
      %418 = vmatmul.mubr.bf16.gmra.mrb[0].mxu0 %v331
      %v419 = vpop.f32.mrb[0].mxu0
      %v420 = vadd.f32 0.0, %v419
      %v421 = vpop.f32.mrb[0].mxu0
      %v422 = vpop.f32.mrb[0].mxu0
      %v423 = vadd.f32 0.0, %v422
      %v424 = vpop.f32.mrb[0].mxu0
      %425 = vmatprep.mubr.bf16.mxu0 0
      %426 = vmatmul.mubr.bf16.gmra.mrb[0].mxu0 %v334
      %v427 = vpop.f32.mrb[0].mxu0
      %v428 = vadd.f32 0.0, %v427
      %v429 = vpop.f32.mrb[0].mxu0
      %v430 = vpop.f32.mrb[0].mxu0
      %v431 = vadd.f32 0.0, %v430
      %v432 = vpop.f32.mrb[0].mxu0
      %433 = vmatprep.mubr.bf16.mxu0 0
      %434 = vmatmul.mubr.bf16.gmra.mrb[0].mxu0 %v337
      %v435 = vpop.f32.mrb[0].mxu0
      %v436 = vadd.f32 0.0, %v435
      %v437 = vpop.f32.mrb[0].mxu0
      %v438 = vpop.f32.mrb[0].mxu0
      %v439 = vadd.f32 0.0, %v438
      %v440 = vpop.f32.mrb[0].mxu0
      %441 = vmatprep.mubr.bf16.mxu0 0
      %442 = vmatmul.mubr.bf16.gmra.mrb[0].mxu0 %v340
      %v443 = vpop.f32.mrb[0].mxu0
      %v444 = vadd.f32 0.0, %v443
      %v445 = vpop.f32.mrb[0].mxu0
      %v446 = vpop.f32.mrb[0].mxu0
      %v447 = vadd.f32 0.0, %v446
      %v448 = vpop.f32.mrb[0].mxu0
      %449 = vmatprep.mubr.bf16.mxu0 0
      %450 = vmatmul.mubr.bf16.gmra.mrb[0].mxu0 %v343
      %v451 = vpop.f32.mrb[0].mxu0
      %v452 = vadd.f32 0.0, %v451
      %v453 = vpop.f32.mrb[0].mxu0
      %v454 = vpop.f32.mrb[0].mxu0
      %v455 = vadd.f32 0.0, %v454
      %v456 = vpop.f32.mrb[0].mxu0
      %457 = vmatprep.mubr.bf16.mxu0 0
      %458 = vmatmul.mubr.bf16.gmra.mrb[0].mxu0 %v346
      %v459 = vpop.f32.mrb[0].mxu0
      %v460 = vadd.f32 0.0, %v459
      %v461 = vpop.f32.mrb[0].mxu0
      %v462 = vpop.f32.mrb[0].mxu0
      %v463 = vadd.f32 0.0, %v462
      %v464 = vpop.f32.mrb[0].mxu0
      %465 = vmatprep.mubr.bf16.mxu0 0
      %466 = vmatmul.mubr.bf16.gmra.mrb[0].mxu0 %v349
      %v467 = vpop.f32.mrb[0].mxu0
      %v468 = vadd.f32 0.0, %v467
      %v469 = vpop.f32.mrb[0].mxu0
      %v470 = vpop.f32.mrb[0].mxu0
      %v471 = vadd.f32 0.0, %v470
      %v472 = vpop.f32.mrb[0].mxu0
      %473 = vmatprep.mubr.bf16.mxu0 0
      %474 = vmatmul.mubr.bf16.gmra.mrb[0].mxu0 %v352
      %v475 = vpop.f32.mrb[0].mxu0
      %v476 = vadd.f32 0.0, %v475
      %v477 = vpop.f32.mrb[0].mxu0
      %v478 = vpop.f32.mrb[0].mxu0
      %v479 = vadd.f32 0.0, %v478
      %v480 = vpop.f32.mrb[0].mxu0
      %481 = vmatprep.mubr.bf16.mxu0 0
      %482 = vmatmul.mubr.bf16.gmra.mrb[0].mxu0 %v355
      %v483 = vpop.f32.mrb[0].mxu0
      %v484 = vadd.f32 0.0, %v483
      %v485 = vpop.f32.mrb[0].mxu0
      %v486 = vpop.f32.mrb[0].mxu0
      %v487 = vadd.f32 0.0, %v486
      %v488 = vpop.f32.mrb[0].mxu0
      %489 = vmatprep.mubr.bf16.mxu0 0
      %490 = vmatmul.mubr.bf16.gmra.mrb[0].mxu0 %v358
      %v491 = vpop.f32.mrb[0].mxu0
      %v492 = vadd.f32 0.0, %v491
      %v493 = vpop.f32.mrb[0].mxu0
      %v494 = vpop.f32.mrb[0].mxu0
      %v495 = vadd.f32 0.0, %v494
      %v496 = vpop.f32.mrb[0].mxu0
      %497 = vmatprep.mubr.bf16.mxu0 0
      %498 = vmatmul.mubr.bf16.gmra.mrb[0].mxu0 %v361
      %v499 = vpop.f32.mrb[0].mxu0
      %v500 = vadd.f32 0.0, %v499
      %v501 = vpop.f32.mrb[0].mxu0
      %v502 = vpop.f32.mrb[0].mxu0
      %v503 = vadd.f32 0.0, %v502
      %v504 = vpop.f32.mrb[0].mxu0
      %505 = vmatprep.mubr.bf16.mxu0 0
      %506 = vmatmul.mubr.bf16.gmra.mrb[0].mxu0 %v364
      %v507 = vpop.f32.mrb[0].mxu0
      %v508 = vadd.f32 0.0, %v507
      %v509 = vpop.f32.mrb[0].mxu0
      %v510 = vpop.f32.mrb[0].mxu0
      %v511 = vadd.f32 0.0, %v510
      %v512 = vpop.f32.mrb[0].mxu0
      %513 = vmatprep.mubr.bf16.mxu0 0
      %514 = vmatmul.mubr.bf16.gmra.mrb[0].mxu0 %v367
      %v515 = vpop.f32.mrb[0].mxu0
      %v516 = vadd.f32 0.0, %v515
      %v517 = vpop.f32.mrb[0].mxu0
      %v518 = vpop.f32.mrb[0].mxu0
      %v519 = vadd.f32 0.0, %v518
      %v520 = vpop.f32.mrb[0].mxu0
      %521 = vmatprep.mubr.bf16.mxu0 0
      %522 = vmatmul.mubr.bf16.gmra.mrb[0].mxu0 %v370
      %v523 = vpop.f32.mrb[0].mxu0
      %v524 = vadd.f32 0.0, %v523
      %v525 = vpop.f32.mrb[0].mxu0
      %v526 = vpop.f32.mrb[0].mxu0
      %v527 = vadd.f32 0.0, %v526
      %v528 = vpop.f32.mrb[0].mxu0
      %529 = vmatprep.mubr.bf16.mxu0 0
      %530 = vmatmul.mubr.bf16.gmra.mrb[0].mxu0 %v373
      %v531 = vpop.f32.mrb[0].mxu0
      %v532 = vadd.f32 0.0, %v531
      %v533 = vpop.f32.mrb[0].mxu0
      %v534 = vpop.f32.mrb[0].mxu0
      %v535 = vadd.f32 0.0, %v534
      %v536 = vpop.f32.mrb[0].mxu0
      %537 = vmatprep.mubr.bf16.mxu0 0
      %538 = vmatmul.mubr.bf16.gmra.mrb[0].mxu0 %v376
      %v539 = vpop.f32.mrb[0].mxu0
      %v540 = vadd.f32 0.0, %v539
      %v541 = vpop.f32.mrb[0].mxu0
      %v542 = vpop.f32.mrb[0].mxu0
      %v543 = vadd.f32 0.0, %v542
      %v544 = vpop.f32.mrb[0].mxu0
      %545 = vdwg.mxu0
      %v546 = vld [vmem:[%s2] sm:$0x1]
      %v548 = vlaneseq
      %v549 = vshrl.u32 %v548, 7
      %v550 = vsub.s32 0, %v549
      %v551 = vrot.slane %v546, %v550
      %v553 = vmul.f32 %v420, %v551
      %v554 = vmul.f32 %v423, %v551
      %v555 = vmul.f32 %v428, %v551
      %v556 = vmul.f32 %v431, %v551
      %v557 = vmul.f32 %v436, %v551
      %v558 = vmul.f32 %v439, %v551
      %v559 = vmul.f32 %v444, %v551
      %v560 = vmul.f32 %v447, %v551
      %v561 = vmul.f32 %v452, %v551
      %v562 = vmul.f32 %v455, %v551
      %v563 = vmul.f32 %v460, %v551
      %v564 = vmul.f32 %v463, %v551
      %v565 = vmul.f32 %v468, %v551
      %v566 = vmul.f32 %v471, %v551
      %v567 = vmul.f32 %v476, %v551
      %v568 = vmul.f32 %v479, %v551
      %v569 = vmul.f32 %v484, %v551
      %v570 = vmul.f32 %v487, %v551
      %v571 = vmul.f32 %v492, %v551
      %v572 = vmul.f32 %v495, %v551
      %v573 = vmul.f32 %v500, %v551
      %v574 = vmul.f32 %v503, %v551
      %v575 = vmul.f32 %v508, %v551
      %v576 = vmul.f32 %v511, %v551
      %v577 = vmul.f32 %v516, %v551
      %v578 = vmul.f32 %v519, %v551
      %v579 = vmul.f32 %v524, %v551
      %v580 = vmul.f32 %v527, %v551
      %v581 = vmul.f32 %v532, %v551
      %v582 = vmul.f32 %v535, %v551
      %v583 = vmul.f32 %v540, %v551
      %v584 = vmul.f32 %v543, %v551
      %v585 = vld [vmem:[%s3] sm:$0x1]
      %v587 = vlaneseq
      %v588 = vshrl.u32 %v587, 7
      %v589 = vsub.s32 0, %v588
      %v590 = vrot.slane %v585, %v589
      %v592 = vadd.f32 %v553, %v590
      %v593 = vadd.f32 %v554, %v590
      %v594 = vadd.f32 %v555, %v590
      %v595 = vadd.f32 %v556, %v590
      %v596 = vadd.f32 %v557, %v590
      %v597 = vadd.f32 %v558, %v590
      %v598 = vadd.f32 %v559, %v590
      %v599 = vadd.f32 %v560, %v590
      %v600 = vadd.f32 %v561, %v590
      %v601 = vadd.f32 %v562, %v590
      %v602 = vadd.f32 %v563, %v590
      %v603 = vadd.f32 %v564, %v590
      %v604 = vadd.f32 %v565, %v590
      %v605 = vadd.f32 %v566, %v590
      %v606 = vadd.f32 %v567, %v590
      %v607 = vadd.f32 %v568, %v590
      %v608 = vadd.f32 %v569, %v590
      %v609 = vadd.f32 %v570, %v590
      %v610 = vadd.f32 %v571, %v590
      %v611 = vadd.f32 %v572, %v590
      %v612 = vadd.f32 %v573, %v590
      %v613 = vadd.f32 %v574, %v590
      %v614 = vadd.f32 %v575, %v590
      %v615 = vadd.f32 %v576, %v590
      %v616 = vadd.f32 %v577, %v590
      %v617 = vadd.f32 %v578, %v590
      %v618 = vadd.f32 %v579, %v590
      %v619 = vadd.f32 %v580, %v590
      %v620 = vadd.f32 %v581, %v590
      %v621 = vadd.f32 %v582, %v590
      %v622 = vadd.f32 %v583, %v590
      %v623 = vadd.f32 %v584, %v590
      %vm624 = vcmp.ge.f32.partialorder %v592, 0.0
      %vm625 = vcmp.ge.f32.partialorder %v593, 0.0
      %vm626 = vcmp.ge.f32.partialorder %v594, 0.0
      %vm627 = vcmp.ge.f32.partialorder %v595, 0.0
      %vm628 = vcmp.ge.f32.partialorder %v596, 0.0
      %vm629 = vcmp.ge.f32.partialorder %v597, 0.0
      %vm630 = vcmp.ge.f32.partialorder %v598, 0.0
      %vm631 = vcmp.ge.f32.partialorder %v599, 0.0
      %vm632 = vcmp.ge.f32.partialorder %v600, 0.0
      %vm633 = vcmp.ge.f32.partialorder %v601, 0.0
      %vm634 = vcmp.ge.f32.partialorder %v602, 0.0
      %vm635 = vcmp.ge.f32.partialorder %v603, 0.0
      %vm636 = vcmp.ge.f32.partialorder %v604, 0.0
      %vm637 = vcmp.ge.f32.partialorder %v605, 0.0
      %vm638 = vcmp.ge.f32.partialorder %v606, 0.0
      %vm639 = vcmp.ge.f32.partialorder %v607, 0.0
      %vm640 = vcmp.ge.f32.partialorder %v608, 0.0
      %vm641 = vcmp.ge.f32.partialorder %v609, 0.0
      %vm642 = vcmp.ge.f32.partialorder %v610, 0.0
      %vm643 = vcmp.ge.f32.partialorder %v611, 0.0
      %vm644 = vcmp.ge.f32.partialorder %v612, 0.0
      %vm645 = vcmp.ge.f32.partialorder %v613, 0.0
      %vm646 = vcmp.ge.f32.partialorder %v614, 0.0
      %vm647 = vcmp.ge.f32.partialorder %v615, 0.0
      %vm648 = vcmp.ge.f32.partialorder %v616, 0.0
      %vm649 = vcmp.ge.f32.partialorder %v617, 0.0
      %vm650 = vcmp.ge.f32.partialorder %v618, 0.0
      %vm651 = vcmp.ge.f32.partialorder %v619, 0.0
      %vm652 = vcmp.ge.f32.partialorder %v620, 0.0
      %vm653 = vcmp.ge.f32.partialorder %v621, 0.0
      %vm654 = vcmp.ge.f32.partialorder %v622, 0.0
      %vm655 = vcmp.ge.f32.partialorder %v623, 0.0
      %v656 = vmul.f32 %v592, 0.1
      %v657 = vmul.f32 %v593, 0.1
      %v658 = vmul.f32 %v594, 0.1
      %v659 = vmul.f32 %v595, 0.1
      %v660 = vmul.f32 %v596, 0.1
      %v661 = vmul.f32 %v597, 0.1
      %v662 = vmul.f32 %v598, 0.1
      %v663 = vmul.f32 %v599, 0.1
      %v664 = vmul.f32 %v600, 0.1
      %v665 = vmul.f32 %v601, 0.1
      %v666 = vmul.f32 %v602, 0.1
      %v667 = vmul.f32 %v603, 0.1
      %v668 = vmul.f32 %v604, 0.1
      %v669 = vmul.f32 %v605, 0.1
      %v670 = vmul.f32 %v606, 0.1
      %v671 = vmul.f32 %v607, 0.1
      %v672 = vmul.f32 %v608, 0.1
      %v673 = vmul.f32 %v609, 0.1
      %v674 = vmul.f32 %v610, 0.1
      %v675 = vmul.f32 %v611, 0.1
      %v676 = vmul.f32 %v612, 0.1
      %v677 = vmul.f32 %v613, 0.1
      %v678 = vmul.f32 %v614, 0.1
      %v679 = vmul.f32 %v615, 0.1
      %v680 = vmul.f32 %v616, 0.1
      %v681 = vmul.f32 %v617, 0.1
      %v682 = vmul.f32 %v618, 0.1
      %v683 = vmul.f32 %v619, 0.1
      %v684 = vmul.f32 %v620, 0.1
      %v685 = vmul.f32 %v621, 0.1
      %v686 = vmul.f32 %v622, 0.1
      %v687 = vmul.f32 %v623, 0.1
      %v688 = vsel %vm624, %v592, %v656
      %v689 = vsel %vm625, %v593, %v657
      %v690 = vsel %vm626, %v594, %v658
      %v691 = vsel %vm627, %v595, %v659
      %v692 = vsel %vm628, %v596, %v660
      %v693 = vsel %vm629, %v597, %v661
      %v694 = vsel %vm630, %v598, %v662
      %v695 = vsel %vm631, %v599, %v663
      %v696 = vsel %vm632, %v600, %v664
      %v697 = vsel %vm633, %v601, %v665
      %v698 = vsel %vm634, %v602, %v666
      %v699 = vsel %vm635, %v603, %v667
      %v700 = vsel %vm636, %v604, %v668
      %v701 = vsel %vm637, %v605, %v669
      %v702 = vsel %vm638, %v606, %v670
      %v703 = vsel %vm639, %v607, %v671
      %v704 = vsel %vm640, %v608, %v672
      %v705 = vsel %vm641, %v609, %v673
      %v706 = vsel %vm642, %v610, %v674
      %v707 = vsel %vm643, %v611, %v675
      %v708 = vsel %vm644, %v612, %v676
      %v709 = vsel %vm645, %v613, %v677
      %v710 = vsel %vm646, %v614, %v678
      %v711 = vsel %vm647, %v615, %v679
      %v712 = vsel %vm648, %v616, %v680
      %v713 = vsel %vm649, %v617, %v681
      %v714 = vsel %vm650, %v618, %v682
      %v715 = vsel %vm651, %v619, %v683
      %v716 = vsel %vm652, %v620, %v684
      %v717 = vsel %vm653, %v621, %v685
      %v718 = vsel %vm654, %v622, %v686
      %v719 = vsel %vm655, %v623, %v687
      %v720 = vpack.c.bf16 %v689, %v688
      %v721 = vpack.c.bf16 %v691, %v690
      %v722 = vpack.c.bf16 %v693, %v692
      %v723 = vpack.c.bf16 %v695, %v694
      %v724 = vpack.c.bf16 %v697, %v696
      %v725 = vpack.c.bf16 %v699, %v698
      %v726 = vpack.c.bf16 %v701, %v700
      %v727 = vpack.c.bf16 %v703, %v702
      %v728 = vpack.c.bf16 %v705, %v704
      %v729 = vpack.c.bf16 %v707, %v706
      %v730 = vpack.c.bf16 %v709, %v708
      %v731 = vpack.c.bf16 %v711, %v710
      %v732 = vpack.c.bf16 %v713, %v712
      %v733 = vpack.c.bf16 %v715, %v714
      %v734 = vpack.c.bf16 %v717, %v716
      %v735 = vpack.c.bf16 %v719, %v718
      %v752 = vunpack.c.l.b16 %v720
      %v753 = vunpack.c.h.b16 %v720
      %v754 = vunpack.c.l.b16 %v721
      %v755 = vunpack.c.h.b16 %v721
      %v756 = vunpack.c.l.b16 %v722
      %v757 = vunpack.c.h.b16 %v722
      %v758 = vunpack.c.l.b16 %v723
      %v759 = vunpack.c.h.b16 %v723
      %v760 = vunpack.c.l.b16 %v724
      %v761 = vunpack.c.h.b16 %v724
      %v762 = vunpack.c.l.b16 %v725
      %v763 = vunpack.c.h.b16 %v725
      %v764 = vunpack.c.l.b16 %v726
      %v765 = vunpack.c.h.b16 %v726
      %v766 = vunpack.c.l.b16 %v727
      %v767 = vunpack.c.h.b16 %v727
      %v768 = vunpack.c.l.b16 %v728
      %v769 = vunpack.c.h.b16 %v728
      %v770 = vunpack.c.l.b16 %v729
      %v771 = vunpack.c.h.b16 %v729
      %v772 = vunpack.c.l.b16 %v730
      %v773 = vunpack.c.h.b16 %v730
      %v774 = vunpack.c.l.b16 %v731
      %v775 = vunpack.c.h.b16 %v731
      %v776 = vunpack.c.l.b16 %v732
      %v777 = vunpack.c.h.b16 %v732
      %v778 = vunpack.c.l.b16 %v733
      %v779 = vunpack.c.h.b16 %v733
      %v780 = vunpack.c.l.b16 %v734
      %v781 = vunpack.c.h.b16 %v734
      %v782 = vunpack.c.l.b16 %v735
      %v783 = vunpack.c.h.b16 %v735
      %v784 = vpack.c.b16 %v752, %v752
      %v785 = vpack.c.b16 %v753, %v753
      %v786 = vpack.c.b16 %v754, %v754
      %v787 = vpack.c.b16 %v755, %v755
      %v788 = vpack.c.b16 %v756, %v756
      %v789 = vpack.c.b16 %v757, %v757
      %v790 = vpack.c.b16 %v758, %v758
      %v791 = vpack.c.b16 %v759, %v759
      %v792 = vpack.c.b16 %v760, %v760
      %v793 = vpack.c.b16 %v761, %v761
      %v794 = vpack.c.b16 %v762, %v762
      %v795 = vpack.c.b16 %v763, %v763
      %v796 = vpack.c.b16 %v764, %v764
      %v797 = vpack.c.b16 %v765, %v765
      %v798 = vpack.c.b16 %v766, %v766
      %v799 = vpack.c.b16 %v767, %v767
      %v800 = vpack.c.b16 %v768, %v768
      %v801 = vpack.c.b16 %v769, %v769
      %v802 = vpack.c.b16 %v770, %v770
      %v803 = vpack.c.b16 %v771, %v771
      %v804 = vpack.c.b16 %v772, %v772
      %v805 = vpack.c.b16 %v773, %v773
      %v806 = vpack.c.b16 %v774, %v774
      %v807 = vpack.c.b16 %v775, %v775
      %v808 = vpack.c.b16 %v776, %v776
      %v809 = vpack.c.b16 %v777, %v777
      %v810 = vpack.c.b16 %v778, %v778
      %v811 = vpack.c.b16 %v779, %v779
      %v812 = vpack.c.b16 %v780, %v780
      %v813 = vpack.c.b16 %v781, %v781
      %v814 = vpack.c.b16 %v782, %v782
      %v815 = vpack.c.b16 %v783, %v783
      %vm848 = vcmask 257024
      %849 = vst.msk [vmem:[%s199] sm:$0xf] %vm848, %v784
      %850 = vst.msk [vmem:[%s199 + $0x4] sm:$0xf] %vm848, %v785
      %851 = vst.msk [vmem:[%s199 + $0x8] sm:$0xf] %vm848, %v786
      %852 = vst.msk [vmem:[%s199 + $0xc] sm:$0xf] %vm848, %v787
      %853 = vst.msk [vmem:[%s199 + $0x10] sm:$0xf] %vm848, %v788
      %854 = vst.msk [vmem:[%s199 + $0x14] sm:$0xf] %vm848, %v789
      %855 = vst.msk [vmem:[%s199 + $0x18] sm:$0xf] %vm848, %v790
      %856 = vst.msk [vmem:[%s199 + $0x1c] sm:$0xf] %vm848, %v791
      %857 = vst.msk [vmem:[%s199 + $0x20] sm:$0xf] %vm848, %v792
      %858 = vst.msk [vmem:[%s199 + $0x24] sm:$0xf] %vm848, %v793
      %859 = vst.msk [vmem:[%s199 + $0x28] sm:$0xf] %vm848, %v794
      %860 = vst.msk [vmem:[%s199 + $0x2c] sm:$0xf] %vm848, %v795
      %861 = vst.msk [vmem:[%s199 + $0x30] sm:$0xf] %vm848, %v796
      %862 = vst.msk [vmem:[%s199 + $0x34] sm:$0xf] %vm848, %v797
      %863 = vst.msk [vmem:[%s199 + $0x38] sm:$0xf] %vm848, %v798
      %864 = vst.msk [vmem:[%s199 + $0x3c] sm:$0xf] %vm848, %v799
      %865 = vst.msk [vmem:[%s199 + $0x40] sm:$0xf] %vm848, %v800
      %866 = vst.msk [vmem:[%s199 + $0x44] sm:$0xf] %vm848, %v801
      %867 = vst.msk [vmem:[%s199 + $0x48] sm:$0xf] %vm848, %v802
      %868 = vst.msk [vmem:[%s199 + $0x4c] sm:$0xf] %vm848, %v803
      %869 = vst.msk [vmem:[%s199 + $0x50] sm:$0xf] %vm848, %v804
      %870 = vst.msk [vmem:[%s199 + $0x54] sm:$0xf] %vm848, %v805
      %871 = vst.msk [vmem:[%s199 + $0x58] sm:$0xf] %vm848, %v806
      %872 = vst.msk [vmem:[%s199 + $0x5c] sm:$0xf] %vm848, %v807
      %873 = vst.msk [vmem:[%s199 + $0x60] sm:$0xf] %vm848, %v808
      %874 = vst.msk [vmem:[%s199 + $0x64] sm:$0xf] %vm848, %v809
      %875 = vst.msk [vmem:[%s199 + $0x68] sm:$0xf] %vm848, %v810
      %876 = vst.msk [vmem:[%s199 + $0x6c] sm:$0xf] %vm848, %v811
      %877 = vst.msk [vmem:[%s199 + $0x70] sm:$0xf] %vm848, %v812
      %878 = vst.msk [vmem:[%s199 + $0x74] sm:$0xf] %vm848, %v813
      %879 = vst.msk [vmem:[%s199 + $0x78] sm:$0xf] %vm848, %v814
      %880 = vst.msk [vmem:[%s199 + $0x7c] sm:$0xf] %vm848, %v815
      %s881 = smul.u32 32, %s15
      %p882 = scmp.lt.s32.totalorder %s881, 63
      %s883 = scalar_select %p882, %s881, 63
      %s884 = smul.addr %s883, 4
      %s885 = scalar_lea.vmem %s4, %s884
      // Predicated region
      $region37: #{elannet_tiny_forward.21} parent=35 // pred_check
        %p886 = pneg %p122
      $region38: #{elannet_tiny_forward.21} parent=35 // pred_check_branch
        %888 = sbr.rel (%p886) target = $region40
      $region39: #{elannet_tiny_forward.21} parent=35 // pred_region
        %s889 = smul.u32 32, %s15
      $region40: #{elannet_tiny_forward.21} parent=35 // pred_fallthru
        _
    $region36: #{elannet_tiny_forward.21} parent=5 // pred_fallthru
      _
    %p890 = scmp.le.s32.totalorder 2, %s10
    // Predicated region
    $region41: #{elannet_tiny_forward.21} parent=5 // pred_check
      %p891 = pneg %p890
    $region42: #{elannet_tiny_forward.21} parent=5 // pred_check_branch
      %893 = sbr.rel (%p891) target = $region44
    $region43: #{elannet_tiny_forward.21} parent=5 // pred_region
      %s894 = ssub.s32 %s10, 2
      // Predicated region
      $region45: #{elannet_tiny_forward.21} parent=43 // pred_check
        %p895 = pneg %p128
      $region46: #{elannet_tiny_forward.21} parent=43 // pred_check_branch
        %897 = sbr.rel (%p895) target = $region48
      $region47: #{elannet_tiny_forward.21} parent=43 // pred_region
        %s898 = smul.u32 32, %s16
        %p899 = scmp.lt.s32.totalorder %s898, 63
        %s900 = scalar_select %p899, %s898, 63
        %s901 = smul.addr %s900, 4
        %s902 = scalar_lea.vmem %s4, %s901
      $region48: #{elannet_tiny_forward.21} parent=43 // pred_fallthru
        _
    $region44: #{elannet_tiny_forward.21} parent=5 // pred_fallthru
      _
  $region6: #{elannet_tiny_forward.21} parent=0 // loop_footer
    %s14 = sadd.s32 1, %s10
  $region7: #{elannet_tiny_forward.21} parent=0 // loop_footer_branch
    %9 = sbr.rel target = $region3
  $region8: #{elannet_tiny_forward.21} parent=0 // loop_exit
    _

// kernel: elannet_tiny_forward.22
$region0: #{elannet_tiny_forward.22}
  #allocation0 [shape = 'u32[]', space=smem, size = 0x4, offset = 0x4, fixed_abs, tag = 'smem constant byte address 0x4 - core index']
  #allocation1 [shape = 'u32[144,128]{1,0:T(1,128)}', space=vmem, size = 0x12000, scoped, tag = 'internal scratch']
  %s0 = inlined_call_operand.vmem [shape: bf16[128,288], index: 0, kind: input, shape index: {}]
  %s1 = inlined_call_operand.vmem [shape: bf16[288,64], index: 1, kind: input, shape index: {}]
  %s2 = inlined_call_operand.vmem [shape: f32[1,64], index: 2, kind: input, shape index: {}]
  %s3 = inlined_call_operand.vmem [shape: f32[1,64], index: 3, kind: input, shape index: {}]
  %s4 = inlined_call_operand.vmem [shape: bf16[128,64], index: 4, kind: output, shape index: {}]
  %s5 = sld [smem:[#allocation0]]
  $region49: #{elannet_tiny_forward.22} parent=0
    _
  %s7 = ssub.s32 1, %s5
  %s8 = scalar_select 0, %s7, %s5
  loop: start=0, step=1, limit=4
  $region2: #{elannet_tiny_forward.22} parent=0 // loop_pre_header
    _
  $region3: #{elannet_tiny_forward.22} parent=0 // loop_header
    %s10 = sphi 0, %s14
    %p11 = scmp.ge.s32.totalorder %s10, 4
    %s20 = sphi 0, %s22
    %s23 = sphi 0, %s20
    %s24 = sphi 0, %s23
    %s40 = sphi 0, %s24
    %s44 = sphi 0, %s44
    %s46 = sphi 0, %s44
    %s47 = sphi 0, %s46
    %s61 = sphi 0, %s47
    %s65 = sphi 0, %s65
    %s67 = sphi 0, %s65
    %s68 = sphi 0, %s67
    %s82 = sphi 0, %s68
    %s86 = sphi 0, %s86
    %s88 = sphi 0, %s86
    %s89 = sphi 0, %s88
    %s103 = sphi 0, %s89
    %s109 = sphi 0, %s111
    %s112 = sphi 0, %s109
    %s113 = sphi 0, %s112
    %s129 = sphi 0, %s113
  $region4: #{elannet_tiny_forward.22} parent=0 // loop_header_branch
    %13 = sbr.rel (%p11) target = $region8
  $region5: #{elannet_tiny_forward.22} parent=0 // loop_body
    %s15 = ssub.s32 %s10, 1
    %s16 = ssub.s32 %s10, 2
    %s17 = sadd.s32 %s10, 1
    %s18 = ssub.s32 %s10, %s17
    %p19 = scmp.eq.s32.totalorder %s18, 0
    %s21 = sadd.s32 %s20, 1
    %s22 = scalar_select %p19, %s20, %s21
    %p25 = pneg %p19
    %p26 = scmp.eq.s32.totalorder %s10, 1
    %p27 = por %p25, %p26
    %p28 = scmp.ne.s32.totalorder %s20, %s23
    %p29 = scmp.eq.s32.totalorder %s10, 0
    %p30 = por %p28, %p29
    %p31 = scmp.ne.s32.totalorder %s20, %s23
    %p32 = scmp.eq.s32.totalorder %s15, 1
    %p33 = por %p31, %p32
    %p34 = scmp.ne.s32.totalorder %s23, %s24
    %p35 = scmp.eq.s32.totalorder %s15, 0
    %p36 = por %p34, %p35
    %p37 = scmp.ne.s32.totalorder %s23, %s24
    %p38 = scmp.eq.s32.totalorder %s16, 1
    %p39 = por %p37, %p38
    %p41 = scmp.ne.s32.totalorder %s24, %s40
    %p42 = scmp.eq.s32.totalorder %s16, 0
    %p43 = por %p41, %p42
    %s45 = sadd.s32 %s44, 1
    %p48 = scmp.eq.s32.totalorder %s10, 1
    %p49 = scmp.ne.s32.totalorder %s44, %s46
    %p50 = scmp.eq.s32.totalorder %s10, 0
    %p51 = por %p49, %p50
    %p52 = scmp.ne.s32.totalorder %s44, %s46
    %p53 = scmp.eq.s32.totalorder %s15, 1
    %p54 = por %p52, %p53
    %p55 = scmp.ne.s32.totalorder %s46, %s47
    %p56 = scmp.eq.s32.totalorder %s15, 0
    %p57 = por %p55, %p56
    %p58 = scmp.ne.s32.totalorder %s46, %s47
    %p59 = scmp.eq.s32.totalorder %s16, 1
    %p60 = por %p58, %p59
    %p62 = scmp.ne.s32.totalorder %s47, %s61
    %p63 = scmp.eq.s32.totalorder %s16, 0
    %p64 = por %p62, %p63
    %s66 = sadd.s32 %s65, 1
    %p69 = scmp.eq.s32.totalorder %s10, 1
    %p70 = scmp.ne.s32.totalorder %s65, %s67
    %p71 = scmp.eq.s32.totalorder %s10, 0
    %p72 = por %p70, %p71
    %p73 = scmp.ne.s32.totalorder %s65, %s67
    %p74 = scmp.eq.s32.totalorder %s15, 1
    %p75 = por %p73, %p74
    %p76 = scmp.ne.s32.totalorder %s67, %s68
    %p77 = scmp.eq.s32.totalorder %s15, 0
    %p78 = por %p76, %p77
    %p79 = scmp.ne.s32.totalorder %s67, %s68
    %p80 = scmp.eq.s32.totalorder %s16, 1
    %p81 = por %p79, %p80
    %p83 = scmp.ne.s32.totalorder %s68, %s82
    %p84 = scmp.eq.s32.totalorder %s16, 0
    %p85 = por %p83, %p84
    %s87 = sadd.s32 %s86, 1
    %p90 = scmp.eq.s32.totalorder %s10, 1
    %p91 = scmp.ne.s32.totalorder %s86, %s88
    %p92 = scmp.eq.s32.totalorder %s10, 0
    %p93 = por %p91, %p92
    %p94 = scmp.ne.s32.totalorder %s86, %s88
    %p95 = scmp.eq.s32.totalorder %s15, 1
    %p96 = por %p94, %p95
    %p97 = scmp.ne.s32.totalorder %s88, %s89
    %p98 = scmp.eq.s32.totalorder %s15, 0
    %p99 = por %p97, %p98
    %p100 = scmp.ne.s32.totalorder %s88, %s89
    %p101 = scmp.eq.s32.totalorder %s16, 1
    %p102 = por %p100, %p101
    %p104 = scmp.ne.s32.totalorder %s89, %s103
    %p105 = scmp.eq.s32.totalorder %s16, 0
    %p106 = por %p104, %p105
    %s107 = ssub.s32 %s10, %s17
    %p108 = scmp.eq.s32.totalorder %s107, 0
    %s110 = sadd.s32 %s109, 1
    %s111 = scalar_select %p108, %s109, %s110
    %p114 = pneg %p108
    %p115 = scmp.eq.s32.totalorder %s10, 1
    %p116 = por %p114, %p115
    %p117 = scmp.ne.s32.totalorder %s109, %s112
    %p118 = scmp.eq.s32.totalorder %s10, 0
    %p119 = por %p117, %p118
    %p120 = scmp.ne.s32.totalorder %s109, %s112
    %p121 = scmp.eq.s32.totalorder %s15, 1
    %p122 = por %p120, %p121
    %p123 = scmp.ne.s32.totalorder %s112, %s113
    %p124 = scmp.eq.s32.totalorder %s15, 0
    %p125 = por %p123, %p124
    %p126 = scmp.ne.s32.totalorder %s112, %s113
    %p127 = scmp.eq.s32.totalorder %s16, 1
    %p128 = por %p126, %p127
    %p130 = scmp.ne.s32.totalorder %s113, %s129
    %p131 = scmp.eq.s32.totalorder %s16, 0
    %p132 = por %p130, %p131
    %p133 = scmp.le.s32.totalorder 1, %s10
    %p134 = scmp.lt.s32.totalorder %s10, 3
    %p135 = pnand %p133, %p134
    %p136 = pneg %p135
    // Predicated region
    $region9: #{elannet_tiny_forward.22} parent=5 // pred_check
      _
    $region10: #{elannet_tiny_forward.22} parent=5 // pred_check_branch
      %138 = sbr.rel (%p135) target = $region12
    $region11: #{elannet_tiny_forward.22} parent=5 // pred_region
      %s139 = ssub.s32 %s10, 1
      // Predicated region
      $region13: #{elannet_tiny_forward.22} parent=11 // pred_check
        %p140 = pneg %p57
      $region14: #{elannet_tiny_forward.22} parent=11 // pred_check_branch
        %142 = sbr.rel (%p140) target = $region16
      $region15: #{elannet_tiny_forward.22} parent=11 // pred_region
        _
      $region16: #{elannet_tiny_forward.22} parent=11 // pred_fallthru
        _
      // Predicated region
      $region17: #{elannet_tiny_forward.22} parent=11 // pred_check
        %p143 = pneg %p78
      $region18: #{elannet_tiny_forward.22} parent=11 // pred_check_branch
        %145 = sbr.rel (%p143) target = $region20
      $region19: #{elannet_tiny_forward.22} parent=11 // pred_region
        _
      $region20: #{elannet_tiny_forward.22} parent=11 // pred_fallthru
        _
      // Predicated region
      $region21: #{elannet_tiny_forward.22} parent=11 // pred_check
        %p146 = pneg %p99
      $region22: #{elannet_tiny_forward.22} parent=11 // pred_check_branch
        %148 = sbr.rel (%p146) target = $region24
      $region23: #{elannet_tiny_forward.22} parent=11 // pred_region
        _
      $region24: #{elannet_tiny_forward.22} parent=11 // pred_fallthru
        _
    $region12: #{elannet_tiny_forward.22} parent=5 // pred_fallthru
      _
    %p149 = scmp.lt.s32.totalorder %s10, 2
    // Predicated region
    $region25: #{elannet_tiny_forward.22} parent=5 // pred_check
      %p150 = pneg %p149
    $region26: #{elannet_tiny_forward.22} parent=5 // pred_check_branch
      %152 = sbr.rel (%p150) target = $region28
    $region27: #{elannet_tiny_forward.22} parent=5 // pred_region
      // Predicated region
      $region29: #{elannet_tiny_forward.22} parent=27 // pred_check
        %p153 = pneg %p30
      $region30: #{elannet_tiny_forward.22} parent=27 // pred_check_branch
        %155 = sbr.rel (%p153) target = $region32
      $region31: #{elannet_tiny_forward.22} parent=27 // pred_region
        %s156 = smul.u32 8, %s10
        %p157 = scmp.lt.s32.totalorder %s156, 15
        %s158 = scalar_select %p157, %s156, 15
        %s159 = smul.addr %s158, 3
        %s160 = smul.addr %s159, 4
        %s161 = scalar_lea.vmem %s0, %s160
        %s162 = smul.u32 8, %s10
      $region32: #{elannet_tiny_forward.22} parent=27 // pred_fallthru
        _
    $region28: #{elannet_tiny_forward.22} parent=5 // pred_fallthru
      _
    %p163 = scmp.le.s32.totalorder 1, %s10
    %p164 = scmp.lt.s32.totalorder %s10, 3
    %p165 = pnand %p163, %p164
    %p166 = pneg %p165
    // Predicated region
    $region33: #{elannet_tiny_forward.22} parent=5 // pred_check
      _
    $region34: #{elannet_tiny_forward.22} parent=5 // pred_check_branch
      %168 = sbr.rel (%p165) target = $region36
    $region35: #{elannet_tiny_forward.22} parent=5 // pred_region
      %s169 = ssub.s32 %s10, 1
      %s170 = smul.u32 8, %s15
      %p171 = scmp.lt.s32.totalorder %s170, 15
      %s172 = scalar_select %p171, %s170, 15
      %s173 = smul.addr %s172, 3
      %s174 = smul.addr %s173, 4
      %s175 = scalar_lea.vmem %s0, %s174
      %p176 = pneg %p36
      %p177 = pneg %p33
      %p178 = pneg %p57
      %p179 = pneg %p54
      %p180 = pneg %p78
      %p181 = pneg %p75
      %p182 = pneg %p99
      %p183 = pneg %p96
      %p184 = pneg %p125
      %p185 = pneg %p122
      %s186 = smul.u32 8, %s15
      %p187 = scmp.lt.s32.totalorder %s186, 15
      %s188 = scalar_select %p187, %s186, 15
      %s189 = smul.addr %s188, 4
      %s190 = scalar_lea.vmem %s4, %s189
      %s191 = smul.u32 8, %s15
      %p192 = scmp.lt.s32.totalorder %s191, 15
      %s193 = scalar_select %p192, %s191, 15
      %s194 = smul.addr %s193, 3
      %s195 = smul.addr %s194, 4
      %s196 = scalar_lea.vmem %s0, %s195
      %s197 = smul.u32 8, %s15
      %s198 = smul.u32 8, %s15
      %p199 = scmp.lt.s32.totalorder %s198, 15
      %s200 = scalar_select %p199, %s198, 15
      %s201 = smul.addr %s200, 4
      %s202 = scalar_lea.vmem %s4, %s201
      %s203 = smul.u32 8, %s15
      %v205 = vld [vmem:[%s196] sm:$0xff]
      %v206 = vld [vmem:[%s196 + $0x8] sm:$0xf]
      %v207 = vld [vmem:[%s196 + $0xc] sm:$0xff]
      %v208 = vld [vmem:[%s196 + $0x14] sm:$0xf]
      %v209 = vld [vmem:[%s196 + $0x18] sm:$0xff]
      %v210 = vld [vmem:[%s196 + $0x20] sm:$0xf]
      %v211 = vld [vmem:[%s196 + $0x24] sm:$0xff]
      %v212 = vld [vmem:[%s196 + $0x2c] sm:$0xf]
      %v213 = vld [vmem:[%s196 + $0x30] sm:$0xff]
      %v214 = vld [vmem:[%s196 + $0x38] sm:$0xf]
      %v215 = vld [vmem:[%s196 + $0x3c] sm:$0xff]
      %v216 = vld [vmem:[%s196 + $0x44] sm:$0xf]
      %v217 = vld [vmem:[%s196 + $0x48] sm:$0xff]
      %v218 = vld [vmem:[%s196 + $0x50] sm:$0xf]
      %v219 = vld [vmem:[%s196 + $0x54] sm:$0xff]
      %v220 = vld [vmem:[%s196 + $0x5c] sm:$0xf]
      %v221 = vld [vmem:[%s1] sm:$0xf]
      %v222 = vld [vmem:[%s1 + $0x4] sm:$0xf]
      %v223 = vld [vmem:[%s1 + $0x8] sm:$0xf]
      %v224 = vld [vmem:[%s1 + $0xc] sm:$0xf]
      %v225 = vld [vmem:[%s1 + $0x10] sm:$0xf]
      %v226 = vld [vmem:[%s1 + $0x14] sm:$0xf]
      %v227 = vld [vmem:[%s1 + $0x18] sm:$0xf]
      %v228 = vld [vmem:[%s1 + $0x1c] sm:$0xf]
      %v229 = vld [vmem:[%s1 + $0x20] sm:$0xf]
      %v230 = vld [vmem:[%s1 + $0x24] sm:$0xf]
      %v231 = vld [vmem:[%s1 + $0x28] sm:$0xf]
      %v232 = vld [vmem:[%s1 + $0x2c] sm:$0xf]
      %v233 = vld [vmem:[%s1 + $0x30] sm:$0xf]
      %v234 = vld [vmem:[%s1 + $0x34] sm:$0xf]
      %v235 = vld [vmem:[%s1 + $0x38] sm:$0xf]
      %v236 = vld [vmem:[%s1 + $0x3c] sm:$0xf]
      %v237 = vld [vmem:[%s1 + $0x40] sm:$0xf]
      %v238 = vld [vmem:[%s1 + $0x44] sm:$0xf]
      %v239 = vld [vmem:[%s1 + $0x48] sm:$0xf]
      %v240 = vld [vmem:[%s1 + $0x4c] sm:$0xf]
      %v241 = vld [vmem:[%s1 + $0x50] sm:$0xf]
      %v242 = vld [vmem:[%s1 + $0x54] sm:$0xf]
      %v243 = vld [vmem:[%s1 + $0x58] sm:$0xf]
      %v244 = vld [vmem:[%s1 + $0x5c] sm:$0xf]
      %v245 = vld [vmem:[%s1 + $0x60] sm:$0xf]
      %v246 = vld [vmem:[%s1 + $0x64] sm:$0xf]
      %v247 = vld [vmem:[%s1 + $0x68] sm:$0xf]
      %v248 = vld [vmem:[%s1 + $0x6c] sm:$0xf]
      %v249 = vld [vmem:[%s1 + $0x70] sm:$0xf]
      %v250 = vld [vmem:[%s1 + $0x74] sm:$0xf]
      %v251 = vld [vmem:[%s1 + $0x78] sm:$0xf]
      %v252 = vld [vmem:[%s1 + $0x7c] sm:$0xf]
      %v253 = vld [vmem:[%s1 + $0x80] sm:$0xf]
      %v254 = vld [vmem:[%s1 + $0x84] sm:$0xf]
      %v255 = vld [vmem:[%s1 + $0x88] sm:$0xf]
      %v256 = vld [vmem:[%s1 + $0x8c] sm:$0xf]
      %v273 = vunpack.c.l.b16 %v205
      %v274 = vunpack.c.h.b16 %v205
      %v275 = vunpack.c.l.b16 %v206
      %v276 = vunpack.c.l.b16 %v207
      %v277 = vunpack.c.h.b16 %v207
      %v278 = vunpack.c.l.b16 %v208
      %v279 = vunpack.c.l.b16 %v209
      %v280 = vunpack.c.h.b16 %v209
      %v281 = vunpack.c.l.b16 %v210
      %v282 = vunpack.c.l.b16 %v211
      %v283 = vunpack.c.h.b16 %v211
      %v284 = vunpack.c.l.b16 %v212
      %v285 = vunpack.c.l.b16 %v213
      %v286 = vunpack.c.h.b16 %v213
      %v287 = vunpack.c.l.b16 %v214
      %v288 = vunpack.c.l.b16 %v215
      %v289 = vunpack.c.h.b16 %v215
      %v290 = vunpack.c.l.b16 %v216
      %v291 = vunpack.c.l.b16 %v217
      %v292 = vunpack.c.h.b16 %v217
      %v293 = vunpack.c.l.b16 %v218
      %v294 = vunpack.c.l.b16 %v219
      %v295 = vunpack.c.h.b16 %v219
      %v296 = vunpack.c.l.b16 %v220
      %v297 = vpack.c.b16 %v276, %v273
      %v298 = vpack.c.b16 %v277, %v274
      %v299 = vpack.c.b16 %v278, %v275
      %v300 = vpack.c.b16 %v282, %v279
      %v301 = vpack.c.b16 %v283, %v280
      %v302 = vpack.c.b16 %v284, %v281
      %v303 = vpack.c.b16 %v288, %v285
      %v304 = vpack.c.b16 %v289, %v286
      %v305 = vpack.c.b16 %v290, %v287
      %v306 = vpack.c.b16 %v294, %v291
      %v307 = vpack.c.b16 %v295, %v292
      %v308 = vpack.c.b16 %v296, %v293
      %v353 = vunpack.c.l.b16 %v221
      %v354 = vunpack.c.l.b16 %v222
      %v355 = vunpack.c.l.b16 %v223
      %v356 = vunpack.c.l.b16 %v224
      %v357 = vunpack.c.l.b16 %v225
      %v358 = vunpack.c.l.b16 %v226
      %v359 = vunpack.c.l.b16 %v227
      %v360 = vunpack.c.l.b16 %v228
      %v361 = vunpack.c.l.b16 %v229
      %v362 = vunpack.c.l.b16 %v230
      %v363 = vunpack.c.l.b16 %v231
      %v364 = vunpack.c.l.b16 %v232
      %v365 = vunpack.c.l.b16 %v233
      %v366 = vunpack.c.l.b16 %v234
      %v367 = vunpack.c.l.b16 %v235
      %v368 = vunpack.c.l.b16 %v236
      %v369 = vunpack.c.l.b16 %v237
      %v370 = vunpack.c.l.b16 %v238
      %v371 = vunpack.c.l.b16 %v239
      %v372 = vunpack.c.l.b16 %v240
      %v373 = vunpack.c.l.b16 %v241
      %v374 = vunpack.c.l.b16 %v242
      %v375 = vunpack.c.l.b16 %v243
      %v376 = vunpack.c.l.b16 %v244
      %v377 = vunpack.c.l.b16 %v245
      %v378 = vunpack.c.l.b16 %v246
      %v379 = vunpack.c.l.b16 %v247
      %v380 = vunpack.c.l.b16 %v248
      %v381 = vunpack.c.l.b16 %v249
      %v382 = vunpack.c.l.b16 %v250
      %v383 = vunpack.c.l.b16 %v251
      %v384 = vunpack.c.l.b16 %v252
      %v385 = vunpack.c.l.b16 %v253
      %v386 = vunpack.c.l.b16 %v254
      %v387 = vunpack.c.l.b16 %v255
      %v388 = vunpack.c.l.b16 %v256
      %v389 = vpack.c.b16 %v354, %v353
      %v390 = vpack.c.b16 %v356, %v355
      %v391 = vpack.c.b16 %v358, %v357
      %v392 = vpack.c.b16 %v360, %v359
      %v393 = vpack.c.b16 %v362, %v361
      %v394 = vpack.c.b16 %v364, %v363
      %v395 = vpack.c.b16 %v366, %v365
      %v396 = vpack.c.b16 %v368, %v367
      %v397 = vpack.c.b16 %v370, %v369
      %v398 = vpack.c.b16 %v372, %v371
      %v399 = vpack.c.b16 %v374, %v373
      %v400 = vpack.c.b16 %v376, %v375
      %v401 = vpack.c.b16 %v378, %v377
      %v402 = vpack.c.b16 %v380, %v379
      %v403 = vpack.c.b16 %v382, %v381
      %v404 = vpack.c.b16 %v384, %v383
      %v405 = vpack.c.b16 %v386, %v385
      %v406 = vpack.c.b16 %v388, %v387
      %vm425 = vcmask 261120
      %v427 = vsel %vm425, %v299, 0
      %v430 = vsel %vm425, %v302, 0
      %v433 = vsel %vm425, %v305, 0
      %v436 = vsel %vm425, %v308, 0
      %438 = vmatprep.subr.bf16.mxu0 0
      %439 = vmatpush1.bf16.msra.mxu0 %v389
      %440 = vmatprep.subr.bf16.mxu0 0
      %441 = vmatpush1.bf16.msra.mxu0 %v390
      %442 = vmatprep.subr.bf16.mxu0 0
      %443 = vmatpush1.bf16.msra.mxu0 %v391
      %444 = vmatprep.subr.bf16.mxu0 0
      %445 = vmatpush1.bf16.msra.mxu0 %v392
      %446 = vmatprep.subr.bf16.mxu0 0
      %447 = vmatpush1.bf16.msra.mxu0 %v393
      %448 = vmatprep.subr.bf16.mxu0 0
      %449 = vmatpush1.bf16.msra.mxu0 %v394
      %450 = vmatprep.subr.bf16.mxu0 0
      %451 = vmatpush1.bf16.msra.mxu0 %v395
      %452 = vmatprep.subr.bf16.mxu0 0
      %453 = vmatpush1.bf16.msra.mxu0 %v396
      %454 = vmatprep.subr.bf16.mxu0 0
      %455 = vmatpush1.bf16.msra.mxu0 %v397
      %456 = vmatprep.subr.bf16.mxu0 0
      %457 = vmatpush1.bf16.msra.mxu0 %v398
      %458 = vmatprep.subr.bf16.mxu0 0
      %459 = vmatpush1.bf16.msra.mxu0 %v399
      %460 = vmatprep.subr.bf16.mxu0 0
      %461 = vmatpush1.bf16.msra.mxu0 %v400
      %462 = vmatprep.subr.bf16.mxu0 0
      %463 = vmatpush1.bf16.msra.mxu0 %v401
      %464 = vmatprep.subr.bf16.mxu0 0
      %465 = vmatpush1.bf16.msra.mxu0 %v402
      %466 = vmatprep.subr.bf16.mxu0 0
      %467 = vmatpush1.bf16.msra.mxu0 %v403
      %468 = vmatprep.subr.bf16.mxu0 0
      %469 = vmatpush1.bf16.msra.mxu0 %v404
      %470 = vmatprep.mubr.bf16.mxu0 %v298
      %471 = vmatmul.mubr.bf16.gmra.mrb[0].mxu0 %v297
      %v472 = vpop.f32.mrb[0].mxu0
      %v473 = vadd.f32 0.0, %v472
      %v474 = vpop.f32.mrb[0].mxu0
      %v475 = vpop.f32.mrb[0].mxu0
      %v476 = vadd.f32 0.0, %v475
      %v477 = vpop.f32.mrb[0].mxu0
      %478 = vmatprep.mubr.bf16.mxu0 %v301
      %479 = vmatmul.mubr.bf16.gmra.mrb[0].mxu0 %v300
      %v480 = vpop.f32.mrb[0].mxu0
      %v481 = vadd.f32 0.0, %v480
      %v482 = vpop.f32.mrb[0].mxu0
      %v483 = vpop.f32.mrb[0].mxu0
      %v484 = vadd.f32 0.0, %v483
      %v485 = vpop.f32.mrb[0].mxu0
      %486 = vmatprep.mubr.bf16.mxu0 %v304
      %487 = vmatmul.mubr.bf16.gmra.mrb[0].mxu0 %v303
      %v488 = vpop.f32.mrb[0].mxu0
      %v489 = vadd.f32 0.0, %v488
      %v490 = vpop.f32.mrb[0].mxu0
      %v491 = vpop.f32.mrb[0].mxu0
      %v492 = vadd.f32 0.0, %v491
      %v493 = vpop.f32.mrb[0].mxu0
      %494 = vmatprep.mubr.bf16.mxu0 %v307
      %495 = vmatmul.mubr.bf16.gmra.mrb[0].mxu0 %v306
      %v496 = vpop.f32.mrb[0].mxu0
      %v497 = vadd.f32 0.0, %v496
      %v498 = vpop.f32.mrb[0].mxu0
      %v499 = vpop.f32.mrb[0].mxu0
      %v500 = vadd.f32 0.0, %v499
      %v501 = vpop.f32.mrb[0].mxu0
      %502 = vdwg.mxu0
      %503 = vmatprep.subr.bf16.mxu0 0
      %504 = vmatpush1.bf16.msra.mxu0 %v405
      %505 = vmatprep.subr.bf16.mxu0 0
      %506 = vmatpush1.bf16.msra.mxu0 %v406
      %507 = vmatprep.subr.bf16.mxu0 0
      %508 = vmatpush1.bf16.msra.mxu0 0
      %509 = vmatprep.subr.bf16.mxu0 0
      %510 = vmatpush1.bf16.msra.mxu0 0
      %511 = vmatprep.subr.bf16.mxu0 0
      %512 = vmatpush1.bf16.msra.mxu0 0
      %513 = vmatprep.subr.bf16.mxu0 0
      %514 = vmatpush1.bf16.msra.mxu0 0
      %515 = vmatprep.subr.bf16.mxu0 0
      %516 = vmatpush1.bf16.msra.mxu0 0
      %517 = vmatprep.subr.bf16.mxu0 0
      %518 = vmatpush1.bf16.msra.mxu0 0
      %519 = vmatprep.subr.bf16.mxu0 0
      %520 = vmatpush1.bf16.msra.mxu0 0
      %521 = vmatprep.subr.bf16.mxu0 0
      %522 = vmatpush1.bf16.msra.mxu0 0
      %523 = vmatprep.subr.bf16.mxu0 0
      %524 = vmatpush1.bf16.msra.mxu0 0
      %525 = vmatprep.subr.bf16.mxu0 0
      %526 = vmatpush1.bf16.msra.mxu0 0
      %527 = vmatprep.subr.bf16.mxu0 0
      %528 = vmatpush1.bf16.msra.mxu0 0
      %529 = vmatprep.subr.bf16.mxu0 0
      %530 = vmatpush1.bf16.msra.mxu0 0
      %531 = vmatprep.subr.bf16.mxu0 0
      %532 = vmatpush1.bf16.msra.mxu0 0
      %533 = vmatprep.subr.bf16.mxu0 0
      %534 = vmatpush1.bf16.msra.mxu0 0
      %535 = vmatprep.mubr.bf16.mxu0 0
      %536 = vmatmul.mubr.bf16.gmra.mrb[0].mxu0 %v427
      %v537 = vpop.f32.mrb[0].mxu0
      %v538 = vadd.f32 %v473, %v537
      %v539 = vpop.f32.mrb[0].mxu0
      %v540 = vpop.f32.mrb[0].mxu0
      %v541 = vadd.f32 %v476, %v540
      %v542 = vpop.f32.mrb[0].mxu0
      %543 = vmatprep.mubr.bf16.mxu0 0
      %544 = vmatmul.mubr.bf16.gmra.mrb[0].mxu0 %v430
      %v545 = vpop.f32.mrb[0].mxu0
      %v546 = vadd.f32 %v481, %v545
      %v547 = vpop.f32.mrb[0].mxu0
      %v548 = vpop.f32.mrb[0].mxu0
      %v549 = vadd.f32 %v484, %v548
      %v550 = vpop.f32.mrb[0].mxu0
      %551 = vmatprep.mubr.bf16.mxu0 0
      %552 = vmatmul.mubr.bf16.gmra.mrb[0].mxu0 %v433
      %v553 = vpop.f32.mrb[0].mxu0
      %v554 = vadd.f32 %v489, %v553
      %v555 = vpop.f32.mrb[0].mxu0
      %v556 = vpop.f32.mrb[0].mxu0
      %v557 = vadd.f32 %v492, %v556
      %v558 = vpop.f32.mrb[0].mxu0
      %559 = vmatprep.mubr.bf16.mxu0 0
      %560 = vmatmul.mubr.bf16.gmra.mrb[0].mxu0 %v436
      %v561 = vpop.f32.mrb[0].mxu0
      %v562 = vadd.f32 %v497, %v561
      %v563 = vpop.f32.mrb[0].mxu0
      %v564 = vpop.f32.mrb[0].mxu0
      %v565 = vadd.f32 %v500, %v564
      %v566 = vpop.f32.mrb[0].mxu0
      %567 = vdwg.mxu0
      %v568 = vld [vmem:[%s2] sm:$0x1]
      %v570 = vlaneseq
      %v571 = vshrl.u32 %v570, 7
      %v572 = vsub.s32 0, %v571
      %v573 = vrot.slane %v568, %v572
      %v575 = vmul.f32 %v538, %v573
      %v576 = vmul.f32 %v541, %v573
      %v577 = vmul.f32 %v546, %v573
      %v578 = vmul.f32 %v549, %v573
      %v579 = vmul.f32 %v554, %v573
      %v580 = vmul.f32 %v557, %v573
      %v581 = vmul.f32 %v562, %v573
      %v582 = vmul.f32 %v565, %v573
      %v583 = vld [vmem:[%s3] sm:$0x1]
      %v585 = vlaneseq
      %v586 = vshrl.u32 %v585, 7
      %v587 = vsub.s32 0, %v586
      %v588 = vrot.slane %v583, %v587
      %v590 = vadd.f32 %v575, %v588
      %v591 = vadd.f32 %v576, %v588
      %v592 = vadd.f32 %v577, %v588
      %v593 = vadd.f32 %v578, %v588
      %v594 = vadd.f32 %v579, %v588
      %v595 = vadd.f32 %v580, %v588
      %v596 = vadd.f32 %v581, %v588
      %v597 = vadd.f32 %v582, %v588
      %vm598 = vcmp.ge.f32.partialorder %v590, 0.0
      %vm599 = vcmp.ge.f32.partialorder %v591, 0.0
      %vm600 = vcmp.ge.f32.partialorder %v592, 0.0
      %vm601 = vcmp.ge.f32.partialorder %v593, 0.0
      %vm602 = vcmp.ge.f32.partialorder %v594, 0.0
      %vm603 = vcmp.ge.f32.partialorder %v595, 0.0
      %vm604 = vcmp.ge.f32.partialorder %v596, 0.0
      %vm605 = vcmp.ge.f32.partialorder %v597, 0.0
      %v606 = vmul.f32 %v590, 0.1
      %v607 = vmul.f32 %v591, 0.1
      %v608 = vmul.f32 %v592, 0.1
      %v609 = vmul.f32 %v593, 0.1
      %v610 = vmul.f32 %v594, 0.1
      %v611 = vmul.f32 %v595, 0.1
      %v612 = vmul.f32 %v596, 0.1
      %v613 = vmul.f32 %v597, 0.1
      %v614 = vsel %vm598, %v590, %v606
      %v615 = vsel %vm599, %v591, %v607
      %v616 = vsel %vm600, %v592, %v608
      %v617 = vsel %vm601, %v593, %v609
      %v618 = vsel %vm602, %v594, %v610
      %v619 = vsel %vm603, %v595, %v611
      %v620 = vsel %vm604, %v596, %v612
      %v621 = vsel %vm605, %v597, %v613
      %v622 = vpack.c.bf16 %v615, %v614
      %v623 = vpack.c.bf16 %v617, %v616
      %v624 = vpack.c.bf16 %v619, %v618
      %v625 = vpack.c.bf16 %v621, %v620
      %v630 = vunpack.c.l.b16 %v622
      %v631 = vunpack.c.h.b16 %v622
      %v632 = vunpack.c.l.b16 %v623
      %v633 = vunpack.c.h.b16 %v623
      %v634 = vunpack.c.l.b16 %v624
      %v635 = vunpack.c.h.b16 %v624
      %v636 = vunpack.c.l.b16 %v625
      %v637 = vunpack.c.h.b16 %v625
      %v638 = vpack.c.b16 %v630, %v630
      %v639 = vpack.c.b16 %v631, %v631
      %v640 = vpack.c.b16 %v632, %v632
      %v641 = vpack.c.b16 %v633, %v633
      %v642 = vpack.c.b16 %v634, %v634
      %v643 = vpack.c.b16 %v635, %v635
      %v644 = vpack.c.b16 %v636, %v636
      %v645 = vpack.c.b16 %v637, %v637
      %vm654 = vcmask 519168
      %655 = vst.msk [vmem:[%s202] sm:$0xf] %vm654, %v638
      %656 = vst.msk [vmem:[%s202 + $0x4] sm:$0xf] %vm654, %v639
      %657 = vst.msk [vmem:[%s202 + $0x8] sm:$0xf] %vm654, %v640
      %658 = vst.msk [vmem:[%s202 + $0xc] sm:$0xf] %vm654, %v641
      %659 = vst.msk [vmem:[%s202 + $0x10] sm:$0xf] %vm654, %v642
      %660 = vst.msk [vmem:[%s202 + $0x14] sm:$0xf] %vm654, %v643
      %661 = vst.msk [vmem:[%s202 + $0x18] sm:$0xf] %vm654, %v644
      %662 = vst.msk [vmem:[%s202 + $0x1c] sm:$0xf] %vm654, %v645
      %s663 = smul.u32 8, %s15
      %p664 = scmp.lt.s32.totalorder %s663, 15
      %s665 = scalar_select %p664, %s663, 15
      %s666 = smul.addr %s665, 4
      %s667 = scalar_lea.vmem %s4, %s666
      // Predicated region
      $region37: #{elannet_tiny_forward.22} parent=35 // pred_check
        %p668 = pneg %p122
      $region38: #{elannet_tiny_forward.22} parent=35 // pred_check_branch
        %670 = sbr.rel (%p668) target = $region40
      $region39: #{elannet_tiny_forward.22} parent=35 // pred_region
        %s671 = smul.u32 8, %s15
      $region40: #{elannet_tiny_forward.22} parent=35 // pred_fallthru
        _
    $region36: #{elannet_tiny_forward.22} parent=5 // pred_fallthru
      _
    %p672 = scmp.le.s32.totalorder 2, %s10
    // Predicated region
    $region41: #{elannet_tiny_forward.22} parent=5 // pred_check
      %p673 = pneg %p672
    $region42: #{elannet_tiny_forward.22} parent=5 // pred_check_branch
      %675 = sbr.rel (%p673) target = $region44
    $region43: #{elannet_tiny_forward.22} parent=5 // pred_region
      %s676 = ssub.s32 %s10, 2
      // Predicated region
      $region45: #{elannet_tiny_forward.22} parent=43 // pred_check
        %p677 = pneg %p128
      $region46: #{elannet_tiny_forward.22} parent=43 // pred_check_branch
        %679 = sbr.rel (%p677) target = $region48
      $region47: #{elannet_tiny_forward.22} parent=43 // pred_region
        %s680 = smul.u32 8, %s16
        %p681 = scmp.lt.s32.totalorder %s680, 15
        %s682 = scalar_select %p681, %s680, 15
        %s683 = smul.addr %s682, 4
        %s684 = scalar_lea.vmem %s4, %s683
      $region48: #{elannet_tiny_forward.22} parent=43 // pred_fallthru
        _
    $region44: #{elannet_tiny_forward.22} parent=5 // pred_fallthru
      _
  $region6: #{elannet_tiny_forward.22} parent=0 // loop_footer
    %s14 = sadd.s32 1, %s10
  $region7: #{elannet_tiny_forward.22} parent=0 // loop_footer_branch
    %9 = sbr.rel target = $region3
  $region8: #{elannet_tiny_forward.22} parent=0 // loop_exit
    _

// kernel: elannet_tiny_forward.23
$region0: #{elannet_tiny_forward.23}
  #allocation0 [shape = 'u32[]', space=smem, size = 0x4, offset = 0x4, fixed_abs, tag = 'smem constant byte address 0x4 - core index']
  #allocation1 [shape = 'u32[144,128]{1,0:T(1,128)}', space=vmem, size = 0x12000, scoped, tag = 'internal scratch']
  %s0 = inlined_call_operand.vmem [shape: bf16[128,64], index: 0, kind: input, shape index: {}]
  %s1 = inlined_call_operand.vmem [shape: bf16[64,64], index: 1, kind: input, shape index: {}]
  %s2 = inlined_call_operand.vmem [shape: f32[1,64], index: 2, kind: input, shape index: {}]
  %s3 = inlined_call_operand.vmem [shape: f32[1,64], index: 3, kind: input, shape index: {}]
  %s4 = inlined_call_operand.vmem [shape: bf16[128,32], index: 4, kind: output, shape index: {0}]
  %s5 = inlined_call_operand.vmem [shape: bf16[128,32], index: 5, kind: output, shape index: {1}]
  %6 = xla_tuple %s4, %s5
  %s7 = sld [smem:[#allocation0]]
  $region57: #{elannet_tiny_forward.23} parent=0
    _
  %s9 = ssub.s32 1, %s7
  %s10 = scalar_select 0, %s9, %s7
  loop: start=0, step=1, limit=4
  $region2: #{elannet_tiny_forward.23} parent=0 // loop_pre_header
    _
  $region3: #{elannet_tiny_forward.23} parent=0 // loop_header
    %s12 = sphi 0, %s16
    %p13 = scmp.ge.s32.totalorder %s12, 4
    %s22 = sphi 0, %s24
    %s25 = sphi 0, %s22
    %s26 = sphi 0, %s25
    %s42 = sphi 0, %s26
    %s46 = sphi 0, %s46
    %s48 = sphi 0, %s46
    %s49 = sphi 0, %s48
    %s63 = sphi 0, %s49
    %s67 = sphi 0, %s67
    %s69 = sphi 0, %s67
    %s70 = sphi 0, %s69
    %s84 = sphi 0, %s70
    %s88 = sphi 0, %s88
    %s90 = sphi 0, %s88
    %s91 = sphi 0, %s90
    %s105 = sphi 0, %s91
    %s111 = sphi 0, %s113
    %s114 = sphi 0, %s111
    %s115 = sphi 0, %s114
    %s131 = sphi 0, %s115
    %s137 = sphi 0, %s139
    %s140 = sphi 0, %s137
    %s141 = sphi 0, %s140
    %s157 = sphi 0, %s141
  $region4: #{elannet_tiny_forward.23} parent=0 // loop_header_branch
    %15 = sbr.rel (%p13) target = $region8
  $region5: #{elannet_tiny_forward.23} parent=0 // loop_body
    %s17 = ssub.s32 %s12, 1
    %s18 = ssub.s32 %s12, 2
    %s19 = sadd.s32 %s12, 1
    %s20 = ssub.s32 %s12, %s19
    %p21 = scmp.eq.s32.totalorder %s20, 0
    %s23 = sadd.s32 %s22, 1
    %s24 = scalar_select %p21, %s22, %s23
    %p27 = pneg %p21
    %p28 = scmp.eq.s32.totalorder %s12, 1
    %p29 = por %p27, %p28
    %p30 = scmp.ne.s32.totalorder %s22, %s25
    %p31 = scmp.eq.s32.totalorder %s12, 0
    %p32 = por %p30, %p31
    %p33 = scmp.ne.s32.totalorder %s22, %s25
    %p34 = scmp.eq.s32.totalorder %s17, 1
    %p35 = por %p33, %p34
    %p36 = scmp.ne.s32.totalorder %s25, %s26
    %p37 = scmp.eq.s32.totalorder %s17, 0
    %p38 = por %p36, %p37
    %p39 = scmp.ne.s32.totalorder %s25, %s26
    %p40 = scmp.eq.s32.totalorder %s18, 1
    %p41 = por %p39, %p40
    %p43 = scmp.ne.s32.totalorder %s26, %s42
    %p44 = scmp.eq.s32.totalorder %s18, 0
    %p45 = por %p43, %p44
    %s47 = sadd.s32 %s46, 1
    %p50 = scmp.eq.s32.totalorder %s12, 1
    %p51 = scmp.ne.s32.totalorder %s46, %s48
    %p52 = scmp.eq.s32.totalorder %s12, 0
    %p53 = por %p51, %p52
    %p54 = scmp.ne.s32.totalorder %s46, %s48
    %p55 = scmp.eq.s32.totalorder %s17, 1
    %p56 = por %p54, %p55
    %p57 = scmp.ne.s32.totalorder %s48, %s49
    %p58 = scmp.eq.s32.totalorder %s17, 0
    %p59 = por %p57, %p58
    %p60 = scmp.ne.s32.totalorder %s48, %s49
    %p61 = scmp.eq.s32.totalorder %s18, 1
    %p62 = por %p60, %p61
    %p64 = scmp.ne.s32.totalorder %s49, %s63
    %p65 = scmp.eq.s32.totalorder %s18, 0
    %p66 = por %p64, %p65
    %s68 = sadd.s32 %s67, 1
    %p71 = scmp.eq.s32.totalorder %s12, 1
    %p72 = scmp.ne.s32.totalorder %s67, %s69
    %p73 = scmp.eq.s32.totalorder %s12, 0
    %p74 = por %p72, %p73
    %p75 = scmp.ne.s32.totalorder %s67, %s69
    %p76 = scmp.eq.s32.totalorder %s17, 1
    %p77 = por %p75, %p76
    %p78 = scmp.ne.s32.totalorder %s69, %s70
    %p79 = scmp.eq.s32.totalorder %s17, 0
    %p80 = por %p78, %p79
    %p81 = scmp.ne.s32.totalorder %s69, %s70
    %p82 = scmp.eq.s32.totalorder %s18, 1
    %p83 = por %p81, %p82
    %p85 = scmp.ne.s32.totalorder %s70, %s84
    %p86 = scmp.eq.s32.totalorder %s18, 0
    %p87 = por %p85, %p86
    %s89 = sadd.s32 %s88, 1
    %p92 = scmp.eq.s32.totalorder %s12, 1
    %p93 = scmp.ne.s32.totalorder %s88, %s90
    %p94 = scmp.eq.s32.totalorder %s12, 0
    %p95 = por %p93, %p94
    %p96 = scmp.ne.s32.totalorder %s88, %s90
    %p97 = scmp.eq.s32.totalorder %s17, 1
    %p98 = por %p96, %p97
    %p99 = scmp.ne.s32.totalorder %s90, %s91
    %p100 = scmp.eq.s32.totalorder %s17, 0
    %p101 = por %p99, %p100
    %p102 = scmp.ne.s32.totalorder %s90, %s91
    %p103 = scmp.eq.s32.totalorder %s18, 1
    %p104 = por %p102, %p103
    %p106 = scmp.ne.s32.totalorder %s91, %s105
    %p107 = scmp.eq.s32.totalorder %s18, 0
    %p108 = por %p106, %p107
    %s109 = ssub.s32 %s12, %s19
    %p110 = scmp.eq.s32.totalorder %s109, 0
    %s112 = sadd.s32 %s111, 1
    %s113 = scalar_select %p110, %s111, %s112
    %p116 = pneg %p110
    %p117 = scmp.eq.s32.totalorder %s12, 1
    %p118 = por %p116, %p117
    %p119 = scmp.ne.s32.totalorder %s111, %s114
    %p120 = scmp.eq.s32.totalorder %s12, 0
    %p121 = por %p119, %p120
    %p122 = scmp.ne.s32.totalorder %s111, %s114
    %p123 = scmp.eq.s32.totalorder %s17, 1
    %p124 = por %p122, %p123
    %p125 = scmp.ne.s32.totalorder %s114, %s115
    %p126 = scmp.eq.s32.totalorder %s17, 0
    %p127 = por %p125, %p126
    %p128 = scmp.ne.s32.totalorder %s114, %s115
    %p129 = scmp.eq.s32.totalorder %s18, 1
    %p130 = por %p128, %p129
    %p132 = scmp.ne.s32.totalorder %s115, %s131
    %p133 = scmp.eq.s32.totalorder %s18, 0
    %p134 = por %p132, %p133
    %s135 = ssub.s32 %s12, %s19
    %p136 = scmp.eq.s32.totalorder %s135, 0
    %s138 = sadd.s32 %s137, 1
    %s139 = scalar_select %p136, %s137, %s138
    %p142 = pneg %p136
    %p143 = scmp.eq.s32.totalorder %s12, 1
    %p144 = por %p142, %p143
    %p145 = scmp.ne.s32.totalorder %s137, %s140
    %p146 = scmp.eq.s32.totalorder %s12, 0
    %p147 = por %p145, %p146
    %p148 = scmp.ne.s32.totalorder %s137, %s140
    %p149 = scmp.eq.s32.totalorder %s17, 1
    %p150 = por %p148, %p149
    %p151 = scmp.ne.s32.totalorder %s140, %s141
    %p152 = scmp.eq.s32.totalorder %s17, 0
    %p153 = por %p151, %p152
    %p154 = scmp.ne.s32.totalorder %s140, %s141
    %p155 = scmp.eq.s32.totalorder %s18, 1
    %p156 = por %p154, %p155
    %p158 = scmp.ne.s32.totalorder %s141, %s157
    %p159 = scmp.eq.s32.totalorder %s18, 0
    %p160 = por %p158, %p159
    %p161 = scmp.le.s32.totalorder 1, %s12
    %p162 = scmp.lt.s32.totalorder %s12, 3
    %p163 = pnand %p161, %p162
    %p164 = pneg %p163
    // Predicated region
    $region9: #{elannet_tiny_forward.23} parent=5 // pred_check
      _
    $region10: #{elannet_tiny_forward.23} parent=5 // pred_check_branch
      %166 = sbr.rel (%p163) target = $region12
    $region11: #{elannet_tiny_forward.23} parent=5 // pred_region
      %s167 = ssub.s32 %s12, 1
      // Predicated region
      $region13: #{elannet_tiny_forward.23} parent=11 // pred_check
        %p168 = pneg %p59
      $region14: #{elannet_tiny_forward.23} parent=11 // pred_check_branch
        %170 = sbr.rel (%p168) target = $region16
      $region15: #{elannet_tiny_forward.23} parent=11 // pred_region
        _
      $region16: #{elannet_tiny_forward.23} parent=11 // pred_fallthru
        _
      // Predicated region
      $region17: #{elannet_tiny_forward.23} parent=11 // pred_check
        %p171 = pneg %p80
      $region18: #{elannet_tiny_forward.23} parent=11 // pred_check_branch
        %173 = sbr.rel (%p171) target = $region20
      $region19: #{elannet_tiny_forward.23} parent=11 // pred_region
        _
      $region20: #{elannet_tiny_forward.23} parent=11 // pred_fallthru
        _
      // Predicated region
      $region21: #{elannet_tiny_forward.23} parent=11 // pred_check
        %p174 = pneg %p101
      $region22: #{elannet_tiny_forward.23} parent=11 // pred_check_branch
        %176 = sbr.rel (%p174) target = $region24
      $region23: #{elannet_tiny_forward.23} parent=11 // pred_region
        _
      $region24: #{elannet_tiny_forward.23} parent=11 // pred_fallthru
        _
    $region12: #{elannet_tiny_forward.23} parent=5 // pred_fallthru
      _
    %p177 = scmp.lt.s32.totalorder %s12, 2
    // Predicated region
    $region25: #{elannet_tiny_forward.23} parent=5 // pred_check
      %p178 = pneg %p177
    $region26: #{elannet_tiny_forward.23} parent=5 // pred_check_branch
      %180 = sbr.rel (%p178) target = $region28
    $region27: #{elannet_tiny_forward.23} parent=5 // pred_region
      // Predicated region
      $region29: #{elannet_tiny_forward.23} parent=27 // pred_check
        %p181 = pneg %p32
      $region30: #{elannet_tiny_forward.23} parent=27 // pred_check_branch
        %183 = sbr.rel (%p181) target = $region32
      $region31: #{elannet_tiny_forward.23} parent=27 // pred_region
        %s184 = smul.u32 8, %s12
        %p185 = scmp.lt.s32.totalorder %s184, 15
        %s186 = scalar_select %p185, %s184, 15
        %s187 = smul.addr %s186, 4
        %s188 = scalar_lea.vmem %s0, %s187
        %s189 = smul.u32 8, %s12
      $region32: #{elannet_tiny_forward.23} parent=27 // pred_fallthru
        _
    $region28: #{elannet_tiny_forward.23} parent=5 // pred_fallthru
      _
    %p190 = scmp.le.s32.totalorder 1, %s12
    %p191 = scmp.lt.s32.totalorder %s12, 3
    %p192 = pnand %p190, %p191
    %p193 = pneg %p192
    // Predicated region
    $region33: #{elannet_tiny_forward.23} parent=5 // pred_check
      _
    $region34: #{elannet_tiny_forward.23} parent=5 // pred_check_branch
      %195 = sbr.rel (%p192) target = $region36
    $region35: #{elannet_tiny_forward.23} parent=5 // pred_region
      %s196 = ssub.s32 %s12, 1
      %s197 = smul.u32 8, %s17
      %p198 = scmp.lt.s32.totalorder %s197, 15
      %s199 = scalar_select %p198, %s197, 15
      %s200 = smul.addr %s199, 4
      %s201 = scalar_lea.vmem %s0, %s200
      %p202 = pneg %p38
      %p203 = pneg %p35
      %p204 = pneg %p59
      %p205 = pneg %p56
      %p206 = pneg %p80
      %p207 = pneg %p77
      %p208 = pneg %p101
      %p209 = pneg %p98
      %p210 = pneg %p127
      %p211 = pneg %p124
      %s212 = smul.u32 8, %s17
      %p213 = scmp.lt.s32.totalorder %s212, 15
      %s214 = scalar_select %p213, %s212, 15
      %s215 = smul.addr %s214, 4
      %s216 = scalar_lea.vmem %s4, %s215
      %p217 = pneg %p153
      %p218 = pneg %p150
      %s219 = smul.u32 8, %s17
      %p220 = scmp.lt.s32.totalorder %s219, 15
      %s221 = scalar_select %p220, %s219, 15
      %s222 = smul.addr %s221, 4
      %s223 = scalar_lea.vmem %s5, %s222
      %s224 = smul.u32 8, %s17
      %p225 = scmp.lt.s32.totalorder %s224, 15
      %s226 = scalar_select %p225, %s224, 15
      %s227 = smul.addr %s226, 4
      %s228 = scalar_lea.vmem %s0, %s227
      %s229 = smul.u32 8, %s17
      %s230 = smul.u32 8, %s17
      %p231 = scmp.lt.s32.totalorder %s230, 15
      %s232 = scalar_select %p231, %s230, 15
      %s233 = smul.addr %s232, 4
      %s234 = scalar_lea.vmem %s4, %s233
      %s235 = smul.u32 8, %s17
      %s236 = smul.u32 8, %s17
      %p237 = scmp.lt.s32.totalorder %s236, 15
      %s238 = scalar_select %p237, %s236, 15
      %s239 = smul.addr %s238, 4
      %s240 = scalar_lea.vmem %s5, %s239
      %s241 = smul.u32 8, %s17
      %v243 = vld [vmem:[%s228] sm:$0xf]
      %v244 = vld [vmem:[%s228 + $0x4] sm:$0xf]
      %v245 = vld [vmem:[%s228 + $0x8] sm:$0xf]
      %v246 = vld [vmem:[%s228 + $0xc] sm:$0xf]
      %v247 = vld [vmem:[%s228 + $0x10] sm:$0xf]
      %v248 = vld [vmem:[%s228 + $0x14] sm:$0xf]
      %v249 = vld [vmem:[%s228 + $0x18] sm:$0xf]
      %v250 = vld [vmem:[%s228 + $0x1c] sm:$0xf]
      %v251 = vld [vmem:[%s1] sm:$0xf]
      %v252 = vld [vmem:[%s1 + $0x4] sm:$0xf]
      %v253 = vld [vmem:[%s1 + $0x8] sm:$0xf]
      %v254 = vld [vmem:[%s1 + $0xc] sm:$0xf]
      %v255 = vld [vmem:[%s1 + $0x10] sm:$0xf]
      %v256 = vld [vmem:[%s1 + $0x14] sm:$0xf]
      %v257 = vld [vmem:[%s1 + $0x18] sm:$0xf]
      %v258 = vld [vmem:[%s1 + $0x1c] sm:$0xf]
      %v267 = vunpack.c.l.b16 %v243
      %v268 = vunpack.c.l.b16 %v244
      %v269 = vunpack.c.l.b16 %v245
      %v270 = vunpack.c.l.b16 %v246
      %v271 = vunpack.c.l.b16 %v247
      %v272 = vunpack.c.l.b16 %v248
      %v273 = vunpack.c.l.b16 %v249
      %v274 = vunpack.c.l.b16 %v250
      %v275 = vpack.c.b16 %v268, %v267
      %v276 = vpack.c.b16 %v270, %v269
      %v277 = vpack.c.b16 %v272, %v271
      %v278 = vpack.c.b16 %v274, %v273
      %v287 = vunpack.c.l.b16 %v251
      %v288 = vunpack.c.l.b16 %v252
      %v289 = vunpack.c.l.b16 %v253
      %v290 = vunpack.c.l.b16 %v254
      %v291 = vunpack.c.l.b16 %v255
      %v292 = vunpack.c.l.b16 %v256
      %v293 = vunpack.c.l.b16 %v257
      %v294 = vunpack.c.l.b16 %v258
      %v295 = vpack.c.b16 %v288, %v287
      %v296 = vpack.c.b16 %v290, %v289
      %v297 = vpack.c.b16 %v292, %v291
      %v298 = vpack.c.b16 %v294, %v293
      %vm303 = vcmask 523264
      %v305 = vsel %vm303, %v275, 0
      %v308 = vsel %vm303, %v276, 0
      %v311 = vsel %vm303, %v277, 0
      %v314 = vsel %vm303, %v278, 0
      %316 = vmatprep.subr.bf16.mxu0 0
      %317 = vmatpush1.bf16.msra.mxu0 %v295
      %318 = vmatprep.subr.bf16.mxu0 0
      %319 = vmatpush1.bf16.msra.mxu0 %v296
      %320 = vmatprep.subr.bf16.mxu0 0
      %321 = vmatpush1.bf16.msra.mxu0 %v297
      %322 = vmatprep.subr.bf16.mxu0 0
      %323 = vmatpush1.bf16.msra.mxu0 %v298
      %324 = vmatprep.subr.bf16.mxu0 0
      %325 = vmatpush1.bf16.msra.mxu0 0
      %326 = vmatprep.subr.bf16.mxu0 0
      %327 = vmatpush1.bf16.msra.mxu0 0
      %328 = vmatprep.subr.bf16.mxu0 0
      %329 = vmatpush1.bf16.msra.mxu0 0
      %330 = vmatprep.subr.bf16.mxu0 0
      %331 = vmatpush1.bf16.msra.mxu0 0
      %332 = vmatprep.subr.bf16.mxu0 0
      %333 = vmatpush1.bf16.msra.mxu0 0
      %334 = vmatprep.subr.bf16.mxu0 0
      %335 = vmatpush1.bf16.msra.mxu0 0
      %336 = vmatprep.subr.bf16.mxu0 0
      %337 = vmatpush1.bf16.msra.mxu0 0
      %338 = vmatprep.subr.bf16.mxu0 0
      %339 = vmatpush1.bf16.msra.mxu0 0
      %340 = vmatprep.subr.bf16.mxu0 0
      %341 = vmatpush1.bf16.msra.mxu0 0
      %342 = vmatprep.subr.bf16.mxu0 0
      %343 = vmatpush1.bf16.msra.mxu0 0
      %344 = vmatprep.subr.bf16.mxu0 0
      %345 = vmatpush1.bf16.msra.mxu0 0
      %346 = vmatprep.subr.bf16.mxu0 0
      %347 = vmatpush1.bf16.msra.mxu0 0
      %348 = vmatprep.mubr.bf16.mxu0 0
      %349 = vmatmul.mubr.bf16.gmra.mrb[0].mxu0 %v305
      %v350 = vpop.f32.mrb[0].mxu0
      %v351 = vadd.f32 0.0, %v350
      %v352 = vpop.f32.mrb[0].mxu0
      %v353 = vpop.f32.mrb[0].mxu0
      %v354 = vadd.f32 0.0, %v353
      %v355 = vpop.f32.mrb[0].mxu0
      %356 = vmatprep.mubr.bf16.mxu0 0
      %357 = vmatmul.mubr.bf16.gmra.mrb[0].mxu0 %v308
      %v358 = vpop.f32.mrb[0].mxu0
      %v359 = vadd.f32 0.0, %v358
      %v360 = vpop.f32.mrb[0].mxu0
      %v361 = vpop.f32.mrb[0].mxu0
      %v362 = vadd.f32 0.0, %v361
      %v363 = vpop.f32.mrb[0].mxu0
      %364 = vmatprep.mubr.bf16.mxu0 0
      %365 = vmatmul.mubr.bf16.gmra.mrb[0].mxu0 %v311
      %v366 = vpop.f32.mrb[0].mxu0
      %v367 = vadd.f32 0.0, %v366
      %v368 = vpop.f32.mrb[0].mxu0
      %v369 = vpop.f32.mrb[0].mxu0
      %v370 = vadd.f32 0.0, %v369
      %v371 = vpop.f32.mrb[0].mxu0
      %372 = vmatprep.mubr.bf16.mxu0 0
      %373 = vmatmul.mubr.bf16.gmra.mrb[0].mxu0 %v314
      %v374 = vpop.f32.mrb[0].mxu0
      %v375 = vadd.f32 0.0, %v374
      %v376 = vpop.f32.mrb[0].mxu0
      %v377 = vpop.f32.mrb[0].mxu0
      %v378 = vadd.f32 0.0, %v377
      %v379 = vpop.f32.mrb[0].mxu0
      %380 = vdwg.mxu0
      %v381 = vld [vmem:[%s2] sm:$0x1]
      %v383 = vlaneseq
      %v384 = vshrl.u32 %v383, 7
      %v385 = vsub.s32 0, %v384
      %v386 = vrot.slane %v381, %v385
      %v388 = vmul.f32 %v351, %v386
      %v389 = vmul.f32 %v354, %v386
      %v390 = vmul.f32 %v359, %v386
      %v391 = vmul.f32 %v362, %v386
      %v392 = vmul.f32 %v367, %v386
      %v393 = vmul.f32 %v370, %v386
      %v394 = vmul.f32 %v375, %v386
      %v395 = vmul.f32 %v378, %v386
      %v396 = vld [vmem:[%s3] sm:$0x1]
      %v398 = vlaneseq
      %v399 = vshrl.u32 %v398, 7
      %v400 = vsub.s32 0, %v399
      %v401 = vrot.slane %v396, %v400
      %v403 = vadd.f32 %v388, %v401
      %v404 = vadd.f32 %v389, %v401
      %v405 = vadd.f32 %v390, %v401
      %v406 = vadd.f32 %v391, %v401
      %v407 = vadd.f32 %v392, %v401
      %v408 = vadd.f32 %v393, %v401
      %v409 = vadd.f32 %v394, %v401
      %v410 = vadd.f32 %v395, %v401
      %vm411 = vcmp.ge.f32.partialorder %v403, 0.0
      %vm412 = vcmp.ge.f32.partialorder %v404, 0.0
      %vm413 = vcmp.ge.f32.partialorder %v405, 0.0
      %vm414 = vcmp.ge.f32.partialorder %v406, 0.0
      %vm415 = vcmp.ge.f32.partialorder %v407, 0.0
      %vm416 = vcmp.ge.f32.partialorder %v408, 0.0
      %vm417 = vcmp.ge.f32.partialorder %v409, 0.0
      %vm418 = vcmp.ge.f32.partialorder %v410, 0.0
      %v419 = vmul.f32 %v403, 0.1
      %v420 = vmul.f32 %v404, 0.1
      %v421 = vmul.f32 %v405, 0.1
      %v422 = vmul.f32 %v406, 0.1
      %v423 = vmul.f32 %v407, 0.1
      %v424 = vmul.f32 %v408, 0.1
      %v425 = vmul.f32 %v409, 0.1
      %v426 = vmul.f32 %v410, 0.1
      %v427 = vsel %vm411, %v403, %v419
      %v428 = vsel %vm412, %v404, %v420
      %v429 = vsel %vm413, %v405, %v421
      %v430 = vsel %vm414, %v406, %v422
      %v431 = vsel %vm415, %v407, %v423
      %v432 = vsel %vm416, %v408, %v424
      %v433 = vsel %vm417, %v409, %v425
      %v434 = vsel %vm418, %v410, %v426
      %v435 = vpack.c.bf16 %v428, %v427
      %v436 = vpack.c.bf16 %v430, %v429
      %v437 = vpack.c.bf16 %v432, %v431
      %v438 = vpack.c.bf16 %v434, %v433
      %v443 = vunpack.c.l.b16 %v435
      %v444 = vunpack.c.h.b16 %v435
      %v445 = vunpack.c.l.b16 %v436
      %v446 = vunpack.c.h.b16 %v436
      %v447 = vunpack.c.l.b16 %v437
      %v448 = vunpack.c.h.b16 %v437
      %v449 = vunpack.c.l.b16 %v438
      %v450 = vunpack.c.h.b16 %v438
      %v451 = vpack.c.b16 %v443, %v443
      %v452 = vpack.c.b16 %v444, %v444
      %v453 = vpack.c.b16 %v445, %v445
      %v454 = vpack.c.b16 %v446, %v446
      %v455 = vpack.c.b16 %v447, %v447
      %v456 = vpack.c.b16 %v448, %v448
      %v457 = vpack.c.b16 %v449, %v449
      %v458 = vpack.c.b16 %v450, %v450
      %vm467 = vcmask 257024
      %468 = vst.msk [vmem:[%s234] sm:$0xf] %vm467, %v451
      %469 = vst.msk [vmem:[%s234 + $0x4] sm:$0xf] %vm467, %v452
      %470 = vst.msk [vmem:[%s234 + $0x8] sm:$0xf] %vm467, %v453
      %471 = vst.msk [vmem:[%s234 + $0xc] sm:$0xf] %vm467, %v454
      %472 = vst.msk [vmem:[%s234 + $0x10] sm:$0xf] %vm467, %v455
      %473 = vst.msk [vmem:[%s234 + $0x14] sm:$0xf] %vm467, %v456
      %474 = vst.msk [vmem:[%s234 + $0x18] sm:$0xf] %vm467, %v457
      %475 = vst.msk [vmem:[%s234 + $0x1c] sm:$0xf] %vm467, %v458
      %476 = vrot.lane.b32.xlu0 %v451, 96
      %v477 = vpop.permute.xlu0 %476
      %478 = vrot.lane.b32.xlu0 %v452, 96
      %v479 = vpop.permute.xlu0 %478
      %480 = vrot.lane.b32.xlu0 %v453, 96
      %v481 = vpop.permute.xlu0 %480
      %482 = vrot.lane.b32.xlu0 %v454, 96
      %v483 = vpop.permute.xlu0 %482
      %484 = vrot.lane.b32.xlu0 %v455, 96
      %v485 = vpop.permute.xlu0 %484
      %486 = vrot.lane.b32.xlu0 %v456, 96
      %v487 = vpop.permute.xlu0 %486
      %488 = vrot.lane.b32.xlu0 %v457, 96
      %v489 = vpop.permute.xlu0 %488
      %490 = vrot.lane.b32.xlu0 %v458, 96
      %v491 = vpop.permute.xlu0 %490
      %500 = vst.msk [vmem:[%s240] sm:$0xf] %vm467, %v477
      %501 = vst.msk [vmem:[%s240 + $0x4] sm:$0xf] %vm467, %v479
      %502 = vst.msk [vmem:[%s240 + $0x8] sm:$0xf] %vm467, %v481
      %503 = vst.msk [vmem:[%s240 + $0xc] sm:$0xf] %vm467, %v483
      %504 = vst.msk [vmem:[%s240 + $0x10] sm:$0xf] %vm467, %v485
      %505 = vst.msk [vmem:[%s240 + $0x14] sm:$0xf] %vm467, %v487
      %506 = vst.msk [vmem:[%s240 + $0x18] sm:$0xf] %vm467, %v489
      %507 = vst.msk [vmem:[%s240 + $0x1c] sm:$0xf] %vm467, %v491
      %s508 = smul.u32 8, %s17
      %p509 = scmp.lt.s32.totalorder %s508, 15
      %s510 = scalar_select %p509, %s508, 15
      %s511 = smul.addr %s510, 4
      %s512 = scalar_lea.vmem %s4, %s511
      %s513 = smul.u32 8, %s17
      %p514 = scmp.lt.s32.totalorder %s513, 15
      %s515 = scalar_select %p514, %s513, 15
      %s516 = smul.addr %s515, 4
      %s517 = scalar_lea.vmem %s5, %s516
      // Predicated region
      $region37: #{elannet_tiny_forward.23} parent=35 // pred_check
        %p518 = pneg %p124
      $region38: #{elannet_tiny_forward.23} parent=35 // pred_check_branch
        %520 = sbr.rel (%p518) target = $region40
      $region39: #{elannet_tiny_forward.23} parent=35 // pred_region
        %s521 = smul.u32 8, %s17
      $region40: #{elannet_tiny_forward.23} parent=35 // pred_fallthru
        _
      // Predicated region
      $region41: #{elannet_tiny_forward.23} parent=35 // pred_check
        %p522 = pneg %p150
      $region42: #{elannet_tiny_forward.23} parent=35 // pred_check_branch
        %524 = sbr.rel (%p522) target = $region44
      $region43: #{elannet_tiny_forward.23} parent=35 // pred_region
        %s525 = smul.u32 8, %s17
      $region44: #{elannet_tiny_forward.23} parent=35 // pred_fallthru
        _
    $region36: #{elannet_tiny_forward.23} parent=5 // pred_fallthru
      _
    %p526 = scmp.le.s32.totalorder 2, %s12
    // Predicated region
    $region45: #{elannet_tiny_forward.23} parent=5 // pred_check
      %p527 = pneg %p526
    $region46: #{elannet_tiny_forward.23} parent=5 // pred_check_branch
      %529 = sbr.rel (%p527) target = $region48
    $region47: #{elannet_tiny_forward.23} parent=5 // pred_region
      %s530 = ssub.s32 %s12, 2
      // Predicated region
      $region49: #{elannet_tiny_forward.23} parent=47 // pred_check
        %p531 = pneg %p130
      $region50: #{elannet_tiny_forward.23} parent=47 // pred_check_branch
        %533 = sbr.rel (%p531) target = $region52
      $region51: #{elannet_tiny_forward.23} parent=47 // pred_region
        %s534 = smul.u32 8, %s18
        %p535 = scmp.lt.s32.totalorder %s534, 15
        %s536 = scalar_select %p535, %s534, 15
        %s537 = smul.addr %s536, 4
        %s538 = scalar_lea.vmem %s4, %s537
      $region52: #{elannet_tiny_forward.23} parent=47 // pred_fallthru
        _
      // Predicated region
      $region53: #{elannet_tiny_forward.23} parent=47 // pred_check
        %p539 = pneg %p156
      $region54: #{elannet_tiny_forward.23} parent=47 // pred_check_branch
        %541 = sbr.rel (%p539) target = $region56
      $region55: #{elannet_tiny_forward.23} parent=47 // pred_region
        %s542 = smul.u32 8, %s18
        %p543 = scmp.lt.s32.totalorder %s542, 15
        %s544 = scalar_select %p543, %s542, 15
        %s545 = smul.addr %s544, 4
        %s546 = scalar_lea.vmem %s5, %s545
      $region56: #{elannet_tiny_forward.23} parent=47 // pred_fallthru
        _
    $region48: #{elannet_tiny_forward.23} parent=5 // pred_fallthru
      _
  $region6: #{elannet_tiny_forward.23} parent=0 // loop_footer
    %s16 = sadd.s32 1, %s12
  $region7: #{elannet_tiny_forward.23} parent=0 // loop_footer_branch
    %11 = sbr.rel target = $region3
  $region8: #{elannet_tiny_forward.23} parent=0 // loop_exit
    _

// kernel: elannet_tiny_forward.27
$region0: #{elannet_tiny_forward.27}
  #allocation0 [shape = 'u32[]', space=smem, size = 0x4, offset = 0x4, fixed_abs, tag = 'smem constant byte address 0x4 - core index']
  #allocation1 [shape = 'u32[144,128]{1,0:T(1,128)}', space=vmem, size = 0x12000, scoped, tag = 'internal scratch']
  %s0 = inlined_call_operand.vmem [shape: bf16[8,2,4,128], index: 0, kind: input, shape index: {}]
  %s1 = inlined_call_operand.vmem [shape: bf16[8,4,64], index: 1, kind: output, shape index: {}]
  %s2 = sld [smem:[#allocation0]]
  $region37: #{elannet_tiny_forward.27} parent=0
    _
  %s4 = ssub.s32 1, %s2
  %s5 = scalar_select 0, %s4, %s2
  loop: start=0, step=1, limit=4
  $region2: #{elannet_tiny_forward.27} parent=0 // loop_pre_header
    _
  $region3: #{elannet_tiny_forward.27} parent=0 // loop_header
    %s7 = sphi 0, %s11
    %p8 = scmp.ge.s32.totalorder %s7, 4
    %s17 = sphi 0, %s19
    %s20 = sphi 0, %s17
    %s21 = sphi 0, %s20
    %s37 = sphi 0, %s21
    %s43 = sphi 0, %s45
    %s46 = sphi 0, %s43
    %s47 = sphi 0, %s46
    %s63 = sphi 0, %s47
  $region4: #{elannet_tiny_forward.27} parent=0 // loop_header_branch
    %10 = sbr.rel (%p8) target = $region8
  $region5: #{elannet_tiny_forward.27} parent=0 // loop_body
    %s12 = ssub.s32 %s7, 1
    %s13 = ssub.s32 %s7, 2
    %s14 = sadd.s32 %s7, 1
    %s15 = ssub.s32 %s7, %s14
    %p16 = scmp.eq.s32.totalorder %s15, 0
    %s18 = sadd.s32 %s17, 1
    %s19 = scalar_select %p16, %s17, %s18
    %p22 = pneg %p16
    %p23 = scmp.eq.s32.totalorder %s7, 1
    %p24 = por %p22, %p23
    %p25 = scmp.ne.s32.totalorder %s17, %s20
    %p26 = scmp.eq.s32.totalorder %s7, 0
    %p27 = por %p25, %p26
    %p28 = scmp.ne.s32.totalorder %s17, %s20
    %p29 = scmp.eq.s32.totalorder %s12, 1
    %p30 = por %p28, %p29
    %p31 = scmp.ne.s32.totalorder %s20, %s21
    %p32 = scmp.eq.s32.totalorder %s12, 0
    %p33 = por %p31, %p32
    %p34 = scmp.ne.s32.totalorder %s20, %s21
    %p35 = scmp.eq.s32.totalorder %s13, 1
    %p36 = por %p34, %p35
    %p38 = scmp.ne.s32.totalorder %s21, %s37
    %p39 = scmp.eq.s32.totalorder %s13, 0
    %p40 = por %p38, %p39
    %s41 = ssub.s32 %s7, %s14
    %p42 = scmp.eq.s32.totalorder %s41, 0
    %s44 = sadd.s32 %s43, 1
    %s45 = scalar_select %p42, %s43, %s44
    %p48 = pneg %p42
    %p49 = scmp.eq.s32.totalorder %s7, 1
    %p50 = por %p48, %p49
    %p51 = scmp.ne.s32.totalorder %s43, %s46
    %p52 = scmp.eq.s32.totalorder %s7, 0
    %p53 = por %p51, %p52
    %p54 = scmp.ne.s32.totalorder %s43, %s46
    %p55 = scmp.eq.s32.totalorder %s12, 1
    %p56 = por %p54, %p55
    %p57 = scmp.ne.s32.totalorder %s46, %s47
    %p58 = scmp.eq.s32.totalorder %s12, 0
    %p59 = por %p57, %p58
    %p60 = scmp.ne.s32.totalorder %s46, %s47
    %p61 = scmp.eq.s32.totalorder %s13, 1
    %p62 = por %p60, %p61
    %p64 = scmp.ne.s32.totalorder %s47, %s63
    %p65 = scmp.eq.s32.totalorder %s13, 0
    %p66 = por %p64, %p65
    %p67 = scmp.le.s32.totalorder 1, %s7
    %p68 = scmp.lt.s32.totalorder %s7, 3
    %p69 = pnand %p67, %p68
    %p70 = pneg %p69
    // Predicated region
    $region9: #{elannet_tiny_forward.27} parent=5 // pred_check
      _
    $region10: #{elannet_tiny_forward.27} parent=5 // pred_check_branch
      %72 = sbr.rel (%p69) target = $region12
    $region11: #{elannet_tiny_forward.27} parent=5 // pred_region
      %s73 = ssub.s32 %s7, 1
    $region12: #{elannet_tiny_forward.27} parent=5 // pred_fallthru
      _
    %p74 = scmp.lt.s32.totalorder %s7, 2
    // Predicated region
    $region13: #{elannet_tiny_forward.27} parent=5 // pred_check
      %p75 = pneg %p74
    $region14: #{elannet_tiny_forward.27} parent=5 // pred_check_branch
      %77 = sbr.rel (%p75) target = $region16
    $region15: #{elannet_tiny_forward.27} parent=5 // pred_region
      // Predicated region
      $region17: #{elannet_tiny_forward.27} parent=15 // pred_check
        %p78 = pneg %p27
      $region18: #{elannet_tiny_forward.27} parent=15 // pred_check_branch
        %80 = sbr.rel (%p78) target = $region20
      $region19: #{elannet_tiny_forward.27} parent=15 // pred_region
        %s81 = smul.u32 4, %s7
        %p82 = scmp.lt.s32.totalorder %s81, 7
        %s83 = scalar_select %p82, %s81, 7
        %s84 = smul.addr %s83, 2
        %s85 = smul.addr %s84, 2
        %s86 = scalar_lea.vmem %s0, %s85
        %s87 = smul.u32 4, %s7
      $region20: #{elannet_tiny_forward.27} parent=15 // pred_fallthru
        _
    $region16: #{elannet_tiny_forward.27} parent=5 // pred_fallthru
      _
    %p88 = scmp.le.s32.totalorder 1, %s7
    %p89 = scmp.lt.s32.totalorder %s7, 3
    %p90 = pnand %p88, %p89
    %p91 = pneg %p90
    // Predicated region
    $region21: #{elannet_tiny_forward.27} parent=5 // pred_check
      _
    $region22: #{elannet_tiny_forward.27} parent=5 // pred_check_branch
      %93 = sbr.rel (%p90) target = $region24
    $region23: #{elannet_tiny_forward.27} parent=5 // pred_region
      %s94 = ssub.s32 %s7, 1
      %s95 = smul.u32 4, %s12
      %p96 = scmp.lt.s32.totalorder %s95, 7
      %s97 = scalar_select %p96, %s95, 7
      %s98 = smul.addr %s97, 2
      %s99 = smul.addr %s98, 2
      %s100 = scalar_lea.vmem %s0, %s99
      %p101 = pneg %p33
      %p102 = pneg %p30
      %p103 = pneg %p59
      %p104 = pneg %p56
      %s105 = smul.u32 4, %s12
      %p106 = scmp.lt.s32.totalorder %s105, 7
      %s107 = scalar_select %p106, %s105, 7
      %s108 = smul.addr %s107, 2
      %s109 = scalar_lea.vmem %s1, %s108
      %s110 = smul.u32 4, %s12
      %p111 = scmp.lt.s32.totalorder %s110, 7
      %s112 = scalar_select %p111, %s110, 7
      %s113 = smul.addr %s112, 2
      %s114 = smul.addr %s113, 2
      %s115 = scalar_lea.vmem %s0, %s114
      %s116 = smul.u32 4, %s12
      %s117 = smul.u32 4, %s12
      %p118 = scmp.lt.s32.totalorder %s117, 7
      %s119 = scalar_select %p118, %s117, 7
      %s120 = smul.addr %s119, 2
      %s121 = scalar_lea.vmem %s1, %s120
      %s122 = smul.u32 4, %s12
      %v123 = vld [vmem:[%s115] sm:$0x3]
      %v124 = vld [vmem:[%s115 + $0x4] sm:$0x3]
      %v125 = vld [vmem:[%s115 + $0x8] sm:$0x3]
      %v126 = vld [vmem:[%s115 + $0xc] sm:$0x3]
      %s127 = scalar_lea.vmem %s115, 2
      %v128 = vld [vmem:[%s127] sm:$0x3]
      %v129 = vld [vmem:[%s127 + $0x4] sm:$0x3]
      %v130 = vld [vmem:[%s127 + $0x8] sm:$0x3]
      %v131 = vld [vmem:[%s127 + $0xc] sm:$0x3]
      %v132 = vmax.bf16 %v123, %v128
      %v133 = vmax.bf16 %v124, %v129
      %v134 = vmax.bf16 %v125, %v130
      %v135 = vmax.bf16 %v126, %v131
      %140 = vrot.lane.b32.xlu0 %v132, 64
      %v141 = vpop.permute.xlu0 %140
      %142 = vrot.lane.b32.xlu0 %v133, 64
      %v143 = vpop.permute.xlu0 %142
      %144 = vrot.lane.b32.xlu0 %v134, 64
      %v145 = vpop.permute.xlu0 %144
      %146 = vrot.lane.b32.xlu0 %v135, 64
      %v147 = vpop.permute.xlu0 %146
      %v152 = vmax.bf16 %v132, %v141
      %v153 = vmax.bf16 %v133, %v143
      %v154 = vmax.bf16 %v134, %v145
      %v155 = vmax.bf16 %v135, %v147
      %vm156 = vcmask 517120
      %157 = vst.msk [vmem:[%s121] sm:$0x3] %vm156, %v152
      %158 = vst.msk [vmem:[%s121 + $0x2] sm:$0x3] %vm156, %v153
      %159 = vst.msk [vmem:[%s121 + $0x4] sm:$0x3] %vm156, %v154
      %160 = vst.msk [vmem:[%s121 + $0x6] sm:$0x3] %vm156, %v155
      %s161 = smul.u32 4, %s12
      %p162 = scmp.lt.s32.totalorder %s161, 7
      %s163 = scalar_select %p162, %s161, 7
      %s164 = smul.addr %s163, 2
      %s165 = scalar_lea.vmem %s1, %s164
      // Predicated region
      $region25: #{elannet_tiny_forward.27} parent=23 // pred_check
        %p166 = pneg %p56
      $region26: #{elannet_tiny_forward.27} parent=23 // pred_check_branch
        %168 = sbr.rel (%p166) target = $region28
      $region27: #{elannet_tiny_forward.27} parent=23 // pred_region
        %s169 = smul.u32 4, %s12
      $region28: #{elannet_tiny_forward.27} parent=23 // pred_fallthru
        _
    $region24: #{elannet_tiny_forward.27} parent=5 // pred_fallthru
      _
    %p170 = scmp.le.s32.totalorder 2, %s7
    // Predicated region
    $region29: #{elannet_tiny_forward.27} parent=5 // pred_check
      %p171 = pneg %p170
    $region30: #{elannet_tiny_forward.27} parent=5 // pred_check_branch
      %173 = sbr.rel (%p171) target = $region32
    $region31: #{elannet_tiny_forward.27} parent=5 // pred_region
      %s174 = ssub.s32 %s7, 2
      // Predicated region
      $region33: #{elannet_tiny_forward.27} parent=31 // pred_check
        %p175 = pneg %p62
      $region34: #{elannet_tiny_forward.27} parent=31 // pred_check_branch
        %177 = sbr.rel (%p175) target = $region36
      $region35: #{elannet_tiny_forward.27} parent=31 // pred_region
        %s178 = smul.u32 4, %s13
        %p179 = scmp.lt.s32.totalorder %s178, 7
        %s180 = scalar_select %p179, %s178, 7
        %s181 = smul.addr %s180, 2
        %s182 = scalar_lea.vmem %s1, %s181
      $region36: #{elannet_tiny_forward.27} parent=31 // pred_fallthru
        _
    $region32: #{elannet_tiny_forward.27} parent=5 // pred_fallthru
      _
  $region6: #{elannet_tiny_forward.27} parent=0 // loop_footer
    %s11 = sadd.s32 1, %s7
  $region7: #{elannet_tiny_forward.27} parent=0 // loop_footer_branch
    %6 = sbr.rel target = $region3
  $region8: #{elannet_tiny_forward.27} parent=0 // loop_exit
    _

// kernel: elannet_tiny_forward.24
$region0: #{elannet_tiny_forward.24}
  #allocation0 [shape = 'u32[]', space=smem, size = 0x4, offset = 0x4, fixed_abs, tag = 'smem constant byte address 0x4 - core index']
  #allocation1 [shape = 'u32[144,128]{1,0:T(1,128)}', space=vmem, size = 0x12000, scoped, tag = 'internal scratch']
  %s0 = inlined_call_operand.vmem [shape: bf16[2,110,32], index: 0, kind: input, shape index: {}]
  %s1 = inlined_call_operand.vmem [shape: bf16[288,32], index: 1, kind: input, shape index: {}]
  %s2 = inlined_call_operand.vmem [shape: f32[1,32], index: 2, kind: input, shape index: {}]
  %s3 = inlined_call_operand.vmem [shape: f32[1,32], index: 3, kind: input, shape index: {}]
  %s4 = inlined_call_operand.vmem [shape: bf16[2,80,32], index: 4, kind: output, shape index: {}]
  %s5 = sld [smem:[#allocation0]]
  $region49: #{elannet_tiny_forward.24} parent=0
    _
  %s7 = ssub.s32 1, %s5
  %s8 = scalar_select 0, %s7, %s5
  loop: start=0, step=1, limit=4
  $region2: #{elannet_tiny_forward.24} parent=0 // loop_pre_header
    _
  $region3: #{elannet_tiny_forward.24} parent=0 // loop_header
    %s10 = sphi 0, %s14
    %p11 = scmp.ge.s32.totalorder %s10, 4
    %s20 = sphi 0, %s22
    %s23 = sphi 0, %s20
    %s24 = sphi 0, %s23
    %s40 = sphi 0, %s24
    %s44 = sphi 0, %s44
    %s46 = sphi 0, %s44
    %s47 = sphi 0, %s46
    %s61 = sphi 0, %s47
    %s65 = sphi 0, %s65
    %s67 = sphi 0, %s65
    %s68 = sphi 0, %s67
    %s82 = sphi 0, %s68
    %s86 = sphi 0, %s86
    %s88 = sphi 0, %s86
    %s89 = sphi 0, %s88
    %s103 = sphi 0, %s89
    %s109 = sphi 0, %s111
    %s112 = sphi 0, %s109
    %s113 = sphi 0, %s112
    %s129 = sphi 0, %s113
  $region4: #{elannet_tiny_forward.24} parent=0 // loop_header_branch
    %13 = sbr.rel (%p11) target = $region8
  $region5: #{elannet_tiny_forward.24} parent=0 // loop_body
    %s15 = ssub.s32 %s10, 1
    %s16 = ssub.s32 %s10, 2
    %s17 = sadd.s32 %s10, 1
    %s18 = ssub.s32 %s10, %s17
    %p19 = scmp.eq.s32.totalorder %s18, 0
    %s21 = sadd.s32 %s20, 1
    %s22 = scalar_select %p19, %s20, %s21
    %p25 = pneg %p19
    %p26 = scmp.eq.s32.totalorder %s10, 1
    %p27 = por %p25, %p26
    %p28 = scmp.ne.s32.totalorder %s20, %s23
    %p29 = scmp.eq.s32.totalorder %s10, 0
    %p30 = por %p28, %p29
    %p31 = scmp.ne.s32.totalorder %s20, %s23
    %p32 = scmp.eq.s32.totalorder %s15, 1
    %p33 = por %p31, %p32
    %p34 = scmp.ne.s32.totalorder %s23, %s24
    %p35 = scmp.eq.s32.totalorder %s15, 0
    %p36 = por %p34, %p35
    %p37 = scmp.ne.s32.totalorder %s23, %s24
    %p38 = scmp.eq.s32.totalorder %s16, 1
    %p39 = por %p37, %p38
    %p41 = scmp.ne.s32.totalorder %s24, %s40
    %p42 = scmp.eq.s32.totalorder %s16, 0
    %p43 = por %p41, %p42
    %s45 = sadd.s32 %s44, 1
    %p48 = scmp.eq.s32.totalorder %s10, 1
    %p49 = scmp.ne.s32.totalorder %s44, %s46
    %p50 = scmp.eq.s32.totalorder %s10, 0
    %p51 = por %p49, %p50
    %p52 = scmp.ne.s32.totalorder %s44, %s46
    %p53 = scmp.eq.s32.totalorder %s15, 1
    %p54 = por %p52, %p53
    %p55 = scmp.ne.s32.totalorder %s46, %s47
    %p56 = scmp.eq.s32.totalorder %s15, 0
    %p57 = por %p55, %p56
    %p58 = scmp.ne.s32.totalorder %s46, %s47
    %p59 = scmp.eq.s32.totalorder %s16, 1
    %p60 = por %p58, %p59
    %p62 = scmp.ne.s32.totalorder %s47, %s61
    %p63 = scmp.eq.s32.totalorder %s16, 0
    %p64 = por %p62, %p63
    %s66 = sadd.s32 %s65, 1
    %p69 = scmp.eq.s32.totalorder %s10, 1
    %p70 = scmp.ne.s32.totalorder %s65, %s67
    %p71 = scmp.eq.s32.totalorder %s10, 0
    %p72 = por %p70, %p71
    %p73 = scmp.ne.s32.totalorder %s65, %s67
    %p74 = scmp.eq.s32.totalorder %s15, 1
    %p75 = por %p73, %p74
    %p76 = scmp.ne.s32.totalorder %s67, %s68
    %p77 = scmp.eq.s32.totalorder %s15, 0
    %p78 = por %p76, %p77
    %p79 = scmp.ne.s32.totalorder %s67, %s68
    %p80 = scmp.eq.s32.totalorder %s16, 1
    %p81 = por %p79, %p80
    %p83 = scmp.ne.s32.totalorder %s68, %s82
    %p84 = scmp.eq.s32.totalorder %s16, 0
    %p85 = por %p83, %p84
    %s87 = sadd.s32 %s86, 1
    %p90 = scmp.eq.s32.totalorder %s10, 1
    %p91 = scmp.ne.s32.totalorder %s86, %s88
    %p92 = scmp.eq.s32.totalorder %s10, 0
    %p93 = por %p91, %p92
    %p94 = scmp.ne.s32.totalorder %s86, %s88
    %p95 = scmp.eq.s32.totalorder %s15, 1
    %p96 = por %p94, %p95
    %p97 = scmp.ne.s32.totalorder %s88, %s89
    %p98 = scmp.eq.s32.totalorder %s15, 0
    %p99 = por %p97, %p98
    %p100 = scmp.ne.s32.totalorder %s88, %s89
    %p101 = scmp.eq.s32.totalorder %s16, 1
    %p102 = por %p100, %p101
    %p104 = scmp.ne.s32.totalorder %s89, %s103
    %p105 = scmp.eq.s32.totalorder %s16, 0
    %p106 = por %p104, %p105
    %s107 = ssub.s32 %s10, %s17
    %p108 = scmp.eq.s32.totalorder %s107, 0
    %s110 = sadd.s32 %s109, 1
    %s111 = scalar_select %p108, %s109, %s110
    %p114 = pneg %p108
    %p115 = scmp.eq.s32.totalorder %s10, 1
    %p116 = por %p114, %p115
    %p117 = scmp.ne.s32.totalorder %s109, %s112
    %p118 = scmp.eq.s32.totalorder %s10, 0
    %p119 = por %p117, %p118
    %p120 = scmp.ne.s32.totalorder %s109, %s112
    %p121 = scmp.eq.s32.totalorder %s15, 1
    %p122 = por %p120, %p121
    %p123 = scmp.ne.s32.totalorder %s112, %s113
    %p124 = scmp.eq.s32.totalorder %s15, 0
    %p125 = por %p123, %p124
    %p126 = scmp.ne.s32.totalorder %s112, %s113
    %p127 = scmp.eq.s32.totalorder %s16, 1
    %p128 = por %p126, %p127
    %p130 = scmp.ne.s32.totalorder %s113, %s129
    %p131 = scmp.eq.s32.totalorder %s16, 0
    %p132 = por %p130, %p131
    %p133 = scmp.le.s32.totalorder 1, %s10
    %p134 = scmp.lt.s32.totalorder %s10, 3
    %p135 = pnand %p133, %p134
    %p136 = pneg %p135
    // Predicated region
    $region9: #{elannet_tiny_forward.24} parent=5 // pred_check
      _
    $region10: #{elannet_tiny_forward.24} parent=5 // pred_check_branch
      %138 = sbr.rel (%p135) target = $region12
    $region11: #{elannet_tiny_forward.24} parent=5 // pred_region
      %s139 = ssub.s32 %s10, 1
      // Predicated region
      $region13: #{elannet_tiny_forward.24} parent=11 // pred_check
        %p140 = pneg %p57
      $region14: #{elannet_tiny_forward.24} parent=11 // pred_check_branch
        %142 = sbr.rel (%p140) target = $region16
      $region15: #{elannet_tiny_forward.24} parent=11 // pred_region
        _
      $region16: #{elannet_tiny_forward.24} parent=11 // pred_fallthru
        _
      // Predicated region
      $region17: #{elannet_tiny_forward.24} parent=11 // pred_check
        %p143 = pneg %p78
      $region18: #{elannet_tiny_forward.24} parent=11 // pred_check_branch
        %145 = sbr.rel (%p143) target = $region20
      $region19: #{elannet_tiny_forward.24} parent=11 // pred_region
        _
      $region20: #{elannet_tiny_forward.24} parent=11 // pred_fallthru
        _
      // Predicated region
      $region21: #{elannet_tiny_forward.24} parent=11 // pred_check
        %p146 = pneg %p99
      $region22: #{elannet_tiny_forward.24} parent=11 // pred_check_branch
        %148 = sbr.rel (%p146) target = $region24
      $region23: #{elannet_tiny_forward.24} parent=11 // pred_region
        _
      $region24: #{elannet_tiny_forward.24} parent=11 // pred_fallthru
        _
    $region12: #{elannet_tiny_forward.24} parent=5 // pred_fallthru
      _
    %p149 = scmp.lt.s32.totalorder %s10, 2
    // Predicated region
    $region25: #{elannet_tiny_forward.24} parent=5 // pred_check
      %p150 = pneg %p149
    $region26: #{elannet_tiny_forward.24} parent=5 // pred_check_branch
      %152 = sbr.rel (%p150) target = $region28
    $region27: #{elannet_tiny_forward.24} parent=5 // pred_region
      // Predicated region
      $region29: #{elannet_tiny_forward.24} parent=27 // pred_check
        %p153 = pneg %p30
      $region30: #{elannet_tiny_forward.24} parent=27 // pred_check_branch
        %155 = sbr.rel (%p153) target = $region32
      $region31: #{elannet_tiny_forward.24} parent=27 // pred_region
        %p156 = scmp.lt.s32.totalorder %s10, 1
        %s157 = scalar_select %p156, %s10, 1
        %s158 = smul.addr %s157, 14
        %s159 = smul.addr %s158, 4
        %s160 = scalar_lea.vmem %s0, %s159
      $region32: #{elannet_tiny_forward.24} parent=27 // pred_fallthru
        _
    $region28: #{elannet_tiny_forward.24} parent=5 // pred_fallthru
      _
    %p161 = scmp.le.s32.totalorder 1, %s10
    %p162 = scmp.lt.s32.totalorder %s10, 3
    %p163 = pnand %p161, %p162
    %p164 = pneg %p163
    // Predicated region
    $region33: #{elannet_tiny_forward.24} parent=5 // pred_check
      _
    $region34: #{elannet_tiny_forward.24} parent=5 // pred_check_branch
      %166 = sbr.rel (%p163) target = $region36
    $region35: #{elannet_tiny_forward.24} parent=5 // pred_region
      %s167 = ssub.s32 %s10, 1
      %p168 = scmp.lt.s32.totalorder %s15, 1
      %s169 = scalar_select %p168, %s15, 1
      %s170 = smul.addr %s169, 14
      %s171 = smul.addr %s170, 4
      %s172 = scalar_lea.vmem %s0, %s171
      %p173 = pneg %p36
      %p174 = pneg %p33
      %p175 = pneg %p57
      %p176 = pneg %p54
      %p177 = pneg %p78
      %p178 = pneg %p75
      %p179 = pneg %p99
      %p180 = pneg %p96
      %p181 = pneg %p125
      %p182 = pneg %p122
      %p183 = scmp.lt.s32.totalorder %s15, 1
      %s184 = scalar_select %p183, %s15, 1
      %s185 = smul.addr %s184, 10
      %s186 = smul.addr %s185, 4
      %s187 = scalar_lea.vmem %s4, %s186
      %p188 = scmp.lt.s32.totalorder %s15, 1
      %s189 = scalar_select %p188, %s15, 1
      %s190 = smul.addr %s189, 14
      %s191 = smul.addr %s190, 4
      %s192 = scalar_lea.vmem %s0, %s191
      %p193 = scmp.lt.s32.totalorder %s15, 1
      %s194 = scalar_select %p193, %s15, 1
      %s195 = smul.addr %s194, 10
      %s196 = smul.addr %s195, 4
      %s197 = scalar_lea.vmem %s4, %s196
      %v199 = vld [vmem:[%s192] sm:$0xf]
      %v200 = vld [vmem:[%s192 + $0x4] sm:$0xf]
      %v201 = vld [vmem:[%s192 + $0x8] sm:$0xf]
      %v202 = vld [vmem:[%s192 + $0xc] sm:$0xf]
      %v203 = vld [vmem:[%s192 + $0x10] sm:$0xf]
      %v204 = vld [vmem:[%s192 + $0x14] sm:$0xf]
      %v205 = vld [vmem:[%s192 + $0x18] sm:$0xf]
      %v206 = vld [vmem:[%s192 + $0x1c] sm:$0xf]
      %v207 = vld [vmem:[%s192 + $0x20] sm:$0xf]
      %v208 = vld [vmem:[%s192 + $0x24] sm:$0xf]
      %v209 = vld [vmem:[%s192 + $0x28] sm:$0x1]
      %v210 = vld [vmem:[%s192] sm:$0xe]
      %v211 = vld [vmem:[%s192 + $0x4] sm:$0xe]
      %v212 = vld [vmem:[%s192 + $0x28] sm:$0xf]
      %v213 = vld [vmem:[%s192 + $0x2c] sm:$0x1]
      %v214 = vld [vmem:[%s192 + $0x2c] sm:$0x3]
      %v215 = vld [vmem:[%s192 + $0x4] sm:$0xc]
      %v216 = vld [vmem:[%s192 + $0x8] sm:$0xc]
      %v217 = vld [vmem:[%s192 + $0x2c] sm:$0xf]
      %v218 = vld [vmem:[%s192 + $0x30] sm:$0x3]
      %v219 = vld [vmem:[%s192 + $0x30] sm:$0x7]
      %v220 = vld [vmem:[%s192 + $0x8] sm:$0x8]
      %v231 = vunpack.c.l.b16 %v199
      %v232 = vunpack.c.l.b16 %v200
      %v233 = vunpack.c.l.b16 %v201
      %v234 = vunpack.c.l.b16 %v202
      %v235 = vunpack.c.l.b16 %v203
      %v236 = vunpack.c.l.b16 %v204
      %v237 = vunpack.c.l.b16 %v205
      %v238 = vunpack.c.l.b16 %v206
      %v239 = vunpack.c.l.b16 %v207
      %v240 = vunpack.c.l.b16 %v208
      %v241 = vpack.c.b16 %v232, %v231
      %v242 = vpack.c.b16 %v234, %v233
      %v243 = vpack.c.b16 %v236, %v235
      %v244 = vpack.c.b16 %v238, %v237
      %v245 = vpack.c.b16 %v240, %v239
      %v247 = vunpack.c.l.b16 %v209
      %v248 = vpack.c.b16 %v247, %v247
      %vm249 = vsmask.f32 7424
      %v251 = vshrl.u32 %v241, 16
      %v253 = vshll.u32 %v241, 16
      %v255 = vrot.slane %v253, 1
      %v256 = vor.u32 %v251, %v255
      %v258 = vshll.u32 %v242, 16
      %v260 = vrot.slane %v258, 1
      %v261 = vsel %vm249, %v256, %v260
      %v262 = vshrl.u32 %v242, 16
      %v264 = vor.u32 %v262, %v260
      %v266 = vshll.u32 %v243, 16
      %v268 = vrot.slane %v266, 1
      %v269 = vsel %vm249, %v264, %v268
      %v270 = vshrl.u32 %v243, 16
      %v272 = vor.u32 %v270, %v268
      %v274 = vshll.u32 %v244, 16
      %v276 = vrot.slane %v274, 1
      %v277 = vsel %vm249, %v272, %v276
      %v278 = vshrl.u32 %v244, 16
      %v280 = vor.u32 %v278, %v276
      %v282 = vshll.u32 %v245, 16
      %v284 = vrot.slane %v282, 1
      %v285 = vsel %vm249, %v280, %v284
      %v286 = vshrl.u32 %v245, 16
      %v288 = vor.u32 %v286, %v284
      %v290 = vshll.u32 %v248, 16
      %v292 = vrot.slane %v290, 1
      %v293 = vsel %vm249, %v288, %v292
      %294 = vrot.lane.b32.xlu0 %v261, 32
      %v295 = vpop.permute.xlu0 %294
      %296 = vrot.lane.b32.xlu0 %v269, 32
      %v297 = vpop.permute.xlu0 %296
      %298 = vrot.lane.b32.xlu0 %v277, 32
      %v299 = vpop.permute.xlu0 %298
      %300 = vrot.lane.b32.xlu0 %v285, 32
      %v301 = vpop.permute.xlu0 %300
      %302 = vrot.lane.b32.xlu0 %v293, 32
      %v303 = vpop.permute.xlu0 %302
      %v305 = vunpack.c.l.b16 %v210
      %v306 = vpack.c.b16 %v232, %v305
      %vm307 = vcmask 1046528
      %v308 = vrot.slane %v306, 1
      %v309 = vrot.slane %v242, 1
      %v310 = vsel %vm307, %v308, %v309
      %v311 = vrot.slane %v243, 1
      %v312 = vsel %vm307, %v309, %v311
      %v313 = vrot.slane %v244, 1
      %v314 = vsel %vm307, %v311, %v313
      %v315 = vrot.slane %v245, 1
      %v316 = vsel %vm307, %v313, %v315
      %v317 = vrot.slane %v248, 1
      %v318 = vsel %vm307, %v315, %v317
      %319 = vrot.lane.b32.xlu0 %v310, 64
      %v320 = vpop.permute.xlu0 %319
      %321 = vrot.lane.b32.xlu0 %v312, 64
      %v322 = vpop.permute.xlu0 %321
      %323 = vrot.lane.b32.xlu0 %v314, 64
      %v324 = vpop.permute.xlu0 %323
      %325 = vrot.lane.b32.xlu0 %v316, 64
      %v326 = vpop.permute.xlu0 %325
      %327 = vrot.lane.b32.xlu0 %v318, 64
      %v328 = vpop.permute.xlu0 %327
      %v332 = vunpack.c.l.b16 %v211
      %v333 = vunpack.c.l.b16 %v212
      %v334 = vunpack.c.l.b16 %v213
      %v335 = vpack.c.b16 %v233, %v332
      %v336 = vpack.c.b16 %v235, %v234
      %v337 = vpack.c.b16 %v237, %v236
      %v338 = vpack.c.b16 %v239, %v238
      %v339 = vpack.c.b16 %v333, %v240
      %v340 = vpack.c.b16 %v334, %v334
      %v341 = vrot.slane %v335, 1
      %v342 = vrot.slane %v336, 1
      %v343 = vsel %vm307, %v341, %v342
      %v344 = vrot.slane %v337, 1
      %v345 = vsel %vm307, %v342, %v344
      %v346 = vrot.slane %v338, 1
      %v347 = vsel %vm307, %v344, %v346
      %v348 = vrot.slane %v339, 1
      %v349 = vsel %vm307, %v346, %v348
      %v350 = vrot.slane %v340, 1
      %v351 = vsel %vm307, %v348, %v350
      %352 = vrot.lane.b32.xlu0 %v343, 96
      %v353 = vpop.permute.xlu0 %352
      %354 = vrot.lane.b32.xlu0 %v345, 96
      %v355 = vpop.permute.xlu0 %354
      %356 = vrot.lane.b32.xlu0 %v347, 96
      %v357 = vpop.permute.xlu0 %356
      %358 = vrot.lane.b32.xlu0 %v349, 96
      %v359 = vpop.permute.xlu0 %358
      %360 = vrot.lane.b32.xlu0 %v351, 96
      %v361 = vpop.permute.xlu0 %360
      %v363 = vunpack.c.l.b16 %v214
      %v364 = vpack.c.b16 %v363, %v363
      %vm365 = vsmask.f32 6400
      %v367 = vshrl.u32 %v335, 16
      %v369 = vrot.slane %v367, 1
      %v370 = vshll.u32 %v335, 16
      %v372 = vrot.slane %v370, 2
      %v373 = vor.u32 %v369, %v372
      %v375 = vshrl.u32 %v336, 16
      %v377 = vrot.slane %v375, 1
      %v378 = vshll.u32 %v336, 16
      %v380 = vrot.slane %v378, 2
      %v381 = vor.u32 %v377, %v380
      %v382 = vsel %vm365, %v373, %v381
      %v384 = vshrl.u32 %v337, 16
      %v386 = vrot.slane %v384, 1
      %v387 = vshll.u32 %v337, 16
      %v389 = vrot.slane %v387, 2
      %v390 = vor.u32 %v386, %v389
      %v391 = vsel %vm365, %v381, %v390
      %v393 = vshrl.u32 %v338, 16
      %v395 = vrot.slane %v393, 1
      %v396 = vshll.u32 %v338, 16
      %v398 = vrot.slane %v396, 2
      %v399 = vor.u32 %v395, %v398
      %v400 = vsel %vm365, %v390, %v399
      %v402 = vshrl.u32 %v339, 16
      %v404 = vrot.slane %v402, 1
      %v405 = vshll.u32 %v339, 16
      %v407 = vrot.slane %v405, 2
      %v408 = vor.u32 %v404, %v407
      %v409 = vsel %vm365, %v399, %v408
      %v411 = vshrl.u32 %v364, 16
      %v413 = vrot.slane %v411, 1
      %v414 = vshll.u32 %v364, 16
      %v416 = vrot.slane %v414, 2
      %v417 = vor.u32 %v413, %v416
      %v418 = vsel %vm365, %v408, %v417
      %v420 = vunpack.c.l.b16 %v215
      %v421 = vpack.c.b16 %v233, %v420
      %vm422 = vcmask 1045504
      %v423 = vrot.slane %v421, 2
      %v424 = vrot.slane %v336, 2
      %v425 = vsel %vm422, %v423, %v424
      %v426 = vrot.slane %v337, 2
      %v427 = vsel %vm422, %v424, %v426
      %v428 = vrot.slane %v338, 2
      %v429 = vsel %vm422, %v426, %v428
      %v430 = vrot.slane %v339, 2
      %v431 = vsel %vm422, %v428, %v430
      %v432 = vrot.slane %v364, 2
      %v433 = vsel %vm422, %v430, %v432
      %434 = vrot.lane.b32.xlu0 %v425, 32
      %v435 = vpop.permute.xlu0 %434
      %436 = vrot.lane.b32.xlu0 %v427, 32
      %v437 = vpop.permute.xlu0 %436
      %438 = vrot.lane.b32.xlu0 %v429, 32
      %v439 = vpop.permute.xlu0 %438
      %440 = vrot.lane.b32.xlu0 %v431, 32
      %v441 = vpop.permute.xlu0 %440
      %442 = vrot.lane.b32.xlu0 %v433, 32
      %v443 = vpop.permute.xlu0 %442
      %v447 = vunpack.c.l.b16 %v216
      %v448 = vunpack.c.l.b16 %v217
      %v449 = vunpack.c.l.b16 %v218
      %v450 = vpack.c.b16 %v234, %v447
      %v451 = vpack.c.b16 %v448, %v333
      %v452 = vpack.c.b16 %v449, %v449
      %v453 = vrot.slane %v450, 2
      %v454 = vrot.slane %v243, 2
      %v455 = vsel %vm422, %v453, %v454
      %v456 = vrot.slane %v244, 2
      %v457 = vsel %vm422, %v454, %v456
      %v458 = vrot.slane %v245, 2
      %v459 = vsel %vm422, %v456, %v458
      %v460 = vrot.slane %v451, 2
      %v461 = vsel %vm422, %v458, %v460
      %v462 = vrot.slane %v452, 2
      %v463 = vsel %vm422, %v460, %v462
      %464 = vrot.lane.b32.xlu0 %v455, 64
      %v465 = vpop.permute.xlu0 %464
      %466 = vrot.lane.b32.xlu0 %v457, 64
      %v467 = vpop.permute.xlu0 %466
      %468 = vrot.lane.b32.xlu0 %v459, 64
      %v469 = vpop.permute.xlu0 %468
      %470 = vrot.lane.b32.xlu0 %v461, 64
      %v471 = vpop.permute.xlu0 %470
      %472 = vrot.lane.b32.xlu0 %v463, 64
      %v473 = vpop.permute.xlu0 %472
      %v475 = vunpack.c.l.b16 %v219
      %v476 = vpack.c.b16 %v475, %v475
      %vm477 = vsmask.f32 5376
      %v479 = vshrl.u32 %v450, 16
      %v481 = vrot.slane %v479, 2
      %v482 = vshll.u32 %v450, 16
      %v484 = vrot.slane %v482, 3
      %v485 = vor.u32 %v481, %v484
      %v486 = vrot.slane %v270, 2
      %v487 = vrot.slane %v266, 3
      %v488 = vor.u32 %v486, %v487
      %v489 = vsel %vm477, %v485, %v488
      %v490 = vrot.slane %v278, 2
      %v491 = vrot.slane %v274, 3
      %v492 = vor.u32 %v490, %v491
      %v493 = vsel %vm477, %v488, %v492
      %v494 = vrot.slane %v286, 2
      %v495 = vrot.slane %v282, 3
      %v496 = vor.u32 %v494, %v495
      %v497 = vsel %vm477, %v492, %v496
      %v499 = vshrl.u32 %v451, 16
      %v501 = vrot.slane %v499, 2
      %v502 = vshll.u32 %v451, 16
      %v504 = vrot.slane %v502, 3
      %v505 = vor.u32 %v501, %v504
      %v506 = vsel %vm477, %v496, %v505
      %v508 = vshrl.u32 %v476, 16
      %v510 = vrot.slane %v508, 2
      %v511 = vshll.u32 %v476, 16
      %v513 = vrot.slane %v511, 3
      %v514 = vor.u32 %v510, %v513
      %v515 = vsel %vm477, %v505, %v514
      %516 = vrot.lane.b32.xlu0 %v489, 96
      %v517 = vpop.permute.xlu0 %516
      %518 = vrot.lane.b32.xlu0 %v493, 96
      %v519 = vpop.permute.xlu0 %518
      %520 = vrot.lane.b32.xlu0 %v497, 96
      %v521 = vpop.permute.xlu0 %520
      %522 = vrot.lane.b32.xlu0 %v506, 96
      %v523 = vpop.permute.xlu0 %522
      %524 = vrot.lane.b32.xlu0 %v515, 96
      %v525 = vpop.permute.xlu0 %524
      %v527 = vunpack.c.l.b16 %v220
      %v528 = vpack.c.b16 %v234, %v527
      %vm529 = vcmask 1044480
      %v530 = vrot.slane %v528, 3
      %v531 = vrot.slane %v243, 3
      %v532 = vsel %vm529, %v530, %v531
      %v533 = vrot.slane %v244, 3
      %v534 = vsel %vm529, %v531, %v533
      %v535 = vrot.slane %v245, 3
      %v536 = vsel %vm529, %v533, %v535
      %v537 = vrot.slane %v451, 3
      %v538 = vsel %vm529, %v535, %v537
      %v539 = vrot.slane %v476, 3
      %v540 = vsel %vm529, %v537, %v539
      %vm541 = vcmask 261120
      %v543 = vsel %vm541, %v241, %v295
      %v545 = vsel %vm541, %v242, %v297
      %v547 = vsel %vm541, %v243, %v299
      %v549 = vsel %vm541, %v244, %v301
      %v551 = vsel %vm541, %v245, %v303
      %vm552 = vcmask 523264
      %v554 = vsel %vm552, %v543, %v320
      %v556 = vsel %vm552, %v545, %v322
      %v558 = vsel %vm552, %v547, %v324
      %v560 = vsel %vm552, %v549, %v326
      %v562 = vsel %vm552, %v551, %v328
      %vm563 = vcmask 785408
      %v565 = vsel %vm563, %v554, %v353
      %v568 = vsel %vm563, %v556, %v355
      %v571 = vsel %vm563, %v558, %v357
      %v574 = vsel %vm563, %v560, %v359
      %v577 = vsel %vm563, %v562, %v361
      %v581 = vsel %vm541, %v382, %v435
      %v584 = vsel %vm541, %v391, %v437
      %v587 = vsel %vm541, %v400, %v439
      %v590 = vsel %vm541, %v409, %v441
      %v593 = vsel %vm541, %v418, %v443
      %v595 = vsel %vm552, %v581, %v465
      %v597 = vsel %vm552, %v584, %v467
      %v599 = vsel %vm552, %v587, %v469
      %v601 = vsel %vm552, %v590, %v471
      %v603 = vsel %vm552, %v593, %v473
      %v605 = vsel %vm563, %v595, %v517
      %v608 = vsel %vm563, %v597, %v519
      %v611 = vsel %vm563, %v599, %v521
      %v614 = vsel %vm563, %v601, %v523
      %v617 = vsel %vm563, %v603, %v525
      %v619 = vld [vmem:[%s1] sm:$0xf]
      %v620 = vld [vmem:[%s1 + $0x4] sm:$0xf]
      %v621 = vld [vmem:[%s1 + $0x8] sm:$0xf]
      %v622 = vld [vmem:[%s1 + $0xc] sm:$0xf]
      %v623 = vld [vmem:[%s1 + $0x10] sm:$0xf]
      %v624 = vld [vmem:[%s1 + $0x14] sm:$0xf]
      %v625 = vld [vmem:[%s1 + $0x18] sm:$0xf]
      %v626 = vld [vmem:[%s1 + $0x1c] sm:$0xf]
      %v627 = vld [vmem:[%s1 + $0x20] sm:$0xf]
      %v628 = vld [vmem:[%s1 + $0x24] sm:$0xf]
      %v629 = vld [vmem:[%s1 + $0x28] sm:$0xf]
      %v630 = vld [vmem:[%s1 + $0x2c] sm:$0xf]
      %v631 = vld [vmem:[%s1 + $0x30] sm:$0xf]
      %v632 = vld [vmem:[%s1 + $0x34] sm:$0xf]
      %v633 = vld [vmem:[%s1 + $0x38] sm:$0xf]
      %v634 = vld [vmem:[%s1 + $0x3c] sm:$0xf]
      %v635 = vld [vmem:[%s1 + $0x40] sm:$0xf]
      %v636 = vld [vmem:[%s1 + $0x44] sm:$0xf]
      %v637 = vld [vmem:[%s1 + $0x48] sm:$0xf]
      %v638 = vld [vmem:[%s1 + $0x4c] sm:$0xf]
      %v639 = vld [vmem:[%s1 + $0x50] sm:$0xf]
      %v640 = vld [vmem:[%s1 + $0x54] sm:$0xf]
      %v641 = vld [vmem:[%s1 + $0x58] sm:$0xf]
      %v642 = vld [vmem:[%s1 + $0x5c] sm:$0xf]
      %v643 = vld [vmem:[%s1 + $0x60] sm:$0xf]
      %v644 = vld [vmem:[%s1 + $0x64] sm:$0xf]
      %v645 = vld [vmem:[%s1 + $0x68] sm:$0xf]
      %v646 = vld [vmem:[%s1 + $0x6c] sm:$0xf]
      %v647 = vld [vmem:[%s1 + $0x70] sm:$0xf]
      %v648 = vld [vmem:[%s1 + $0x74] sm:$0xf]
      %v649 = vld [vmem:[%s1 + $0x78] sm:$0xf]
      %v650 = vld [vmem:[%s1 + $0x7c] sm:$0xf]
      %v651 = vld [vmem:[%s1 + $0x80] sm:$0xf]
      %v652 = vld [vmem:[%s1 + $0x84] sm:$0xf]
      %v653 = vld [vmem:[%s1 + $0x88] sm:$0xf]
      %v654 = vld [vmem:[%s1 + $0x8c] sm:$0xf]
      %v691 = vunpack.c.l.b16 %v619
      %v692 = vunpack.c.l.b16 %v620
      %v693 = vunpack.c.l.b16 %v621
      %v694 = vunpack.c.l.b16 %v622
      %v695 = vunpack.c.l.b16 %v623
      %v696 = vunpack.c.l.b16 %v624
      %v697 = vunpack.c.l.b16 %v625
      %v698 = vunpack.c.l.b16 %v626
      %v699 = vunpack.c.l.b16 %v627
      %v700 = vunpack.c.l.b16 %v628
      %v701 = vunpack.c.l.b16 %v629
      %v702 = vunpack.c.l.b16 %v630
      %v703 = vunpack.c.l.b16 %v631
      %v704 = vunpack.c.l.b16 %v632
      %v705 = vunpack.c.l.b16 %v633
      %v706 = vunpack.c.l.b16 %v634
      %v707 = vunpack.c.l.b16 %v635
      %v708 = vunpack.c.l.b16 %v636
      %v709 = vunpack.c.l.b16 %v637
      %v710 = vunpack.c.l.b16 %v638
      %v711 = vunpack.c.l.b16 %v639
      %v712 = vunpack.c.l.b16 %v640
      %v713 = vunpack.c.l.b16 %v641
      %v714 = vunpack.c.l.b16 %v642
      %v715 = vunpack.c.l.b16 %v643
      %v716 = vunpack.c.l.b16 %v644
      %v717 = vunpack.c.l.b16 %v645
      %v718 = vunpack.c.l.b16 %v646
      %v719 = vunpack.c.l.b16 %v647
      %v720 = vunpack.c.l.b16 %v648
      %v721 = vunpack.c.l.b16 %v649
      %v722 = vunpack.c.l.b16 %v650
      %v723 = vunpack.c.l.b16 %v651
      %v724 = vunpack.c.l.b16 %v652
      %v725 = vunpack.c.l.b16 %v653
      %v726 = vunpack.c.l.b16 %v654
      %v727 = vpack.c.b16 %v692, %v691
      %v728 = vpack.c.b16 %v694, %v693
      %v729 = vpack.c.b16 %v696, %v695
      %v730 = vpack.c.b16 %v698, %v697
      %v731 = vpack.c.b16 %v700, %v699
      %v732 = vpack.c.b16 %v702, %v701
      %v733 = vpack.c.b16 %v704, %v703
      %v734 = vpack.c.b16 %v706, %v705
      %v735 = vpack.c.b16 %v708, %v707
      %v736 = vpack.c.b16 %v710, %v709
      %v737 = vpack.c.b16 %v712, %v711
      %v738 = vpack.c.b16 %v714, %v713
      %v739 = vpack.c.b16 %v716, %v715
      %v740 = vpack.c.b16 %v718, %v717
      %v741 = vpack.c.b16 %v720, %v719
      %v742 = vpack.c.b16 %v722, %v721
      %v743 = vpack.c.b16 %v724, %v723
      %v744 = vpack.c.b16 %v726, %v725
      %v764 = vsel %vm541, %v532, 0
      %v767 = vsel %vm541, %v534, 0
      %v770 = vsel %vm541, %v536, 0
      %v773 = vsel %vm541, %v538, 0
      %v776 = vsel %vm541, %v540, 0
      %778 = vmatprep.subr.bf16.mxu0 0
      %779 = vmatpush1.bf16.msra.mxu0 %v727
      %780 = vmatprep.subr.bf16.mxu0 0
      %781 = vmatpush1.bf16.msra.mxu0 %v728
      %782 = vmatprep.subr.bf16.mxu0 0
      %783 = vmatpush1.bf16.msra.mxu0 %v729
      %784 = vmatprep.subr.bf16.mxu0 0
      %785 = vmatpush1.bf16.msra.mxu0 %v730
      %786 = vmatprep.subr.bf16.mxu0 0
      %787 = vmatpush1.bf16.msra.mxu0 %v731
      %788 = vmatprep.subr.bf16.mxu0 0
      %789 = vmatpush1.bf16.msra.mxu0 %v732
      %790 = vmatprep.subr.bf16.mxu0 0
      %791 = vmatpush1.bf16.msra.mxu0 %v733
      %792 = vmatprep.subr.bf16.mxu0 0
      %793 = vmatpush1.bf16.msra.mxu0 %v734
      %794 = vmatprep.subr.bf16.mxu0 0
      %795 = vmatpush1.bf16.msra.mxu0 %v735
      %796 = vmatprep.subr.bf16.mxu0 0
      %797 = vmatpush1.bf16.msra.mxu0 %v736
      %798 = vmatprep.subr.bf16.mxu0 0
      %799 = vmatpush1.bf16.msra.mxu0 %v737
      %800 = vmatprep.subr.bf16.mxu0 0
      %801 = vmatpush1.bf16.msra.mxu0 %v738
      %802 = vmatprep.subr.bf16.mxu0 0
      %803 = vmatpush1.bf16.msra.mxu0 %v739
      %804 = vmatprep.subr.bf16.mxu0 0
      %805 = vmatpush1.bf16.msra.mxu0 %v740
      %806 = vmatprep.subr.bf16.mxu0 0
      %807 = vmatpush1.bf16.msra.mxu0 %v741
      %808 = vmatprep.subr.bf16.mxu0 0
      %809 = vmatpush1.bf16.msra.mxu0 %v742
      %810 = vmatprep.mubr.bf16.mxu0 %v605
      %811 = vmatmul.mubr.bf16.gmra.mrb[0].mxu0 %v565
      %v812 = vpop.f32.mrb[0].mxu0
      %v813 = vadd.f32 0.0, %v812
      %v814 = vpop.f32.mrb[0].mxu0
      %v815 = vpop.f32.mrb[0].mxu0
      %v816 = vadd.f32 0.0, %v815
      %v817 = vpop.f32.mrb[0].mxu0
      %818 = vmatprep.mubr.bf16.mxu0 %v608
      %819 = vmatmul.mubr.bf16.gmra.mrb[0].mxu0 %v568
      %v820 = vpop.f32.mrb[0].mxu0
      %v821 = vadd.f32 0.0, %v820
      %v822 = vpop.f32.mrb[0].mxu0
      %v823 = vpop.f32.mrb[0].mxu0
      %v824 = vadd.f32 0.0, %v823
      %v825 = vpop.f32.mrb[0].mxu0
      %826 = vmatprep.mubr.bf16.mxu0 %v611
      %827 = vmatmul.mubr.bf16.gmra.mrb[0].mxu0 %v571
      %v828 = vpop.f32.mrb[0].mxu0
      %v829 = vadd.f32 0.0, %v828
      %v830 = vpop.f32.mrb[0].mxu0
      %v831 = vpop.f32.mrb[0].mxu0
      %v832 = vadd.f32 0.0, %v831
      %v833 = vpop.f32.mrb[0].mxu0
      %834 = vmatprep.mubr.bf16.mxu0 %v614
      %835 = vmatmul.mubr.bf16.gmra.mrb[0].mxu0 %v574
      %v836 = vpop.f32.mrb[0].mxu0
      %v837 = vadd.f32 0.0, %v836
      %v838 = vpop.f32.mrb[0].mxu0
      %v839 = vpop.f32.mrb[0].mxu0
      %v840 = vadd.f32 0.0, %v839
      %v841 = vpop.f32.mrb[0].mxu0
      %842 = vmatprep.mubr.bf16.mxu0 %v617
      %843 = vmatmul.mubr.bf16.gmra.mrb[0].mxu0 %v577
      %v844 = vpop.f32.mrb[0].mxu0
      %v845 = vadd.f32 0.0, %v844
      %v846 = vpop.f32.mrb[0].mxu0
      %v847 = vpop.f32.mrb[0].mxu0
      %v848 = vadd.f32 0.0, %v847
      %v849 = vpop.f32.mrb[0].mxu0
      %850 = vdwg.mxu0
      %851 = vmatprep.subr.bf16.mxu0 0
      %852 = vmatpush1.bf16.msra.mxu0 %v743
      %853 = vmatprep.subr.bf16.mxu0 0
      %854 = vmatpush1.bf16.msra.mxu0 %v744
      %855 = vmatprep.subr.bf16.mxu0 0
      %856 = vmatpush1.bf16.msra.mxu0 0
      %857 = vmatprep.subr.bf16.mxu0 0
      %858 = vmatpush1.bf16.msra.mxu0 0
      %859 = vmatprep.subr.bf16.mxu0 0
      %860 = vmatpush1.bf16.msra.mxu0 0
      %861 = vmatprep.subr.bf16.mxu0 0
      %862 = vmatpush1.bf16.msra.mxu0 0
      %863 = vmatprep.subr.bf16.mxu0 0
      %864 = vmatpush1.bf16.msra.mxu0 0
      %865 = vmatprep.subr.bf16.mxu0 0
      %866 = vmatpush1.bf16.msra.mxu0 0
      %867 = vmatprep.subr.bf16.mxu0 0
      %868 = vmatpush1.bf16.msra.mxu0 0
      %869 = vmatprep.subr.bf16.mxu0 0
      %870 = vmatpush1.bf16.msra.mxu0 0
      %871 = vmatprep.subr.bf16.mxu0 0
      %872 = vmatpush1.bf16.msra.mxu0 0
      %873 = vmatprep.subr.bf16.mxu0 0
      %874 = vmatpush1.bf16.msra.mxu0 0
      %875 = vmatprep.subr.bf16.mxu0 0
      %876 = vmatpush1.bf16.msra.mxu0 0
      %877 = vmatprep.subr.bf16.mxu0 0
      %878 = vmatpush1.bf16.msra.mxu0 0
      %879 = vmatprep.subr.bf16.mxu0 0
      %880 = vmatpush1.bf16.msra.mxu0 0
      %881 = vmatprep.subr.bf16.mxu0 0
      %882 = vmatpush1.bf16.msra.mxu0 0
      %883 = vmatprep.mubr.bf16.mxu0 0
      %884 = vmatmul.mubr.bf16.gmra.mrb[0].mxu0 %v764
      %v885 = vpop.f32.mrb[0].mxu0
      %v886 = vadd.f32 %v813, %v885
      %v887 = vpop.f32.mrb[0].mxu0
      %v888 = vpop.f32.mrb[0].mxu0
      %v889 = vadd.f32 %v816, %v888
      %v890 = vpop.f32.mrb[0].mxu0
      %891 = vmatprep.mubr.bf16.mxu0 0
      %892 = vmatmul.mubr.bf16.gmra.mrb[0].mxu0 %v767
      %v893 = vpop.f32.mrb[0].mxu0
      %v894 = vadd.f32 %v821, %v893
      %v895 = vpop.f32.mrb[0].mxu0
      %v896 = vpop.f32.mrb[0].mxu0
      %v897 = vadd.f32 %v824, %v896
      %v898 = vpop.f32.mrb[0].mxu0
      %899 = vmatprep.mubr.bf16.mxu0 0
      %900 = vmatmul.mubr.bf16.gmra.mrb[0].mxu0 %v770
      %v901 = vpop.f32.mrb[0].mxu0
      %v902 = vadd.f32 %v829, %v901
      %v903 = vpop.f32.mrb[0].mxu0
      %v904 = vpop.f32.mrb[0].mxu0
      %v905 = vadd.f32 %v832, %v904
      %v906 = vpop.f32.mrb[0].mxu0
      %907 = vmatprep.mubr.bf16.mxu0 0
      %908 = vmatmul.mubr.bf16.gmra.mrb[0].mxu0 %v773
      %v909 = vpop.f32.mrb[0].mxu0
      %v910 = vadd.f32 %v837, %v909
      %v911 = vpop.f32.mrb[0].mxu0
      %v912 = vpop.f32.mrb[0].mxu0
      %v913 = vadd.f32 %v840, %v912
      %v914 = vpop.f32.mrb[0].mxu0
      %915 = vmatprep.mubr.bf16.mxu0 0
      %916 = vmatmul.mubr.bf16.gmra.mrb[0].mxu0 %v776
      %v917 = vpop.f32.mrb[0].mxu0
      %v918 = vadd.f32 %v845, %v917
      %v919 = vpop.f32.mrb[0].mxu0
      %v920 = vpop.f32.mrb[0].mxu0
      %v921 = vadd.f32 %v848, %v920
      %v922 = vpop.f32.mrb[0].mxu0
      %923 = vdwg.mxu0
      %v924 = vld [vmem:[%s2] sm:$0x1]
      %v926 = vlaneseq
      %v927 = vshrl.u32 %v926, 7
      %v928 = vsub.s32 0, %v927
      %v929 = vrot.slane %v924, %v928
      %v931 = vmul.f32 %v886, %v929
      %v932 = vmul.f32 %v889, %v929
      %v933 = vmul.f32 %v894, %v929
      %v934 = vmul.f32 %v897, %v929
      %v935 = vmul.f32 %v902, %v929
      %v936 = vmul.f32 %v905, %v929
      %v937 = vmul.f32 %v910, %v929
      %v938 = vmul.f32 %v913, %v929
      %v939 = vmul.f32 %v918, %v929
      %v940 = vmul.f32 %v921, %v929
      %v941 = vld [vmem:[%s3] sm:$0x1]
      %v943 = vlaneseq
      %v944 = vshrl.u32 %v943, 7
      %v945 = vsub.s32 0, %v944
      %v946 = vrot.slane %v941, %v945
      %v948 = vadd.f32 %v931, %v946
      %v949 = vadd.f32 %v932, %v946
      %v950 = vadd.f32 %v933, %v946
      %v951 = vadd.f32 %v934, %v946
      %v952 = vadd.f32 %v935, %v946
      %v953 = vadd.f32 %v936, %v946
      %v954 = vadd.f32 %v937, %v946
      %v955 = vadd.f32 %v938, %v946
      %v956 = vadd.f32 %v939, %v946
      %v957 = vadd.f32 %v940, %v946
      %vm958 = vcmp.ge.f32.partialorder %v948, 0.0
      %vm959 = vcmp.ge.f32.partialorder %v949, 0.0
      %vm960 = vcmp.ge.f32.partialorder %v950, 0.0
      %vm961 = vcmp.ge.f32.partialorder %v951, 0.0
      %vm962 = vcmp.ge.f32.partialorder %v952, 0.0
      %vm963 = vcmp.ge.f32.partialorder %v953, 0.0
      %vm964 = vcmp.ge.f32.partialorder %v954, 0.0
      %vm965 = vcmp.ge.f32.partialorder %v955, 0.0
      %vm966 = vcmp.ge.f32.partialorder %v956, 0.0
      %vm967 = vcmp.ge.f32.partialorder %v957, 0.0
      %v968 = vmul.f32 %v948, 0.1
      %v969 = vmul.f32 %v949, 0.1
      %v970 = vmul.f32 %v950, 0.1
      %v971 = vmul.f32 %v951, 0.1
      %v972 = vmul.f32 %v952, 0.1
      %v973 = vmul.f32 %v953, 0.1
      %v974 = vmul.f32 %v954, 0.1
      %v975 = vmul.f32 %v955, 0.1
      %v976 = vmul.f32 %v956, 0.1
      %v977 = vmul.f32 %v957, 0.1
      %v978 = vsel %vm958, %v948, %v968
      %v979 = vsel %vm959, %v949, %v969
      %v980 = vsel %vm960, %v950, %v970
      %v981 = vsel %vm961, %v951, %v971
      %v982 = vsel %vm962, %v952, %v972
      %v983 = vsel %vm963, %v953, %v973
      %v984 = vsel %vm964, %v954, %v974
      %v985 = vsel %vm965, %v955, %v975
      %v986 = vsel %vm966, %v956, %v976
      %v987 = vsel %vm967, %v957, %v977
      %v988 = vpack.c.bf16 %v979, %v978
      %v989 = vpack.c.bf16 %v981, %v980
      %v990 = vpack.c.bf16 %v983, %v982
      %v991 = vpack.c.bf16 %v985, %v984
      %v992 = vpack.c.bf16 %v987, %v986
      %v998 = vunpack.c.l.b16 %v988
      %v999 = vunpack.c.h.b16 %v988
      %v1000 = vunpack.c.l.b16 %v989
      %v1001 = vunpack.c.h.b16 %v989
      %v1002 = vunpack.c.l.b16 %v990
      %v1003 = vunpack.c.h.b16 %v990
      %v1004 = vunpack.c.l.b16 %v991
      %v1005 = vunpack.c.h.b16 %v991
      %v1006 = vunpack.c.l.b16 %v992
      %v1007 = vunpack.c.h.b16 %v992
      %v1008 = vpack.c.b16 %v998, %v998
      %v1009 = vpack.c.b16 %v999, %v999
      %v1010 = vpack.c.b16 %v1000, %v1000
      %v1011 = vpack.c.b16 %v1001, %v1001
      %v1012 = vpack.c.b16 %v1002, %v1002
      %v1013 = vpack.c.b16 %v1003, %v1003
      %v1014 = vpack.c.b16 %v1004, %v1004
      %v1015 = vpack.c.b16 %v1005, %v1005
      %v1016 = vpack.c.b16 %v1006, %v1006
      %v1017 = vpack.c.b16 %v1007, %v1007
      %vm1028 = vcmask 257024
      %1029 = vst.msk [vmem:[%s197] sm:$0xf] %vm1028, %v1008
      %1030 = vst.msk [vmem:[%s197 + $0x4] sm:$0xf] %vm1028, %v1009
      %1031 = vst.msk [vmem:[%s197 + $0x8] sm:$0xf] %vm1028, %v1010
      %1032 = vst.msk [vmem:[%s197 + $0xc] sm:$0xf] %vm1028, %v1011
      %1033 = vst.msk [vmem:[%s197 + $0x10] sm:$0xf] %vm1028, %v1012
      %1034 = vst.msk [vmem:[%s197 + $0x14] sm:$0xf] %vm1028, %v1013
      %1035 = vst.msk [vmem:[%s197 + $0x18] sm:$0xf] %vm1028, %v1014
      %1036 = vst.msk [vmem:[%s197 + $0x1c] sm:$0xf] %vm1028, %v1015
      %1037 = vst.msk [vmem:[%s197 + $0x20] sm:$0xf] %vm1028, %v1016
      %1038 = vst.msk [vmem:[%s197 + $0x24] sm:$0xf] %vm1028, %v1017
      %p1039 = scmp.lt.s32.totalorder %s15, 1
      %s1040 = scalar_select %p1039, %s15, 1
      %s1041 = smul.addr %s1040, 10
      %s1042 = smul.addr %s1041, 4
      %s1043 = scalar_lea.vmem %s4, %s1042
      // Predicated region
      $region37: #{elannet_tiny_forward.24} parent=35 // pred_check
        %p1044 = pneg %p122
      $region38: #{elannet_tiny_forward.24} parent=35 // pred_check_branch
        %1046 = sbr.rel (%p1044) target = $region40
      $region39: #{elannet_tiny_forward.24} parent=35 // pred_region
        _
      $region40: #{elannet_tiny_forward.24} parent=35 // pred_fallthru
        _
    $region36: #{elannet_tiny_forward.24} parent=5 // pred_fallthru
      _
    %p1047 = scmp.le.s32.totalorder 2, %s10
    // Predicated region
    $region41: #{elannet_tiny_forward.24} parent=5 // pred_check
      %p1048 = pneg %p1047
    $region42: #{elannet_tiny_forward.24} parent=5 // pred_check_branch
      %1050 = sbr.rel (%p1048) target = $region44
    $region43: #{elannet_tiny_forward.24} parent=5 // pred_region
      %s1051 = ssub.s32 %s10, 2
      // Predicated region
      $region45: #{elannet_tiny_forward.24} parent=43 // pred_check
        %p1052 = pneg %p128
      $region46: #{elannet_tiny_forward.24} parent=43 // pred_check_branch
        %1054 = sbr.rel (%p1052) target = $region48
      $region47: #{elannet_tiny_forward.24} parent=43 // pred_region
        %p1055 = scmp.lt.s32.totalorder %s16, 1
        %s1056 = scalar_select %p1055, %s16, 1
        %s1057 = smul.addr %s1056, 10
        %s1058 = smul.addr %s1057, 4
        %s1059 = scalar_lea.vmem %s4, %s1058
      $region48: #{elannet_tiny_forward.24} parent=43 // pred_fallthru
        _
    $region44: #{elannet_tiny_forward.24} parent=5 // pred_fallthru
      _
  $region6: #{elannet_tiny_forward.24} parent=0 // loop_footer
    %s14 = sadd.s32 1, %s10
  $region7: #{elannet_tiny_forward.24} parent=0 // loop_footer_branch
    %9 = sbr.rel target = $region3
  $region8: #{elannet_tiny_forward.24} parent=0 // loop_exit
    _

// kernel: elannet_tiny_forward.26
$region0: #{elannet_tiny_forward.26}
  #allocation0 [shape = 'u32[]', space=smem, size = 0x4, offset = 0x4, fixed_abs, tag = 'smem constant byte address 0x4 - core index']
  #allocation1 [shape = 'u32[144,128]{1,0:T(1,128)}', space=vmem, size = 0x12000, scoped, tag = 'internal scratch']
  %s0 = inlined_call_operand.vmem [shape: bf16[128,32], index: 0, kind: input, shape index: {}]
  %s1 = inlined_call_operand.vmem [shape: bf16[128,32], index: 1, kind: input, shape index: {}]
  %s2 = inlined_call_operand.vmem [shape: bf16[128,32], index: 2, kind: input, shape index: {}]
  %s3 = inlined_call_operand.vmem [shape: bf16[128,32], index: 3, kind: input, shape index: {}]
  %s4 = inlined_call_operand.vmem [shape: bf16[128,64], index: 4, kind: input, shape index: {}]
  %s5 = inlined_call_operand.vmem [shape: f32[1,64], index: 5, kind: input, shape index: {}]
  %s6 = inlined_call_operand.vmem [shape: f32[1,64], index: 6, kind: input, shape index: {}]
  %s7 = inlined_call_operand.vmem [shape: bf16[128,64], index: 7, kind: output, shape index: {}]
  %s8 = sld [smem:[#allocation0]]
  $region61: #{elannet_tiny_forward.26} parent=0
    _
  %s10 = ssub.s32 1, %s8
  %s11 = scalar_select 0, %s10, %s8
  loop: start=0, step=1, limit=4
  $region2: #{elannet_tiny_forward.26} parent=0 // loop_pre_header
    _
  $region3: #{elannet_tiny_forward.26} parent=0 // loop_header
    %s13 = sphi 0, %s17
    %p14 = scmp.ge.s32.totalorder %s13, 4
    %s23 = sphi 0, %s25
    %s26 = sphi 0, %s23
    %s27 = sphi 0, %s26
    %s43 = sphi 0, %s27
    %s49 = sphi 0, %s51
    %s52 = sphi 0, %s49
    %s53 = sphi 0, %s52
    %s69 = sphi 0, %s53
    %s75 = sphi 0, %s77
    %s78 = sphi 0, %s75
    %s79 = sphi 0, %s78
    %s95 = sphi 0, %s79
    %s101 = sphi 0, %s103
    %s104 = sphi 0, %s101
    %s105 = sphi 0, %s104
    %s121 = sphi 0, %s105
    %s125 = sphi 0, %s125
    %s127 = sphi 0, %s125
    %s128 = sphi 0, %s127
    %s142 = sphi 0, %s128
    %s146 = sphi 0, %s146
    %s148 = sphi 0, %s146
    %s149 = sphi 0, %s148
    %s163 = sphi 0, %s149
    %s167 = sphi 0, %s167
    %s169 = sphi 0, %s167
    %s170 = sphi 0, %s169
    %s184 = sphi 0, %s170
    %s190 = sphi 0, %s192
    %s193 = sphi 0, %s190
    %s194 = sphi 0, %s193
    %s210 = sphi 0, %s194
  $region4: #{elannet_tiny_forward.26} parent=0 // loop_header_branch
    %16 = sbr.rel (%p14) target = $region8
  $region5: #{elannet_tiny_forward.26} parent=0 // loop_body
    %s18 = ssub.s32 %s13, 1
    %s19 = ssub.s32 %s13, 2
    %s20 = sadd.s32 %s13, 1
    %s21 = ssub.s32 %s13, %s20
    %p22 = scmp.eq.s32.totalorder %s21, 0
    %s24 = sadd.s32 %s23, 1
    %s25 = scalar_select %p22, %s23, %s24
    %p28 = pneg %p22
    %p29 = scmp.eq.s32.totalorder %s13, 1
    %p30 = por %p28, %p29
    %p31 = scmp.ne.s32.totalorder %s23, %s26
    %p32 = scmp.eq.s32.totalorder %s13, 0
    %p33 = por %p31, %p32
    %p34 = scmp.ne.s32.totalorder %s23, %s26
    %p35 = scmp.eq.s32.totalorder %s18, 1
    %p36 = por %p34, %p35
    %p37 = scmp.ne.s32.totalorder %s26, %s27
    %p38 = scmp.eq.s32.totalorder %s18, 0
    %p39 = por %p37, %p38
    %p40 = scmp.ne.s32.totalorder %s26, %s27
    %p41 = scmp.eq.s32.totalorder %s19, 1
    %p42 = por %p40, %p41
    %p44 = scmp.ne.s32.totalorder %s27, %s43
    %p45 = scmp.eq.s32.totalorder %s19, 0
    %p46 = por %p44, %p45
    %s47 = ssub.s32 %s13, %s20
    %p48 = scmp.eq.s32.totalorder %s47, 0
    %s50 = sadd.s32 %s49, 1
    %s51 = scalar_select %p48, %s49, %s50
    %p54 = pneg %p48
    %p55 = scmp.eq.s32.totalorder %s13, 1
    %p56 = por %p54, %p55
    %p57 = scmp.ne.s32.totalorder %s49, %s52
    %p58 = scmp.eq.s32.totalorder %s13, 0
    %p59 = por %p57, %p58
    %p60 = scmp.ne.s32.totalorder %s49, %s52
    %p61 = scmp.eq.s32.totalorder %s18, 1
    %p62 = por %p60, %p61
    %p63 = scmp.ne.s32.totalorder %s52, %s53
    %p64 = scmp.eq.s32.totalorder %s18, 0
    %p65 = por %p63, %p64
    %p66 = scmp.ne.s32.totalorder %s52, %s53
    %p67 = scmp.eq.s32.totalorder %s19, 1
    %p68 = por %p66, %p67
    %p70 = scmp.ne.s32.totalorder %s53, %s69
    %p71 = scmp.eq.s32.totalorder %s19, 0
    %p72 = por %p70, %p71
    %s73 = ssub.s32 %s13, %s20
    %p74 = scmp.eq.s32.totalorder %s73, 0
    %s76 = sadd.s32 %s75, 1
    %s77 = scalar_select %p74, %s75, %s76
    %p80 = pneg %p74
    %p81 = scmp.eq.s32.totalorder %s13, 1
    %p82 = por %p80, %p81
    %p83 = scmp.ne.s32.totalorder %s75, %s78
    %p84 = scmp.eq.s32.totalorder %s13, 0
    %p85 = por %p83, %p84
    %p86 = scmp.ne.s32.totalorder %s75, %s78
    %p87 = scmp.eq.s32.totalorder %s18, 1
    %p88 = por %p86, %p87
    %p89 = scmp.ne.s32.totalorder %s78, %s79
    %p90 = scmp.eq.s32.totalorder %s18, 0
    %p91 = por %p89, %p90
    %p92 = scmp.ne.s32.totalorder %s78, %s79
    %p93 = scmp.eq.s32.totalorder %s19, 1
    %p94 = por %p92, %p93
    %p96 = scmp.ne.s32.totalorder %s79, %s95
    %p97 = scmp.eq.s32.totalorder %s19, 0
    %p98 = por %p96, %p97
    %s99 = ssub.s32 %s13, %s20
    %p100 = scmp.eq.s32.totalorder %s99, 0
    %s102 = sadd.s32 %s101, 1
    %s103 = scalar_select %p100, %s101, %s102
    %p106 = pneg %p100
    %p107 = scmp.eq.s32.totalorder %s13, 1
    %p108 = por %p106, %p107
    %p109 = scmp.ne.s32.totalorder %s101, %s104
    %p110 = scmp.eq.s32.totalorder %s13, 0
    %p111 = por %p109, %p110
    %p112 = scmp.ne.s32.totalorder %s101, %s104
    %p113 = scmp.eq.s32.totalorder %s18, 1
    %p114 = por %p112, %p113
    %p115 = scmp.ne.s32.totalorder %s104, %s105
    %p116 = scmp.eq.s32.totalorder %s18, 0
    %p117 = por %p115, %p116
    %p118 = scmp.ne.s32.totalorder %s104, %s105
    %p119 = scmp.eq.s32.totalorder %s19, 1
    %p120 = por %p118, %p119
    %p122 = scmp.ne.s32.totalorder %s105, %s121
    %p123 = scmp.eq.s32.totalorder %s19, 0
    %p124 = por %p122, %p123
    %s126 = sadd.s32 %s125, 1
    %p129 = scmp.eq.s32.totalorder %s13, 1
    %p130 = scmp.ne.s32.totalorder %s125, %s127
    %p131 = scmp.eq.s32.totalorder %s13, 0
    %p132 = por %p130, %p131
    %p133 = scmp.ne.s32.totalorder %s125, %s127
    %p134 = scmp.eq.s32.totalorder %s18, 1
    %p135 = por %p133, %p134
    %p136 = scmp.ne.s32.totalorder %s127, %s128
    %p137 = scmp.eq.s32.totalorder %s18, 0
    %p138 = por %p136, %p137
    %p139 = scmp.ne.s32.totalorder %s127, %s128
    %p140 = scmp.eq.s32.totalorder %s19, 1
    %p141 = por %p139, %p140
    %p143 = scmp.ne.s32.totalorder %s128, %s142
    %p144 = scmp.eq.s32.totalorder %s19, 0
    %p145 = por %p143, %p144
    %s147 = sadd.s32 %s146, 1
    %p150 = scmp.eq.s32.totalorder %s13, 1
    %p151 = scmp.ne.s32.totalorder %s146, %s148
    %p152 = scmp.eq.s32.totalorder %s13, 0
    %p153 = por %p151, %p152
    %p154 = scmp.ne.s32.totalorder %s146, %s148
    %p155 = scmp.eq.s32.totalorder %s18, 1
    %p156 = por %p154, %p155
    %p157 = scmp.ne.s32.totalorder %s148, %s149
    %p158 = scmp.eq.s32.totalorder %s18, 0
    %p159 = por %p157, %p158
    %p160 = scmp.ne.s32.totalorder %s148, %s149
    %p161 = scmp.eq.s32.totalorder %s19, 1
    %p162 = por %p160, %p161
    %p164 = scmp.ne.s32.totalorder %s149, %s163
    %p165 = scmp.eq.s32.totalorder %s19, 0
    %p166 = por %p164, %p165
    %s168 = sadd.s32 %s167, 1
    %p171 = scmp.eq.s32.totalorder %s13, 1
    %p172 = scmp.ne.s32.totalorder %s167, %s169
    %p173 = scmp.eq.s32.totalorder %s13, 0
    %p174 = por %p172, %p173
    %p175 = scmp.ne.s32.totalorder %s167, %s169
    %p176 = scmp.eq.s32.totalorder %s18, 1
    %p177 = por %p175, %p176
    %p178 = scmp.ne.s32.totalorder %s169, %s170
    %p179 = scmp.eq.s32.totalorder %s18, 0
    %p180 = por %p178, %p179
    %p181 = scmp.ne.s32.totalorder %s169, %s170
    %p182 = scmp.eq.s32.totalorder %s19, 1
    %p183 = por %p181, %p182
    %p185 = scmp.ne.s32.totalorder %s170, %s184
    %p186 = scmp.eq.s32.totalorder %s19, 0
    %p187 = por %p185, %p186
    %s188 = ssub.s32 %s13, %s20
    %p189 = scmp.eq.s32.totalorder %s188, 0
    %s191 = sadd.s32 %s190, 1
    %s192 = scalar_select %p189, %s190, %s191
    %p195 = pneg %p189
    %p196 = scmp.eq.s32.totalorder %s13, 1
    %p197 = por %p195, %p196
    %p198 = scmp.ne.s32.totalorder %s190, %s193
    %p199 = scmp.eq.s32.totalorder %s13, 0
    %p200 = por %p198, %p199
    %p201 = scmp.ne.s32.totalorder %s190, %s193
    %p202 = scmp.eq.s32.totalorder %s18, 1
    %p203 = por %p201, %p202
    %p204 = scmp.ne.s32.totalorder %s193, %s194
    %p205 = scmp.eq.s32.totalorder %s18, 0
    %p206 = por %p204, %p205
    %p207 = scmp.ne.s32.totalorder %s193, %s194
    %p208 = scmp.eq.s32.totalorder %s19, 1
    %p209 = por %p207, %p208
    %p211 = scmp.ne.s32.totalorder %s194, %s210
    %p212 = scmp.eq.s32.totalorder %s19, 0
    %p213 = por %p211, %p212
    %p214 = scmp.le.s32.totalorder 1, %s13
    %p215 = scmp.lt.s32.totalorder %s13, 3
    %p216 = pnand %p214, %p215
    %p217 = pneg %p216
    // Predicated region
    $region9: #{elannet_tiny_forward.26} parent=5 // pred_check
      _
    $region10: #{elannet_tiny_forward.26} parent=5 // pred_check_branch
      %219 = sbr.rel (%p216) target = $region12
    $region11: #{elannet_tiny_forward.26} parent=5 // pred_region
      %s220 = ssub.s32 %s13, 1
      // Predicated region
      $region13: #{elannet_tiny_forward.26} parent=11 // pred_check
        %p221 = pneg %p138
      $region14: #{elannet_tiny_forward.26} parent=11 // pred_check_branch
        %223 = sbr.rel (%p221) target = $region16
      $region15: #{elannet_tiny_forward.26} parent=11 // pred_region
        _
      $region16: #{elannet_tiny_forward.26} parent=11 // pred_fallthru
        _
      // Predicated region
      $region17: #{elannet_tiny_forward.26} parent=11 // pred_check
        %p224 = pneg %p159
      $region18: #{elannet_tiny_forward.26} parent=11 // pred_check_branch
        %226 = sbr.rel (%p224) target = $region20
      $region19: #{elannet_tiny_forward.26} parent=11 // pred_region
        _
      $region20: #{elannet_tiny_forward.26} parent=11 // pred_fallthru
        _
      // Predicated region
      $region21: #{elannet_tiny_forward.26} parent=11 // pred_check
        %p227 = pneg %p180
      $region22: #{elannet_tiny_forward.26} parent=11 // pred_check_branch
        %229 = sbr.rel (%p227) target = $region24
      $region23: #{elannet_tiny_forward.26} parent=11 // pred_region
        _
      $region24: #{elannet_tiny_forward.26} parent=11 // pred_fallthru
        _
    $region12: #{elannet_tiny_forward.26} parent=5 // pred_fallthru
      _
    %p230 = scmp.lt.s32.totalorder %s13, 2
    // Predicated region
    $region25: #{elannet_tiny_forward.26} parent=5 // pred_check
      %p231 = pneg %p230
    $region26: #{elannet_tiny_forward.26} parent=5 // pred_check_branch
      %233 = sbr.rel (%p231) target = $region28
    $region27: #{elannet_tiny_forward.26} parent=5 // pred_region
      // Predicated region
      $region29: #{elannet_tiny_forward.26} parent=27 // pred_check
        %p234 = pneg %p33
      $region30: #{elannet_tiny_forward.26} parent=27 // pred_check_branch
        %236 = sbr.rel (%p234) target = $region32
      $region31: #{elannet_tiny_forward.26} parent=27 // pred_region
        %s237 = smul.u32 8, %s13
        %p238 = scmp.lt.s32.totalorder %s237, 15
        %s239 = scalar_select %p238, %s237, 15
        %s240 = smul.addr %s239, 4
        %s241 = scalar_lea.vmem %s0, %s240
        %s242 = smul.u32 8, %s13
      $region32: #{elannet_tiny_forward.26} parent=27 // pred_fallthru
        _
      // Predicated region
      $region33: #{elannet_tiny_forward.26} parent=27 // pred_check
        %p243 = pneg %p59
      $region34: #{elannet_tiny_forward.26} parent=27 // pred_check_branch
        %245 = sbr.rel (%p243) target = $region36
      $region35: #{elannet_tiny_forward.26} parent=27 // pred_region
        %s246 = smul.u32 8, %s13
        %p247 = scmp.lt.s32.totalorder %s246, 15
        %s248 = scalar_select %p247, %s246, 15
        %s249 = smul.addr %s248, 4
        %s250 = scalar_lea.vmem %s1, %s249
        %s251 = smul.u32 8, %s13
      $region36: #{elannet_tiny_forward.26} parent=27 // pred_fallthru
        _
      // Predicated region
      $region37: #{elannet_tiny_forward.26} parent=27 // pred_check
        %p252 = pneg %p85
      $region38: #{elannet_tiny_forward.26} parent=27 // pred_check_branch
        %254 = sbr.rel (%p252) target = $region40
      $region39: #{elannet_tiny_forward.26} parent=27 // pred_region
        %s255 = smul.u32 8, %s13
        %p256 = scmp.lt.s32.totalorder %s255, 15
        %s257 = scalar_select %p256, %s255, 15
        %s258 = smul.addr %s257, 4
        %s259 = scalar_lea.vmem %s2, %s258
        %s260 = smul.u32 8, %s13
      $region40: #{elannet_tiny_forward.26} parent=27 // pred_fallthru
        _
      // Predicated region
      $region41: #{elannet_tiny_forward.26} parent=27 // pred_check
        %p261 = pneg %p111
      $region42: #{elannet_tiny_forward.26} parent=27 // pred_check_branch
        %263 = sbr.rel (%p261) target = $region44
      $region43: #{elannet_tiny_forward.26} parent=27 // pred_region
        %s264 = smul.u32 8, %s13
        %p265 = scmp.lt.s32.totalorder %s264, 15
        %s266 = scalar_select %p265, %s264, 15
        %s267 = smul.addr %s266, 4
        %s268 = scalar_lea.vmem %s3, %s267
        %s269 = smul.u32 8, %s13
      $region44: #{elannet_tiny_forward.26} parent=27 // pred_fallthru
        _
    $region28: #{elannet_tiny_forward.26} parent=5 // pred_fallthru
      _
    %p270 = scmp.le.s32.totalorder 1, %s13
    %p271 = scmp.lt.s32.totalorder %s13, 3
    %p272 = pnand %p270, %p271
    %p273 = pneg %p272
    // Predicated region
    $region45: #{elannet_tiny_forward.26} parent=5 // pred_check
      _
    $region46: #{elannet_tiny_forward.26} parent=5 // pred_check_branch
      %275 = sbr.rel (%p272) target = $region48
    $region47: #{elannet_tiny_forward.26} parent=5 // pred_region
      %s276 = ssub.s32 %s13, 1
      %s277 = smul.u32 8, %s18
      %p278 = scmp.lt.s32.totalorder %s277, 15
      %s279 = scalar_select %p278, %s277, 15
      %s280 = smul.addr %s279, 4
      %s281 = scalar_lea.vmem %s0, %s280
      %p282 = pneg %p39
      %p283 = pneg %p36
      %s284 = smul.u32 8, %s18
      %p285 = scmp.lt.s32.totalorder %s284, 15
      %s286 = scalar_select %p285, %s284, 15
      %s287 = smul.addr %s286, 4
      %s288 = scalar_lea.vmem %s1, %s287
      %p289 = pneg %p65
      %p290 = pneg %p62
      %s291 = smul.u32 8, %s18
      %p292 = scmp.lt.s32.totalorder %s291, 15
      %s293 = scalar_select %p292, %s291, 15
      %s294 = smul.addr %s293, 4
      %s295 = scalar_lea.vmem %s2, %s294
      %p296 = pneg %p91
      %p297 = pneg %p88
      %s298 = smul.u32 8, %s18
      %p299 = scmp.lt.s32.totalorder %s298, 15
      %s300 = scalar_select %p299, %s298, 15
      %s301 = smul.addr %s300, 4
      %s302 = scalar_lea.vmem %s3, %s301
      %p303 = pneg %p117
      %p304 = pneg %p114
      %p305 = pneg %p138
      %p306 = pneg %p135
      %p307 = pneg %p159
      %p308 = pneg %p156
      %p309 = pneg %p180
      %p310 = pneg %p177
      %p311 = pneg %p206
      %p312 = pneg %p203
      %s313 = smul.u32 8, %s18
      %p314 = scmp.lt.s32.totalorder %s313, 15
      %s315 = scalar_select %p314, %s313, 15
      %s316 = smul.addr %s315, 4
      %s317 = scalar_lea.vmem %s7, %s316
      %s318 = smul.u32 8, %s18
      %p319 = scmp.lt.s32.totalorder %s318, 15
      %s320 = scalar_select %p319, %s318, 15
      %s321 = smul.addr %s320, 4
      %s322 = scalar_lea.vmem %s0, %s321
      %s323 = smul.u32 8, %s18
      %s324 = smul.u32 8, %s18
      %p325 = scmp.lt.s32.totalorder %s324, 15
      %s326 = scalar_select %p325, %s324, 15
      %s327 = smul.addr %s326, 4
      %s328 = scalar_lea.vmem %s1, %s327
      %s329 = smul.u32 8, %s18
      %s330 = smul.u32 8, %s18
      %p331 = scmp.lt.s32.totalorder %s330, 15
      %s332 = scalar_select %p331, %s330, 15
      %s333 = smul.addr %s332, 4
      %s334 = scalar_lea.vmem %s2, %s333
      %s335 = smul.u32 8, %s18
      %s336 = smul.u32 8, %s18
      %p337 = scmp.lt.s32.totalorder %s336, 15
      %s338 = scalar_select %p337, %s336, 15
      %s339 = smul.addr %s338, 4
      %s340 = scalar_lea.vmem %s3, %s339
      %s341 = smul.u32 8, %s18
      %s342 = smul.u32 8, %s18
      %p343 = scmp.lt.s32.totalorder %s342, 15
      %s344 = scalar_select %p343, %s342, 15
      %s345 = smul.addr %s344, 4
      %s346 = scalar_lea.vmem %s7, %s345
      %s347 = smul.u32 8, %s18
      %v349 = vld [vmem:[%s322] sm:$0xf]
      %v350 = vld [vmem:[%s322 + $0x4] sm:$0xf]
      %v351 = vld [vmem:[%s322 + $0x8] sm:$0xf]
      %v352 = vld [vmem:[%s322 + $0xc] sm:$0xf]
      %v353 = vld [vmem:[%s322 + $0x10] sm:$0xf]
      %v354 = vld [vmem:[%s322 + $0x14] sm:$0xf]
      %v355 = vld [vmem:[%s322 + $0x18] sm:$0xf]
      %v356 = vld [vmem:[%s322 + $0x1c] sm:$0xf]
      %v357 = vld [vmem:[%s328] sm:$0xf]
      %v358 = vld [vmem:[%s328 + $0x4] sm:$0xf]
      %v359 = vld [vmem:[%s328 + $0x8] sm:$0xf]
      %v360 = vld [vmem:[%s328 + $0xc] sm:$0xf]
      %v361 = vld [vmem:[%s328 + $0x10] sm:$0xf]
      %v362 = vld [vmem:[%s328 + $0x14] sm:$0xf]
      %v363 = vld [vmem:[%s328 + $0x18] sm:$0xf]
      %v364 = vld [vmem:[%s328 + $0x1c] sm:$0xf]
      %v365 = vld [vmem:[%s334] sm:$0xf]
      %v366 = vld [vmem:[%s334 + $0x4] sm:$0xf]
      %v367 = vld [vmem:[%s334 + $0x8] sm:$0xf]
      %v368 = vld [vmem:[%s334 + $0xc] sm:$0xf]
      %v369 = vld [vmem:[%s334 + $0x10] sm:$0xf]
      %v370 = vld [vmem:[%s334 + $0x14] sm:$0xf]
      %v371 = vld [vmem:[%s334 + $0x18] sm:$0xf]
      %v372 = vld [vmem:[%s334 + $0x1c] sm:$0xf]
      %v373 = vld [vmem:[%s340] sm:$0xf]
      %v374 = vld [vmem:[%s340 + $0x4] sm:$0xf]
      %v375 = vld [vmem:[%s340 + $0x8] sm:$0xf]
      %v376 = vld [vmem:[%s340 + $0xc] sm:$0xf]
      %v377 = vld [vmem:[%s340 + $0x10] sm:$0xf]
      %v378 = vld [vmem:[%s340 + $0x14] sm:$0xf]
      %v379 = vld [vmem:[%s340 + $0x18] sm:$0xf]
      %v380 = vld [vmem:[%s340 + $0x1c] sm:$0xf]
      %v389 = vunpack.c.l.b16 %v349
      %v390 = vunpack.c.l.b16 %v350
      %v391 = vunpack.c.l.b16 %v351
      %v392 = vunpack.c.l.b16 %v352
      %v393 = vunpack.c.l.b16 %v353
      %v394 = vunpack.c.l.b16 %v354
      %v395 = vunpack.c.l.b16 %v355
      %v396 = vunpack.c.l.b16 %v356
      %v397 = vpack.c.b16 %v390, %v389
      %v398 = vpack.c.b16 %v392, %v391
      %v399 = vpack.c.b16 %v394, %v393
      %v400 = vpack.c.b16 %v396, %v395
      %v409 = vunpack.c.l.b16 %v357
      %v410 = vunpack.c.l.b16 %v358
      %v411 = vunpack.c.l.b16 %v359
      %v412 = vunpack.c.l.b16 %v360
      %v413 = vunpack.c.l.b16 %v361
      %v414 = vunpack.c.l.b16 %v362
      %v415 = vunpack.c.l.b16 %v363
      %v416 = vunpack.c.l.b16 %v364
      %v417 = vpack.c.b16 %v410, %v409
      %v418 = vpack.c.b16 %v412, %v411
      %v419 = vpack.c.b16 %v414, %v413
      %v420 = vpack.c.b16 %v416, %v415
      %421 = vrot.lane.b32.xlu0 %v417, 32
      %v422 = vpop.permute.xlu0 %421
      %423 = vrot.lane.b32.xlu0 %v418, 32
      %v424 = vpop.permute.xlu0 %423
      %425 = vrot.lane.b32.xlu0 %v419, 32
      %v426 = vpop.permute.xlu0 %425
      %427 = vrot.lane.b32.xlu0 %v420, 32
      %v428 = vpop.permute.xlu0 %427
      %v437 = vunpack.c.l.b16 %v365
      %v438 = vunpack.c.l.b16 %v366
      %v439 = vunpack.c.l.b16 %v367
      %v440 = vunpack.c.l.b16 %v368
      %v441 = vunpack.c.l.b16 %v369
      %v442 = vunpack.c.l.b16 %v370
      %v443 = vunpack.c.l.b16 %v371
      %v444 = vunpack.c.l.b16 %v372
      %v445 = vpack.c.b16 %v438, %v437
      %v446 = vpack.c.b16 %v440, %v439
      %v447 = vpack.c.b16 %v442, %v441
      %v448 = vpack.c.b16 %v444, %v443
      %449 = vrot.lane.b32.xlu0 %v445, 64
      %v450 = vpop.permute.xlu0 %449
      %451 = vrot.lane.b32.xlu0 %v446, 64
      %v452 = vpop.permute.xlu0 %451
      %453 = vrot.lane.b32.xlu0 %v447, 64
      %v454 = vpop.permute.xlu0 %453
      %455 = vrot.lane.b32.xlu0 %v448, 64
      %v456 = vpop.permute.xlu0 %455
      %v465 = vunpack.c.l.b16 %v373
      %v466 = vunpack.c.l.b16 %v374
      %v467 = vunpack.c.l.b16 %v375
      %v468 = vunpack.c.l.b16 %v376
      %v469 = vunpack.c.l.b16 %v377
      %v470 = vunpack.c.l.b16 %v378
      %v471 = vunpack.c.l.b16 %v379
      %v472 = vunpack.c.l.b16 %v380
      %v473 = vpack.c.b16 %v466, %v465
      %v474 = vpack.c.b16 %v468, %v467
      %v475 = vpack.c.b16 %v470, %v469
      %v476 = vpack.c.b16 %v472, %v471
      %477 = vrot.lane.b32.xlu0 %v473, 96
      %v478 = vpop.permute.xlu0 %477
      %479 = vrot.lane.b32.xlu0 %v474, 96
      %v480 = vpop.permute.xlu0 %479
      %481 = vrot.lane.b32.xlu0 %v475, 96
      %v482 = vpop.permute.xlu0 %481
      %483 = vrot.lane.b32.xlu0 %v476, 96
      %v484 = vpop.permute.xlu0 %483
      %vm485 = vcmask 261120
      %v488 = vsel %vm485, %v397, %v422
      %v491 = vsel %vm485, %v398, %v424
      %v494 = vsel %vm485, %v399, %v426
      %v497 = vsel %vm485, %v400, %v428
      %vm498 = vcmask 523264
      %v500 = vsel %vm498, %v488, %v450
      %v502 = vsel %vm498, %v491, %v452
      %v504 = vsel %vm498, %v494, %v454
      %v506 = vsel %vm498, %v497, %v456
      %vm507 = vcmask 785408
      %v509 = vsel %vm507, %v500, %v478
      %v512 = vsel %vm507, %v502, %v480
      %v515 = vsel %vm507, %v504, %v482
      %v518 = vsel %vm507, %v506, %v484
      %v520 = vld [vmem:[%s4] sm:$0xf]
      %v521 = vld [vmem:[%s4 + $0x4] sm:$0xf]
      %v522 = vld [vmem:[%s4 + $0x8] sm:$0xf]
      %v523 = vld [vmem:[%s4 + $0xc] sm:$0xf]
      %v524 = vld [vmem:[%s4 + $0x10] sm:$0xf]
      %v525 = vld [vmem:[%s4 + $0x14] sm:$0xf]
      %v526 = vld [vmem:[%s4 + $0x18] sm:$0xf]
      %v527 = vld [vmem:[%s4 + $0x1c] sm:$0xf]
      %v528 = vld [vmem:[%s4 + $0x20] sm:$0xf]
      %v529 = vld [vmem:[%s4 + $0x24] sm:$0xf]
      %v530 = vld [vmem:[%s4 + $0x28] sm:$0xf]
      %v531 = vld [vmem:[%s4 + $0x2c] sm:$0xf]
      %v532 = vld [vmem:[%s4 + $0x30] sm:$0xf]
      %v533 = vld [vmem:[%s4 + $0x34] sm:$0xf]
      %v534 = vld [vmem:[%s4 + $0x38] sm:$0xf]
      %v535 = vld [vmem:[%s4 + $0x3c] sm:$0xf]
      %v552 = vunpack.c.l.b16 %v520
      %v553 = vunpack.c.l.b16 %v521
      %v554 = vunpack.c.l.b16 %v522
      %v555 = vunpack.c.l.b16 %v523
      %v556 = vunpack.c.l.b16 %v524
      %v557 = vunpack.c.l.b16 %v525
      %v558 = vunpack.c.l.b16 %v526
      %v559 = vunpack.c.l.b16 %v527
      %v560 = vunpack.c.l.b16 %v528
      %v561 = vunpack.c.l.b16 %v529
      %v562 = vunpack.c.l.b16 %v530
      %v563 = vunpack.c.l.b16 %v531
      %v564 = vunpack.c.l.b16 %v532
      %v565 = vunpack.c.l.b16 %v533
      %v566 = vunpack.c.l.b16 %v534
      %v567 = vunpack.c.l.b16 %v535
      %v568 = vpack.c.b16 %v553, %v552
      %v569 = vpack.c.b16 %v555, %v554
      %v570 = vpack.c.b16 %v557, %v556
      %v571 = vpack.c.b16 %v559, %v558
      %v572 = vpack.c.b16 %v561, %v560
      %v573 = vpack.c.b16 %v563, %v562
      %v574 = vpack.c.b16 %v565, %v564
      %v575 = vpack.c.b16 %v567, %v566
      %584 = vmatprep.subr.bf16.mxu0 0
      %585 = vmatpush1.bf16.msra.mxu0 %v568
      %586 = vmatprep.subr.bf16.mxu0 0
      %587 = vmatpush1.bf16.msra.mxu0 %v569
      %588 = vmatprep.subr.bf16.mxu0 0
      %589 = vmatpush1.bf16.msra.mxu0 %v570
      %590 = vmatprep.subr.bf16.mxu0 0
      %591 = vmatpush1.bf16.msra.mxu0 %v571
      %592 = vmatprep.subr.bf16.mxu0 0
      %593 = vmatpush1.bf16.msra.mxu0 %v572
      %594 = vmatprep.subr.bf16.mxu0 0
      %595 = vmatpush1.bf16.msra.mxu0 %v573
      %596 = vmatprep.subr.bf16.mxu0 0
      %597 = vmatpush1.bf16.msra.mxu0 %v574
      %598 = vmatprep.subr.bf16.mxu0 0
      %599 = vmatpush1.bf16.msra.mxu0 %v575
      %600 = vmatprep.subr.bf16.mxu0 0
      %601 = vmatpush1.bf16.msra.mxu0 0
      %602 = vmatprep.subr.bf16.mxu0 0
      %603 = vmatpush1.bf16.msra.mxu0 0
      %604 = vmatprep.subr.bf16.mxu0 0
      %605 = vmatpush1.bf16.msra.mxu0 0
      %606 = vmatprep.subr.bf16.mxu0 0
      %607 = vmatpush1.bf16.msra.mxu0 0
      %608 = vmatprep.subr.bf16.mxu0 0
      %609 = vmatpush1.bf16.msra.mxu0 0
      %610 = vmatprep.subr.bf16.mxu0 0
      %611 = vmatpush1.bf16.msra.mxu0 0
      %612 = vmatprep.subr.bf16.mxu0 0
      %613 = vmatpush1.bf16.msra.mxu0 0
      %614 = vmatprep.subr.bf16.mxu0 0
      %615 = vmatpush1.bf16.msra.mxu0 0
      %616 = vmatprep.mubr.bf16.mxu0 0
      %617 = vmatmul.mubr.bf16.gmra.mrb[0].mxu0 %v509
      %v618 = vpop.f32.mrb[0].mxu0
      %v619 = vadd.f32 0.0, %v618
      %v620 = vpop.f32.mrb[0].mxu0
      %v621 = vpop.f32.mrb[0].mxu0
      %v622 = vadd.f32 0.0, %v621
      %v623 = vpop.f32.mrb[0].mxu0
      %624 = vmatprep.mubr.bf16.mxu0 0
      %625 = vmatmul.mubr.bf16.gmra.mrb[0].mxu0 %v512
      %v626 = vpop.f32.mrb[0].mxu0
      %v627 = vadd.f32 0.0, %v626
      %v628 = vpop.f32.mrb[0].mxu0
      %v629 = vpop.f32.mrb[0].mxu0
      %v630 = vadd.f32 0.0, %v629
      %v631 = vpop.f32.mrb[0].mxu0
      %632 = vmatprep.mubr.bf16.mxu0 0
      %633 = vmatmul.mubr.bf16.gmra.mrb[0].mxu0 %v515
      %v634 = vpop.f32.mrb[0].mxu0
      %v635 = vadd.f32 0.0, %v634
      %v636 = vpop.f32.mrb[0].mxu0
      %v637 = vpop.f32.mrb[0].mxu0
      %v638 = vadd.f32 0.0, %v637
      %v639 = vpop.f32.mrb[0].mxu0
      %640 = vmatprep.mubr.bf16.mxu0 0
      %641 = vmatmul.mubr.bf16.gmra.mrb[0].mxu0 %v518
      %v642 = vpop.f32.mrb[0].mxu0
      %v643 = vadd.f32 0.0, %v642
      %v644 = vpop.f32.mrb[0].mxu0
      %v645 = vpop.f32.mrb[0].mxu0
      %v646 = vadd.f32 0.0, %v645
      %v647 = vpop.f32.mrb[0].mxu0
      %648 = vdwg.mxu0
      %v649 = vld [vmem:[%s5] sm:$0x1]
      %v651 = vlaneseq
      %v652 = vshrl.u32 %v651, 7
      %v653 = vsub.s32 0, %v652
      %v654 = vrot.slane %v649, %v653
      %v656 = vmul.f32 %v619, %v654
      %v657 = vmul.f32 %v622, %v654
      %v658 = vmul.f32 %v627, %v654
      %v659 = vmul.f32 %v630, %v654
      %v660 = vmul.f32 %v635, %v654
      %v661 = vmul.f32 %v638, %v654
      %v662 = vmul.f32 %v643, %v654
      %v663 = vmul.f32 %v646, %v654
      %v664 = vld [vmem:[%s6] sm:$0x1]
      %v666 = vlaneseq
      %v667 = vshrl.u32 %v666, 7
      %v668 = vsub.s32 0, %v667
      %v669 = vrot.slane %v664, %v668
      %v671 = vadd.f32 %v656, %v669
      %v672 = vadd.f32 %v657, %v669
      %v673 = vadd.f32 %v658, %v669
      %v674 = vadd.f32 %v659, %v669
      %v675 = vadd.f32 %v660, %v669
      %v676 = vadd.f32 %v661, %v669
      %v677 = vadd.f32 %v662, %v669
      %v678 = vadd.f32 %v663, %v669
      %v679 = vsub.f32 0.0, %v671
      %v680 = vsub.f32 0.0, %v672
      %v681 = vsub.f32 0.0, %v673
      %v682 = vsub.f32 0.0, %v674
      %v683 = vsub.f32 0.0, %v675
      %v684 = vsub.f32 0.0, %v676
      %v685 = vsub.f32 0.0, %v677
      %v686 = vsub.f32 0.0, %v678
      %v687 = vmul.f32 %v679, 1.442695
      %v688 = vpow.pop %v687
      %v689 = vmul.f32 %v680, 1.442695
      %v690 = vpow.pop %v689
      %v691 = vmul.f32 %v681, 1.442695
      %v692 = vpow.pop %v691
      %v693 = vmul.f32 %v682, 1.442695
      %v694 = vpow.pop %v693
      %v695 = vmul.f32 %v683, 1.442695
      %v696 = vpow.pop %v695
      %v697 = vmul.f32 %v684, 1.442695
      %v698 = vpow.pop %v697
      %v699 = vmul.f32 %v685, 1.442695
      %v700 = vpow.pop %v699
      %v701 = vmul.f32 %v686, 1.442695
      %v702 = vpow.pop %v701
      %v703 = vadd.f32 %v688, 1.0
      %v704 = vadd.f32 %v690, 1.0
      %v705 = vadd.f32 %v692, 1.0
      %v706 = vadd.f32 %v694, 1.0
      %v707 = vadd.f32 %v696, 1.0
      %v708 = vadd.f32 %v698, 1.0
      %v709 = vadd.f32 %v700, 1.0
      %v710 = vadd.f32 %v702, 1.0
      %v711 = vrcp.pop %v703
      %v712 = vrcp.pop %v704
      %v713 = vrcp.pop %v705
      %v714 = vrcp.pop %v706
      %v715 = vrcp.pop %v707
      %v716 = vrcp.pop %v708
      %v717 = vrcp.pop %v709
      %v718 = vrcp.pop %v710
      %v719 = vmul.f32 %v671, %v711
      %v720 = vmul.f32 %v672, %v712
      %v721 = vmul.f32 %v673, %v713
      %v722 = vmul.f32 %v674, %v714
      %v723 = vmul.f32 %v675, %v715
      %v724 = vmul.f32 %v676, %v716
      %v725 = vmul.f32 %v677, %v717
      %v726 = vmul.f32 %v678, %v718
      %v727 = vpack.c.bf16 %v720, %v719
      %v728 = vpack.c.bf16 %v722, %v721
      %v729 = vpack.c.bf16 %v724, %v723
      %v730 = vpack.c.bf16 %v726, %v725
      %v735 = vunpack.c.l.b16 %v727
      %v736 = vunpack.c.h.b16 %v727
      %v737 = vunpack.c.l.b16 %v728
      %v738 = vunpack.c.h.b16 %v728
      %v739 = vunpack.c.l.b16 %v729
      %v740 = vunpack.c.h.b16 %v729
      %v741 = vunpack.c.l.b16 %v730
      %v742 = vunpack.c.h.b16 %v730
      %v743 = vpack.c.b16 %v735, %v735
      %v744 = vpack.c.b16 %v736, %v736
      %v745 = vpack.c.b16 %v737, %v737
      %v746 = vpack.c.b16 %v738, %v738
      %v747 = vpack.c.b16 %v739, %v739
      %v748 = vpack.c.b16 %v740, %v740
      %v749 = vpack.c.b16 %v741, %v741
      %v750 = vpack.c.b16 %v742, %v742
      %vm759 = vcmask 519168
      %760 = vst.msk [vmem:[%s346] sm:$0xf] %vm759, %v743
      %761 = vst.msk [vmem:[%s346 + $0x4] sm:$0xf] %vm759, %v744
      %762 = vst.msk [vmem:[%s346 + $0x8] sm:$0xf] %vm759, %v745
      %763 = vst.msk [vmem:[%s346 + $0xc] sm:$0xf] %vm759, %v746
      %764 = vst.msk [vmem:[%s346 + $0x10] sm:$0xf] %vm759, %v747
      %765 = vst.msk [vmem:[%s346 + $0x14] sm:$0xf] %vm759, %v748
      %766 = vst.msk [vmem:[%s346 + $0x18] sm:$0xf] %vm759, %v749
      %767 = vst.msk [vmem:[%s346 + $0x1c] sm:$0xf] %vm759, %v750
      %s768 = smul.u32 8, %s18
      %p769 = scmp.lt.s32.totalorder %s768, 15
      %s770 = scalar_select %p769, %s768, 15
      %s771 = smul.addr %s770, 4
      %s772 = scalar_lea.vmem %s7, %s771
      // Predicated region
      $region49: #{elannet_tiny_forward.26} parent=47 // pred_check
        %p773 = pneg %p203
      $region50: #{elannet_tiny_forward.26} parent=47 // pred_check_branch
        %775 = sbr.rel (%p773) target = $region52
      $region51: #{elannet_tiny_forward.26} parent=47 // pred_region
        %s776 = smul.u32 8, %s18
      $region52: #{elannet_tiny_forward.26} parent=47 // pred_fallthru
        _
    $region48: #{elannet_tiny_forward.26} parent=5 // pred_fallthru
      _
    %p777 = scmp.le.s32.totalorder 2, %s13
    // Predicated region
    $region53: #{elannet_tiny_forward.26} parent=5 // pred_check
      %p778 = pneg %p777
    $region54: #{elannet_tiny_forward.26} parent=5 // pred_check_branch
      %780 = sbr.rel (%p778) target = $region56
    $region55: #{elannet_tiny_forward.26} parent=5 // pred_region
      %s781 = ssub.s32 %s13, 2
      // Predicated region
      $region57: #{elannet_tiny_forward.26} parent=55 // pred_check
        %p782 = pneg %p209
      $region58: #{elannet_tiny_forward.26} parent=55 // pred_check_branch
        %784 = sbr.rel (%p782) target = $region60
      $region59: #{elannet_tiny_forward.26} parent=55 // pred_region
        %s785 = smul.u32 8, %s19
        %p786 = scmp.lt.s32.totalorder %s785, 15
        %s787 = scalar_select %p786, %s785, 15
        %s788 = smul.addr %s787, 4
        %s789 = scalar_lea.vmem %s7, %s788
      $region60: #{elannet_tiny_forward.26} parent=55 // pred_fallthru
        _
    $region56: #{elannet_tiny_forward.26} parent=5 // pred_fallthru
      _
  $region6: #{elannet_tiny_forward.26} parent=0 // loop_footer
    %s17 = sadd.s32 1, %s13
  $region7: #{elannet_tiny_forward.26} parent=0 // loop_footer_branch
    %12 = sbr.rel target = $region3
  $region8: #{elannet_tiny_forward.26} parent=0 // loop_exit
    _

// kernel: elannet_tiny_forward.28
$region0: #{elannet_tiny_forward.28}
  #allocation0 [shape = 'u32[]', space=smem, size = 0x4, offset = 0x4, fixed_abs, tag = 'smem constant byte address 0x4 - core index']
  #allocation1 [shape = 'u32[144,128]{1,0:T(1,128)}', space=vmem, size = 0x12000, scoped, tag = 'internal scratch']
  %s0 = inlined_call_operand.vmem [shape: bf16[32,64], index: 0, kind: input, shape index: {}]
  %s1 = inlined_call_operand.vmem [shape: bf16[64,64], index: 1, kind: input, shape index: {}]
  %s2 = inlined_call_operand.vmem [shape: f32[1,64], index: 2, kind: input, shape index: {}]
  %s3 = inlined_call_operand.vmem [shape: f32[1,64], index: 3, kind: input, shape index: {}]
  %s4 = inlined_call_operand.vmem [shape: bf16[32,32], index: 4, kind: output, shape index: {0}]
  %s5 = inlined_call_operand.vmem [shape: bf16[32,32], index: 5, kind: output, shape index: {1}]
  %6 = xla_tuple %s4, %s5
  %s7 = sld [smem:[#allocation0]]
  $region57: #{elannet_tiny_forward.28} parent=0
    _
  %s9 = ssub.s32 1, %s7
  %s10 = scalar_select 0, %s9, %s7
  loop: start=0, step=1, limit=4
  $region2: #{elannet_tiny_forward.28} parent=0 // loop_pre_header
    _
  $region3: #{elannet_tiny_forward.28} parent=0 // loop_header
    %s12 = sphi 0, %s16
    %p13 = scmp.ge.s32.totalorder %s12, 4
    %s22 = sphi 0, %s24
    %s25 = sphi 0, %s22
    %s26 = sphi 0, %s25
    %s42 = sphi 0, %s26
    %s46 = sphi 0, %s46
    %s48 = sphi 0, %s46
    %s49 = sphi 0, %s48
    %s63 = sphi 0, %s49
    %s67 = sphi 0, %s67
    %s69 = sphi 0, %s67
    %s70 = sphi 0, %s69
    %s84 = sphi 0, %s70
    %s88 = sphi 0, %s88
    %s90 = sphi 0, %s88
    %s91 = sphi 0, %s90
    %s105 = sphi 0, %s91
    %s111 = sphi 0, %s113
    %s114 = sphi 0, %s111
    %s115 = sphi 0, %s114
    %s131 = sphi 0, %s115
    %s137 = sphi 0, %s139
    %s140 = sphi 0, %s137
    %s141 = sphi 0, %s140
    %s157 = sphi 0, %s141
  $region4: #{elannet_tiny_forward.28} parent=0 // loop_header_branch
    %15 = sbr.rel (%p13) target = $region8
  $region5: #{elannet_tiny_forward.28} parent=0 // loop_body
    %s17 = ssub.s32 %s12, 1
    %s18 = ssub.s32 %s12, 2
    %s19 = sadd.s32 %s12, 1
    %s20 = ssub.s32 %s12, %s19
    %p21 = scmp.eq.s32.totalorder %s20, 0
    %s23 = sadd.s32 %s22, 1
    %s24 = scalar_select %p21, %s22, %s23
    %p27 = pneg %p21
    %p28 = scmp.eq.s32.totalorder %s12, 1
    %p29 = por %p27, %p28
    %p30 = scmp.ne.s32.totalorder %s22, %s25
    %p31 = scmp.eq.s32.totalorder %s12, 0
    %p32 = por %p30, %p31
    %p33 = scmp.ne.s32.totalorder %s22, %s25
    %p34 = scmp.eq.s32.totalorder %s17, 1
    %p35 = por %p33, %p34
    %p36 = scmp.ne.s32.totalorder %s25, %s26
    %p37 = scmp.eq.s32.totalorder %s17, 0
    %p38 = por %p36, %p37
    %p39 = scmp.ne.s32.totalorder %s25, %s26
    %p40 = scmp.eq.s32.totalorder %s18, 1
    %p41 = por %p39, %p40
    %p43 = scmp.ne.s32.totalorder %s26, %s42
    %p44 = scmp.eq.s32.totalorder %s18, 0
    %p45 = por %p43, %p44
    %s47 = sadd.s32 %s46, 1
    %p50 = scmp.eq.s32.totalorder %s12, 1
    %p51 = scmp.ne.s32.totalorder %s46, %s48
    %p52 = scmp.eq.s32.totalorder %s12, 0
    %p53 = por %p51, %p52
    %p54 = scmp.ne.s32.totalorder %s46, %s48
    %p55 = scmp.eq.s32.totalorder %s17, 1
    %p56 = por %p54, %p55
    %p57 = scmp.ne.s32.totalorder %s48, %s49
    %p58 = scmp.eq.s32.totalorder %s17, 0
    %p59 = por %p57, %p58
    %p60 = scmp.ne.s32.totalorder %s48, %s49
    %p61 = scmp.eq.s32.totalorder %s18, 1
    %p62 = por %p60, %p61
    %p64 = scmp.ne.s32.totalorder %s49, %s63
    %p65 = scmp.eq.s32.totalorder %s18, 0
    %p66 = por %p64, %p65
    %s68 = sadd.s32 %s67, 1
    %p71 = scmp.eq.s32.totalorder %s12, 1
    %p72 = scmp.ne.s32.totalorder %s67, %s69
    %p73 = scmp.eq.s32.totalorder %s12, 0
    %p74 = por %p72, %p73
    %p75 = scmp.ne.s32.totalorder %s67, %s69
    %p76 = scmp.eq.s32.totalorder %s17, 1
    %p77 = por %p75, %p76
    %p78 = scmp.ne.s32.totalorder %s69, %s70
    %p79 = scmp.eq.s32.totalorder %s17, 0
    %p80 = por %p78, %p79
    %p81 = scmp.ne.s32.totalorder %s69, %s70
    %p82 = scmp.eq.s32.totalorder %s18, 1
    %p83 = por %p81, %p82
    %p85 = scmp.ne.s32.totalorder %s70, %s84
    %p86 = scmp.eq.s32.totalorder %s18, 0
    %p87 = por %p85, %p86
    %s89 = sadd.s32 %s88, 1
    %p92 = scmp.eq.s32.totalorder %s12, 1
    %p93 = scmp.ne.s32.totalorder %s88, %s90
    %p94 = scmp.eq.s32.totalorder %s12, 0
    %p95 = por %p93, %p94
    %p96 = scmp.ne.s32.totalorder %s88, %s90
    %p97 = scmp.eq.s32.totalorder %s17, 1
    %p98 = por %p96, %p97
    %p99 = scmp.ne.s32.totalorder %s90, %s91
    %p100 = scmp.eq.s32.totalorder %s17, 0
    %p101 = por %p99, %p100
    %p102 = scmp.ne.s32.totalorder %s90, %s91
    %p103 = scmp.eq.s32.totalorder %s18, 1
    %p104 = por %p102, %p103
    %p106 = scmp.ne.s32.totalorder %s91, %s105
    %p107 = scmp.eq.s32.totalorder %s18, 0
    %p108 = por %p106, %p107
    %s109 = ssub.s32 %s12, %s19
    %p110 = scmp.eq.s32.totalorder %s109, 0
    %s112 = sadd.s32 %s111, 1
    %s113 = scalar_select %p110, %s111, %s112
    %p116 = pneg %p110
    %p117 = scmp.eq.s32.totalorder %s12, 1
    %p118 = por %p116, %p117
    %p119 = scmp.ne.s32.totalorder %s111, %s114
    %p120 = scmp.eq.s32.totalorder %s12, 0
    %p121 = por %p119, %p120
    %p122 = scmp.ne.s32.totalorder %s111, %s114
    %p123 = scmp.eq.s32.totalorder %s17, 1
    %p124 = por %p122, %p123
    %p125 = scmp.ne.s32.totalorder %s114, %s115
    %p126 = scmp.eq.s32.totalorder %s17, 0
    %p127 = por %p125, %p126
    %p128 = scmp.ne.s32.totalorder %s114, %s115
    %p129 = scmp.eq.s32.totalorder %s18, 1
    %p130 = por %p128, %p129
    %p132 = scmp.ne.s32.totalorder %s115, %s131
    %p133 = scmp.eq.s32.totalorder %s18, 0
    %p134 = por %p132, %p133
    %s135 = ssub.s32 %s12, %s19
    %p136 = scmp.eq.s32.totalorder %s135, 0
    %s138 = sadd.s32 %s137, 1
    %s139 = scalar_select %p136, %s137, %s138
    %p142 = pneg %p136
    %p143 = scmp.eq.s32.totalorder %s12, 1
    %p144 = por %p142, %p143
    %p145 = scmp.ne.s32.totalorder %s137, %s140
    %p146 = scmp.eq.s32.totalorder %s12, 0
    %p147 = por %p145, %p146
    %p148 = scmp.ne.s32.totalorder %s137, %s140
    %p149 = scmp.eq.s32.totalorder %s17, 1
    %p150 = por %p148, %p149
    %p151 = scmp.ne.s32.totalorder %s140, %s141
    %p152 = scmp.eq.s32.totalorder %s17, 0
    %p153 = por %p151, %p152
    %p154 = scmp.ne.s32.totalorder %s140, %s141
    %p155 = scmp.eq.s32.totalorder %s18, 1
    %p156 = por %p154, %p155
    %p158 = scmp.ne.s32.totalorder %s141, %s157
    %p159 = scmp.eq.s32.totalorder %s18, 0
    %p160 = por %p158, %p159
    %p161 = scmp.le.s32.totalorder 1, %s12
    %p162 = scmp.lt.s32.totalorder %s12, 3
    %p163 = pnand %p161, %p162
    %p164 = pneg %p163
    // Predicated region
    $region9: #{elannet_tiny_forward.28} parent=5 // pred_check
      _
    $region10: #{elannet_tiny_forward.28} parent=5 // pred_check_branch
      %166 = sbr.rel (%p163) target = $region12
    $region11: #{elannet_tiny_forward.28} parent=5 // pred_region
      %s167 = ssub.s32 %s12, 1
      // Predicated region
      $region13: #{elannet_tiny_forward.28} parent=11 // pred_check
        %p168 = pneg %p59
      $region14: #{elannet_tiny_forward.28} parent=11 // pred_check_branch
        %170 = sbr.rel (%p168) target = $region16
      $region15: #{elannet_tiny_forward.28} parent=11 // pred_region
        _
      $region16: #{elannet_tiny_forward.28} parent=11 // pred_fallthru
        _
      // Predicated region
      $region17: #{elannet_tiny_forward.28} parent=11 // pred_check
        %p171 = pneg %p80
      $region18: #{elannet_tiny_forward.28} parent=11 // pred_check_branch
        %173 = sbr.rel (%p171) target = $region20
      $region19: #{elannet_tiny_forward.28} parent=11 // pred_region
        _
      $region20: #{elannet_tiny_forward.28} parent=11 // pred_fallthru
        _
      // Predicated region
      $region21: #{elannet_tiny_forward.28} parent=11 // pred_check
        %p174 = pneg %p101
      $region22: #{elannet_tiny_forward.28} parent=11 // pred_check_branch
        %176 = sbr.rel (%p174) target = $region24
      $region23: #{elannet_tiny_forward.28} parent=11 // pred_region
        _
      $region24: #{elannet_tiny_forward.28} parent=11 // pred_fallthru
        _
    $region12: #{elannet_tiny_forward.28} parent=5 // pred_fallthru
      _
    %p177 = scmp.lt.s32.totalorder %s12, 2
    // Predicated region
    $region25: #{elannet_tiny_forward.28} parent=5 // pred_check
      %p178 = pneg %p177
    $region26: #{elannet_tiny_forward.28} parent=5 // pred_check_branch
      %180 = sbr.rel (%p178) target = $region28
    $region27: #{elannet_tiny_forward.28} parent=5 // pred_region
      // Predicated region
      $region29: #{elannet_tiny_forward.28} parent=27 // pred_check
        %p181 = pneg %p32
      $region30: #{elannet_tiny_forward.28} parent=27 // pred_check_branch
        %183 = sbr.rel (%p181) target = $region32
      $region31: #{elannet_tiny_forward.28} parent=27 // pred_region
        %s184 = smul.u32 2, %s12
        %p185 = scmp.lt.s32.totalorder %s184, 3
        %s186 = scalar_select %p185, %s184, 3
        %s187 = smul.addr %s186, 4
        %s188 = scalar_lea.vmem %s0, %s187
        %s189 = smul.u32 2, %s12
      $region32: #{elannet_tiny_forward.28} parent=27 // pred_fallthru
        _
    $region28: #{elannet_tiny_forward.28} parent=5 // pred_fallthru
      _
    %p190 = scmp.le.s32.totalorder 1, %s12
    %p191 = scmp.lt.s32.totalorder %s12, 3
    %p192 = pnand %p190, %p191
    %p193 = pneg %p192
    // Predicated region
    $region33: #{elannet_tiny_forward.28} parent=5 // pred_check
      _
    $region34: #{elannet_tiny_forward.28} parent=5 // pred_check_branch
      %195 = sbr.rel (%p192) target = $region36
    $region35: #{elannet_tiny_forward.28} parent=5 // pred_region
      %s196 = ssub.s32 %s12, 1
      %s197 = smul.u32 2, %s17
      %p198 = scmp.lt.s32.totalorder %s197, 3
      %s199 = scalar_select %p198, %s197, 3
      %s200 = smul.addr %s199, 4
      %s201 = scalar_lea.vmem %s0, %s200
      %p202 = pneg %p38
      %p203 = pneg %p35
      %p204 = pneg %p59
      %p205 = pneg %p56
      %p206 = pneg %p80
      %p207 = pneg %p77
      %p208 = pneg %p101
      %p209 = pneg %p98
      %p210 = pneg %p127
      %p211 = pneg %p124
      %s212 = smul.u32 2, %s17
      %p213 = scmp.lt.s32.totalorder %s212, 3
      %s214 = scalar_select %p213, %s212, 3
      %s215 = smul.addr %s214, 4
      %s216 = scalar_lea.vmem %s4, %s215
      %p217 = pneg %p153
      %p218 = pneg %p150
      %s219 = smul.u32 2, %s17
      %p220 = scmp.lt.s32.totalorder %s219, 3
      %s221 = scalar_select %p220, %s219, 3
      %s222 = smul.addr %s221, 4
      %s223 = scalar_lea.vmem %s5, %s222
      %s224 = smul.u32 2, %s17
      %p225 = scmp.lt.s32.totalorder %s224, 3
      %s226 = scalar_select %p225, %s224, 3
      %s227 = smul.addr %s226, 4
      %s228 = scalar_lea.vmem %s0, %s227
      %s229 = smul.u32 2, %s17
      %s230 = smul.u32 2, %s17
      %p231 = scmp.lt.s32.totalorder %s230, 3
      %s232 = scalar_select %p231, %s230, 3
      %s233 = smul.addr %s232, 4
      %s234 = scalar_lea.vmem %s4, %s233
      %s235 = smul.u32 2, %s17
      %s236 = smul.u32 2, %s17
      %p237 = scmp.lt.s32.totalorder %s236, 3
      %s238 = scalar_select %p237, %s236, 3
      %s239 = smul.addr %s238, 4
      %s240 = scalar_lea.vmem %s5, %s239
      %s241 = smul.u32 2, %s17
      %v243 = vld [vmem:[%s228] sm:$0xf]
      %v244 = vld [vmem:[%s228 + $0x4] sm:$0xf]
      %v245 = vld [vmem:[%s1] sm:$0xf]
      %v246 = vld [vmem:[%s1 + $0x4] sm:$0xf]
      %v247 = vld [vmem:[%s1 + $0x8] sm:$0xf]
      %v248 = vld [vmem:[%s1 + $0xc] sm:$0xf]
      %v249 = vld [vmem:[%s1 + $0x10] sm:$0xf]
      %v250 = vld [vmem:[%s1 + $0x14] sm:$0xf]
      %v251 = vld [vmem:[%s1 + $0x18] sm:$0xf]
      %v252 = vld [vmem:[%s1 + $0x1c] sm:$0xf]
      %v255 = vunpack.c.l.b16 %v243
      %v256 = vunpack.c.l.b16 %v244
      %v257 = vpack.c.b16 %v256, %v255
      %v266 = vunpack.c.l.b16 %v245
      %v267 = vunpack.c.l.b16 %v246
      %v268 = vunpack.c.l.b16 %v247
      %v269 = vunpack.c.l.b16 %v248
      %v270 = vunpack.c.l.b16 %v249
      %v271 = vunpack.c.l.b16 %v250
      %v272 = vunpack.c.l.b16 %v251
      %v273 = vunpack.c.l.b16 %v252
      %v274 = vpack.c.b16 %v267, %v266
      %v275 = vpack.c.b16 %v269, %v268
      %v276 = vpack.c.b16 %v271, %v270
      %v277 = vpack.c.b16 %v273, %v272
      %vm282 = vcmask 523264
      %v284 = vsel %vm282, %v257, 0
      %286 = vmatprep.subr.bf16.mxu0 0
      %287 = vmatpush1.bf16.msra.mxu0 %v274
      %288 = vmatprep.subr.bf16.mxu0 0
      %289 = vmatpush1.bf16.msra.mxu0 %v275
      %290 = vmatprep.subr.bf16.mxu0 0
      %291 = vmatpush1.bf16.msra.mxu0 %v276
      %292 = vmatprep.subr.bf16.mxu0 0
      %293 = vmatpush1.bf16.msra.mxu0 %v277
      %294 = vmatprep.subr.bf16.mxu0 0
      %295 = vmatpush1.bf16.msra.mxu0 0
      %296 = vmatprep.subr.bf16.mxu0 0
      %297 = vmatpush1.bf16.msra.mxu0 0
      %298 = vmatprep.subr.bf16.mxu0 0
      %299 = vmatpush1.bf16.msra.mxu0 0
      %300 = vmatprep.subr.bf16.mxu0 0
      %301 = vmatpush1.bf16.msra.mxu0 0
      %302 = vmatprep.subr.bf16.mxu0 0
      %303 = vmatpush1.bf16.msra.mxu0 0
      %304 = vmatprep.subr.bf16.mxu0 0
      %305 = vmatpush1.bf16.msra.mxu0 0
      %306 = vmatprep.subr.bf16.mxu0 0
      %307 = vmatpush1.bf16.msra.mxu0 0
      %308 = vmatprep.subr.bf16.mxu0 0
      %309 = vmatpush1.bf16.msra.mxu0 0
      %310 = vmatprep.subr.bf16.mxu0 0
      %311 = vmatpush1.bf16.msra.mxu0 0
      %312 = vmatprep.subr.bf16.mxu0 0
      %313 = vmatpush1.bf16.msra.mxu0 0
      %314 = vmatprep.subr.bf16.mxu0 0
      %315 = vmatpush1.bf16.msra.mxu0 0
      %316 = vmatprep.subr.bf16.mxu0 0
      %317 = vmatpush1.bf16.msra.mxu0 0
      %318 = vmatprep.mubr.bf16.mxu0 0
      %319 = vmatmul.mubr.bf16.gmra.mrb[0].mxu0 %v284
      %v320 = vpop.f32.mrb[0].mxu0
      %v321 = vadd.f32 0.0, %v320
      %v322 = vpop.f32.mrb[0].mxu0
      %v323 = vpop.f32.mrb[0].mxu0
      %v324 = vadd.f32 0.0, %v323
      %v325 = vpop.f32.mrb[0].mxu0
      %326 = vdwg.mxu0
      %v327 = vld [vmem:[%s2] sm:$0x1]
      %v329 = vlaneseq
      %v330 = vshrl.u32 %v329, 7
      %v331 = vsub.s32 0, %v330
      %v332 = vrot.slane %v327, %v331
      %v334 = vmul.f32 %v321, %v332
      %v335 = vmul.f32 %v324, %v332
      %v336 = vld [vmem:[%s3] sm:$0x1]
      %v338 = vlaneseq
      %v339 = vshrl.u32 %v338, 7
      %v340 = vsub.s32 0, %v339
      %v341 = vrot.slane %v336, %v340
      %v343 = vadd.f32 %v334, %v341
      %v344 = vadd.f32 %v335, %v341
      %vm345 = vcmp.ge.f32.partialorder %v343, 0.0
      %vm346 = vcmp.ge.f32.partialorder %v344, 0.0
      %v347 = vmul.f32 %v343, 0.1
      %v348 = vmul.f32 %v344, 0.1
      %v349 = vsel %vm345, %v343, %v347
      %v350 = vsel %vm346, %v344, %v348
      %v351 = vpack.c.bf16 %v350, %v349
      %v353 = vunpack.c.l.b16 %v351
      %v354 = vunpack.c.h.b16 %v351
      %v355 = vpack.c.b16 %v353, %v353
      %v356 = vpack.c.b16 %v354, %v354
      %vm359 = vcmask 257024
      %360 = vst.msk [vmem:[%s234] sm:$0xf] %vm359, %v355
      %361 = vst.msk [vmem:[%s234 + $0x4] sm:$0xf] %vm359, %v356
      %362 = vrot.lane.b32.xlu0 %v355, 96
      %v363 = vpop.permute.xlu0 %362
      %364 = vrot.lane.b32.xlu0 %v356, 96
      %v365 = vpop.permute.xlu0 %364
      %368 = vst.msk [vmem:[%s240] sm:$0xf] %vm359, %v363
      %369 = vst.msk [vmem:[%s240 + $0x4] sm:$0xf] %vm359, %v365
      %s370 = smul.u32 2, %s17
      %p371 = scmp.lt.s32.totalorder %s370, 3
      %s372 = scalar_select %p371, %s370, 3
      %s373 = smul.addr %s372, 4
      %s374 = scalar_lea.vmem %s4, %s373
      %s375 = smul.u32 2, %s17
      %p376 = scmp.lt.s32.totalorder %s375, 3
      %s377 = scalar_select %p376, %s375, 3
      %s378 = smul.addr %s377, 4
      %s379 = scalar_lea.vmem %s5, %s378
      // Predicated region
      $region37: #{elannet_tiny_forward.28} parent=35 // pred_check
        %p380 = pneg %p124
      $region38: #{elannet_tiny_forward.28} parent=35 // pred_check_branch
        %382 = sbr.rel (%p380) target = $region40
      $region39: #{elannet_tiny_forward.28} parent=35 // pred_region
        %s383 = smul.u32 2, %s17
      $region40: #{elannet_tiny_forward.28} parent=35 // pred_fallthru
        _
      // Predicated region
      $region41: #{elannet_tiny_forward.28} parent=35 // pred_check
        %p384 = pneg %p150
      $region42: #{elannet_tiny_forward.28} parent=35 // pred_check_branch
        %386 = sbr.rel (%p384) target = $region44
      $region43: #{elannet_tiny_forward.28} parent=35 // pred_region
        %s387 = smul.u32 2, %s17
      $region44: #{elannet_tiny_forward.28} parent=35 // pred_fallthru
        _
    $region36: #{elannet_tiny_forward.28} parent=5 // pred_fallthru
      _
    %p388 = scmp.le.s32.totalorder 2, %s12
    // Predicated region
    $region45: #{elannet_tiny_forward.28} parent=5 // pred_check
      %p389 = pneg %p388
    $region46: #{elannet_tiny_forward.28} parent=5 // pred_check_branch
      %391 = sbr.rel (%p389) target = $region48
    $region47: #{elannet_tiny_forward.28} parent=5 // pred_region
      %s392 = ssub.s32 %s12, 2
      // Predicated region
      $region49: #{elannet_tiny_forward.28} parent=47 // pred_check
        %p393 = pneg %p130
      $region50: #{elannet_tiny_forward.28} parent=47 // pred_check_branch
        %395 = sbr.rel (%p393) target = $region52
      $region51: #{elannet_tiny_forward.28} parent=47 // pred_region
        %s396 = smul.u32 2, %s18
        %p397 = scmp.lt.s32.totalorder %s396, 3
        %s398 = scalar_select %p397, %s396, 3
        %s399 = smul.addr %s398, 4
        %s400 = scalar_lea.vmem %s4, %s399
      $region52: #{elannet_tiny_forward.28} parent=47 // pred_fallthru
        _
      // Predicated region
      $region53: #{elannet_tiny_forward.28} parent=47 // pred_check
        %p401 = pneg %p156
      $region54: #{elannet_tiny_forward.28} parent=47 // pred_check_branch
        %403 = sbr.rel (%p401) target = $region56
      $region55: #{elannet_tiny_forward.28} parent=47 // pred_region
        %s404 = smul.u32 2, %s18
        %p405 = scmp.lt.s32.totalorder %s404, 3
        %s406 = scalar_select %p405, %s404, 3
        %s407 = smul.addr %s406, 4
        %s408 = scalar_lea.vmem %s5, %s407
      $region56: #{elannet_tiny_forward.28} parent=47 // pred_fallthru
        _
    $region48: #{elannet_tiny_forward.28} parent=5 // pred_fallthru
      _
  $region6: #{elannet_tiny_forward.28} parent=0 // loop_footer
    %s16 = sadd.s32 1, %s12
  $region7: #{elannet_tiny_forward.28} parent=0 // loop_footer_branch
    %11 = sbr.rel target = $region3
  $region8: #{elannet_tiny_forward.28} parent=0 // loop_exit
    _

// kernel: elannet_tiny_forward.32
$region0: #{elannet_tiny_forward.32}
  #allocation0 [shape = 'u32[]', space=smem, size = 0x4, offset = 0x4, fixed_abs, tag = 'smem constant byte address 0x4 - core index']
  #allocation1 [shape = 'u32[144,128]{1,0:T(1,128)}', space=vmem, size = 0x12000, scoped, tag = 'internal scratch']
  %s0 = inlined_call_operand.vmem [shape: bf16[4,2,2,256], index: 0, kind: input, shape index: {}]
  %s1 = inlined_call_operand.vmem [shape: bf16[4,2,128], index: 1, kind: output, shape index: {}]
  %s2 = sld [smem:[#allocation0]]
  $region37: #{elannet_tiny_forward.32} parent=0
    _
  %s4 = ssub.s32 1, %s2
  %s5 = scalar_select 0, %s4, %s2
  loop: start=0, step=1, limit=4
  $region2: #{elannet_tiny_forward.32} parent=0 // loop_pre_header
    _
  $region3: #{elannet_tiny_forward.32} parent=0 // loop_header
    %s7 = sphi 0, %s11
    %p8 = scmp.ge.s32.totalorder %s7, 4
    %s17 = sphi 0, %s19
    %s20 = sphi 0, %s17
    %s21 = sphi 0, %s20
    %s37 = sphi 0, %s21
    %s43 = sphi 0, %s45
    %s46 = sphi 0, %s43
    %s47 = sphi 0, %s46
    %s63 = sphi 0, %s47
  $region4: #{elannet_tiny_forward.32} parent=0 // loop_header_branch
    %10 = sbr.rel (%p8) target = $region8
  $region5: #{elannet_tiny_forward.32} parent=0 // loop_body
    %s12 = ssub.s32 %s7, 1
    %s13 = ssub.s32 %s7, 2
    %s14 = sadd.s32 %s7, 1
    %s15 = ssub.s32 %s7, %s14
    %p16 = scmp.eq.s32.totalorder %s15, 0
    %s18 = sadd.s32 %s17, 1
    %s19 = scalar_select %p16, %s17, %s18
    %p22 = pneg %p16
    %p23 = scmp.eq.s32.totalorder %s7, 1
    %p24 = por %p22, %p23
    %p25 = scmp.ne.s32.totalorder %s17, %s20
    %p26 = scmp.eq.s32.totalorder %s7, 0
    %p27 = por %p25, %p26
    %p28 = scmp.ne.s32.totalorder %s17, %s20
    %p29 = scmp.eq.s32.totalorder %s12, 1
    %p30 = por %p28, %p29
    %p31 = scmp.ne.s32.totalorder %s20, %s21
    %p32 = scmp.eq.s32.totalorder %s12, 0
    %p33 = por %p31, %p32
    %p34 = scmp.ne.s32.totalorder %s20, %s21
    %p35 = scmp.eq.s32.totalorder %s13, 1
    %p36 = por %p34, %p35
    %p38 = scmp.ne.s32.totalorder %s21, %s37
    %p39 = scmp.eq.s32.totalorder %s13, 0
    %p40 = por %p38, %p39
    %s41 = ssub.s32 %s7, %s14
    %p42 = scmp.eq.s32.totalorder %s41, 0
    %s44 = sadd.s32 %s43, 1
    %s45 = scalar_select %p42, %s43, %s44
    %p48 = pneg %p42
    %p49 = scmp.eq.s32.totalorder %s7, 1
    %p50 = por %p48, %p49
    %p51 = scmp.ne.s32.totalorder %s43, %s46
    %p52 = scmp.eq.s32.totalorder %s7, 0
    %p53 = por %p51, %p52
    %p54 = scmp.ne.s32.totalorder %s43, %s46
    %p55 = scmp.eq.s32.totalorder %s12, 1
    %p56 = por %p54, %p55
    %p57 = scmp.ne.s32.totalorder %s46, %s47
    %p58 = scmp.eq.s32.totalorder %s12, 0
    %p59 = por %p57, %p58
    %p60 = scmp.ne.s32.totalorder %s46, %s47
    %p61 = scmp.eq.s32.totalorder %s13, 1
    %p62 = por %p60, %p61
    %p64 = scmp.ne.s32.totalorder %s47, %s63
    %p65 = scmp.eq.s32.totalorder %s13, 0
    %p66 = por %p64, %p65
    %p67 = scmp.le.s32.totalorder 1, %s7
    %p68 = scmp.lt.s32.totalorder %s7, 3
    %p69 = pnand %p67, %p68
    %p70 = pneg %p69
    // Predicated region
    $region9: #{elannet_tiny_forward.32} parent=5 // pred_check
      _
    $region10: #{elannet_tiny_forward.32} parent=5 // pred_check_branch
      %72 = sbr.rel (%p69) target = $region12
    $region11: #{elannet_tiny_forward.32} parent=5 // pred_region
      %s73 = ssub.s32 %s7, 1
    $region12: #{elannet_tiny_forward.32} parent=5 // pred_fallthru
      _
    %p74 = scmp.lt.s32.totalorder %s7, 2
    // Predicated region
    $region13: #{elannet_tiny_forward.32} parent=5 // pred_check
      %p75 = pneg %p74
    $region14: #{elannet_tiny_forward.32} parent=5 // pred_check_branch
      %77 = sbr.rel (%p75) target = $region16
    $region15: #{elannet_tiny_forward.32} parent=5 // pred_region
      // Predicated region
      $region17: #{elannet_tiny_forward.32} parent=15 // pred_check
        %p78 = pneg %p27
      $region18: #{elannet_tiny_forward.32} parent=15 // pred_check_branch
        %80 = sbr.rel (%p78) target = $region20
      $region19: #{elannet_tiny_forward.32} parent=15 // pred_region
        %s81 = smul.u32 2, %s7
        %p82 = scmp.lt.s32.totalorder %s81, 3
        %s83 = scalar_select %p82, %s81, 3
        %s84 = smul.addr %s83, 4
        %s85 = scalar_lea.vmem %s0, %s84
        %s86 = smul.u32 2, %s7
      $region20: #{elannet_tiny_forward.32} parent=15 // pred_fallthru
        _
    $region16: #{elannet_tiny_forward.32} parent=5 // pred_fallthru
      _
    %p87 = scmp.le.s32.totalorder 1, %s7
    %p88 = scmp.lt.s32.totalorder %s7, 3
    %p89 = pnand %p87, %p88
    %p90 = pneg %p89
    // Predicated region
    $region21: #{elannet_tiny_forward.32} parent=5 // pred_check
      _
    $region22: #{elannet_tiny_forward.32} parent=5 // pred_check_branch
      %92 = sbr.rel (%p89) target = $region24
    $region23: #{elannet_tiny_forward.32} parent=5 // pred_region
      %s93 = ssub.s32 %s7, 1
      %s94 = smul.u32 2, %s12
      %p95 = scmp.lt.s32.totalorder %s94, 3
      %s96 = scalar_select %p95, %s94, 3
      %s97 = smul.addr %s96, 4
      %s98 = scalar_lea.vmem %s0, %s97
      %p99 = pneg %p33
      %p100 = pneg %p30
      %p101 = pneg %p59
      %p102 = pneg %p56
      %s103 = smul.u32 2, %s12
      %p104 = scmp.lt.s32.totalorder %s103, 3
      %s105 = scalar_select %p104, %s103, 3
      %s106 = scalar_lea.vmem %s1, %s105
      %s107 = smul.u32 2, %s12
      %p108 = scmp.lt.s32.totalorder %s107, 3
      %s109 = scalar_select %p108, %s107, 3
      %s110 = smul.addr %s109, 4
      %s111 = scalar_lea.vmem %s0, %s110
      %s112 = smul.u32 2, %s12
      %s113 = smul.u32 2, %s12
      %p114 = scmp.lt.s32.totalorder %s113, 3
      %s115 = scalar_select %p114, %s113, 3
      %s116 = scalar_lea.vmem %s1, %s115
      %s117 = smul.u32 2, %s12
      %v118 = vld [vmem:[%s111] sm:$0x3]
      %v119 = vld [vmem:[%s111 + $0x4] sm:$0x3]
      %s120 = scalar_lea.vmem %s111, 2
      %v121 = vld [vmem:[%s120] sm:$0x3]
      %v122 = vld [vmem:[%s120 + $0x4] sm:$0x3]
      %v123 = vmax.bf16 %v118, %v121
      %v124 = vmax.bf16 %v119, %v122
      %v127 = vrot.slane %v123, 1
      %v128 = vrot.slane %v124, 1
      %v131 = vmax.bf16 %v123, %v127
      %v132 = vmax.bf16 %v124, %v128
      %133 = vst [vmem:[%s116] sm:$0x1] %v131
      %134 = vst [vmem:[%s116 + $0x1] sm:$0x1] %v132
      %s135 = smul.u32 2, %s12
      %p136 = scmp.lt.s32.totalorder %s135, 3
      %s137 = scalar_select %p136, %s135, 3
      %s138 = scalar_lea.vmem %s1, %s137
      // Predicated region
      $region25: #{elannet_tiny_forward.32} parent=23 // pred_check
        %p139 = pneg %p56
      $region26: #{elannet_tiny_forward.32} parent=23 // pred_check_branch
        %141 = sbr.rel (%p139) target = $region28
      $region27: #{elannet_tiny_forward.32} parent=23 // pred_region
        %s142 = smul.u32 2, %s12
      $region28: #{elannet_tiny_forward.32} parent=23 // pred_fallthru
        _
    $region24: #{elannet_tiny_forward.32} parent=5 // pred_fallthru
      _
    %p143 = scmp.le.s32.totalorder 2, %s7
    // Predicated region
    $region29: #{elannet_tiny_forward.32} parent=5 // pred_check
      %p144 = pneg %p143
    $region30: #{elannet_tiny_forward.32} parent=5 // pred_check_branch
      %146 = sbr.rel (%p144) target = $region32
    $region31: #{elannet_tiny_forward.32} parent=5 // pred_region
      %s147 = ssub.s32 %s7, 2
      // Predicated region
      $region33: #{elannet_tiny_forward.32} parent=31 // pred_check
        %p148 = pneg %p62
      $region34: #{elannet_tiny_forward.32} parent=31 // pred_check_branch
        %150 = sbr.rel (%p148) target = $region36
      $region35: #{elannet_tiny_forward.32} parent=31 // pred_region
        %s151 = smul.u32 2, %s13
        %p152 = scmp.lt.s32.totalorder %s151, 3
        %s153 = scalar_select %p152, %s151, 3
        %s154 = scalar_lea.vmem %s1, %s153
      $region36: #{elannet_tiny_forward.32} parent=31 // pred_fallthru
        _
    $region32: #{elannet_tiny_forward.32} parent=5 // pred_fallthru
      _
  $region6: #{elannet_tiny_forward.32} parent=0 // loop_footer
    %s11 = sadd.s32 1, %s7
  $region7: #{elannet_tiny_forward.32} parent=0 // loop_footer_branch
    %6 = sbr.rel target = $region3
  $region8: #{elannet_tiny_forward.32} parent=0 // loop_exit
    _

// kernel: elannet_tiny_forward.33
$region0: #{elannet_tiny_forward.33}
  #allocation0 [shape = 'u32[]', space=smem, size = 0x4, offset = 0x4, fixed_abs, tag = 'smem constant byte address 0x4 - core index']
  #allocation1 [shape = 'u32[144,128]{1,0:T(1,128)}', space=vmem, size = 0x12000, scoped, tag = 'internal scratch']
  %s0 = inlined_call_operand.vmem [shape: bf16[8,128], index: 0, kind: input, shape index: {}]
  %s1 = inlined_call_operand.vmem [shape: bf16[128,128], index: 1, kind: input, shape index: {}]
  %s2 = inlined_call_operand.vmem [shape: f32[1,128], index: 2, kind: input, shape index: {}]
  %s3 = inlined_call_operand.vmem [shape: f32[1,128], index: 3, kind: input, shape index: {}]
  %s4 = inlined_call_operand.vmem [shape: bf16[8,64], index: 4, kind: output, shape index: {0}]
  %s5 = inlined_call_operand.vmem [shape: bf16[8,64], index: 5, kind: output, shape index: {1}]
  %6 = xla_tuple %s4, %s5
  %s7 = sld [smem:[#allocation0]]
  $region34: #{elannet_tiny_forward.33} parent=0
    _
  %s9 = ssub.s32 1, %s7
  %s10 = scalar_select 0, %s9, %s7
  // Predicated region
  $region2: #{elannet_tiny_forward.33} parent=0 // pred_check
    _
  $region3: #{elannet_tiny_forward.33} parent=0 // pred_check_branch
    %12 = sbr.rel (0) target = $region5
  $region4: #{elannet_tiny_forward.33} parent=0 // pred_region
    _
  $region5: #{elannet_tiny_forward.33} parent=0 // pred_fallthru
    _
  // Predicated region
  $region6: #{elannet_tiny_forward.33} parent=0 // pred_check
    _
  $region7: #{elannet_tiny_forward.33} parent=0 // pred_check_branch
    %14 = sbr.rel (0) target = $region9
  $region8: #{elannet_tiny_forward.33} parent=0 // pred_region
    _
  $region9: #{elannet_tiny_forward.33} parent=0 // pred_fallthru
    _
  // Predicated region
  $region10: #{elannet_tiny_forward.33} parent=0 // pred_check
    _
  $region11: #{elannet_tiny_forward.33} parent=0 // pred_check_branch
    %16 = sbr.rel (0) target = $region13
  $region12: #{elannet_tiny_forward.33} parent=0 // pred_region
    _
  $region13: #{elannet_tiny_forward.33} parent=0 // pred_fallthru
    _
  // Predicated region
  $region14: #{elannet_tiny_forward.33} parent=0 // pred_check
    _
  $region15: #{elannet_tiny_forward.33} parent=0 // pred_check_branch
    %18 = sbr.rel (0) target = $region17
  $region16: #{elannet_tiny_forward.33} parent=0 // pred_region
    _
  $region17: #{elannet_tiny_forward.33} parent=0 // pred_fallthru
    _
  %v20 = vld [vmem:[%s0] sm:$0xf]
  %v21 = vld [vmem:[%s1] sm:$0xf]
  %v22 = vld [vmem:[%s1 + $0x4] sm:$0xf]
  %v23 = vld [vmem:[%s1 + $0x8] sm:$0xf]
  %v24 = vld [vmem:[%s1 + $0xc] sm:$0xf]
  %v25 = vld [vmem:[%s1 + $0x10] sm:$0xf]
  %v26 = vld [vmem:[%s1 + $0x14] sm:$0xf]
  %v27 = vld [vmem:[%s1 + $0x18] sm:$0xf]
  %v28 = vld [vmem:[%s1 + $0x1c] sm:$0xf]
  %v29 = vld [vmem:[%s1 + $0x20] sm:$0xf]
  %v30 = vld [vmem:[%s1 + $0x24] sm:$0xf]
  %v31 = vld [vmem:[%s1 + $0x28] sm:$0xf]
  %v32 = vld [vmem:[%s1 + $0x2c] sm:$0xf]
  %v33 = vld [vmem:[%s1 + $0x30] sm:$0xf]
  %v34 = vld [vmem:[%s1 + $0x34] sm:$0xf]
  %v35 = vld [vmem:[%s1 + $0x38] sm:$0xf]
  %v36 = vld [vmem:[%s1 + $0x3c] sm:$0xf]
  %v53 = vunpack.c.l.b16 %v21
  %v54 = vunpack.c.l.b16 %v22
  %v55 = vunpack.c.l.b16 %v23
  %v56 = vunpack.c.l.b16 %v24
  %v57 = vunpack.c.l.b16 %v25
  %v58 = vunpack.c.l.b16 %v26
  %v59 = vunpack.c.l.b16 %v27
  %v60 = vunpack.c.l.b16 %v28
  %v61 = vunpack.c.l.b16 %v29
  %v62 = vunpack.c.l.b16 %v30
  %v63 = vunpack.c.l.b16 %v31
  %v64 = vunpack.c.l.b16 %v32
  %v65 = vunpack.c.l.b16 %v33
  %v66 = vunpack.c.l.b16 %v34
  %v67 = vunpack.c.l.b16 %v35
  %v68 = vunpack.c.l.b16 %v36
  %v69 = vpack.c.b16 %v54, %v53
  %v70 = vpack.c.b16 %v56, %v55
  %v71 = vpack.c.b16 %v58, %v57
  %v72 = vpack.c.b16 %v60, %v59
  %v73 = vpack.c.b16 %v62, %v61
  %v74 = vpack.c.b16 %v64, %v63
  %v75 = vpack.c.b16 %v66, %v65
  %v76 = vpack.c.b16 %v68, %v67
  %85 = vmatprep.subr.bf16.mxu0 0
  %86 = vmatpush1.bf16.msra.mxu0 %v69
  %87 = vmatprep.subr.bf16.mxu0 0
  %88 = vmatpush1.bf16.msra.mxu0 %v70
  %89 = vmatprep.subr.bf16.mxu0 0
  %90 = vmatpush1.bf16.msra.mxu0 %v71
  %91 = vmatprep.subr.bf16.mxu0 0
  %92 = vmatpush1.bf16.msra.mxu0 %v72
  %93 = vmatprep.subr.bf16.mxu0 0
  %94 = vmatpush1.bf16.msra.mxu0 %v73
  %95 = vmatprep.subr.bf16.mxu0 0
  %96 = vmatpush1.bf16.msra.mxu0 %v74
  %97 = vmatprep.subr.bf16.mxu0 0
  %98 = vmatpush1.bf16.msra.mxu0 %v75
  %99 = vmatprep.subr.bf16.mxu0 0
  %100 = vmatpush1.bf16.msra.mxu0 %v76
  %101 = vmatprep.subr.bf16.mxu0 0
  %102 = vmatpush1.bf16.msra.mxu0 0
  %103 = vmatprep.subr.bf16.mxu0 0
  %104 = vmatpush1.bf16.msra.mxu0 0
  %105 = vmatprep.subr.bf16.mxu0 0
  %106 = vmatpush1.bf16.msra.mxu0 0
  %107 = vmatprep.subr.bf16.mxu0 0
  %108 = vmatpush1.bf16.msra.mxu0 0
  %109 = vmatprep.subr.bf16.mxu0 0
  %110 = vmatpush1.bf16.msra.mxu0 0
  %111 = vmatprep.subr.bf16.mxu0 0
  %112 = vmatpush1.bf16.msra.mxu0 0
  %113 = vmatprep.subr.bf16.mxu0 0
  %114 = vmatpush1.bf16.msra.mxu0 0
  %115 = vmatprep.subr.bf16.mxu0 0
  %116 = vmatpush1.bf16.msra.mxu0 0
  %117 = vmatprep.mubr.bf16.mxu0 0
  %118 = vmatmul.mubr.bf16.gmra.mrb[0].mxu0 %v20
  %v119 = vpop.f32.mrb[0].mxu0
  %v120 = vadd.f32 0.0, %v119
  %v121 = vpop.f32.mrb[0].mxu0
  %v122 = vpop.f32.mrb[0].mxu0
  %v123 = vpop.f32.mrb[0].mxu0
  %124 = vdwg.mxu0
  %v125 = vld [vmem:[%s2] sm:$0x1]
  %v127 = vlaneseq
  %v128 = vshrl.u32 %v127, 7
  %v129 = vsub.s32 0, %v128
  %v130 = vrot.slane %v125, %v129
  %v132 = vmul.f32 %v120, %v130
  %v133 = vld [vmem:[%s3] sm:$0x1]
  %v135 = vlaneseq
  %v136 = vshrl.u32 %v135, 7
  %v137 = vsub.s32 0, %v136
  %v138 = vrot.slane %v133, %v137
  %v140 = vadd.f32 %v132, %v138
  %vm141 = vcmp.ge.f32.partialorder %v140, 0.0
  %v142 = vmul.f32 %v140, 0.1
  %v143 = vsel %vm141, %v140, %v142
  %v144 = vpack.c.bf16 %v143, %v143
  %vm145 = vcmask 519168
  %146 = vst.msk [vmem:[%s4] sm:$0xf] %vm145, %v144
  %v148 = vunpack.c.l.b16 %v144
  %v149 = vpack.c.b16 %v148, %v148
  %150 = vrot.lane.b32.xlu0 %v149, 64
  %v151 = vpop.permute.xlu0 %150
  %153 = vst.msk [vmem:[%s5] sm:$0xf] %vm145, %v151
  // Predicated region
  $region18: #{elannet_tiny_forward.33} parent=0 // pred_check
    _
  $region19: #{elannet_tiny_forward.33} parent=0 // pred_check_branch
    %155 = sbr.rel (0) target = $region21
  $region20: #{elannet_tiny_forward.33} parent=0 // pred_region
    _
  $region21: #{elannet_tiny_forward.33} parent=0 // pred_fallthru
    _
  // Predicated region
  $region22: #{elannet_tiny_forward.33} parent=0 // pred_check
    _
  $region23: #{elannet_tiny_forward.33} parent=0 // pred_check_branch
    %157 = sbr.rel (0) target = $region25
  $region24: #{elannet_tiny_forward.33} parent=0 // pred_region
    _
  $region25: #{elannet_tiny_forward.33} parent=0 // pred_fallthru
    _
  // Predicated region
  $region26: #{elannet_tiny_forward.33} parent=0 // pred_check
    _
  $region27: #{elannet_tiny_forward.33} parent=0 // pred_check_branch
    %159 = sbr.rel (0) target = $region29
  $region28: #{elannet_tiny_forward.33} parent=0 // pred_region
    _
  $region29: #{elannet_tiny_forward.33} parent=0 // pred_fallthru
    _
  // Predicated region
  $region30: #{elannet_tiny_forward.33} parent=0 // pred_check
    _
  $region31: #{elannet_tiny_forward.33} parent=0 // pred_check_branch
    %161 = sbr.rel (0) target = $region33
  $region32: #{elannet_tiny_forward.33} parent=0 // pred_region
    _
  $region33: #{elannet_tiny_forward.33} parent=0 // pred_fallthru
    _

// kernel: elannet_tiny_forward.29
$region0: #{elannet_tiny_forward.29}
  #allocation0 [shape = 'u32[]', space=smem, size = 0x4, offset = 0x4, fixed_abs, tag = 'smem constant byte address 0x4 - core index']
  #allocation1 [shape = 'u32[144,128]{1,0:T(1,128)}', space=vmem, size = 0x12000, scoped, tag = 'internal scratch']
  %s0 = inlined_call_operand.vmem [shape: bf16[2,42,32], index: 0, kind: input, shape index: {}]
  %s1 = inlined_call_operand.vmem [shape: bf16[288,32], index: 1, kind: input, shape index: {}]
  %s2 = inlined_call_operand.vmem [shape: f32[1,32], index: 2, kind: input, shape index: {}]
  %s3 = inlined_call_operand.vmem [shape: f32[1,32], index: 3, kind: input, shape index: {}]
  %s4 = inlined_call_operand.vmem [shape: bf16[2,24,32], index: 4, kind: output, shape index: {}]
  %s5 = sld [smem:[#allocation0]]
  $region49: #{elannet_tiny_forward.29} parent=0
    _
  %s7 = ssub.s32 1, %s5
  %s8 = scalar_select 0, %s7, %s5
  loop: start=0, step=1, limit=4
  $region2: #{elannet_tiny_forward.29} parent=0 // loop_pre_header
    _
  $region3: #{elannet_tiny_forward.29} parent=0 // loop_header
    %s10 = sphi 0, %s14
    %p11 = scmp.ge.s32.totalorder %s10, 4
    %s20 = sphi 0, %s22
    %s23 = sphi 0, %s20
    %s24 = sphi 0, %s23
    %s40 = sphi 0, %s24
    %s44 = sphi 0, %s44
    %s46 = sphi 0, %s44
    %s47 = sphi 0, %s46
    %s61 = sphi 0, %s47
    %s65 = sphi 0, %s65
    %s67 = sphi 0, %s65
    %s68 = sphi 0, %s67
    %s82 = sphi 0, %s68
    %s86 = sphi 0, %s86
    %s88 = sphi 0, %s86
    %s89 = sphi 0, %s88
    %s103 = sphi 0, %s89
    %s109 = sphi 0, %s111
    %s112 = sphi 0, %s109
    %s113 = sphi 0, %s112
    %s129 = sphi 0, %s113
  $region4: #{elannet_tiny_forward.29} parent=0 // loop_header_branch
    %13 = sbr.rel (%p11) target = $region8
  $region5: #{elannet_tiny_forward.29} parent=0 // loop_body
    %s15 = ssub.s32 %s10, 1
    %s16 = ssub.s32 %s10, 2
    %s17 = sadd.s32 %s10, 1
    %s18 = ssub.s32 %s10, %s17
    %p19 = scmp.eq.s32.totalorder %s18, 0
    %s21 = sadd.s32 %s20, 1
    %s22 = scalar_select %p19, %s20, %s21
    %p25 = pneg %p19
    %p26 = scmp.eq.s32.totalorder %s10, 1
    %p27 = por %p25, %p26
    %p28 = scmp.ne.s32.totalorder %s20, %s23
    %p29 = scmp.eq.s32.totalorder %s10, 0
    %p30 = por %p28, %p29
    %p31 = scmp.ne.s32.totalorder %s20, %s23
    %p32 = scmp.eq.s32.totalorder %s15, 1
    %p33 = por %p31, %p32
    %p34 = scmp.ne.s32.totalorder %s23, %s24
    %p35 = scmp.eq.s32.totalorder %s15, 0
    %p36 = por %p34, %p35
    %p37 = scmp.ne.s32.totalorder %s23, %s24
    %p38 = scmp.eq.s32.totalorder %s16, 1
    %p39 = por %p37, %p38
    %p41 = scmp.ne.s32.totalorder %s24, %s40
    %p42 = scmp.eq.s32.totalorder %s16, 0
    %p43 = por %p41, %p42
    %s45 = sadd.s32 %s44, 1
    %p48 = scmp.eq.s32.totalorder %s10, 1
    %p49 = scmp.ne.s32.totalorder %s44, %s46
    %p50 = scmp.eq.s32.totalorder %s10, 0
    %p51 = por %p49, %p50
    %p52 = scmp.ne.s32.totalorder %s44, %s46
    %p53 = scmp.eq.s32.totalorder %s15, 1
    %p54 = por %p52, %p53
    %p55 = scmp.ne.s32.totalorder %s46, %s47
    %p56 = scmp.eq.s32.totalorder %s15, 0
    %p57 = por %p55, %p56
    %p58 = scmp.ne.s32.totalorder %s46, %s47
    %p59 = scmp.eq.s32.totalorder %s16, 1
    %p60 = por %p58, %p59
    %p62 = scmp.ne.s32.totalorder %s47, %s61
    %p63 = scmp.eq.s32.totalorder %s16, 0
    %p64 = por %p62, %p63
    %s66 = sadd.s32 %s65, 1
    %p69 = scmp.eq.s32.totalorder %s10, 1
    %p70 = scmp.ne.s32.totalorder %s65, %s67
    %p71 = scmp.eq.s32.totalorder %s10, 0
    %p72 = por %p70, %p71
    %p73 = scmp.ne.s32.totalorder %s65, %s67
    %p74 = scmp.eq.s32.totalorder %s15, 1
    %p75 = por %p73, %p74
    %p76 = scmp.ne.s32.totalorder %s67, %s68
    %p77 = scmp.eq.s32.totalorder %s15, 0
    %p78 = por %p76, %p77
    %p79 = scmp.ne.s32.totalorder %s67, %s68
    %p80 = scmp.eq.s32.totalorder %s16, 1
    %p81 = por %p79, %p80
    %p83 = scmp.ne.s32.totalorder %s68, %s82
    %p84 = scmp.eq.s32.totalorder %s16, 0
    %p85 = por %p83, %p84
    %s87 = sadd.s32 %s86, 1
    %p90 = scmp.eq.s32.totalorder %s10, 1
    %p91 = scmp.ne.s32.totalorder %s86, %s88
    %p92 = scmp.eq.s32.totalorder %s10, 0
    %p93 = por %p91, %p92
    %p94 = scmp.ne.s32.totalorder %s86, %s88
    %p95 = scmp.eq.s32.totalorder %s15, 1
    %p96 = por %p94, %p95
    %p97 = scmp.ne.s32.totalorder %s88, %s89
    %p98 = scmp.eq.s32.totalorder %s15, 0
    %p99 = por %p97, %p98
    %p100 = scmp.ne.s32.totalorder %s88, %s89
    %p101 = scmp.eq.s32.totalorder %s16, 1
    %p102 = por %p100, %p101
    %p104 = scmp.ne.s32.totalorder %s89, %s103
    %p105 = scmp.eq.s32.totalorder %s16, 0
    %p106 = por %p104, %p105
    %s107 = ssub.s32 %s10, %s17
    %p108 = scmp.eq.s32.totalorder %s107, 0
    %s110 = sadd.s32 %s109, 1
    %s111 = scalar_select %p108, %s109, %s110
    %p114 = pneg %p108
    %p115 = scmp.eq.s32.totalorder %s10, 1
    %p116 = por %p114, %p115
    %p117 = scmp.ne.s32.totalorder %s109, %s112
    %p118 = scmp.eq.s32.totalorder %s10, 0
    %p119 = por %p117, %p118
    %p120 = scmp.ne.s32.totalorder %s109, %s112
    %p121 = scmp.eq.s32.totalorder %s15, 1
    %p122 = por %p120, %p121
    %p123 = scmp.ne.s32.totalorder %s112, %s113
    %p124 = scmp.eq.s32.totalorder %s15, 0
    %p125 = por %p123, %p124
    %p126 = scmp.ne.s32.totalorder %s112, %s113
    %p127 = scmp.eq.s32.totalorder %s16, 1
    %p128 = por %p126, %p127
    %p130 = scmp.ne.s32.totalorder %s113, %s129
    %p131 = scmp.eq.s32.totalorder %s16, 0
    %p132 = por %p130, %p131
    %p133 = scmp.le.s32.totalorder 1, %s10
    %p134 = scmp.lt.s32.totalorder %s10, 3
    %p135 = pnand %p133, %p134
    %p136 = pneg %p135
    // Predicated region
    $region9: #{elannet_tiny_forward.29} parent=5 // pred_check
      _
    $region10: #{elannet_tiny_forward.29} parent=5 // pred_check_branch
      %138 = sbr.rel (%p135) target = $region12
    $region11: #{elannet_tiny_forward.29} parent=5 // pred_region
      %s139 = ssub.s32 %s10, 1
      // Predicated region
      $region13: #{elannet_tiny_forward.29} parent=11 // pred_check
        %p140 = pneg %p57
      $region14: #{elannet_tiny_forward.29} parent=11 // pred_check_branch
        %142 = sbr.rel (%p140) target = $region16
      $region15: #{elannet_tiny_forward.29} parent=11 // pred_region
        _
      $region16: #{elannet_tiny_forward.29} parent=11 // pred_fallthru
        _
      // Predicated region
      $region17: #{elannet_tiny_forward.29} parent=11 // pred_check
        %p143 = pneg %p78
      $region18: #{elannet_tiny_forward.29} parent=11 // pred_check_branch
        %145 = sbr.rel (%p143) target = $region20
      $region19: #{elannet_tiny_forward.29} parent=11 // pred_region
        _
      $region20: #{elannet_tiny_forward.29} parent=11 // pred_fallthru
        _
      // Predicated region
      $region21: #{elannet_tiny_forward.29} parent=11 // pred_check
        %p146 = pneg %p99
      $region22: #{elannet_tiny_forward.29} parent=11 // pred_check_branch
        %148 = sbr.rel (%p146) target = $region24
      $region23: #{elannet_tiny_forward.29} parent=11 // pred_region
        _
      $region24: #{elannet_tiny_forward.29} parent=11 // pred_fallthru
        _
    $region12: #{elannet_tiny_forward.29} parent=5 // pred_fallthru
      _
    %p149 = scmp.lt.s32.totalorder %s10, 2
    // Predicated region
    $region25: #{elannet_tiny_forward.29} parent=5 // pred_check
      %p150 = pneg %p149
    $region26: #{elannet_tiny_forward.29} parent=5 // pred_check_branch
      %152 = sbr.rel (%p150) target = $region28
    $region27: #{elannet_tiny_forward.29} parent=5 // pred_region
      // Predicated region
      $region29: #{elannet_tiny_forward.29} parent=27 // pred_check
        %p153 = pneg %p30
      $region30: #{elannet_tiny_forward.29} parent=27 // pred_check_branch
        %155 = sbr.rel (%p153) target = $region32
      $region31: #{elannet_tiny_forward.29} parent=27 // pred_region
        %p156 = scmp.lt.s32.totalorder %s10, 1
        %s157 = scalar_select %p156, %s10, 1
        %s158 = smul.addr %s157, 6
        %s159 = smul.addr %s158, 4
        %s160 = scalar_lea.vmem %s0, %s159
      $region32: #{elannet_tiny_forward.29} parent=27 // pred_fallthru
        _
    $region28: #{elannet_tiny_forward.29} parent=5 // pred_fallthru
      _
    %p161 = scmp.le.s32.totalorder 1, %s10
    %p162 = scmp.lt.s32.totalorder %s10, 3
    %p163 = pnand %p161, %p162
    %p164 = pneg %p163
    // Predicated region
    $region33: #{elannet_tiny_forward.29} parent=5 // pred_check
      _
    $region34: #{elannet_tiny_forward.29} parent=5 // pred_check_branch
      %166 = sbr.rel (%p163) target = $region36
    $region35: #{elannet_tiny_forward.29} parent=5 // pred_region
      %s167 = ssub.s32 %s10, 1
      %p168 = scmp.lt.s32.totalorder %s15, 1
      %s169 = scalar_select %p168, %s15, 1
      %s170 = smul.addr %s169, 6
      %s171 = smul.addr %s170, 4
      %s172 = scalar_lea.vmem %s0, %s171
      %p173 = pneg %p36
      %p174 = pneg %p33
      %p175 = pneg %p57
      %p176 = pneg %p54
      %p177 = pneg %p78
      %p178 = pneg %p75
      %p179 = pneg %p99
      %p180 = pneg %p96
      %p181 = pneg %p125
      %p182 = pneg %p122
      %p183 = scmp.lt.s32.totalorder %s15, 1
      %s184 = scalar_select %p183, %s15, 1
      %s185 = smul.addr %s184, 3
      %s186 = smul.addr %s185, 4
      %s187 = scalar_lea.vmem %s4, %s186
      %p188 = scmp.lt.s32.totalorder %s15, 1
      %s189 = scalar_select %p188, %s15, 1
      %s190 = smul.addr %s189, 6
      %s191 = smul.addr %s190, 4
      %s192 = scalar_lea.vmem %s0, %s191
      %p193 = scmp.lt.s32.totalorder %s15, 1
      %s194 = scalar_select %p193, %s15, 1
      %s195 = smul.addr %s194, 3
      %s196 = smul.addr %s195, 4
      %s197 = scalar_lea.vmem %s4, %s196
      %v199 = vld [vmem:[%s192] sm:$0xf]
      %v200 = vld [vmem:[%s192 + $0x4] sm:$0xf]
      %v201 = vld [vmem:[%s192 + $0x8] sm:$0xf]
      %v202 = vld [vmem:[%s192 + $0xc] sm:$0x1]
      %v203 = vld [vmem:[%s192] sm:$0xe]
      %v204 = vld [vmem:[%s192] sm:$0x8]
      %v205 = vld [vmem:[%s192 + $0xc] sm:$0x7]
      %v206 = vld [vmem:[%s192 + $0xc] sm:$0xf]
      %v207 = vld [vmem:[%s192 + $0x4] sm:$0xc]
      %v208 = vld [vmem:[%s192 + $0x10] sm:$0x3]
      %v209 = vld [vmem:[%s192 + $0x10] sm:$0x7]
      %v210 = vld [vmem:[%s192 + $0x4] sm:$0x8]
      %v214 = vunpack.c.l.b16 %v199
      %v215 = vunpack.c.l.b16 %v200
      %v216 = vunpack.c.l.b16 %v201
      %v217 = vpack.c.b16 %v215, %v214
      %v218 = vpack.c.b16 %v216, %v216
      %v220 = vunpack.c.l.b16 %v202
      %v221 = vpack.c.b16 %v220, %v216
      %vm222 = vsmask.f32 7424
      %v224 = vshrl.u32 %v217, 16
      %v226 = vshll.u32 %v217, 16
      %v228 = vrot.slane %v226, 1
      %v229 = vor.u32 %v224, %v228
      %v231 = vshll.u32 %v221, 16
      %v233 = vrot.slane %v231, 1
      %v234 = vsel %vm222, %v229, %v233
      %v235 = vshrl.u32 %v221, 16
      %v237 = vor.u32 %v235, %v233
      %238 = vrot.lane.b32.xlu0 %v234, 32
      %v239 = vpop.permute.xlu0 %238
      %240 = vrot.lane.b32.xlu0 %v237, 32
      %v241 = vpop.permute.xlu0 %240
      %v243 = vunpack.c.l.b16 %v203
      %v244 = vpack.c.b16 %v215, %v243
      %vm245 = vcmask 1046528
      %v246 = vrot.slane %v244, 1
      %v247 = vrot.slane %v221, 1
      %v248 = vsel %vm245, %v246, %v247
      %249 = vrot.lane.b32.xlu0 %v248, 64
      %v250 = vpop.permute.xlu0 %249
      %251 = vrot.lane.b32.xlu0 %v247, 64
      %v252 = vpop.permute.xlu0 %251
      %v255 = vunpack.c.l.b16 %v204
      %v256 = vunpack.c.l.b16 %v205
      %v257 = vpack.c.b16 %v215, %v255
      %v258 = vpack.c.b16 %v256, %v216
      %vm259 = vcmask 1044480
      %v260 = vrot.slane %v257, 3
      %v261 = vrot.slane %v258, 3
      %v262 = vsel %vm259, %v260, %v261
      %263 = vrot.lane.b32.xlu0 %v262, 96
      %v264 = vpop.permute.xlu0 %263
      %265 = vrot.lane.b32.xlu0 %v261, 96
      %v266 = vpop.permute.xlu0 %265
      %v268 = vunpack.c.l.b16 %v206
      %v269 = vpack.c.b16 %v268, %v216
      %vm270 = vsmask.f32 4352
      %v272 = vshrl.u32 %v257, 16
      %v274 = vrot.slane %v272, 3
      %v275 = vshll.u32 %v257, 16
      %v277 = vrot.slane %v275, 4
      %v278 = vor.u32 %v274, %v277
      %v280 = vshrl.u32 %v269, 16
      %v282 = vrot.slane %v280, 3
      %v283 = vshll.u32 %v269, 16
      %v285 = vrot.slane %v283, 4
      %v286 = vor.u32 %v282, %v285
      %v287 = vsel %vm270, %v278, %v286
      %v288 = vpack.c.b16 %v216, %v215
      %v289 = vpack.c.b16 %v268, %v268
      %290 = vrot.lane.b32.xlu0 %v288, 32
      %v291 = vpop.permute.xlu0 %290
      %292 = vrot.lane.b32.xlu0 %v289, 32
      %v293 = vpop.permute.xlu0 %292
      %v296 = vunpack.c.l.b16 %v207
      %v297 = vunpack.c.l.b16 %v208
      %v298 = vpack.c.b16 %v216, %v296
      %v299 = vpack.c.b16 %v297, %v268
      %vm300 = vcmask 1045504
      %v301 = vrot.slane %v298, 2
      %v302 = vrot.slane %v299, 2
      %v303 = vsel %vm300, %v301, %v302
      %304 = vrot.lane.b32.xlu0 %v303, 64
      %v305 = vpop.permute.xlu0 %304
      %306 = vrot.lane.b32.xlu0 %v302, 64
      %v307 = vpop.permute.xlu0 %306
      %v309 = vunpack.c.l.b16 %v209
      %v310 = vpack.c.b16 %v309, %v268
      %vm311 = vsmask.f32 5376
      %v313 = vshrl.u32 %v298, 16
      %v315 = vrot.slane %v313, 2
      %v316 = vshll.u32 %v298, 16
      %v318 = vrot.slane %v316, 3
      %v319 = vor.u32 %v315, %v318
      %v321 = vshrl.u32 %v310, 16
      %v323 = vrot.slane %v321, 2
      %v324 = vshll.u32 %v310, 16
      %v326 = vrot.slane %v324, 3
      %v327 = vor.u32 %v323, %v326
      %v328 = vsel %vm311, %v319, %v327
      %329 = vrot.lane.b32.xlu0 %v328, 96
      %v330 = vpop.permute.xlu0 %329
      %331 = vrot.lane.b32.xlu0 %v327, 96
      %v332 = vpop.permute.xlu0 %331
      %v334 = vunpack.c.l.b16 %v210
      %v335 = vpack.c.b16 %v216, %v334
      %v336 = vrot.slane %v335, 3
      %v337 = vrot.slane %v310, 3
      %v338 = vsel %vm259, %v336, %v337
      %vm339 = vcmask 261120
      %v341 = vsel %vm339, %v217, %v239
      %v344 = vsel %vm339, %v218, %v241
      %vm345 = vcmask 523264
      %v347 = vsel %vm345, %v341, %v250
      %v349 = vsel %vm345, %v344, %v252
      %vm350 = vcmask 785408
      %v352 = vsel %vm350, %v347, %v264
      %v355 = vsel %vm350, %v349, %v266
      %v359 = vsel %vm339, %v287, %v291
      %v362 = vsel %vm339, %v286, %v293
      %v364 = vsel %vm345, %v359, %v305
      %v366 = vsel %vm345, %v362, %v307
      %v368 = vsel %vm350, %v364, %v330
      %v371 = vsel %vm350, %v366, %v332
      %v373 = vld [vmem:[%s1] sm:$0xf]
      %v374 = vld [vmem:[%s1 + $0x4] sm:$0xf]
      %v375 = vld [vmem:[%s1 + $0x8] sm:$0xf]
      %v376 = vld [vmem:[%s1 + $0xc] sm:$0xf]
      %v377 = vld [vmem:[%s1 + $0x10] sm:$0xf]
      %v378 = vld [vmem:[%s1 + $0x14] sm:$0xf]
      %v379 = vld [vmem:[%s1 + $0x18] sm:$0xf]
      %v380 = vld [vmem:[%s1 + $0x1c] sm:$0xf]
      %v381 = vld [vmem:[%s1 + $0x20] sm:$0xf]
      %v382 = vld [vmem:[%s1 + $0x24] sm:$0xf]
      %v383 = vld [vmem:[%s1 + $0x28] sm:$0xf]
      %v384 = vld [vmem:[%s1 + $0x2c] sm:$0xf]
      %v385 = vld [vmem:[%s1 + $0x30] sm:$0xf]
      %v386 = vld [vmem:[%s1 + $0x34] sm:$0xf]
      %v387 = vld [vmem:[%s1 + $0x38] sm:$0xf]
      %v388 = vld [vmem:[%s1 + $0x3c] sm:$0xf]
      %v389 = vld [vmem:[%s1 + $0x40] sm:$0xf]
      %v390 = vld [vmem:[%s1 + $0x44] sm:$0xf]
      %v391 = vld [vmem:[%s1 + $0x48] sm:$0xf]
      %v392 = vld [vmem:[%s1 + $0x4c] sm:$0xf]
      %v393 = vld [vmem:[%s1 + $0x50] sm:$0xf]
      %v394 = vld [vmem:[%s1 + $0x54] sm:$0xf]
      %v395 = vld [vmem:[%s1 + $0x58] sm:$0xf]
      %v396 = vld [vmem:[%s1 + $0x5c] sm:$0xf]
      %v397 = vld [vmem:[%s1 + $0x60] sm:$0xf]
      %v398 = vld [vmem:[%s1 + $0x64] sm:$0xf]
      %v399 = vld [vmem:[%s1 + $0x68] sm:$0xf]
      %v400 = vld [vmem:[%s1 + $0x6c] sm:$0xf]
      %v401 = vld [vmem:[%s1 + $0x70] sm:$0xf]
      %v402 = vld [vmem:[%s1 + $0x74] sm:$0xf]
      %v403 = vld [vmem:[%s1 + $0x78] sm:$0xf]
      %v404 = vld [vmem:[%s1 + $0x7c] sm:$0xf]
      %v405 = vld [vmem:[%s1 + $0x80] sm:$0xf]
      %v406 = vld [vmem:[%s1 + $0x84] sm:$0xf]
      %v407 = vld [vmem:[%s1 + $0x88] sm:$0xf]
      %v408 = vld [vmem:[%s1 + $0x8c] sm:$0xf]
      %v445 = vunpack.c.l.b16 %v373
      %v446 = vunpack.c.l.b16 %v374
      %v447 = vunpack.c.l.b16 %v375
      %v448 = vunpack.c.l.b16 %v376
      %v449 = vunpack.c.l.b16 %v377
      %v450 = vunpack.c.l.b16 %v378
      %v451 = vunpack.c.l.b16 %v379
      %v452 = vunpack.c.l.b16 %v380
      %v453 = vunpack.c.l.b16 %v381
      %v454 = vunpack.c.l.b16 %v382
      %v455 = vunpack.c.l.b16 %v383
      %v456 = vunpack.c.l.b16 %v384
      %v457 = vunpack.c.l.b16 %v385
      %v458 = vunpack.c.l.b16 %v386
      %v459 = vunpack.c.l.b16 %v387
      %v460 = vunpack.c.l.b16 %v388
      %v461 = vunpack.c.l.b16 %v389
      %v462 = vunpack.c.l.b16 %v390
      %v463 = vunpack.c.l.b16 %v391
      %v464 = vunpack.c.l.b16 %v392
      %v465 = vunpack.c.l.b16 %v393
      %v466 = vunpack.c.l.b16 %v394
      %v467 = vunpack.c.l.b16 %v395
      %v468 = vunpack.c.l.b16 %v396
      %v469 = vunpack.c.l.b16 %v397
      %v470 = vunpack.c.l.b16 %v398
      %v471 = vunpack.c.l.b16 %v399
      %v472 = vunpack.c.l.b16 %v400
      %v473 = vunpack.c.l.b16 %v401
      %v474 = vunpack.c.l.b16 %v402
      %v475 = vunpack.c.l.b16 %v403
      %v476 = vunpack.c.l.b16 %v404
      %v477 = vunpack.c.l.b16 %v405
      %v478 = vunpack.c.l.b16 %v406
      %v479 = vunpack.c.l.b16 %v407
      %v480 = vunpack.c.l.b16 %v408
      %v481 = vpack.c.b16 %v446, %v445
      %v482 = vpack.c.b16 %v448, %v447
      %v483 = vpack.c.b16 %v450, %v449
      %v484 = vpack.c.b16 %v452, %v451
      %v485 = vpack.c.b16 %v454, %v453
      %v486 = vpack.c.b16 %v456, %v455
      %v487 = vpack.c.b16 %v458, %v457
      %v488 = vpack.c.b16 %v460, %v459
      %v489 = vpack.c.b16 %v462, %v461
      %v490 = vpack.c.b16 %v464, %v463
      %v491 = vpack.c.b16 %v466, %v465
      %v492 = vpack.c.b16 %v468, %v467
      %v493 = vpack.c.b16 %v470, %v469
      %v494 = vpack.c.b16 %v472, %v471
      %v495 = vpack.c.b16 %v474, %v473
      %v496 = vpack.c.b16 %v476, %v475
      %v497 = vpack.c.b16 %v478, %v477
      %v498 = vpack.c.b16 %v480, %v479
      %v518 = vsel %vm339, %v338, 0
      %v521 = vsel %vm339, %v337, 0
      %523 = vmatprep.subr.bf16.mxu0 0
      %524 = vmatpush1.bf16.msra.mxu0 %v481
      %525 = vmatprep.subr.bf16.mxu0 0
      %526 = vmatpush1.bf16.msra.mxu0 %v482
      %527 = vmatprep.subr.bf16.mxu0 0
      %528 = vmatpush1.bf16.msra.mxu0 %v483
      %529 = vmatprep.subr.bf16.mxu0 0
      %530 = vmatpush1.bf16.msra.mxu0 %v484
      %531 = vmatprep.subr.bf16.mxu0 0
      %532 = vmatpush1.bf16.msra.mxu0 %v485
      %533 = vmatprep.subr.bf16.mxu0 0
      %534 = vmatpush1.bf16.msra.mxu0 %v486
      %535 = vmatprep.subr.bf16.mxu0 0
      %536 = vmatpush1.bf16.msra.mxu0 %v487
      %537 = vmatprep.subr.bf16.mxu0 0
      %538 = vmatpush1.bf16.msra.mxu0 %v488
      %539 = vmatprep.subr.bf16.mxu0 0
      %540 = vmatpush1.bf16.msra.mxu0 %v489
      %541 = vmatprep.subr.bf16.mxu0 0
      %542 = vmatpush1.bf16.msra.mxu0 %v490
      %543 = vmatprep.subr.bf16.mxu0 0
      %544 = vmatpush1.bf16.msra.mxu0 %v491
      %545 = vmatprep.subr.bf16.mxu0 0
      %546 = vmatpush1.bf16.msra.mxu0 %v492
      %547 = vmatprep.subr.bf16.mxu0 0
      %548 = vmatpush1.bf16.msra.mxu0 %v493
      %549 = vmatprep.subr.bf16.mxu0 0
      %550 = vmatpush1.bf16.msra.mxu0 %v494
      %551 = vmatprep.subr.bf16.mxu0 0
      %552 = vmatpush1.bf16.msra.mxu0 %v495
      %553 = vmatprep.subr.bf16.mxu0 0
      %554 = vmatpush1.bf16.msra.mxu0 %v496
      %555 = vmatprep.mubr.bf16.mxu0 %v368
      %556 = vmatmul.mubr.bf16.gmra.mrb[0].mxu0 %v352
      %v557 = vpop.f32.mrb[0].mxu0
      %v558 = vadd.f32 0.0, %v557
      %v559 = vpop.f32.mrb[0].mxu0
      %v560 = vpop.f32.mrb[0].mxu0
      %v561 = vadd.f32 0.0, %v560
      %v562 = vpop.f32.mrb[0].mxu0
      %563 = vmatprep.mubr.bf16.mxu0 %v371
      %564 = vmatmul.mubr.bf16.gmra.mrb[0].mxu0 %v355
      %v565 = vpop.f32.mrb[0].mxu0
      %v566 = vadd.f32 0.0, %v565
      %v567 = vpop.f32.mrb[0].mxu0
      %v568 = vpop.f32.mrb[0].mxu0
      %v569 = vpop.f32.mrb[0].mxu0
      %570 = vdwg.mxu0
      %571 = vmatprep.subr.bf16.mxu0 0
      %572 = vmatpush1.bf16.msra.mxu0 %v497
      %573 = vmatprep.subr.bf16.mxu0 0
      %574 = vmatpush1.bf16.msra.mxu0 %v498
      %575 = vmatprep.subr.bf16.mxu0 0
      %576 = vmatpush1.bf16.msra.mxu0 0
      %577 = vmatprep.subr.bf16.mxu0 0
      %578 = vmatpush1.bf16.msra.mxu0 0
      %579 = vmatprep.subr.bf16.mxu0 0
      %580 = vmatpush1.bf16.msra.mxu0 0
      %581 = vmatprep.subr.bf16.mxu0 0
      %582 = vmatpush1.bf16.msra.mxu0 0
      %583 = vmatprep.subr.bf16.mxu0 0
      %584 = vmatpush1.bf16.msra.mxu0 0
      %585 = vmatprep.subr.bf16.mxu0 0
      %586 = vmatpush1.bf16.msra.mxu0 0
      %587 = vmatprep.subr.bf16.mxu0 0
      %588 = vmatpush1.bf16.msra.mxu0 0
      %589 = vmatprep.subr.bf16.mxu0 0
      %590 = vmatpush1.bf16.msra.mxu0 0
      %591 = vmatprep.subr.bf16.mxu0 0
      %592 = vmatpush1.bf16.msra.mxu0 0
      %593 = vmatprep.subr.bf16.mxu0 0
      %594 = vmatpush1.bf16.msra.mxu0 0
      %595 = vmatprep.subr.bf16.mxu0 0
      %596 = vmatpush1.bf16.msra.mxu0 0
      %597 = vmatprep.subr.bf16.mxu0 0
      %598 = vmatpush1.bf16.msra.mxu0 0
      %599 = vmatprep.subr.bf16.mxu0 0
      %600 = vmatpush1.bf16.msra.mxu0 0
      %601 = vmatprep.subr.bf16.mxu0 0
      %602 = vmatpush1.bf16.msra.mxu0 0
      %603 = vmatprep.mubr.bf16.mxu0 0
      %604 = vmatmul.mubr.bf16.gmra.mrb[0].mxu0 %v518
      %v605 = vpop.f32.mrb[0].mxu0
      %v606 = vadd.f32 %v558, %v605
      %v607 = vpop.f32.mrb[0].mxu0
      %v608 = vpop.f32.mrb[0].mxu0
      %v609 = vadd.f32 %v561, %v608
      %v610 = vpop.f32.mrb[0].mxu0
      %611 = vmatprep.mubr.bf16.mxu0 0
      %612 = vmatmul.mubr.bf16.gmra.mrb[0].mxu0 %v521
      %v613 = vpop.f32.mrb[0].mxu0
      %v614 = vadd.f32 %v566, %v613
      %v615 = vpop.f32.mrb[0].mxu0
      %v616 = vpop.f32.mrb[0].mxu0
      %v617 = vpop.f32.mrb[0].mxu0
      %618 = vdwg.mxu0
      %v619 = vld [vmem:[%s2] sm:$0x1]
      %v621 = vlaneseq
      %v622 = vshrl.u32 %v621, 7
      %v623 = vsub.s32 0, %v622
      %v624 = vrot.slane %v619, %v623
      %v626 = vmul.f32 %v606, %v624
      %v627 = vmul.f32 %v609, %v624
      %v628 = vmul.f32 %v614, %v624
      %v629 = vld [vmem:[%s3] sm:$0x1]
      %v631 = vlaneseq
      %v632 = vshrl.u32 %v631, 7
      %v633 = vsub.s32 0, %v632
      %v634 = vrot.slane %v629, %v633
      %v636 = vadd.f32 %v626, %v634
      %v637 = vadd.f32 %v627, %v634
      %v638 = vadd.f32 %v628, %v634
      %vm639 = vcmp.ge.f32.partialorder %v636, 0.0
      %vm640 = vcmp.ge.f32.partialorder %v637, 0.0
      %vm641 = vcmp.ge.f32.partialorder %v638, 0.0
      %v642 = vmul.f32 %v636, 0.1
      %v643 = vmul.f32 %v637, 0.1
      %v644 = vmul.f32 %v638, 0.1
      %v645 = vsel %vm639, %v636, %v642
      %v646 = vsel %vm640, %v637, %v643
      %v647 = vsel %vm641, %v638, %v644
      %v648 = vpack.c.bf16 %v646, %v645
      %v649 = vpack.c.bf16 %v647, %v647
      %v652 = vunpack.c.l.b16 %v648
      %v653 = vunpack.c.h.b16 %v648
      %v654 = vunpack.c.l.b16 %v649
      %v655 = vpack.c.b16 %v652, %v652
      %v656 = vpack.c.b16 %v653, %v653
      %v657 = vpack.c.b16 %v654, %v654
      %vm661 = vcmask 257024
      %662 = vst.msk [vmem:[%s197] sm:$0xf] %vm661, %v655
      %663 = vst.msk [vmem:[%s197 + $0x4] sm:$0xf] %vm661, %v656
      %664 = vst.msk [vmem:[%s197 + $0x8] sm:$0xf] %vm661, %v657
      %p665 = scmp.lt.s32.totalorder %s15, 1
      %s666 = scalar_select %p665, %s15, 1
      %s667 = smul.addr %s666, 3
      %s668 = smul.addr %s667, 4
      %s669 = scalar_lea.vmem %s4, %s668
      // Predicated region
      $region37: #{elannet_tiny_forward.29} parent=35 // pred_check
        %p670 = pneg %p122
      $region38: #{elannet_tiny_forward.29} parent=35 // pred_check_branch
        %672 = sbr.rel (%p670) target = $region40
      $region39: #{elannet_tiny_forward.29} parent=35 // pred_region
        _
      $region40: #{elannet_tiny_forward.29} parent=35 // pred_fallthru
        _
    $region36: #{elannet_tiny_forward.29} parent=5 // pred_fallthru
      _
    %p673 = scmp.le.s32.totalorder 2, %s10
    // Predicated region
    $region41: #{elannet_tiny_forward.29} parent=5 // pred_check
      %p674 = pneg %p673
    $region42: #{elannet_tiny_forward.29} parent=5 // pred_check_branch
      %676 = sbr.rel (%p674) target = $region44
    $region43: #{elannet_tiny_forward.29} parent=5 // pred_region
      %s677 = ssub.s32 %s10, 2
      // Predicated region
      $region45: #{elannet_tiny_forward.29} parent=43 // pred_check
        %p678 = pneg %p128
      $region46: #{elannet_tiny_forward.29} parent=43 // pred_check_branch
        %680 = sbr.rel (%p678) target = $region48
      $region47: #{elannet_tiny_forward.29} parent=43 // pred_region
        %p681 = scmp.lt.s32.totalorder %s16, 1
        %s682 = scalar_select %p681, %s16, 1
        %s683 = smul.addr %s682, 3
        %s684 = smul.addr %s683, 4
        %s685 = scalar_lea.vmem %s4, %s684
      $region48: #{elannet_tiny_forward.29} parent=43 // pred_fallthru
        _
    $region44: #{elannet_tiny_forward.29} parent=5 // pred_fallthru
      _
  $region6: #{elannet_tiny_forward.29} parent=0 // loop_footer
    %s14 = sadd.s32 1, %s10
  $region7: #{elannet_tiny_forward.29} parent=0 // loop_footer_branch
    %9 = sbr.rel target = $region3
  $region8: #{elannet_tiny_forward.29} parent=0 // loop_exit
    _

// kernel: elannet_tiny_forward.31
$region0: #{elannet_tiny_forward.31}
  #allocation0 [shape = 'u32[]', space=smem, size = 0x4, offset = 0x4, fixed_abs, tag = 'smem constant byte address 0x4 - core index']
  #allocation1 [shape = 'u32[144,128]{1,0:T(1,128)}', space=vmem, size = 0x12000, scoped, tag = 'internal scratch']
  %s0 = inlined_call_operand.vmem [shape: bf16[32,32], index: 0, kind: input, shape index: {}]
  %s1 = inlined_call_operand.vmem [shape: bf16[32,32], index: 1, kind: input, shape index: {}]
  %s2 = inlined_call_operand.vmem [shape: bf16[32,32], index: 2, kind: input, shape index: {}]
  %s3 = inlined_call_operand.vmem [shape: bf16[32,32], index: 3, kind: input, shape index: {}]
  %s4 = inlined_call_operand.vmem [shape: bf16[128,128], index: 4, kind: input, shape index: {}]
  %s5 = inlined_call_operand.vmem [shape: f32[1,128], index: 5, kind: input, shape index: {}]
  %s6 = inlined_call_operand.vmem [shape: f32[1,128], index: 6, kind: input, shape index: {}]
  %s7 = inlined_call_operand.vmem [shape: bf16[32,128], index: 7, kind: output, shape index: {}]
  %s8 = sld [smem:[#allocation0]]
  $region61: #{elannet_tiny_forward.31} parent=0
    _
  %s10 = ssub.s32 1, %s8
  %s11 = scalar_select 0, %s10, %s8
  loop: start=0, step=1, limit=4
  $region2: #{elannet_tiny_forward.31} parent=0 // loop_pre_header
    _
  $region3: #{elannet_tiny_forward.31} parent=0 // loop_header
    %s13 = sphi 0, %s17
    %p14 = scmp.ge.s32.totalorder %s13, 4
    %s23 = sphi 0, %s25
    %s26 = sphi 0, %s23
    %s27 = sphi 0, %s26
    %s43 = sphi 0, %s27
    %s49 = sphi 0, %s51
    %s52 = sphi 0, %s49
    %s53 = sphi 0, %s52
    %s69 = sphi 0, %s53
    %s75 = sphi 0, %s77
    %s78 = sphi 0, %s75
    %s79 = sphi 0, %s78
    %s95 = sphi 0, %s79
    %s101 = sphi 0, %s103
    %s104 = sphi 0, %s101
    %s105 = sphi 0, %s104
    %s121 = sphi 0, %s105
    %s125 = sphi 0, %s125
    %s127 = sphi 0, %s125
    %s128 = sphi 0, %s127
    %s142 = sphi 0, %s128
    %s146 = sphi 0, %s146
    %s148 = sphi 0, %s146
    %s149 = sphi 0, %s148
    %s163 = sphi 0, %s149
    %s167 = sphi 0, %s167
    %s169 = sphi 0, %s167
    %s170 = sphi 0, %s169
    %s184 = sphi 0, %s170
    %s190 = sphi 0, %s192
    %s193 = sphi 0, %s190
    %s194 = sphi 0, %s193
    %s210 = sphi 0, %s194
  $region4: #{elannet_tiny_forward.31} parent=0 // loop_header_branch
    %16 = sbr.rel (%p14) target = $region8
  $region5: #{elannet_tiny_forward.31} parent=0 // loop_body
    %s18 = ssub.s32 %s13, 1
    %s19 = ssub.s32 %s13, 2
    %s20 = sadd.s32 %s13, 1
    %s21 = ssub.s32 %s13, %s20
    %p22 = scmp.eq.s32.totalorder %s21, 0
    %s24 = sadd.s32 %s23, 1
    %s25 = scalar_select %p22, %s23, %s24
    %p28 = pneg %p22
    %p29 = scmp.eq.s32.totalorder %s13, 1
    %p30 = por %p28, %p29
    %p31 = scmp.ne.s32.totalorder %s23, %s26
    %p32 = scmp.eq.s32.totalorder %s13, 0
    %p33 = por %p31, %p32
    %p34 = scmp.ne.s32.totalorder %s23, %s26
    %p35 = scmp.eq.s32.totalorder %s18, 1
    %p36 = por %p34, %p35
    %p37 = scmp.ne.s32.totalorder %s26, %s27
    %p38 = scmp.eq.s32.totalorder %s18, 0
    %p39 = por %p37, %p38
    %p40 = scmp.ne.s32.totalorder %s26, %s27
    %p41 = scmp.eq.s32.totalorder %s19, 1
    %p42 = por %p40, %p41
    %p44 = scmp.ne.s32.totalorder %s27, %s43
    %p45 = scmp.eq.s32.totalorder %s19, 0
    %p46 = por %p44, %p45
    %s47 = ssub.s32 %s13, %s20
    %p48 = scmp.eq.s32.totalorder %s47, 0
    %s50 = sadd.s32 %s49, 1
    %s51 = scalar_select %p48, %s49, %s50
    %p54 = pneg %p48
    %p55 = scmp.eq.s32.totalorder %s13, 1
    %p56 = por %p54, %p55
    %p57 = scmp.ne.s32.totalorder %s49, %s52
    %p58 = scmp.eq.s32.totalorder %s13, 0
    %p59 = por %p57, %p58
    %p60 = scmp.ne.s32.totalorder %s49, %s52
    %p61 = scmp.eq.s32.totalorder %s18, 1
    %p62 = por %p60, %p61
    %p63 = scmp.ne.s32.totalorder %s52, %s53
    %p64 = scmp.eq.s32.totalorder %s18, 0
    %p65 = por %p63, %p64
    %p66 = scmp.ne.s32.totalorder %s52, %s53
    %p67 = scmp.eq.s32.totalorder %s19, 1
    %p68 = por %p66, %p67
    %p70 = scmp.ne.s32.totalorder %s53, %s69
    %p71 = scmp.eq.s32.totalorder %s19, 0
    %p72 = por %p70, %p71
    %s73 = ssub.s32 %s13, %s20
    %p74 = scmp.eq.s32.totalorder %s73, 0
    %s76 = sadd.s32 %s75, 1
    %s77 = scalar_select %p74, %s75, %s76
    %p80 = pneg %p74
    %p81 = scmp.eq.s32.totalorder %s13, 1
    %p82 = por %p80, %p81
    %p83 = scmp.ne.s32.totalorder %s75, %s78
    %p84 = scmp.eq.s32.totalorder %s13, 0
    %p85 = por %p83, %p84
    %p86 = scmp.ne.s32.totalorder %s75, %s78
    %p87 = scmp.eq.s32.totalorder %s18, 1
    %p88 = por %p86, %p87
    %p89 = scmp.ne.s32.totalorder %s78, %s79
    %p90 = scmp.eq.s32.totalorder %s18, 0
    %p91 = por %p89, %p90
    %p92 = scmp.ne.s32.totalorder %s78, %s79
    %p93 = scmp.eq.s32.totalorder %s19, 1
    %p94 = por %p92, %p93
    %p96 = scmp.ne.s32.totalorder %s79, %s95
    %p97 = scmp.eq.s32.totalorder %s19, 0
    %p98 = por %p96, %p97
    %s99 = ssub.s32 %s13, %s20
    %p100 = scmp.eq.s32.totalorder %s99, 0
    %s102 = sadd.s32 %s101, 1
    %s103 = scalar_select %p100, %s101, %s102
    %p106 = pneg %p100
    %p107 = scmp.eq.s32.totalorder %s13, 1
    %p108 = por %p106, %p107
    %p109 = scmp.ne.s32.totalorder %s101, %s104
    %p110 = scmp.eq.s32.totalorder %s13, 0
    %p111 = por %p109, %p110
    %p112 = scmp.ne.s32.totalorder %s101, %s104
    %p113 = scmp.eq.s32.totalorder %s18, 1
    %p114 = por %p112, %p113
    %p115 = scmp.ne.s32.totalorder %s104, %s105
    %p116 = scmp.eq.s32.totalorder %s18, 0
    %p117 = por %p115, %p116
    %p118 = scmp.ne.s32.totalorder %s104, %s105
    %p119 = scmp.eq.s32.totalorder %s19, 1
    %p120 = por %p118, %p119
    %p122 = scmp.ne.s32.totalorder %s105, %s121
    %p123 = scmp.eq.s32.totalorder %s19, 0
    %p124 = por %p122, %p123
    %s126 = sadd.s32 %s125, 1
    %p129 = scmp.eq.s32.totalorder %s13, 1
    %p130 = scmp.ne.s32.totalorder %s125, %s127
    %p131 = scmp.eq.s32.totalorder %s13, 0
    %p132 = por %p130, %p131
    %p133 = scmp.ne.s32.totalorder %s125, %s127
    %p134 = scmp.eq.s32.totalorder %s18, 1
    %p135 = por %p133, %p134
    %p136 = scmp.ne.s32.totalorder %s127, %s128
    %p137 = scmp.eq.s32.totalorder %s18, 0
    %p138 = por %p136, %p137
    %p139 = scmp.ne.s32.totalorder %s127, %s128
    %p140 = scmp.eq.s32.totalorder %s19, 1
    %p141 = por %p139, %p140
    %p143 = scmp.ne.s32.totalorder %s128, %s142
    %p144 = scmp.eq.s32.totalorder %s19, 0
    %p145 = por %p143, %p144
    %s147 = sadd.s32 %s146, 1
    %p150 = scmp.eq.s32.totalorder %s13, 1
    %p151 = scmp.ne.s32.totalorder %s146, %s148
    %p152 = scmp.eq.s32.totalorder %s13, 0
    %p153 = por %p151, %p152
    %p154 = scmp.ne.s32.totalorder %s146, %s148
    %p155 = scmp.eq.s32.totalorder %s18, 1
    %p156 = por %p154, %p155
    %p157 = scmp.ne.s32.totalorder %s148, %s149
    %p158 = scmp.eq.s32.totalorder %s18, 0
    %p159 = por %p157, %p158
    %p160 = scmp.ne.s32.totalorder %s148, %s149
    %p161 = scmp.eq.s32.totalorder %s19, 1
    %p162 = por %p160, %p161
    %p164 = scmp.ne.s32.totalorder %s149, %s163
    %p165 = scmp.eq.s32.totalorder %s19, 0
    %p166 = por %p164, %p165
    %s168 = sadd.s32 %s167, 1
    %p171 = scmp.eq.s32.totalorder %s13, 1
    %p172 = scmp.ne.s32.totalorder %s167, %s169
    %p173 = scmp.eq.s32.totalorder %s13, 0
    %p174 = por %p172, %p173
    %p175 = scmp.ne.s32.totalorder %s167, %s169
    %p176 = scmp.eq.s32.totalorder %s18, 1
    %p177 = por %p175, %p176
    %p178 = scmp.ne.s32.totalorder %s169, %s170
    %p179 = scmp.eq.s32.totalorder %s18, 0
    %p180 = por %p178, %p179
    %p181 = scmp.ne.s32.totalorder %s169, %s170
    %p182 = scmp.eq.s32.totalorder %s19, 1
    %p183 = por %p181, %p182
    %p185 = scmp.ne.s32.totalorder %s170, %s184
    %p186 = scmp.eq.s32.totalorder %s19, 0
    %p187 = por %p185, %p186
    %s188 = ssub.s32 %s13, %s20
    %p189 = scmp.eq.s32.totalorder %s188, 0
    %s191 = sadd.s32 %s190, 1
    %s192 = scalar_select %p189, %s190, %s191
    %p195 = pneg %p189
    %p196 = scmp.eq.s32.totalorder %s13, 1
    %p197 = por %p195, %p196
    %p198 = scmp.ne.s32.totalorder %s190, %s193
    %p199 = scmp.eq.s32.totalorder %s13, 0
    %p200 = por %p198, %p199
    %p201 = scmp.ne.s32.totalorder %s190, %s193
    %p202 = scmp.eq.s32.totalorder %s18, 1
    %p203 = por %p201, %p202
    %p204 = scmp.ne.s32.totalorder %s193, %s194
    %p205 = scmp.eq.s32.totalorder %s18, 0
    %p206 = por %p204, %p205
    %p207 = scmp.ne.s32.totalorder %s193, %s194
    %p208 = scmp.eq.s32.totalorder %s19, 1
    %p209 = por %p207, %p208
    %p211 = scmp.ne.s32.totalorder %s194, %s210
    %p212 = scmp.eq.s32.totalorder %s19, 0
    %p213 = por %p211, %p212
    %p214 = scmp.le.s32.totalorder 1, %s13
    %p215 = scmp.lt.s32.totalorder %s13, 3
    %p216 = pnand %p214, %p215
    %p217 = pneg %p216
    // Predicated region
    $region9: #{elannet_tiny_forward.31} parent=5 // pred_check
      _
    $region10: #{elannet_tiny_forward.31} parent=5 // pred_check_branch
      %219 = sbr.rel (%p216) target = $region12
    $region11: #{elannet_tiny_forward.31} parent=5 // pred_region
      %s220 = ssub.s32 %s13, 1
      // Predicated region
      $region13: #{elannet_tiny_forward.31} parent=11 // pred_check
        %p221 = pneg %p138
      $region14: #{elannet_tiny_forward.31} parent=11 // pred_check_branch
        %223 = sbr.rel (%p221) target = $region16
      $region15: #{elannet_tiny_forward.31} parent=11 // pred_region
        _
      $region16: #{elannet_tiny_forward.31} parent=11 // pred_fallthru
        _
      // Predicated region
      $region17: #{elannet_tiny_forward.31} parent=11 // pred_check
        %p224 = pneg %p159
      $region18: #{elannet_tiny_forward.31} parent=11 // pred_check_branch
        %226 = sbr.rel (%p224) target = $region20
      $region19: #{elannet_tiny_forward.31} parent=11 // pred_region
        _
      $region20: #{elannet_tiny_forward.31} parent=11 // pred_fallthru
        _
      // Predicated region
      $region21: #{elannet_tiny_forward.31} parent=11 // pred_check
        %p227 = pneg %p180
      $region22: #{elannet_tiny_forward.31} parent=11 // pred_check_branch
        %229 = sbr.rel (%p227) target = $region24
      $region23: #{elannet_tiny_forward.31} parent=11 // pred_region
        _
      $region24: #{elannet_tiny_forward.31} parent=11 // pred_fallthru
        _
    $region12: #{elannet_tiny_forward.31} parent=5 // pred_fallthru
      _
    %p230 = scmp.lt.s32.totalorder %s13, 2
    // Predicated region
    $region25: #{elannet_tiny_forward.31} parent=5 // pred_check
      %p231 = pneg %p230
    $region26: #{elannet_tiny_forward.31} parent=5 // pred_check_branch
      %233 = sbr.rel (%p231) target = $region28
    $region27: #{elannet_tiny_forward.31} parent=5 // pred_region
      // Predicated region
      $region29: #{elannet_tiny_forward.31} parent=27 // pred_check
        %p234 = pneg %p33
      $region30: #{elannet_tiny_forward.31} parent=27 // pred_check_branch
        %236 = sbr.rel (%p234) target = $region32
      $region31: #{elannet_tiny_forward.31} parent=27 // pred_region
        %s237 = smul.u32 2, %s13
        %p238 = scmp.lt.s32.totalorder %s237, 3
        %s239 = scalar_select %p238, %s237, 3
        %s240 = smul.addr %s239, 4
        %s241 = scalar_lea.vmem %s0, %s240
        %s242 = smul.u32 2, %s13
      $region32: #{elannet_tiny_forward.31} parent=27 // pred_fallthru
        _
      // Predicated region
      $region33: #{elannet_tiny_forward.31} parent=27 // pred_check
        %p243 = pneg %p59
      $region34: #{elannet_tiny_forward.31} parent=27 // pred_check_branch
        %245 = sbr.rel (%p243) target = $region36
      $region35: #{elannet_tiny_forward.31} parent=27 // pred_region
        %s246 = smul.u32 2, %s13
        %p247 = scmp.lt.s32.totalorder %s246, 3
        %s248 = scalar_select %p247, %s246, 3
        %s249 = smul.addr %s248, 4
        %s250 = scalar_lea.vmem %s1, %s249
        %s251 = smul.u32 2, %s13
      $region36: #{elannet_tiny_forward.31} parent=27 // pred_fallthru
        _
      // Predicated region
      $region37: #{elannet_tiny_forward.31} parent=27 // pred_check
        %p252 = pneg %p85
      $region38: #{elannet_tiny_forward.31} parent=27 // pred_check_branch
        %254 = sbr.rel (%p252) target = $region40
      $region39: #{elannet_tiny_forward.31} parent=27 // pred_region
        %s255 = smul.u32 2, %s13
        %p256 = scmp.lt.s32.totalorder %s255, 3
        %s257 = scalar_select %p256, %s255, 3
        %s258 = smul.addr %s257, 4
        %s259 = scalar_lea.vmem %s2, %s258
        %s260 = smul.u32 2, %s13
      $region40: #{elannet_tiny_forward.31} parent=27 // pred_fallthru
        _
      // Predicated region
      $region41: #{elannet_tiny_forward.31} parent=27 // pred_check
        %p261 = pneg %p111
      $region42: #{elannet_tiny_forward.31} parent=27 // pred_check_branch
        %263 = sbr.rel (%p261) target = $region44
      $region43: #{elannet_tiny_forward.31} parent=27 // pred_region
        %s264 = smul.u32 2, %s13
        %p265 = scmp.lt.s32.totalorder %s264, 3
        %s266 = scalar_select %p265, %s264, 3
        %s267 = smul.addr %s266, 4
        %s268 = scalar_lea.vmem %s3, %s267
        %s269 = smul.u32 2, %s13
      $region44: #{elannet_tiny_forward.31} parent=27 // pred_fallthru
        _
    $region28: #{elannet_tiny_forward.31} parent=5 // pred_fallthru
      _
    %p270 = scmp.le.s32.totalorder 1, %s13
    %p271 = scmp.lt.s32.totalorder %s13, 3
    %p272 = pnand %p270, %p271
    %p273 = pneg %p272
    // Predicated region
    $region45: #{elannet_tiny_forward.31} parent=5 // pred_check
      _
    $region46: #{elannet_tiny_forward.31} parent=5 // pred_check_branch
      %275 = sbr.rel (%p272) target = $region48
    $region47: #{elannet_tiny_forward.31} parent=5 // pred_region
      %s276 = ssub.s32 %s13, 1
      %s277 = smul.u32 2, %s18
      %p278 = scmp.lt.s32.totalorder %s277, 3
      %s279 = scalar_select %p278, %s277, 3
      %s280 = smul.addr %s279, 4
      %s281 = scalar_lea.vmem %s0, %s280
      %p282 = pneg %p39
      %p283 = pneg %p36
      %s284 = smul.u32 2, %s18
      %p285 = scmp.lt.s32.totalorder %s284, 3
      %s286 = scalar_select %p285, %s284, 3
      %s287 = smul.addr %s286, 4
      %s288 = scalar_lea.vmem %s1, %s287
      %p289 = pneg %p65
      %p290 = pneg %p62
      %s291 = smul.u32 2, %s18
      %p292 = scmp.lt.s32.totalorder %s291, 3
      %s293 = scalar_select %p292, %s291, 3
      %s294 = smul.addr %s293, 4
      %s295 = scalar_lea.vmem %s2, %s294
      %p296 = pneg %p91
      %p297 = pneg %p88
      %s298 = smul.u32 2, %s18
      %p299 = scmp.lt.s32.totalorder %s298, 3
      %s300 = scalar_select %p299, %s298, 3
      %s301 = smul.addr %s300, 4
      %s302 = scalar_lea.vmem %s3, %s301
      %p303 = pneg %p117
      %p304 = pneg %p114
      %p305 = pneg %p138
      %p306 = pneg %p135
      %p307 = pneg %p159
      %p308 = pneg %p156
      %p309 = pneg %p180
      %p310 = pneg %p177
      %p311 = pneg %p206
      %p312 = pneg %p203
      %s313 = smul.u32 2, %s18
      %p314 = scmp.lt.s32.totalorder %s313, 3
      %s315 = scalar_select %p314, %s313, 3
      %s316 = smul.addr %s315, 4
      %s317 = scalar_lea.vmem %s7, %s316
      %s318 = smul.u32 2, %s18
      %p319 = scmp.lt.s32.totalorder %s318, 3
      %s320 = scalar_select %p319, %s318, 3
      %s321 = smul.addr %s320, 4
      %s322 = scalar_lea.vmem %s0, %s321
      %s323 = smul.u32 2, %s18
      %s324 = smul.u32 2, %s18
      %p325 = scmp.lt.s32.totalorder %s324, 3
      %s326 = scalar_select %p325, %s324, 3
      %s327 = smul.addr %s326, 4
      %s328 = scalar_lea.vmem %s1, %s327
      %s329 = smul.u32 2, %s18
      %s330 = smul.u32 2, %s18
      %p331 = scmp.lt.s32.totalorder %s330, 3
      %s332 = scalar_select %p331, %s330, 3
      %s333 = smul.addr %s332, 4
      %s334 = scalar_lea.vmem %s2, %s333
      %s335 = smul.u32 2, %s18
      %s336 = smul.u32 2, %s18
      %p337 = scmp.lt.s32.totalorder %s336, 3
      %s338 = scalar_select %p337, %s336, 3
      %s339 = smul.addr %s338, 4
      %s340 = scalar_lea.vmem %s3, %s339
      %s341 = smul.u32 2, %s18
      %s342 = smul.u32 2, %s18
      %p343 = scmp.lt.s32.totalorder %s342, 3
      %s344 = scalar_select %p343, %s342, 3
      %s345 = smul.addr %s344, 4
      %s346 = scalar_lea.vmem %s7, %s345
      %s347 = smul.u32 2, %s18
      %v349 = vld [vmem:[%s322] sm:$0xf]
      %v350 = vld [vmem:[%s322 + $0x4] sm:$0xf]
      %v351 = vld [vmem:[%s328] sm:$0xf]
      %v352 = vld [vmem:[%s328 + $0x4] sm:$0xf]
      %v353 = vld [vmem:[%s334] sm:$0xf]
      %v354 = vld [vmem:[%s334 + $0x4] sm:$0xf]
      %v355 = vld [vmem:[%s340] sm:$0xf]
      %v356 = vld [vmem:[%s340 + $0x4] sm:$0xf]
      %v359 = vunpack.c.l.b16 %v349
      %v360 = vunpack.c.l.b16 %v350
      %v361 = vpack.c.b16 %v360, %v359
      %v364 = vunpack.c.l.b16 %v351
      %v365 = vunpack.c.l.b16 %v352
      %v366 = vpack.c.b16 %v365, %v364
      %367 = vrot.lane.b32.xlu0 %v366, 32
      %v368 = vpop.permute.xlu0 %367
      %v371 = vunpack.c.l.b16 %v353
      %v372 = vunpack.c.l.b16 %v354
      %v373 = vpack.c.b16 %v372, %v371
      %374 = vrot.lane.b32.xlu0 %v373, 64
      %v375 = vpop.permute.xlu0 %374
      %v378 = vunpack.c.l.b16 %v355
      %v379 = vunpack.c.l.b16 %v356
      %v380 = vpack.c.b16 %v379, %v378
      %381 = vrot.lane.b32.xlu0 %v380, 96
      %v382 = vpop.permute.xlu0 %381
      %vm383 = vcmask 261120
      %v386 = vsel %vm383, %v361, %v368
      %vm387 = vcmask 523264
      %v389 = vsel %vm387, %v386, %v375
      %vm390 = vcmask 785408
      %v392 = vsel %vm390, %v389, %v382
      %v394 = vld [vmem:[%s4] sm:$0xf]
      %v395 = vld [vmem:[%s4 + $0x4] sm:$0xf]
      %v396 = vld [vmem:[%s4 + $0x8] sm:$0xf]
      %v397 = vld [vmem:[%s4 + $0xc] sm:$0xf]
      %v398 = vld [vmem:[%s4 + $0x10] sm:$0xf]
      %v399 = vld [vmem:[%s4 + $0x14] sm:$0xf]
      %v400 = vld [vmem:[%s4 + $0x18] sm:$0xf]
      %v401 = vld [vmem:[%s4 + $0x1c] sm:$0xf]
      %v402 = vld [vmem:[%s4 + $0x20] sm:$0xf]
      %v403 = vld [vmem:[%s4 + $0x24] sm:$0xf]
      %v404 = vld [vmem:[%s4 + $0x28] sm:$0xf]
      %v405 = vld [vmem:[%s4 + $0x2c] sm:$0xf]
      %v406 = vld [vmem:[%s4 + $0x30] sm:$0xf]
      %v407 = vld [vmem:[%s4 + $0x34] sm:$0xf]
      %v408 = vld [vmem:[%s4 + $0x38] sm:$0xf]
      %v409 = vld [vmem:[%s4 + $0x3c] sm:$0xf]
      %v426 = vunpack.c.l.b16 %v394
      %v427 = vunpack.c.l.b16 %v395
      %v428 = vunpack.c.l.b16 %v396
      %v429 = vunpack.c.l.b16 %v397
      %v430 = vunpack.c.l.b16 %v398
      %v431 = vunpack.c.l.b16 %v399
      %v432 = vunpack.c.l.b16 %v400
      %v433 = vunpack.c.l.b16 %v401
      %v434 = vunpack.c.l.b16 %v402
      %v435 = vunpack.c.l.b16 %v403
      %v436 = vunpack.c.l.b16 %v404
      %v437 = vunpack.c.l.b16 %v405
      %v438 = vunpack.c.l.b16 %v406
      %v439 = vunpack.c.l.b16 %v407
      %v440 = vunpack.c.l.b16 %v408
      %v441 = vunpack.c.l.b16 %v409
      %v442 = vpack.c.b16 %v427, %v426
      %v443 = vpack.c.b16 %v429, %v428
      %v444 = vpack.c.b16 %v431, %v430
      %v445 = vpack.c.b16 %v433, %v432
      %v446 = vpack.c.b16 %v435, %v434
      %v447 = vpack.c.b16 %v437, %v436
      %v448 = vpack.c.b16 %v439, %v438
      %v449 = vpack.c.b16 %v441, %v440
      %458 = vmatprep.subr.bf16.mxu0 0
      %459 = vmatpush1.bf16.msra.mxu0 %v442
      %460 = vmatprep.subr.bf16.mxu0 0
      %461 = vmatpush1.bf16.msra.mxu0 %v443
      %462 = vmatprep.subr.bf16.mxu0 0
      %463 = vmatpush1.bf16.msra.mxu0 %v444
      %464 = vmatprep.subr.bf16.mxu0 0
      %465 = vmatpush1.bf16.msra.mxu0 %v445
      %466 = vmatprep.subr.bf16.mxu0 0
      %467 = vmatpush1.bf16.msra.mxu0 %v446
      %468 = vmatprep.subr.bf16.mxu0 0
      %469 = vmatpush1.bf16.msra.mxu0 %v447
      %470 = vmatprep.subr.bf16.mxu0 0
      %471 = vmatpush1.bf16.msra.mxu0 %v448
      %472 = vmatprep.subr.bf16.mxu0 0
      %473 = vmatpush1.bf16.msra.mxu0 %v449
      %474 = vmatprep.subr.bf16.mxu0 0
      %475 = vmatpush1.bf16.msra.mxu0 0
      %476 = vmatprep.subr.bf16.mxu0 0
      %477 = vmatpush1.bf16.msra.mxu0 0
      %478 = vmatprep.subr.bf16.mxu0 0
      %479 = vmatpush1.bf16.msra.mxu0 0
      %480 = vmatprep.subr.bf16.mxu0 0
      %481 = vmatpush1.bf16.msra.mxu0 0
      %482 = vmatprep.subr.bf16.mxu0 0
      %483 = vmatpush1.bf16.msra.mxu0 0
      %484 = vmatprep.subr.bf16.mxu0 0
      %485 = vmatpush1.bf16.msra.mxu0 0
      %486 = vmatprep.subr.bf16.mxu0 0
      %487 = vmatpush1.bf16.msra.mxu0 0
      %488 = vmatprep.subr.bf16.mxu0 0
      %489 = vmatpush1.bf16.msra.mxu0 0
      %490 = vmatprep.mubr.bf16.mxu0 0
      %491 = vmatmul.mubr.bf16.gmra.mrb[0].mxu0 %v392
      %v492 = vpop.f32.mrb[0].mxu0
      %v493 = vadd.f32 0.0, %v492
      %v494 = vpop.f32.mrb[0].mxu0
      %v495 = vpop.f32.mrb[0].mxu0
      %v496 = vadd.f32 0.0, %v495
      %v497 = vpop.f32.mrb[0].mxu0
      %498 = vdwg.mxu0
      %v499 = vld [vmem:[%s5] sm:$0x1]
      %v501 = vlaneseq
      %v502 = vshrl.u32 %v501, 7
      %v503 = vsub.s32 0, %v502
      %v504 = vrot.slane %v499, %v503
      %v506 = vmul.f32 %v493, %v504
      %v507 = vmul.f32 %v496, %v504
      %v508 = vld [vmem:[%s6] sm:$0x1]
      %v510 = vlaneseq
      %v511 = vshrl.u32 %v510, 7
      %v512 = vsub.s32 0, %v511
      %v513 = vrot.slane %v508, %v512
      %v515 = vadd.f32 %v506, %v513
      %v516 = vadd.f32 %v507, %v513
      %v517 = vsub.f32 0.0, %v515
      %v518 = vsub.f32 0.0, %v516
      %v519 = vmul.f32 %v517, 1.442695
      %v520 = vpow.pop %v519
      %v521 = vmul.f32 %v518, 1.442695
      %v522 = vpow.pop %v521
      %v523 = vadd.f32 %v520, 1.0
      %v524 = vadd.f32 %v522, 1.0
      %v525 = vrcp.pop %v523
      %v526 = vrcp.pop %v524
      %v527 = vmul.f32 %v515, %v525
      %v528 = vmul.f32 %v516, %v526
      %v529 = vpack.c.bf16 %v528, %v527
      %v531 = vunpack.c.l.b16 %v529
      %v532 = vunpack.c.h.b16 %v529
      %v533 = vpack.c.b16 %v531, %v531
      %v534 = vpack.c.b16 %v532, %v532
      %537 = vst [vmem:[%s346] sm:$0xf] %v533
      %538 = vst [vmem:[%s346 + $0x4] sm:$0xf] %v534
      %s539 = smul.u32 2, %s18
      %p540 = scmp.lt.s32.totalorder %s539, 3
      %s541 = scalar_select %p540, %s539, 3
      %s542 = smul.addr %s541, 4
      %s543 = scalar_lea.vmem %s7, %s542
      // Predicated region
      $region49: #{elannet_tiny_forward.31} parent=47 // pred_check
        %p544 = pneg %p203
      $region50: #{elannet_tiny_forward.31} parent=47 // pred_check_branch
        %546 = sbr.rel (%p544) target = $region52
      $region51: #{elannet_tiny_forward.31} parent=47 // pred_region
        %s547 = smul.u32 2, %s18
      $region52: #{elannet_tiny_forward.31} parent=47 // pred_fallthru
        _
    $region48: #{elannet_tiny_forward.31} parent=5 // pred_fallthru
      _
    %p548 = scmp.le.s32.totalorder 2, %s13
    // Predicated region
    $region53: #{elannet_tiny_forward.31} parent=5 // pred_check
      %p549 = pneg %p548
    $region54: #{elannet_tiny_forward.31} parent=5 // pred_check_branch
      %551 = sbr.rel (%p549) target = $region56
    $region55: #{elannet_tiny_forward.31} parent=5 // pred_region
      %s552 = ssub.s32 %s13, 2
      // Predicated region
      $region57: #{elannet_tiny_forward.31} parent=55 // pred_check
        %p553 = pneg %p209
      $region58: #{elannet_tiny_forward.31} parent=55 // pred_check_branch
        %555 = sbr.rel (%p553) target = $region60
      $region59: #{elannet_tiny_forward.31} parent=55 // pred_region
        %s556 = smul.u32 2, %s19
        %p557 = scmp.lt.s32.totalorder %s556, 3
        %s558 = scalar_select %p557, %s556, 3
        %s559 = smul.addr %s558, 4
        %s560 = scalar_lea.vmem %s7, %s559
      $region60: #{elannet_tiny_forward.31} parent=55 // pred_fallthru
        _
    $region56: #{elannet_tiny_forward.31} parent=5 // pred_fallthru
      _
  $region6: #{elannet_tiny_forward.31} parent=0 // loop_footer
    %s17 = sadd.s32 1, %s13
  $region7: #{elannet_tiny_forward.31} parent=0 // loop_footer_branch
    %12 = sbr.rel target = $region3
  $region8: #{elannet_tiny_forward.31} parent=0 // loop_exit
    _

// kernel: elannet_tiny_forward.37
$region0: #{elannet_tiny_forward.37}
  #allocation0 [shape = 'u32[]', space=smem, size = 0x4, offset = 0x4, fixed_abs, tag = 'smem constant byte address 0x4 - core index']
  #allocation1 [shape = 'u32[144,128]{1,0:T(1,128)}', space=vmem, size = 0x12000, scoped, tag = 'internal scratch']
  %s0 = inlined_call_operand.vmem [shape: bf16[2,2,1,512], index: 0, kind: input, shape index: {}]
  %s1 = inlined_call_operand.vmem [shape: bf16[2,1,256], index: 1, kind: output, shape index: {}]
  %s2 = sld [smem:[#allocation0]]
  $region37: #{elannet_tiny_forward.37} parent=0
    _
  %s4 = ssub.s32 1, %s2
  %s5 = scalar_select 0, %s4, %s2
  loop: start=0, step=1, limit=4
  $region2: #{elannet_tiny_forward.37} parent=0 // loop_pre_header
    _
  $region3: #{elannet_tiny_forward.37} parent=0 // loop_header
    %s7 = sphi 0, %s11
    %p8 = scmp.ge.s32.totalorder %s7, 4
    %s17 = sphi 0, %s19
    %s20 = sphi 0, %s17
    %s21 = sphi 0, %s20
    %s37 = sphi 0, %s21
    %s43 = sphi 0, %s45
    %s46 = sphi 0, %s43
    %s47 = sphi 0, %s46
    %s63 = sphi 0, %s47
  $region4: #{elannet_tiny_forward.37} parent=0 // loop_header_branch
    %10 = sbr.rel (%p8) target = $region8
  $region5: #{elannet_tiny_forward.37} parent=0 // loop_body
    %s12 = ssub.s32 %s7, 1
    %s13 = ssub.s32 %s7, 2
    %s14 = sadd.s32 %s7, 1
    %s15 = ssub.s32 %s7, %s14
    %p16 = scmp.eq.s32.totalorder %s15, 0
    %s18 = sadd.s32 %s17, 1
    %s19 = scalar_select %p16, %s17, %s18
    %p22 = pneg %p16
    %p23 = scmp.eq.s32.totalorder %s7, 1
    %p24 = por %p22, %p23
    %p25 = scmp.ne.s32.totalorder %s17, %s20
    %p26 = scmp.eq.s32.totalorder %s7, 0
    %p27 = por %p25, %p26
    %p28 = scmp.ne.s32.totalorder %s17, %s20
    %p29 = scmp.eq.s32.totalorder %s12, 1
    %p30 = por %p28, %p29
    %p31 = scmp.ne.s32.totalorder %s20, %s21
    %p32 = scmp.eq.s32.totalorder %s12, 0
    %p33 = por %p31, %p32
    %p34 = scmp.ne.s32.totalorder %s20, %s21
    %p35 = scmp.eq.s32.totalorder %s13, 1
    %p36 = por %p34, %p35
    %p38 = scmp.ne.s32.totalorder %s21, %s37
    %p39 = scmp.eq.s32.totalorder %s13, 0
    %p40 = por %p38, %p39
    %s41 = ssub.s32 %s7, %s14
    %p42 = scmp.eq.s32.totalorder %s41, 0
    %s44 = sadd.s32 %s43, 1
    %s45 = scalar_select %p42, %s43, %s44
    %p48 = pneg %p42
    %p49 = scmp.eq.s32.totalorder %s7, 1
    %p50 = por %p48, %p49
    %p51 = scmp.ne.s32.totalorder %s43, %s46
    %p52 = scmp.eq.s32.totalorder %s7, 0
    %p53 = por %p51, %p52
    %p54 = scmp.ne.s32.totalorder %s43, %s46
    %p55 = scmp.eq.s32.totalorder %s12, 1
    %p56 = por %p54, %p55
    %p57 = scmp.ne.s32.totalorder %s46, %s47
    %p58 = scmp.eq.s32.totalorder %s12, 0
    %p59 = por %p57, %p58
    %p60 = scmp.ne.s32.totalorder %s46, %s47
    %p61 = scmp.eq.s32.totalorder %s13, 1
    %p62 = por %p60, %p61
    %p64 = scmp.ne.s32.totalorder %s47, %s63
    %p65 = scmp.eq.s32.totalorder %s13, 0
    %p66 = por %p64, %p65
    %p67 = scmp.le.s32.totalorder 1, %s7
    %p68 = scmp.lt.s32.totalorder %s7, 3
    %p69 = pnand %p67, %p68
    %p70 = pneg %p69
    // Predicated region
    $region9: #{elannet_tiny_forward.37} parent=5 // pred_check
      _
    $region10: #{elannet_tiny_forward.37} parent=5 // pred_check_branch
      %72 = sbr.rel (%p69) target = $region12
    $region11: #{elannet_tiny_forward.37} parent=5 // pred_region
      %s73 = ssub.s32 %s7, 1
    $region12: #{elannet_tiny_forward.37} parent=5 // pred_fallthru
      _
    %p74 = scmp.lt.s32.totalorder %s7, 2
    // Predicated region
    $region13: #{elannet_tiny_forward.37} parent=5 // pred_check
      %p75 = pneg %p74
    $region14: #{elannet_tiny_forward.37} parent=5 // pred_check_branch
      %77 = sbr.rel (%p75) target = $region16
    $region15: #{elannet_tiny_forward.37} parent=5 // pred_region
      // Predicated region
      $region17: #{elannet_tiny_forward.37} parent=15 // pred_check
        %p78 = pneg %p27
      $region18: #{elannet_tiny_forward.37} parent=15 // pred_check_branch
        %80 = sbr.rel (%p78) target = $region20
      $region19: #{elannet_tiny_forward.37} parent=15 // pred_region
        %p81 = scmp.lt.s32.totalorder %s7, 1
        %s82 = scalar_select %p81, %s7, 1
        %s83 = smul.addr %s82, 8
        %s84 = scalar_lea.vmem %s0, %s83
      $region20: #{elannet_tiny_forward.37} parent=15 // pred_fallthru
        _
    $region16: #{elannet_tiny_forward.37} parent=5 // pred_fallthru
      _
    %p85 = scmp.le.s32.totalorder 1, %s7
    %p86 = scmp.lt.s32.totalorder %s7, 3
    %p87 = pnand %p85, %p86
    %p88 = pneg %p87
    // Predicated region
    $region21: #{elannet_tiny_forward.37} parent=5 // pred_check
      _
    $region22: #{elannet_tiny_forward.37} parent=5 // pred_check_branch
      %90 = sbr.rel (%p87) target = $region24
    $region23: #{elannet_tiny_forward.37} parent=5 // pred_region
      %s91 = ssub.s32 %s7, 1
      %p92 = scmp.lt.s32.totalorder %s12, 1
      %s93 = scalar_select %p92, %s12, 1
      %s94 = smul.addr %s93, 8
      %s95 = scalar_lea.vmem %s0, %s94
      %p96 = pneg %p33
      %p97 = pneg %p30
      %p98 = pneg %p59
      %p99 = pneg %p56
      %p100 = scmp.lt.s32.totalorder %s12, 1
      %s101 = scalar_select %p100, %s12, 1
      %s102 = smul.addr %s101, 2
      %s103 = scalar_lea.vmem %s1, %s102
      %p104 = scmp.lt.s32.totalorder %s12, 1
      %s105 = scalar_select %p104, %s12, 1
      %s106 = smul.addr %s105, 8
      %s107 = scalar_lea.vmem %s0, %s106
      %p108 = scmp.lt.s32.totalorder %s12, 1
      %s109 = scalar_select %p108, %s12, 1
      %s110 = smul.addr %s109, 2
      %s111 = scalar_lea.vmem %s1, %s110
      %v112 = vld [vmem:[%s107] sm:$0xf]
      %s113 = scalar_lea.vmem %s107, 4
      %v114 = vld [vmem:[%s113] sm:$0xf]
      %v115 = vmax.bf16 %v112, %v114
      %v117 = vrot.slane %v115, 2
      %v119 = vmax.bf16 %v115, %v117
      %vm120 = vcmask 1040384
      %vm121 = vsmask.f32 256
      %vm122 = vmand %vm120, %vm121
      %vm123 = vcmask 1041409
      %vm124 = vsmask.f32 1280
      %vm125 = vmand %vm123, %vm124
      %vm126 = vmor %vm125, %vm122
      %v127 = vld [vmem:[%s111] sm:$0x3]
      %v128 = vsel %vm126, %v119, %v127
      %129 = vst [vmem:[%s111] sm:$0x3] %v128
      %p130 = scmp.lt.s32.totalorder %s12, 1
      %s131 = scalar_select %p130, %s12, 1
      %s132 = smul.addr %s131, 2
      %s133 = scalar_lea.vmem %s1, %s132
      // Predicated region
      $region25: #{elannet_tiny_forward.37} parent=23 // pred_check
        %p134 = pneg %p56
      $region26: #{elannet_tiny_forward.37} parent=23 // pred_check_branch
        %136 = sbr.rel (%p134) target = $region28
      $region27: #{elannet_tiny_forward.37} parent=23 // pred_region
        _
      $region28: #{elannet_tiny_forward.37} parent=23 // pred_fallthru
        _
    $region24: #{elannet_tiny_forward.37} parent=5 // pred_fallthru
      _
    %p137 = scmp.le.s32.totalorder 2, %s7
    // Predicated region
    $region29: #{elannet_tiny_forward.37} parent=5 // pred_check
      %p138 = pneg %p137
    $region30: #{elannet_tiny_forward.37} parent=5 // pred_check_branch
      %140 = sbr.rel (%p138) target = $region32
    $region31: #{elannet_tiny_forward.37} parent=5 // pred_region
      %s141 = ssub.s32 %s7, 2
      // Predicated region
      $region33: #{elannet_tiny_forward.37} parent=31 // pred_check
        %p142 = pneg %p62
      $region34: #{elannet_tiny_forward.37} parent=31 // pred_check_branch
        %144 = sbr.rel (%p142) target = $region36
      $region35: #{elannet_tiny_forward.37} parent=31 // pred_region
        %p145 = scmp.lt.s32.totalorder %s13, 1
        %s146 = scalar_select %p145, %s13, 1
        %s147 = smul.addr %s146, 2
        %s148 = scalar_lea.vmem %s1, %s147
      $region36: #{elannet_tiny_forward.37} parent=31 // pred_fallthru
        _
    $region32: #{elannet_tiny_forward.37} parent=5 // pred_fallthru
      _
  $region6: #{elannet_tiny_forward.37} parent=0 // loop_footer
    %s11 = sadd.s32 1, %s7
  $region7: #{elannet_tiny_forward.37} parent=0 // loop_footer_branch
    %6 = sbr.rel target = $region3
  $region8: #{elannet_tiny_forward.37} parent=0 // loop_exit
    _

// kernel: elannet_tiny_forward.36
$region0: #{elannet_tiny_forward.36}
  #allocation0 [shape = 'u32[]', space=smem, size = 0x4, offset = 0x4, fixed_abs, tag = 'smem constant byte address 0x4 - core index']
  #allocation1 [shape = 'u32[144,128]{1,0:T(1,128)}', space=vmem, size = 0x12000, scoped, tag = 'internal scratch']
  %s0 = inlined_call_operand.vmem [shape: bf16[8,64], index: 0, kind: input, shape index: {}]
  %s1 = inlined_call_operand.vmem [shape: bf16[8,64], index: 1, kind: input, shape index: {}]
  %s2 = inlined_call_operand.vmem [shape: bf16[8,64], index: 2, kind: input, shape index: {}]
  %s3 = inlined_call_operand.vmem [shape: bf16[8,64], index: 3, kind: input, shape index: {}]
  %s4 = inlined_call_operand.vmem [shape: bf16[256,256], index: 4, kind: input, shape index: {}]
  %s5 = inlined_call_operand.vmem [shape: f32[1,256], index: 5, kind: input, shape index: {}]
  %s6 = inlined_call_operand.vmem [shape: f32[1,256], index: 6, kind: input, shape index: {}]
  %s7 = inlined_call_operand.vmem [shape: bf16[8,256], index: 7, kind: output, shape index: {}]
  %s8 = sld [smem:[#allocation0]]
  $region38: #{elannet_tiny_forward.36} parent=0
    _
  %s10 = ssub.s32 1, %s8
  %s11 = scalar_select 0, %s10, %s8
  // Predicated region
  $region2: #{elannet_tiny_forward.36} parent=0 // pred_check
    _
  $region3: #{elannet_tiny_forward.36} parent=0 // pred_check_branch
    %13 = sbr.rel (0) target = $region5
  $region4: #{elannet_tiny_forward.36} parent=0 // pred_region
    _
  $region5: #{elannet_tiny_forward.36} parent=0 // pred_fallthru
    _
  // Predicated region
  $region6: #{elannet_tiny_forward.36} parent=0 // pred_check
    _
  $region7: #{elannet_tiny_forward.36} parent=0 // pred_check_branch
    %15 = sbr.rel (0) target = $region9
  $region8: #{elannet_tiny_forward.36} parent=0 // pred_region
    _
  $region9: #{elannet_tiny_forward.36} parent=0 // pred_fallthru
    _
  // Predicated region
  $region10: #{elannet_tiny_forward.36} parent=0 // pred_check
    _
  $region11: #{elannet_tiny_forward.36} parent=0 // pred_check_branch
    %17 = sbr.rel (0) target = $region13
  $region12: #{elannet_tiny_forward.36} parent=0 // pred_region
    _
  $region13: #{elannet_tiny_forward.36} parent=0 // pred_fallthru
    _
  // Predicated region
  $region14: #{elannet_tiny_forward.36} parent=0 // pred_check
    _
  $region15: #{elannet_tiny_forward.36} parent=0 // pred_check_branch
    %19 = sbr.rel (0) target = $region17
  $region16: #{elannet_tiny_forward.36} parent=0 // pred_region
    _
  $region17: #{elannet_tiny_forward.36} parent=0 // pred_fallthru
    _
  // Predicated region
  $region18: #{elannet_tiny_forward.36} parent=0 // pred_check
    _
  $region19: #{elannet_tiny_forward.36} parent=0 // pred_check_branch
    %21 = sbr.rel (0) target = $region21
  $region20: #{elannet_tiny_forward.36} parent=0 // pred_region
    _
  $region21: #{elannet_tiny_forward.36} parent=0 // pred_fallthru
    _
  // Predicated region
  $region22: #{elannet_tiny_forward.36} parent=0 // pred_check
    _
  $region23: #{elannet_tiny_forward.36} parent=0 // pred_check_branch
    %23 = sbr.rel (0) target = $region25
  $region24: #{elannet_tiny_forward.36} parent=0 // pred_region
    _
  $region25: #{elannet_tiny_forward.36} parent=0 // pred_fallthru
    _
  // Predicated region
  $region26: #{elannet_tiny_forward.36} parent=0 // pred_check
    _
  $region27: #{elannet_tiny_forward.36} parent=0 // pred_check_branch
    %25 = sbr.rel (0) target = $region29
  $region28: #{elannet_tiny_forward.36} parent=0 // pred_region
    _
  $region29: #{elannet_tiny_forward.36} parent=0 // pred_fallthru
    _
  %v26 = vld [vmem:[%s0] sm:$0xf]
  %v27 = vld [vmem:[%s1] sm:$0xf]
  %v28 = vld [vmem:[%s2] sm:$0xf]
  %v29 = vld [vmem:[%s3] sm:$0xf]
  %v31 = vunpack.c.l.b16 %v27
  %v32 = vpack.c.b16 %v31, %v31
  %33 = vrot.lane.b32.xlu0 %v32, 64
  %v34 = vpop.permute.xlu0 %33
  %v36 = vunpack.c.l.b16 %v29
  %v37 = vpack.c.b16 %v36, %v36
  %38 = vrot.lane.b32.xlu0 %v37, 64
  %v39 = vpop.permute.xlu0 %38
  %vm40 = vcmask 523264
  %v43 = vsel %vm40, %v26, %v34
  %v47 = vsel %vm40, %v28, %v39
  %v49 = vld [vmem:[%s4] sm:$0xff]
  %v50 = vld [vmem:[%s4 + $0x8] sm:$0xff]
  %v51 = vld [vmem:[%s4 + $0x10] sm:$0xff]
  %v52 = vld [vmem:[%s4 + $0x18] sm:$0xff]
  %v53 = vld [vmem:[%s4 + $0x20] sm:$0xff]
  %v54 = vld [vmem:[%s4 + $0x28] sm:$0xff]
  %v55 = vld [vmem:[%s4 + $0x30] sm:$0xff]
  %v56 = vld [vmem:[%s4 + $0x38] sm:$0xff]
  %v57 = vld [vmem:[%s4 + $0x40] sm:$0xff]
  %v58 = vld [vmem:[%s4 + $0x48] sm:$0xff]
  %v59 = vld [vmem:[%s4 + $0x50] sm:$0xff]
  %v60 = vld [vmem:[%s4 + $0x58] sm:$0xff]
  %v61 = vld [vmem:[%s4 + $0x60] sm:$0xff]
  %v62 = vld [vmem:[%s4 + $0x68] sm:$0xff]
  %v63 = vld [vmem:[%s4 + $0x70] sm:$0xff]
  %v64 = vld [vmem:[%s4 + $0x78] sm:$0xff]
  %v65 = vld [vmem:[%s4 + $0x80] sm:$0xff]
  %v66 = vld [vmem:[%s4 + $0x88] sm:$0xff]
  %v67 = vld [vmem:[%s4 + $0x90] sm:$0xff]
  %v68 = vld [vmem:[%s4 + $0x98] sm:$0xff]
  %v69 = vld [vmem:[%s4 + $0xa0] sm:$0xff]
  %v70 = vld [vmem:[%s4 + $0xa8] sm:$0xff]
  %v71 = vld [vmem:[%s4 + $0xb0] sm:$0xff]
  %v72 = vld [vmem:[%s4 + $0xb8] sm:$0xff]
  %v73 = vld [vmem:[%s4 + $0xc0] sm:$0xff]
  %v74 = vld [vmem:[%s4 + $0xc8] sm:$0xff]
  %v75 = vld [vmem:[%s4 + $0xd0] sm:$0xff]
  %v76 = vld [vmem:[%s4 + $0xd8] sm:$0xff]
  %v77 = vld [vmem:[%s4 + $0xe0] sm:$0xff]
  %v78 = vld [vmem:[%s4 + $0xe8] sm:$0xff]
  %v79 = vld [vmem:[%s4 + $0xf0] sm:$0xff]
  %v80 = vld [vmem:[%s4 + $0xf8] sm:$0xff]
  %v113 = vunpack.c.l.b16 %v49
  %v114 = vunpack.c.h.b16 %v49
  %v115 = vunpack.c.l.b16 %v50
  %v116 = vunpack.c.h.b16 %v50
  %v117 = vunpack.c.l.b16 %v51
  %v118 = vunpack.c.h.b16 %v51
  %v119 = vunpack.c.l.b16 %v52
  %v120 = vunpack.c.h.b16 %v52
  %v121 = vunpack.c.l.b16 %v53
  %v122 = vunpack.c.h.b16 %v53
  %v123 = vunpack.c.l.b16 %v54
  %v124 = vunpack.c.h.b16 %v54
  %v125 = vunpack.c.l.b16 %v55
  %v126 = vunpack.c.h.b16 %v55
  %v127 = vunpack.c.l.b16 %v56
  %v128 = vunpack.c.h.b16 %v56
  %v129 = vunpack.c.l.b16 %v57
  %v130 = vunpack.c.h.b16 %v57
  %v131 = vunpack.c.l.b16 %v58
  %v132 = vunpack.c.h.b16 %v58
  %v133 = vunpack.c.l.b16 %v59
  %v134 = vunpack.c.h.b16 %v59
  %v135 = vunpack.c.l.b16 %v60
  %v136 = vunpack.c.h.b16 %v60
  %v137 = vunpack.c.l.b16 %v61
  %v138 = vunpack.c.h.b16 %v61
  %v139 = vunpack.c.l.b16 %v62
  %v140 = vunpack.c.h.b16 %v62
  %v141 = vunpack.c.l.b16 %v63
  %v142 = vunpack.c.h.b16 %v63
  %v143 = vunpack.c.l.b16 %v64
  %v144 = vunpack.c.h.b16 %v64
  %v145 = vunpack.c.l.b16 %v65
  %v146 = vunpack.c.h.b16 %v65
  %v147 = vunpack.c.l.b16 %v66
  %v148 = vunpack.c.h.b16 %v66
  %v149 = vunpack.c.l.b16 %v67
  %v150 = vunpack.c.h.b16 %v67
  %v151 = vunpack.c.l.b16 %v68
  %v152 = vunpack.c.h.b16 %v68
  %v153 = vunpack.c.l.b16 %v69
  %v154 = vunpack.c.h.b16 %v69
  %v155 = vunpack.c.l.b16 %v70
  %v156 = vunpack.c.h.b16 %v70
  %v157 = vunpack.c.l.b16 %v71
  %v158 = vunpack.c.h.b16 %v71
  %v159 = vunpack.c.l.b16 %v72
  %v160 = vunpack.c.h.b16 %v72
  %v161 = vunpack.c.l.b16 %v73
  %v162 = vunpack.c.h.b16 %v73
  %v163 = vunpack.c.l.b16 %v74
  %v164 = vunpack.c.h.b16 %v74
  %v165 = vunpack.c.l.b16 %v75
  %v166 = vunpack.c.h.b16 %v75
  %v167 = vunpack.c.l.b16 %v76
  %v168 = vunpack.c.h.b16 %v76
  %v169 = vunpack.c.l.b16 %v77
  %v170 = vunpack.c.h.b16 %v77
  %v171 = vunpack.c.l.b16 %v78
  %v172 = vunpack.c.h.b16 %v78
  %v173 = vunpack.c.l.b16 %v79
  %v174 = vunpack.c.h.b16 %v79
  %v175 = vunpack.c.l.b16 %v80
  %v176 = vunpack.c.h.b16 %v80
  %v177 = vpack.c.b16 %v115, %v113
  %v178 = vpack.c.b16 %v116, %v114
  %v179 = vpack.c.b16 %v119, %v117
  %v180 = vpack.c.b16 %v120, %v118
  %v181 = vpack.c.b16 %v123, %v121
  %v182 = vpack.c.b16 %v124, %v122
  %v183 = vpack.c.b16 %v127, %v125
  %v184 = vpack.c.b16 %v128, %v126
  %v185 = vpack.c.b16 %v131, %v129
  %v186 = vpack.c.b16 %v132, %v130
  %v187 = vpack.c.b16 %v135, %v133
  %v188 = vpack.c.b16 %v136, %v134
  %v189 = vpack.c.b16 %v139, %v137
  %v190 = vpack.c.b16 %v140, %v138
  %v191 = vpack.c.b16 %v143, %v141
  %v192 = vpack.c.b16 %v144, %v142
  %v193 = vpack.c.b16 %v147, %v145
  %v194 = vpack.c.b16 %v148, %v146
  %v195 = vpack.c.b16 %v151, %v149
  %v196 = vpack.c.b16 %v152, %v150
  %v197 = vpack.c.b16 %v155, %v153
  %v198 = vpack.c.b16 %v156, %v154
  %v199 = vpack.c.b16 %v159, %v157
  %v200 = vpack.c.b16 %v160, %v158
  %v201 = vpack.c.b16 %v163, %v161
  %v202 = vpack.c.b16 %v164, %v162
  %v203 = vpack.c.b16 %v167, %v165
  %v204 = vpack.c.b16 %v168, %v166
  %v205 = vpack.c.b16 %v171, %v169
  %v206 = vpack.c.b16 %v172, %v170
  %v207 = vpack.c.b16 %v175, %v173
  %v208 = vpack.c.b16 %v176, %v174
  %241 = vmatprep.subr.bf16.mxu0 %v178
  %242 = vmatpush1.bf16.msra.mxu0 %v177
  %243 = vmatprep.subr.bf16.mxu0 %v180
  %244 = vmatpush1.bf16.msra.mxu0 %v179
  %245 = vmatprep.subr.bf16.mxu0 %v182
  %246 = vmatpush1.bf16.msra.mxu0 %v181
  %247 = vmatprep.subr.bf16.mxu0 %v184
  %248 = vmatpush1.bf16.msra.mxu0 %v183
  %249 = vmatprep.subr.bf16.mxu0 %v186
  %250 = vmatpush1.bf16.msra.mxu0 %v185
  %251 = vmatprep.subr.bf16.mxu0 %v188
  %252 = vmatpush1.bf16.msra.mxu0 %v187
  %253 = vmatprep.subr.bf16.mxu0 %v190
  %254 = vmatpush1.bf16.msra.mxu0 %v189
  %255 = vmatprep.subr.bf16.mxu0 %v192
  %256 = vmatpush1.bf16.msra.mxu0 %v191
  %257 = vmatprep.subr.bf16.mxu0 %v194
  %258 = vmatpush1.bf16.msra.mxu0 %v193
  %259 = vmatprep.subr.bf16.mxu0 %v196
  %260 = vmatpush1.bf16.msra.mxu0 %v195
  %261 = vmatprep.subr.bf16.mxu0 %v198
  %262 = vmatpush1.bf16.msra.mxu0 %v197
  %263 = vmatprep.subr.bf16.mxu0 %v200
  %264 = vmatpush1.bf16.msra.mxu0 %v199
  %265 = vmatprep.subr.bf16.mxu0 %v202
  %266 = vmatpush1.bf16.msra.mxu0 %v201
  %267 = vmatprep.subr.bf16.mxu0 %v204
  %268 = vmatpush1.bf16.msra.mxu0 %v203
  %269 = vmatprep.subr.bf16.mxu0 %v206
  %270 = vmatpush1.bf16.msra.mxu0 %v205
  %271 = vmatprep.subr.bf16.mxu0 %v208
  %272 = vmatpush1.bf16.msra.mxu0 %v207
  %273 = vmatprep.mubr.bf16.mxu0 %v47
  %274 = vmatmul.mubr.bf16.gmra.mrb[0].mxu0 %v43
  %v275 = vpop.f32.mrb[0].mxu0
  %v276 = vadd.f32 0.0, %v275
  %v277 = vpop.f32.mrb[0].mxu0
  %v278 = vadd.f32 0.0, %v277
  %v279 = vpop.f32.mrb[0].mxu0
  %v280 = vpop.f32.mrb[0].mxu0
  %281 = vdwg.mxu0
  %v282 = vld [vmem:[%s5] sm:$0x3]
  %v284 = vlaneseq
  %v285 = vshrl.u32 %v284, 7
  %v286 = vsub.s32 0, %v285
  %v287 = vrot.slane %v282, %v286
  %v288 = vlaneseq
  %v289 = vshrl.u32 %v288, 7
  %v290 = vsub.s32 1, %v289
  %v291 = vrot.slane %v282, %v290
  %v294 = vmul.f32 %v276, %v287
  %v295 = vmul.f32 %v278, %v291
  %v296 = vld [vmem:[%s6] sm:$0x3]
  %v298 = vlaneseq
  %v299 = vshrl.u32 %v298, 7
  %v300 = vsub.s32 0, %v299
  %v301 = vrot.slane %v296, %v300
  %v302 = vlaneseq
  %v303 = vshrl.u32 %v302, 7
  %v304 = vsub.s32 1, %v303
  %v305 = vrot.slane %v296, %v304
  %v308 = vadd.f32 %v294, %v301
  %v309 = vadd.f32 %v295, %v305
  %v310 = vsub.f32 0.0, %v308
  %v311 = vsub.f32 0.0, %v309
  %v312 = vmul.f32 %v310, 1.442695
  %v313 = vpow.pop %v312
  %v314 = vmul.f32 %v311, 1.442695
  %v315 = vpow.pop %v314
  %v316 = vadd.f32 %v313, 1.0
  %v317 = vadd.f32 %v315, 1.0
  %v318 = vrcp.pop %v316
  %v319 = vrcp.pop %v317
  %v320 = vmul.f32 %v308, %v318
  %v321 = vmul.f32 %v309, %v319
  %v322 = vpack.c.bf16 %v320, %v320
  %v323 = vpack.c.bf16 %v321, %v321
  %v326 = vunpack.c.l.b16 %v322
  %v327 = vunpack.c.l.b16 %v323
  %v328 = vpack.c.b16 %v327, %v326
  %330 = vst [vmem:[%s7] sm:$0xff] %v328
  // Predicated region
  $region30: #{elannet_tiny_forward.36} parent=0 // pred_check
    _
  $region31: #{elannet_tiny_forward.36} parent=0 // pred_check_branch
    %332 = sbr.rel (0) target = $region33
  $region32: #{elannet_tiny_forward.36} parent=0 // pred_region
    _
  $region33: #{elannet_tiny_forward.36} parent=0 // pred_fallthru
    _
  // Predicated region
  $region34: #{elannet_tiny_forward.36} parent=0 // pred_check
    _
  $region35: #{elannet_tiny_forward.36} parent=0 // pred_check_branch
    %334 = sbr.rel (0) target = $region37
  $region36: #{elannet_tiny_forward.36} parent=0 // pred_region
    _
  $region37: #{elannet_tiny_forward.36} parent=0 // pred_fallthru
    _

// kernel: elannet_tiny_forward.34
$region0: #{elannet_tiny_forward.34}
  #allocation0 [shape = 'u32[]', space=smem, size = 0x4, offset = 0x4, fixed_abs, tag = 'smem constant byte address 0x4 - core index']
  #allocation1 [shape = 'u32[144,128]{1,0:T(1,128)}', space=vmem, size = 0x12000, scoped, tag = 'internal scratch']
  %s0 = inlined_call_operand.vmem [shape: bf16[2,20,64], index: 0, kind: input, shape index: {}]
  %s1 = inlined_call_operand.vmem [shape: bf16[576,64], index: 1, kind: input, shape index: {}]
  %s2 = inlined_call_operand.vmem [shape: f32[1,64], index: 2, kind: input, shape index: {}]
  %s3 = inlined_call_operand.vmem [shape: f32[1,64], index: 3, kind: input, shape index: {}]
  %s4 = inlined_call_operand.vmem [shape: bf16[2,8,64], index: 4, kind: output, shape index: {}]
  %s5 = sld [smem:[#allocation0]]
  $region49: #{elannet_tiny_forward.34} parent=0
    _
  %s7 = ssub.s32 1, %s5
  %s8 = scalar_select 0, %s7, %s5
  loop: start=0, step=1, limit=4
  $region2: #{elannet_tiny_forward.34} parent=0 // loop_pre_header
    _
  $region3: #{elannet_tiny_forward.34} parent=0 // loop_header
    %s10 = sphi 0, %s14
    %p11 = scmp.ge.s32.totalorder %s10, 4
    %s20 = sphi 0, %s22
    %s23 = sphi 0, %s20
    %s24 = sphi 0, %s23
    %s40 = sphi 0, %s24
    %s44 = sphi 0, %s44
    %s46 = sphi 0, %s44
    %s47 = sphi 0, %s46
    %s61 = sphi 0, %s47
    %s65 = sphi 0, %s65
    %s67 = sphi 0, %s65
    %s68 = sphi 0, %s67
    %s82 = sphi 0, %s68
    %s86 = sphi 0, %s86
    %s88 = sphi 0, %s86
    %s89 = sphi 0, %s88
    %s103 = sphi 0, %s89
    %s109 = sphi 0, %s111
    %s112 = sphi 0, %s109
    %s113 = sphi 0, %s112
    %s129 = sphi 0, %s113
  $region4: #{elannet_tiny_forward.34} parent=0 // loop_header_branch
    %13 = sbr.rel (%p11) target = $region8
  $region5: #{elannet_tiny_forward.34} parent=0 // loop_body
    %s15 = ssub.s32 %s10, 1
    %s16 = ssub.s32 %s10, 2
    %s17 = sadd.s32 %s10, 1
    %s18 = ssub.s32 %s10, %s17
    %p19 = scmp.eq.s32.totalorder %s18, 0
    %s21 = sadd.s32 %s20, 1
    %s22 = scalar_select %p19, %s20, %s21
    %p25 = pneg %p19
    %p26 = scmp.eq.s32.totalorder %s10, 1
    %p27 = por %p25, %p26
    %p28 = scmp.ne.s32.totalorder %s20, %s23
    %p29 = scmp.eq.s32.totalorder %s10, 0
    %p30 = por %p28, %p29
    %p31 = scmp.ne.s32.totalorder %s20, %s23
    %p32 = scmp.eq.s32.totalorder %s15, 1
    %p33 = por %p31, %p32
    %p34 = scmp.ne.s32.totalorder %s23, %s24
    %p35 = scmp.eq.s32.totalorder %s15, 0
    %p36 = por %p34, %p35
    %p37 = scmp.ne.s32.totalorder %s23, %s24
    %p38 = scmp.eq.s32.totalorder %s16, 1
    %p39 = por %p37, %p38
    %p41 = scmp.ne.s32.totalorder %s24, %s40
    %p42 = scmp.eq.s32.totalorder %s16, 0
    %p43 = por %p41, %p42
    %s45 = sadd.s32 %s44, 1
    %p48 = scmp.eq.s32.totalorder %s10, 1
    %p49 = scmp.ne.s32.totalorder %s44, %s46
    %p50 = scmp.eq.s32.totalorder %s10, 0
    %p51 = por %p49, %p50
    %p52 = scmp.ne.s32.totalorder %s44, %s46
    %p53 = scmp.eq.s32.totalorder %s15, 1
    %p54 = por %p52, %p53
    %p55 = scmp.ne.s32.totalorder %s46, %s47
    %p56 = scmp.eq.s32.totalorder %s15, 0
    %p57 = por %p55, %p56
    %p58 = scmp.ne.s32.totalorder %s46, %s47
    %p59 = scmp.eq.s32.totalorder %s16, 1
    %p60 = por %p58, %p59
    %p62 = scmp.ne.s32.totalorder %s47, %s61
    %p63 = scmp.eq.s32.totalorder %s16, 0
    %p64 = por %p62, %p63
    %s66 = sadd.s32 %s65, 1
    %p69 = scmp.eq.s32.totalorder %s10, 1
    %p70 = scmp.ne.s32.totalorder %s65, %s67
    %p71 = scmp.eq.s32.totalorder %s10, 0
    %p72 = por %p70, %p71
    %p73 = scmp.ne.s32.totalorder %s65, %s67
    %p74 = scmp.eq.s32.totalorder %s15, 1
    %p75 = por %p73, %p74
    %p76 = scmp.ne.s32.totalorder %s67, %s68
    %p77 = scmp.eq.s32.totalorder %s15, 0
    %p78 = por %p76, %p77
    %p79 = scmp.ne.s32.totalorder %s67, %s68
    %p80 = scmp.eq.s32.totalorder %s16, 1
    %p81 = por %p79, %p80
    %p83 = scmp.ne.s32.totalorder %s68, %s82
    %p84 = scmp.eq.s32.totalorder %s16, 0
    %p85 = por %p83, %p84
    %s87 = sadd.s32 %s86, 1
    %p90 = scmp.eq.s32.totalorder %s10, 1
    %p91 = scmp.ne.s32.totalorder %s86, %s88
    %p92 = scmp.eq.s32.totalorder %s10, 0
    %p93 = por %p91, %p92
    %p94 = scmp.ne.s32.totalorder %s86, %s88
    %p95 = scmp.eq.s32.totalorder %s15, 1
    %p96 = por %p94, %p95
    %p97 = scmp.ne.s32.totalorder %s88, %s89
    %p98 = scmp.eq.s32.totalorder %s15, 0
    %p99 = por %p97, %p98
    %p100 = scmp.ne.s32.totalorder %s88, %s89
    %p101 = scmp.eq.s32.totalorder %s16, 1
    %p102 = por %p100, %p101
    %p104 = scmp.ne.s32.totalorder %s89, %s103
    %p105 = scmp.eq.s32.totalorder %s16, 0
    %p106 = por %p104, %p105
    %s107 = ssub.s32 %s10, %s17
    %p108 = scmp.eq.s32.totalorder %s107, 0
    %s110 = sadd.s32 %s109, 1
    %s111 = scalar_select %p108, %s109, %s110
    %p114 = pneg %p108
    %p115 = scmp.eq.s32.totalorder %s10, 1
    %p116 = por %p114, %p115
    %p117 = scmp.ne.s32.totalorder %s109, %s112
    %p118 = scmp.eq.s32.totalorder %s10, 0
    %p119 = por %p117, %p118
    %p120 = scmp.ne.s32.totalorder %s109, %s112
    %p121 = scmp.eq.s32.totalorder %s15, 1
    %p122 = por %p120, %p121
    %p123 = scmp.ne.s32.totalorder %s112, %s113
    %p124 = scmp.eq.s32.totalorder %s15, 0
    %p125 = por %p123, %p124
    %p126 = scmp.ne.s32.totalorder %s112, %s113
    %p127 = scmp.eq.s32.totalorder %s16, 1
    %p128 = por %p126, %p127
    %p130 = scmp.ne.s32.totalorder %s113, %s129
    %p131 = scmp.eq.s32.totalorder %s16, 0
    %p132 = por %p130, %p131
    %p133 = scmp.le.s32.totalorder 1, %s10
    %p134 = scmp.lt.s32.totalorder %s10, 3
    %p135 = pnand %p133, %p134
    %p136 = pneg %p135
    // Predicated region
    $region9: #{elannet_tiny_forward.34} parent=5 // pred_check
      _
    $region10: #{elannet_tiny_forward.34} parent=5 // pred_check_branch
      %138 = sbr.rel (%p135) target = $region12
    $region11: #{elannet_tiny_forward.34} parent=5 // pred_region
      %s139 = ssub.s32 %s10, 1
      // Predicated region
      $region13: #{elannet_tiny_forward.34} parent=11 // pred_check
        %p140 = pneg %p57
      $region14: #{elannet_tiny_forward.34} parent=11 // pred_check_branch
        %142 = sbr.rel (%p140) target = $region16
      $region15: #{elannet_tiny_forward.34} parent=11 // pred_region
        _
      $region16: #{elannet_tiny_forward.34} parent=11 // pred_fallthru
        _
      // Predicated region
      $region17: #{elannet_tiny_forward.34} parent=11 // pred_check
        %p143 = pneg %p78
      $region18: #{elannet_tiny_forward.34} parent=11 // pred_check_branch
        %145 = sbr.rel (%p143) target = $region20
      $region19: #{elannet_tiny_forward.34} parent=11 // pred_region
        _
      $region20: #{elannet_tiny_forward.34} parent=11 // pred_fallthru
        _
      // Predicated region
      $region21: #{elannet_tiny_forward.34} parent=11 // pred_check
        %p146 = pneg %p99
      $region22: #{elannet_tiny_forward.34} parent=11 // pred_check_branch
        %148 = sbr.rel (%p146) target = $region24
      $region23: #{elannet_tiny_forward.34} parent=11 // pred_region
        _
      $region24: #{elannet_tiny_forward.34} parent=11 // pred_fallthru
        _
    $region12: #{elannet_tiny_forward.34} parent=5 // pred_fallthru
      _
    %p149 = scmp.lt.s32.totalorder %s10, 2
    // Predicated region
    $region25: #{elannet_tiny_forward.34} parent=5 // pred_check
      %p150 = pneg %p149
    $region26: #{elannet_tiny_forward.34} parent=5 // pred_check_branch
      %152 = sbr.rel (%p150) target = $region28
    $region27: #{elannet_tiny_forward.34} parent=5 // pred_region
      // Predicated region
      $region29: #{elannet_tiny_forward.34} parent=27 // pred_check
        %p153 = pneg %p30
      $region30: #{elannet_tiny_forward.34} parent=27 // pred_check_branch
        %155 = sbr.rel (%p153) target = $region32
      $region31: #{elannet_tiny_forward.34} parent=27 // pred_region
        %p156 = scmp.lt.s32.totalorder %s10, 1
        %s157 = scalar_select %p156, %s10, 1
        %s158 = smul.addr %s157, 3
        %s159 = smul.addr %s158, 4
        %s160 = scalar_lea.vmem %s0, %s159
      $region32: #{elannet_tiny_forward.34} parent=27 // pred_fallthru
        _
    $region28: #{elannet_tiny_forward.34} parent=5 // pred_fallthru
      _
    %p161 = scmp.le.s32.totalorder 1, %s10
    %p162 = scmp.lt.s32.totalorder %s10, 3
    %p163 = pnand %p161, %p162
    %p164 = pneg %p163
    // Predicated region
    $region33: #{elannet_tiny_forward.34} parent=5 // pred_check
      _
    $region34: #{elannet_tiny_forward.34} parent=5 // pred_check_branch
      %166 = sbr.rel (%p163) target = $region36
    $region35: #{elannet_tiny_forward.34} parent=5 // pred_region
      %s167 = ssub.s32 %s10, 1
      %p168 = scmp.lt.s32.totalorder %s15, 1
      %s169 = scalar_select %p168, %s15, 1
      %s170 = smul.addr %s169, 3
      %s171 = smul.addr %s170, 4
      %s172 = scalar_lea.vmem %s0, %s171
      %p173 = pneg %p36
      %p174 = pneg %p33
      %p175 = pneg %p57
      %p176 = pneg %p54
      %p177 = pneg %p78
      %p178 = pneg %p75
      %p179 = pneg %p99
      %p180 = pneg %p96
      %p181 = pneg %p125
      %p182 = pneg %p122
      %p183 = scmp.lt.s32.totalorder %s15, 1
      %s184 = scalar_select %p183, %s15, 1
      %s185 = smul.addr %s184, 4
      %s186 = scalar_lea.vmem %s4, %s185
      %p187 = scmp.lt.s32.totalorder %s15, 1
      %s188 = scalar_select %p187, %s15, 1
      %s189 = smul.addr %s188, 3
      %s190 = smul.addr %s189, 4
      %s191 = scalar_lea.vmem %s0, %s190
      %p192 = scmp.lt.s32.totalorder %s15, 1
      %s193 = scalar_select %p192, %s15, 1
      %s194 = smul.addr %s193, 4
      %s195 = scalar_lea.vmem %s4, %s194
      %v197 = vld [vmem:[%s191] sm:$0xf]
      %v198 = vld [vmem:[%s191 + $0x4] sm:$0x1]
      %v199 = vld [vmem:[%s191] sm:$0xe]
      %v200 = vld [vmem:[%s191] sm:$0xc]
      %v201 = vld [vmem:[%s191 + $0x4] sm:$0x3]
      %v202 = vld [vmem:[%s191 + $0x4] sm:$0x7]
      %v203 = vld [vmem:[%s191] sm:$0x8]
      %v204 = vld [vmem:[%s191 + $0x4] sm:$0xf]
      %v205 = vld [vmem:[%s191 + $0x8] sm:$0x1]
      %v206 = vld [vmem:[%s191 + $0x4] sm:$0xe]
      %v209 = vunpack.c.l.b16 %v197
      %v210 = vunpack.c.l.b16 %v198
      %v211 = vpack.c.b16 %v210, %v209
      %v213 = vshrl.u32 %v211, 16
      %v215 = vshll.u32 %v211, 16
      %v217 = vrot.slane %v215, 1
      %v218 = vor.u32 %v213, %v217
      %219 = vrot.lane.b32.xlu0 %v218, 64
      %v220 = vpop.permute.xlu0 %219
      %v222 = vunpack.c.l.b16 %v199
      %v223 = vpack.c.b16 %v210, %v222
      %v224 = vrot.slane %v223, 1
      %v227 = vunpack.c.l.b16 %v200
      %v228 = vunpack.c.l.b16 %v201
      %v229 = vpack.c.b16 %v228, %v227
      %v230 = vrot.slane %v229, 2
      %231 = vrot.lane.b32.xlu0 %v230, 64
      %v232 = vpop.permute.xlu0 %231
      %v234 = vunpack.c.l.b16 %v202
      %v235 = vpack.c.b16 %v234, %v227
      %v237 = vshrl.u32 %v235, 16
      %v239 = vrot.slane %v237, 2
      %v240 = vshll.u32 %v235, 16
      %v242 = vrot.slane %v240, 3
      %v243 = vor.u32 %v239, %v242
      %v245 = vunpack.c.l.b16 %v203
      %v246 = vpack.c.b16 %v234, %v245
      %v247 = vrot.slane %v246, 3
      %248 = vrot.lane.b32.xlu0 %v247, 64
      %v249 = vpop.permute.xlu0 %248
      %v252 = vunpack.c.l.b16 %v204
      %v253 = vunpack.c.l.b16 %v205
      %v254 = vpack.c.b16 %v253, %v252
      %v256 = vshrl.u32 %v254, 16
      %v258 = vshll.u32 %v254, 16
      %v260 = vrot.slane %v258, 1
      %v261 = vor.u32 %v256, %v260
      %262 = vrot.lane.b32.xlu0 %v261, 64
      %v263 = vpop.permute.xlu0 %262
      %v265 = vunpack.c.l.b16 %v206
      %v266 = vpack.c.b16 %v253, %v265
      %v267 = vrot.slane %v266, 1
      %vm268 = vcmask 523264
      %v271 = vsel %vm268, %v197, %v220
      %v275 = vsel %vm268, %v224, %v232
      %v279 = vsel %vm268, %v243, %v249
      %v283 = vsel %vm268, %v204, %v263
      %v285 = vld [vmem:[%s1] sm:$0xf]
      %v286 = vld [vmem:[%s1 + $0x4] sm:$0xf]
      %v287 = vld [vmem:[%s1 + $0x8] sm:$0xf]
      %v288 = vld [vmem:[%s1 + $0xc] sm:$0xf]
      %v289 = vld [vmem:[%s1 + $0x10] sm:$0xf]
      %v290 = vld [vmem:[%s1 + $0x14] sm:$0xf]
      %v291 = vld [vmem:[%s1 + $0x18] sm:$0xf]
      %v292 = vld [vmem:[%s1 + $0x1c] sm:$0xf]
      %v293 = vld [vmem:[%s1 + $0x20] sm:$0xf]
      %v294 = vld [vmem:[%s1 + $0x24] sm:$0xf]
      %v295 = vld [vmem:[%s1 + $0x28] sm:$0xf]
      %v296 = vld [vmem:[%s1 + $0x2c] sm:$0xf]
      %v297 = vld [vmem:[%s1 + $0x30] sm:$0xf]
      %v298 = vld [vmem:[%s1 + $0x34] sm:$0xf]
      %v299 = vld [vmem:[%s1 + $0x38] sm:$0xf]
      %v300 = vld [vmem:[%s1 + $0x3c] sm:$0xf]
      %v301 = vld [vmem:[%s1 + $0x40] sm:$0xf]
      %v302 = vld [vmem:[%s1 + $0x44] sm:$0xf]
      %v303 = vld [vmem:[%s1 + $0x48] sm:$0xf]
      %v304 = vld [vmem:[%s1 + $0x4c] sm:$0xf]
      %v305 = vld [vmem:[%s1 + $0x50] sm:$0xf]
      %v306 = vld [vmem:[%s1 + $0x54] sm:$0xf]
      %v307 = vld [vmem:[%s1 + $0x58] sm:$0xf]
      %v308 = vld [vmem:[%s1 + $0x5c] sm:$0xf]
      %v309 = vld [vmem:[%s1 + $0x60] sm:$0xf]
      %v310 = vld [vmem:[%s1 + $0x64] sm:$0xf]
      %v311 = vld [vmem:[%s1 + $0x68] sm:$0xf]
      %v312 = vld [vmem:[%s1 + $0x6c] sm:$0xf]
      %v313 = vld [vmem:[%s1 + $0x70] sm:$0xf]
      %v314 = vld [vmem:[%s1 + $0x74] sm:$0xf]
      %v315 = vld [vmem:[%s1 + $0x78] sm:$0xf]
      %v316 = vld [vmem:[%s1 + $0x7c] sm:$0xf]
      %v317 = vld [vmem:[%s1 + $0x80] sm:$0xf]
      %v318 = vld [vmem:[%s1 + $0x84] sm:$0xf]
      %v319 = vld [vmem:[%s1 + $0x88] sm:$0xf]
      %v320 = vld [vmem:[%s1 + $0x8c] sm:$0xf]
      %v321 = vld [vmem:[%s1 + $0x90] sm:$0xf]
      %v322 = vld [vmem:[%s1 + $0x94] sm:$0xf]
      %v323 = vld [vmem:[%s1 + $0x98] sm:$0xf]
      %v324 = vld [vmem:[%s1 + $0x9c] sm:$0xf]
      %v325 = vld [vmem:[%s1 + $0xa0] sm:$0xf]
      %v326 = vld [vmem:[%s1 + $0xa4] sm:$0xf]
      %v327 = vld [vmem:[%s1 + $0xa8] sm:$0xf]
      %v328 = vld [vmem:[%s1 + $0xac] sm:$0xf]
      %v329 = vld [vmem:[%s1 + $0xb0] sm:$0xf]
      %v330 = vld [vmem:[%s1 + $0xb4] sm:$0xf]
      %v331 = vld [vmem:[%s1 + $0xb8] sm:$0xf]
      %v332 = vld [vmem:[%s1 + $0xbc] sm:$0xf]
      %v333 = vld [vmem:[%s1 + $0xc0] sm:$0xf]
      %v334 = vld [vmem:[%s1 + $0xc4] sm:$0xf]
      %v335 = vld [vmem:[%s1 + $0xc8] sm:$0xf]
      %v336 = vld [vmem:[%s1 + $0xcc] sm:$0xf]
      %v337 = vld [vmem:[%s1 + $0xd0] sm:$0xf]
      %v338 = vld [vmem:[%s1 + $0xd4] sm:$0xf]
      %v339 = vld [vmem:[%s1 + $0xd8] sm:$0xf]
      %v340 = vld [vmem:[%s1 + $0xdc] sm:$0xf]
      %v341 = vld [vmem:[%s1 + $0xe0] sm:$0xf]
      %v342 = vld [vmem:[%s1 + $0xe4] sm:$0xf]
      %v343 = vld [vmem:[%s1 + $0xe8] sm:$0xf]
      %v344 = vld [vmem:[%s1 + $0xec] sm:$0xf]
      %v345 = vld [vmem:[%s1 + $0xf0] sm:$0xf]
      %v346 = vld [vmem:[%s1 + $0xf4] sm:$0xf]
      %v347 = vld [vmem:[%s1 + $0xf8] sm:$0xf]
      %v348 = vld [vmem:[%s1 + $0xfc] sm:$0xf]
      %v349 = vld [vmem:[%s1 + $0x100] sm:$0xf]
      %v350 = vld [vmem:[%s1 + $0x104] sm:$0xf]
      %v351 = vld [vmem:[%s1 + $0x108] sm:$0xf]
      %v352 = vld [vmem:[%s1 + $0x10c] sm:$0xf]
      %v353 = vld [vmem:[%s1 + $0x110] sm:$0xf]
      %v354 = vld [vmem:[%s1 + $0x114] sm:$0xf]
      %v355 = vld [vmem:[%s1 + $0x118] sm:$0xf]
      %v356 = vld [vmem:[%s1 + $0x11c] sm:$0xf]
      %v429 = vunpack.c.l.b16 %v285
      %v430 = vunpack.c.l.b16 %v286
      %v431 = vunpack.c.l.b16 %v287
      %v432 = vunpack.c.l.b16 %v288
      %v433 = vunpack.c.l.b16 %v289
      %v434 = vunpack.c.l.b16 %v290
      %v435 = vunpack.c.l.b16 %v291
      %v436 = vunpack.c.l.b16 %v292
      %v437 = vunpack.c.l.b16 %v293
      %v438 = vunpack.c.l.b16 %v294
      %v439 = vunpack.c.l.b16 %v295
      %v440 = vunpack.c.l.b16 %v296
      %v441 = vunpack.c.l.b16 %v297
      %v442 = vunpack.c.l.b16 %v298
      %v443 = vunpack.c.l.b16 %v299
      %v444 = vunpack.c.l.b16 %v300
      %v445 = vunpack.c.l.b16 %v301
      %v446 = vunpack.c.l.b16 %v302
      %v447 = vunpack.c.l.b16 %v303
      %v448 = vunpack.c.l.b16 %v304
      %v449 = vunpack.c.l.b16 %v305
      %v450 = vunpack.c.l.b16 %v306
      %v451 = vunpack.c.l.b16 %v307
      %v452 = vunpack.c.l.b16 %v308
      %v453 = vunpack.c.l.b16 %v309
      %v454 = vunpack.c.l.b16 %v310
      %v455 = vunpack.c.l.b16 %v311
      %v456 = vunpack.c.l.b16 %v312
      %v457 = vunpack.c.l.b16 %v313
      %v458 = vunpack.c.l.b16 %v314
      %v459 = vunpack.c.l.b16 %v315
      %v460 = vunpack.c.l.b16 %v316
      %v461 = vunpack.c.l.b16 %v317
      %v462 = vunpack.c.l.b16 %v318
      %v463 = vunpack.c.l.b16 %v319
      %v464 = vunpack.c.l.b16 %v320
      %v465 = vunpack.c.l.b16 %v321
      %v466 = vunpack.c.l.b16 %v322
      %v467 = vunpack.c.l.b16 %v323
      %v468 = vunpack.c.l.b16 %v324
      %v469 = vunpack.c.l.b16 %v325
      %v470 = vunpack.c.l.b16 %v326
      %v471 = vunpack.c.l.b16 %v327
      %v472 = vunpack.c.l.b16 %v328
      %v473 = vunpack.c.l.b16 %v329
      %v474 = vunpack.c.l.b16 %v330
      %v475 = vunpack.c.l.b16 %v331
      %v476 = vunpack.c.l.b16 %v332
      %v477 = vunpack.c.l.b16 %v333
      %v478 = vunpack.c.l.b16 %v334
      %v479 = vunpack.c.l.b16 %v335
      %v480 = vunpack.c.l.b16 %v336
      %v481 = vunpack.c.l.b16 %v337
      %v482 = vunpack.c.l.b16 %v338
      %v483 = vunpack.c.l.b16 %v339
      %v484 = vunpack.c.l.b16 %v340
      %v485 = vunpack.c.l.b16 %v341
      %v486 = vunpack.c.l.b16 %v342
      %v487 = vunpack.c.l.b16 %v343
      %v488 = vunpack.c.l.b16 %v344
      %v489 = vunpack.c.l.b16 %v345
      %v490 = vunpack.c.l.b16 %v346
      %v491 = vunpack.c.l.b16 %v347
      %v492 = vunpack.c.l.b16 %v348
      %v493 = vunpack.c.l.b16 %v349
      %v494 = vunpack.c.l.b16 %v350
      %v495 = vunpack.c.l.b16 %v351
      %v496 = vunpack.c.l.b16 %v352
      %v497 = vunpack.c.l.b16 %v353
      %v498 = vunpack.c.l.b16 %v354
      %v499 = vunpack.c.l.b16 %v355
      %v500 = vunpack.c.l.b16 %v356
      %v501 = vpack.c.b16 %v430, %v429
      %v502 = vpack.c.b16 %v432, %v431
      %v503 = vpack.c.b16 %v434, %v433
      %v504 = vpack.c.b16 %v436, %v435
      %v505 = vpack.c.b16 %v438, %v437
      %v506 = vpack.c.b16 %v440, %v439
      %v507 = vpack.c.b16 %v442, %v441
      %v508 = vpack.c.b16 %v444, %v443
      %v509 = vpack.c.b16 %v446, %v445
      %v510 = vpack.c.b16 %v448, %v447
      %v511 = vpack.c.b16 %v450, %v449
      %v512 = vpack.c.b16 %v452, %v451
      %v513 = vpack.c.b16 %v454, %v453
      %v514 = vpack.c.b16 %v456, %v455
      %v515 = vpack.c.b16 %v458, %v457
      %v516 = vpack.c.b16 %v460, %v459
      %v517 = vpack.c.b16 %v462, %v461
      %v518 = vpack.c.b16 %v464, %v463
      %v519 = vpack.c.b16 %v466, %v465
      %v520 = vpack.c.b16 %v468, %v467
      %v521 = vpack.c.b16 %v470, %v469
      %v522 = vpack.c.b16 %v472, %v471
      %v523 = vpack.c.b16 %v474, %v473
      %v524 = vpack.c.b16 %v476, %v475
      %v525 = vpack.c.b16 %v478, %v477
      %v526 = vpack.c.b16 %v480, %v479
      %v527 = vpack.c.b16 %v482, %v481
      %v528 = vpack.c.b16 %v484, %v483
      %v529 = vpack.c.b16 %v486, %v485
      %v530 = vpack.c.b16 %v488, %v487
      %v531 = vpack.c.b16 %v490, %v489
      %v532 = vpack.c.b16 %v492, %v491
      %v533 = vpack.c.b16 %v494, %v493
      %v534 = vpack.c.b16 %v496, %v495
      %v535 = vpack.c.b16 %v498, %v497
      %v536 = vpack.c.b16 %v500, %v499
      %v574 = vsel %vm268, %v267, 0
      %576 = vmatprep.subr.bf16.mxu0 0
      %577 = vmatpush1.bf16.msra.mxu0 %v501
      %578 = vmatprep.subr.bf16.mxu0 0
      %579 = vmatpush1.bf16.msra.mxu0 %v502
      %580 = vmatprep.subr.bf16.mxu0 0
      %581 = vmatpush1.bf16.msra.mxu0 %v503
      %582 = vmatprep.subr.bf16.mxu0 0
      %583 = vmatpush1.bf16.msra.mxu0 %v504
      %584 = vmatprep.subr.bf16.mxu0 0
      %585 = vmatpush1.bf16.msra.mxu0 %v505
      %586 = vmatprep.subr.bf16.mxu0 0
      %587 = vmatpush1.bf16.msra.mxu0 %v506
      %588 = vmatprep.subr.bf16.mxu0 0
      %589 = vmatpush1.bf16.msra.mxu0 %v507
      %590 = vmatprep.subr.bf16.mxu0 0
      %591 = vmatpush1.bf16.msra.mxu0 %v508
      %592 = vmatprep.subr.bf16.mxu0 0
      %593 = vmatpush1.bf16.msra.mxu0 %v509
      %594 = vmatprep.subr.bf16.mxu0 0
      %595 = vmatpush1.bf16.msra.mxu0 %v510
      %596 = vmatprep.subr.bf16.mxu0 0
      %597 = vmatpush1.bf16.msra.mxu0 %v511
      %598 = vmatprep.subr.bf16.mxu0 0
      %599 = vmatpush1.bf16.msra.mxu0 %v512
      %600 = vmatprep.subr.bf16.mxu0 0
      %601 = vmatpush1.bf16.msra.mxu0 %v513
      %602 = vmatprep.subr.bf16.mxu0 0
      %603 = vmatpush1.bf16.msra.mxu0 %v514
      %604 = vmatprep.subr.bf16.mxu0 0
      %605 = vmatpush1.bf16.msra.mxu0 %v515
      %606 = vmatprep.subr.bf16.mxu0 0
      %607 = vmatpush1.bf16.msra.mxu0 %v516
      %608 = vmatprep.mubr.bf16.mxu0 %v275
      %609 = vmatmul.mubr.bf16.gmra.mrb[0].mxu0 %v271
      %v610 = vpop.f32.mrb[0].mxu0
      %v611 = vadd.f32 0.0, %v610
      %v612 = vpop.f32.mrb[0].mxu0
      %v613 = vpop.f32.mrb[0].mxu0
      %v614 = vpop.f32.mrb[0].mxu0
      %615 = vdwg.mxu0
      %616 = vmatprep.subr.bf16.mxu0 0
      %617 = vmatpush1.bf16.msra.mxu0 %v517
      %618 = vmatprep.subr.bf16.mxu0 0
      %619 = vmatpush1.bf16.msra.mxu0 %v518
      %620 = vmatprep.subr.bf16.mxu0 0
      %621 = vmatpush1.bf16.msra.mxu0 %v519
      %622 = vmatprep.subr.bf16.mxu0 0
      %623 = vmatpush1.bf16.msra.mxu0 %v520
      %624 = vmatprep.subr.bf16.mxu0 0
      %625 = vmatpush1.bf16.msra.mxu0 %v521
      %626 = vmatprep.subr.bf16.mxu0 0
      %627 = vmatpush1.bf16.msra.mxu0 %v522
      %628 = vmatprep.subr.bf16.mxu0 0
      %629 = vmatpush1.bf16.msra.mxu0 %v523
      %630 = vmatprep.subr.bf16.mxu0 0
      %631 = vmatpush1.bf16.msra.mxu0 %v524
      %632 = vmatprep.subr.bf16.mxu0 0
      %633 = vmatpush1.bf16.msra.mxu0 %v525
      %634 = vmatprep.subr.bf16.mxu0 0
      %635 = vmatpush1.bf16.msra.mxu0 %v526
      %636 = vmatprep.subr.bf16.mxu0 0
      %637 = vmatpush1.bf16.msra.mxu0 %v527
      %638 = vmatprep.subr.bf16.mxu0 0
      %639 = vmatpush1.bf16.msra.mxu0 %v528
      %640 = vmatprep.subr.bf16.mxu0 0
      %641 = vmatpush1.bf16.msra.mxu0 %v529
      %642 = vmatprep.subr.bf16.mxu0 0
      %643 = vmatpush1.bf16.msra.mxu0 %v530
      %644 = vmatprep.subr.bf16.mxu0 0
      %645 = vmatpush1.bf16.msra.mxu0 %v531
      %646 = vmatprep.subr.bf16.mxu0 0
      %647 = vmatpush1.bf16.msra.mxu0 %v532
      %648 = vmatprep.mubr.bf16.mxu0 %v283
      %649 = vmatmul.mubr.bf16.gmra.mrb[0].mxu0 %v279
      %v650 = vpop.f32.mrb[0].mxu0
      %v651 = vadd.f32 %v611, %v650
      %v652 = vpop.f32.mrb[0].mxu0
      %v653 = vpop.f32.mrb[0].mxu0
      %v654 = vpop.f32.mrb[0].mxu0
      %655 = vdwg.mxu0
      %656 = vmatprep.subr.bf16.mxu0 0
      %657 = vmatpush1.bf16.msra.mxu0 %v533
      %658 = vmatprep.subr.bf16.mxu0 0
      %659 = vmatpush1.bf16.msra.mxu0 %v534
      %660 = vmatprep.subr.bf16.mxu0 0
      %661 = vmatpush1.bf16.msra.mxu0 %v535
      %662 = vmatprep.subr.bf16.mxu0 0
      %663 = vmatpush1.bf16.msra.mxu0 %v536
      %664 = vmatprep.subr.bf16.mxu0 0
      %665 = vmatpush1.bf16.msra.mxu0 0
      %666 = vmatprep.subr.bf16.mxu0 0
      %667 = vmatpush1.bf16.msra.mxu0 0
      %668 = vmatprep.subr.bf16.mxu0 0
      %669 = vmatpush1.bf16.msra.mxu0 0
      %670 = vmatprep.subr.bf16.mxu0 0
      %671 = vmatpush1.bf16.msra.mxu0 0
      %672 = vmatprep.subr.bf16.mxu0 0
      %673 = vmatpush1.bf16.msra.mxu0 0
      %674 = vmatprep.subr.bf16.mxu0 0
      %675 = vmatpush1.bf16.msra.mxu0 0
      %676 = vmatprep.subr.bf16.mxu0 0
      %677 = vmatpush1.bf16.msra.mxu0 0
      %678 = vmatprep.subr.bf16.mxu0 0
      %679 = vmatpush1.bf16.msra.mxu0 0
      %680 = vmatprep.subr.bf16.mxu0 0
      %681 = vmatpush1.bf16.msra.mxu0 0
      %682 = vmatprep.subr.bf16.mxu0 0
      %683 = vmatpush1.bf16.msra.mxu0 0
      %684 = vmatprep.subr.bf16.mxu0 0
      %685 = vmatpush1.bf16.msra.mxu0 0
      %686 = vmatprep.subr.bf16.mxu0 0
      %687 = vmatpush1.bf16.msra.mxu0 0
      %688 = vmatprep.mubr.bf16.mxu0 0
      %689 = vmatmul.mubr.bf16.gmra.mrb[0].mxu0 %v574
      %v690 = vpop.f32.mrb[0].mxu0
      %v691 = vadd.f32 %v651, %v690
      %v692 = vpop.f32.mrb[0].mxu0
      %v693 = vpop.f32.mrb[0].mxu0
      %v694 = vpop.f32.mrb[0].mxu0
      %695 = vdwg.mxu0
      %v696 = vld [vmem:[%s2] sm:$0x1]
      %v698 = vlaneseq
      %v699 = vshrl.u32 %v698, 7
      %v700 = vsub.s32 0, %v699
      %v701 = vrot.slane %v696, %v700
      %v703 = vmul.f32 %v691, %v701
      %v704 = vld [vmem:[%s3] sm:$0x1]
      %v706 = vlaneseq
      %v707 = vshrl.u32 %v706, 7
      %v708 = vsub.s32 0, %v707
      %v709 = vrot.slane %v704, %v708
      %v711 = vadd.f32 %v703, %v709
      %vm712 = vcmp.ge.f32.partialorder %v711, 0.0
      %v713 = vmul.f32 %v711, 0.1
      %v714 = vsel %vm712, %v711, %v713
      %v715 = vpack.c.bf16 %v714, %v714
      %vm716 = vcmask 519168
      %717 = vst.msk [vmem:[%s195] sm:$0xf] %vm716, %v715
      %p718 = scmp.lt.s32.totalorder %s15, 1
      %s719 = scalar_select %p718, %s15, 1
      %s720 = smul.addr %s719, 4
      %s721 = scalar_lea.vmem %s4, %s720
      // Predicated region
      $region37: #{elannet_tiny_forward.34} parent=35 // pred_check
        %p722 = pneg %p122
      $region38: #{elannet_tiny_forward.34} parent=35 // pred_check_branch
        %724 = sbr.rel (%p722) target = $region40
      $region39: #{elannet_tiny_forward.34} parent=35 // pred_region
        _
      $region40: #{elannet_tiny_forward.34} parent=35 // pred_fallthru
        _
    $region36: #{elannet_tiny_forward.34} parent=5 // pred_fallthru
      _
    %p725 = scmp.le.s32.totalorder 2, %s10
    // Predicated region
    $region41: #{elannet_tiny_forward.34} parent=5 // pred_check
      %p726 = pneg %p725
    $region42: #{elannet_tiny_forward.34} parent=5 // pred_check_branch
      %728 = sbr.rel (%p726) target = $region44
    $region43: #{elannet_tiny_forward.34} parent=5 // pred_region
      %s729 = ssub.s32 %s10, 2
      // Predicated region
      $region45: #{elannet_tiny_forward.34} parent=43 // pred_check
        %p730 = pneg %p128
      $region46: #{elannet_tiny_forward.34} parent=43 // pred_check_branch
        %732 = sbr.rel (%p730) target = $region48
      $region47: #{elannet_tiny_forward.34} parent=43 // pred_region
        %p733 = scmp.lt.s32.totalorder %s16, 1
        %s734 = scalar_select %p733, %s16, 1
        %s735 = smul.addr %s734, 4
        %s736 = scalar_lea.vmem %s4, %s735
      $region48: #{elannet_tiny_forward.34} parent=43 // pred_fallthru
        _
    $region44: #{elannet_tiny_forward.34} parent=5 // pred_fallthru
      _
  $region6: #{elannet_tiny_forward.34} parent=0 // loop_footer
    %s14 = sadd.s32 1, %s10
  $region7: #{elannet_tiny_forward.34} parent=0 // loop_footer_branch
    %9 = sbr.rel target = $region3
  $region8: #{elannet_tiny_forward.34} parent=0 // loop_exit
    _

// kernel: elannet_tiny_forward.38
$region0: #{elannet_tiny_forward.38}
  #allocation0 [shape = 'u32[]', space=smem, size = 0x4, offset = 0x4, fixed_abs, tag = 'smem constant byte address 0x4 - core index']
  #allocation1 [shape = 'u32[144,128]{1,0:T(1,128)}', space=vmem, size = 0x12000, scoped, tag = 'internal scratch']
  %s0 = inlined_call_operand.vmem [shape: bf16[2,256], index: 0, kind: input, shape index: {}]
  %s1 = inlined_call_operand.vmem [shape: bf16[256,256], index: 1, kind: input, shape index: {}]
  %s2 = inlined_call_operand.vmem [shape: f32[1,256], index: 2, kind: input, shape index: {}]
  %s3 = inlined_call_operand.vmem [shape: f32[1,256], index: 3, kind: input, shape index: {}]
  %s4 = inlined_call_operand.vmem [shape: bf16[2,128], index: 4, kind: output, shape index: {0}]
  %s5 = inlined_call_operand.vmem [shape: bf16[2,128], index: 5, kind: output, shape index: {1}]
  %6 = xla_tuple %s4, %s5
  %s7 = sld [smem:[#allocation0]]
  $region34: #{elannet_tiny_forward.38} parent=0
    _
  %s9 = ssub.s32 1, %s7
  %s10 = scalar_select 0, %s9, %s7
  // Predicated region
  $region2: #{elannet_tiny_forward.38} parent=0 // pred_check
    _
  $region3: #{elannet_tiny_forward.38} parent=0 // pred_check_branch
    %12 = sbr.rel (0) target = $region5
  $region4: #{elannet_tiny_forward.38} parent=0 // pred_region
    _
  $region5: #{elannet_tiny_forward.38} parent=0 // pred_fallthru
    _
  // Predicated region
  $region6: #{elannet_tiny_forward.38} parent=0 // pred_check
    _
  $region7: #{elannet_tiny_forward.38} parent=0 // pred_check_branch
    %14 = sbr.rel (0) target = $region9
  $region8: #{elannet_tiny_forward.38} parent=0 // pred_region
    _
  $region9: #{elannet_tiny_forward.38} parent=0 // pred_fallthru
    _
  // Predicated region
  $region10: #{elannet_tiny_forward.38} parent=0 // pred_check
    _
  $region11: #{elannet_tiny_forward.38} parent=0 // pred_check_branch
    %16 = sbr.rel (0) target = $region13
  $region12: #{elannet_tiny_forward.38} parent=0 // pred_region
    _
  $region13: #{elannet_tiny_forward.38} parent=0 // pred_fallthru
    _
  // Predicated region
  $region14: #{elannet_tiny_forward.38} parent=0 // pred_check
    _
  $region15: #{elannet_tiny_forward.38} parent=0 // pred_check_branch
    %18 = sbr.rel (0) target = $region17
  $region16: #{elannet_tiny_forward.38} parent=0 // pred_region
    _
  $region17: #{elannet_tiny_forward.38} parent=0 // pred_fallthru
    _
  %v19 = vld [vmem:[%s0] sm:$0x3]
  %v20 = vld [vmem:[%s1] sm:$0xff]
  %v21 = vld [vmem:[%s1 + $0x8] sm:$0xff]
  %v22 = vld [vmem:[%s1 + $0x10] sm:$0xff]
  %v23 = vld [vmem:[%s1 + $0x18] sm:$0xff]
  %v24 = vld [vmem:[%s1 + $0x20] sm:$0xff]
  %v25 = vld [vmem:[%s1 + $0x28] sm:$0xff]
  %v26 = vld [vmem:[%s1 + $0x30] sm:$0xff]
  %v27 = vld [vmem:[%s1 + $0x38] sm:$0xff]
  %v28 = vld [vmem:[%s1 + $0x40] sm:$0xff]
  %v29 = vld [vmem:[%s1 + $0x48] sm:$0xff]
  %v30 = vld [vmem:[%s1 + $0x50] sm:$0xff]
  %v31 = vld [vmem:[%s1 + $0x58] sm:$0xff]
  %v32 = vld [vmem:[%s1 + $0x60] sm:$0xff]
  %v33 = vld [vmem:[%s1 + $0x68] sm:$0xff]
  %v34 = vld [vmem:[%s1 + $0x70] sm:$0xff]
  %v35 = vld [vmem:[%s1 + $0x78] sm:$0xff]
  %v36 = vld [vmem:[%s1 + $0x80] sm:$0xff]
  %v37 = vld [vmem:[%s1 + $0x88] sm:$0xff]
  %v38 = vld [vmem:[%s1 + $0x90] sm:$0xff]
  %v39 = vld [vmem:[%s1 + $0x98] sm:$0xff]
  %v40 = vld [vmem:[%s1 + $0xa0] sm:$0xff]
  %v41 = vld [vmem:[%s1 + $0xa8] sm:$0xff]
  %v42 = vld [vmem:[%s1 + $0xb0] sm:$0xff]
  %v43 = vld [vmem:[%s1 + $0xb8] sm:$0xff]
  %v44 = vld [vmem:[%s1 + $0xc0] sm:$0xff]
  %v45 = vld [vmem:[%s1 + $0xc8] sm:$0xff]
  %v46 = vld [vmem:[%s1 + $0xd0] sm:$0xff]
  %v47 = vld [vmem:[%s1 + $0xd8] sm:$0xff]
  %v48 = vld [vmem:[%s1 + $0xe0] sm:$0xff]
  %v49 = vld [vmem:[%s1 + $0xe8] sm:$0xff]
  %v50 = vld [vmem:[%s1 + $0xf0] sm:$0xff]
  %v51 = vld [vmem:[%s1 + $0xf8] sm:$0xff]
  %v54 = vunpack.c.l.s4 1966171168
  %v55 = vunpack.c.0.s8 %v54
  %v56 = vlaneseq
  %v57 = vshrl.u32 %v56, 7
  %v58 = vsub.s32 %v55, %v57
  %v59 = vrot.slane %v19, %v58
  %v60 = vcombine.high %v59, %v59
  %v62 = vunpack.c.l.s4 1966171168
  %v63 = vunpack.c.0.s8 %v62
  %v64 = vlaneseq
  %v65 = vshrl.u32 %v64, 7
  %v66 = vsub.s32 %v63, %v65
  %v67 = vrot.slane %v59, %v66
  %v69 = vunpack.c.l.s4 1966171168
  %v70 = vunpack.c.0.s8 %v69
  %v71 = vlaneseq
  %v72 = vshrl.u32 %v71, 7
  %v73 = vsub.s32 %v70, %v72
  %v74 = vrot.slane %v60, %v73
  %v109 = vunpack.c.l.b16 %v20
  %v110 = vunpack.c.h.b16 %v20
  %v111 = vunpack.c.l.b16 %v21
  %v112 = vunpack.c.h.b16 %v21
  %v113 = vunpack.c.l.b16 %v22
  %v114 = vunpack.c.h.b16 %v22
  %v115 = vunpack.c.l.b16 %v23
  %v116 = vunpack.c.h.b16 %v23
  %v117 = vunpack.c.l.b16 %v24
  %v118 = vunpack.c.h.b16 %v24
  %v119 = vunpack.c.l.b16 %v25
  %v120 = vunpack.c.h.b16 %v25
  %v121 = vunpack.c.l.b16 %v26
  %v122 = vunpack.c.h.b16 %v26
  %v123 = vunpack.c.l.b16 %v27
  %v124 = vunpack.c.h.b16 %v27
  %v125 = vunpack.c.l.b16 %v28
  %v126 = vunpack.c.h.b16 %v28
  %v127 = vunpack.c.l.b16 %v29
  %v128 = vunpack.c.h.b16 %v29
  %v129 = vunpack.c.l.b16 %v30
  %v130 = vunpack.c.h.b16 %v30
  %v131 = vunpack.c.l.b16 %v31
  %v132 = vunpack.c.h.b16 %v31
  %v133 = vunpack.c.l.b16 %v32
  %v134 = vunpack.c.h.b16 %v32
  %v135 = vunpack.c.l.b16 %v33
  %v136 = vunpack.c.h.b16 %v33
  %v137 = vunpack.c.l.b16 %v34
  %v138 = vunpack.c.h.b16 %v34
  %v139 = vunpack.c.l.b16 %v35
  %v140 = vunpack.c.h.b16 %v35
  %v141 = vunpack.c.l.b16 %v36
  %v142 = vunpack.c.h.b16 %v36
  %v143 = vunpack.c.l.b16 %v37
  %v144 = vunpack.c.h.b16 %v37
  %v145 = vunpack.c.l.b16 %v38
  %v146 = vunpack.c.h.b16 %v38
  %v147 = vunpack.c.l.b16 %v39
  %v148 = vunpack.c.h.b16 %v39
  %v149 = vunpack.c.l.b16 %v40
  %v150 = vunpack.c.h.b16 %v40
  %v151 = vunpack.c.l.b16 %v41
  %v152 = vunpack.c.h.b16 %v41
  %v153 = vunpack.c.l.b16 %v42
  %v154 = vunpack.c.h.b16 %v42
  %v155 = vunpack.c.l.b16 %v43
  %v156 = vunpack.c.h.b16 %v43
  %v157 = vunpack.c.l.b16 %v44
  %v158 = vunpack.c.h.b16 %v44
  %v159 = vunpack.c.l.b16 %v45
  %v160 = vunpack.c.h.b16 %v45
  %v161 = vunpack.c.l.b16 %v46
  %v162 = vunpack.c.h.b16 %v46
  %v163 = vunpack.c.l.b16 %v47
  %v164 = vunpack.c.h.b16 %v47
  %v165 = vunpack.c.l.b16 %v48
  %v166 = vunpack.c.h.b16 %v48
  %v167 = vunpack.c.l.b16 %v49
  %v168 = vunpack.c.h.b16 %v49
  %v169 = vunpack.c.l.b16 %v50
  %v170 = vunpack.c.h.b16 %v50
  %v171 = vunpack.c.l.b16 %v51
  %v172 = vunpack.c.h.b16 %v51
  %v173 = vpack.c.b16 %v111, %v109
  %v174 = vpack.c.b16 %v112, %v110
  %v175 = vpack.c.b16 %v115, %v113
  %v176 = vpack.c.b16 %v116, %v114
  %v177 = vpack.c.b16 %v119, %v117
  %v178 = vpack.c.b16 %v120, %v118
  %v179 = vpack.c.b16 %v123, %v121
  %v180 = vpack.c.b16 %v124, %v122
  %v181 = vpack.c.b16 %v127, %v125
  %v182 = vpack.c.b16 %v128, %v126
  %v183 = vpack.c.b16 %v131, %v129
  %v184 = vpack.c.b16 %v132, %v130
  %v185 = vpack.c.b16 %v135, %v133
  %v186 = vpack.c.b16 %v136, %v134
  %v187 = vpack.c.b16 %v139, %v137
  %v188 = vpack.c.b16 %v140, %v138
  %v189 = vpack.c.b16 %v143, %v141
  %v190 = vpack.c.b16 %v144, %v142
  %v191 = vpack.c.b16 %v147, %v145
  %v192 = vpack.c.b16 %v148, %v146
  %v193 = vpack.c.b16 %v151, %v149
  %v194 = vpack.c.b16 %v152, %v150
  %v195 = vpack.c.b16 %v155, %v153
  %v196 = vpack.c.b16 %v156, %v154
  %v197 = vpack.c.b16 %v159, %v157
  %v198 = vpack.c.b16 %v160, %v158
  %v199 = vpack.c.b16 %v163, %v161
  %v200 = vpack.c.b16 %v164, %v162
  %v201 = vpack.c.b16 %v167, %v165
  %v202 = vpack.c.b16 %v168, %v166
  %v203 = vpack.c.b16 %v171, %v169
  %v204 = vpack.c.b16 %v172, %v170
  %237 = vmatprep.subr.bf16.mxu0 %v174
  %238 = vmatpush1.bf16.msra.mxu0 %v173
  %239 = vmatprep.subr.bf16.mxu0 %v176
  %240 = vmatpush1.bf16.msra.mxu0 %v175
  %241 = vmatprep.subr.bf16.mxu0 %v178
  %242 = vmatpush1.bf16.msra.mxu0 %v177
  %243 = vmatprep.subr.bf16.mxu0 %v180
  %244 = vmatpush1.bf16.msra.mxu0 %v179
  %245 = vmatprep.subr.bf16.mxu0 %v182
  %246 = vmatpush1.bf16.msra.mxu0 %v181
  %247 = vmatprep.subr.bf16.mxu0 %v184
  %248 = vmatpush1.bf16.msra.mxu0 %v183
  %249 = vmatprep.subr.bf16.mxu0 %v186
  %250 = vmatpush1.bf16.msra.mxu0 %v185
  %251 = vmatprep.subr.bf16.mxu0 %v188
  %252 = vmatpush1.bf16.msra.mxu0 %v187
  %253 = vmatprep.subr.bf16.mxu0 %v190
  %254 = vmatpush1.bf16.msra.mxu0 %v189
  %255 = vmatprep.subr.bf16.mxu0 %v192
  %256 = vmatpush1.bf16.msra.mxu0 %v191
  %257 = vmatprep.subr.bf16.mxu0 %v194
  %258 = vmatpush1.bf16.msra.mxu0 %v193
  %259 = vmatprep.subr.bf16.mxu0 %v196
  %260 = vmatpush1.bf16.msra.mxu0 %v195
  %261 = vmatprep.subr.bf16.mxu0 %v198
  %262 = vmatpush1.bf16.msra.mxu0 %v197
  %263 = vmatprep.subr.bf16.mxu0 %v200
  %264 = vmatpush1.bf16.msra.mxu0 %v199
  %265 = vmatprep.subr.bf16.mxu0 %v202
  %266 = vmatpush1.bf16.msra.mxu0 %v201
  %267 = vmatprep.subr.bf16.mxu0 %v204
  %268 = vmatpush1.bf16.msra.mxu0 %v203
  %269 = vmatprep.mubr.bf16.mxu0 %v74
  %270 = vmatmul.mubr.bf16.gmra.mrb[0].mxu0 %v67
  %v271 = vpop.f32.mrb[0].mxu0
  %v272 = vadd.f32 0.0, %v271
  %v273 = vpop.f32.mrb[0].mxu0
  %v274 = vadd.f32 0.0, %v273
  %v275 = vpop.f32.mrb[0].mxu0
  %v276 = vpop.f32.mrb[0].mxu0
  %277 = vdwg.mxu0
  %v278 = vld [vmem:[%s2] sm:$0x3]
  %v280 = vlaneseq
  %v281 = vshrl.u32 %v280, 7
  %v282 = vsub.s32 0, %v281
  %v283 = vrot.slane %v278, %v282
  %v284 = vlaneseq
  %v285 = vshrl.u32 %v284, 7
  %v286 = vsub.s32 1, %v285
  %v287 = vrot.slane %v278, %v286
  %v290 = vmul.f32 %v272, %v283
  %v291 = vmul.f32 %v274, %v287
  %v292 = vld [vmem:[%s3] sm:$0x3]
  %v294 = vlaneseq
  %v295 = vshrl.u32 %v294, 7
  %v296 = vsub.s32 0, %v295
  %v297 = vrot.slane %v292, %v296
  %v298 = vlaneseq
  %v299 = vshrl.u32 %v298, 7
  %v300 = vsub.s32 1, %v299
  %v301 = vrot.slane %v292, %v300
  %v304 = vadd.f32 %v290, %v297
  %v305 = vadd.f32 %v291, %v301
  %vm306 = vcmp.ge.f32.partialorder %v304, 0.0
  %vm307 = vcmp.ge.f32.partialorder %v305, 0.0
  %v308 = vmul.f32 %v304, 0.1
  %v309 = vmul.f32 %v305, 0.1
  %v310 = vsel %vm306, %v304, %v308
  %v311 = vsel %vm307, %v305, %v309
  %v312 = vpack.c.bf16 %v310, %v310
  %313 = vst [vmem:[%s4] sm:$0x1] %v312
  %v314 = vpack.c.bf16 %v311, %v311
  %315 = vst [vmem:[%s5] sm:$0x1] %v314
  // Predicated region
  $region18: #{elannet_tiny_forward.38} parent=0 // pred_check
    _
  $region19: #{elannet_tiny_forward.38} parent=0 // pred_check_branch
    %317 = sbr.rel (0) target = $region21
  $region20: #{elannet_tiny_forward.38} parent=0 // pred_region
    _
  $region21: #{elannet_tiny_forward.38} parent=0 // pred_fallthru
    _
  // Predicated region
  $region22: #{elannet_tiny_forward.38} parent=0 // pred_check
    _
  $region23: #{elannet_tiny_forward.38} parent=0 // pred_check_branch
    %319 = sbr.rel (0) target = $region25
  $region24: #{elannet_tiny_forward.38} parent=0 // pred_region
    _
  $region25: #{elannet_tiny_forward.38} parent=0 // pred_fallthru
    _
  // Predicated region
  $region26: #{elannet_tiny_forward.38} parent=0 // pred_check
    _
  $region27: #{elannet_tiny_forward.38} parent=0 // pred_check_branch
    %321 = sbr.rel (0) target = $region29
  $region28: #{elannet_tiny_forward.38} parent=0 // pred_region
    _
  $region29: #{elannet_tiny_forward.38} parent=0 // pred_fallthru
    _
  // Predicated region
  $region30: #{elannet_tiny_forward.38} parent=0 // pred_check
    _
  $region31: #{elannet_tiny_forward.38} parent=0 // pred_check_branch
    %323 = sbr.rel (0) target = $region33
  $region32: #{elannet_tiny_forward.38} parent=0 // pred_region
    _
  $region33: #{elannet_tiny_forward.38} parent=0 // pred_fallthru
    _

// kernel: elannet_tiny_forward.39
$region0: #{elannet_tiny_forward.39}
  #allocation0 [shape = 'u32[]', space=smem, size = 0x4, offset = 0x4, fixed_abs, tag = 'smem constant byte address 0x4 - core index']
  #allocation1 [shape = 'u32[144,128]{1,0:T(1,128)}', space=vmem, size = 0x12000, scoped, tag = 'internal scratch']
  %s0 = inlined_call_operand.vmem [shape: bf16[2,12,128], index: 0, kind: input, shape index: {}]
  %s1 = inlined_call_operand.vmem [shape: bf16[1152,128], index: 1, kind: input, shape index: {}]
  %s2 = inlined_call_operand.vmem [shape: f32[1,128], index: 2, kind: input, shape index: {}]
  %s3 = inlined_call_operand.vmem [shape: f32[1,128], index: 3, kind: input, shape index: {}]
  %s4 = inlined_call_operand.vmem [shape: bf16[2,3,128], index: 4, kind: output, shape index: {}]
  %s5 = sld [smem:[#allocation0]]
  $region49: #{elannet_tiny_forward.39} parent=0
    _
  %s7 = ssub.s32 1, %s5
  %s8 = scalar_select 0, %s7, %s5
  loop: start=0, step=1, limit=4
  $region2: #{elannet_tiny_forward.39} parent=0 // loop_pre_header
    _
  $region3: #{elannet_tiny_forward.39} parent=0 // loop_header
    %s10 = sphi 0, %s14
    %p11 = scmp.ge.s32.totalorder %s10, 4
    %s20 = sphi 0, %s22
    %s23 = sphi 0, %s20
    %s24 = sphi 0, %s23
    %s40 = sphi 0, %s24
    %s44 = sphi 0, %s44
    %s46 = sphi 0, %s44
    %s47 = sphi 0, %s46
    %s61 = sphi 0, %s47
    %s65 = sphi 0, %s65
    %s67 = sphi 0, %s65
    %s68 = sphi 0, %s67
    %s82 = sphi 0, %s68
    %s86 = sphi 0, %s86
    %s88 = sphi 0, %s86
    %s89 = sphi 0, %s88
    %s103 = sphi 0, %s89
    %s109 = sphi 0, %s111
    %s112 = sphi 0, %s109
    %s113 = sphi 0, %s112
    %s129 = sphi 0, %s113
  $region4: #{elannet_tiny_forward.39} parent=0 // loop_header_branch
    %13 = sbr.rel (%p11) target = $region8
  $region5: #{elannet_tiny_forward.39} parent=0 // loop_body
    %s15 = ssub.s32 %s10, 1
    %s16 = ssub.s32 %s10, 2
    %s17 = sadd.s32 %s10, 1
    %s18 = ssub.s32 %s10, %s17
    %p19 = scmp.eq.s32.totalorder %s18, 0
    %s21 = sadd.s32 %s20, 1
    %s22 = scalar_select %p19, %s20, %s21
    %p25 = pneg %p19
    %p26 = scmp.eq.s32.totalorder %s10, 1
    %p27 = por %p25, %p26
    %p28 = scmp.ne.s32.totalorder %s20, %s23
    %p29 = scmp.eq.s32.totalorder %s10, 0
    %p30 = por %p28, %p29
    %p31 = scmp.ne.s32.totalorder %s20, %s23
    %p32 = scmp.eq.s32.totalorder %s15, 1
    %p33 = por %p31, %p32
    %p34 = scmp.ne.s32.totalorder %s23, %s24
    %p35 = scmp.eq.s32.totalorder %s15, 0
    %p36 = por %p34, %p35
    %p37 = scmp.ne.s32.totalorder %s23, %s24
    %p38 = scmp.eq.s32.totalorder %s16, 1
    %p39 = por %p37, %p38
    %p41 = scmp.ne.s32.totalorder %s24, %s40
    %p42 = scmp.eq.s32.totalorder %s16, 0
    %p43 = por %p41, %p42
    %s45 = sadd.s32 %s44, 1
    %p48 = scmp.eq.s32.totalorder %s10, 1
    %p49 = scmp.ne.s32.totalorder %s44, %s46
    %p50 = scmp.eq.s32.totalorder %s10, 0
    %p51 = por %p49, %p50
    %p52 = scmp.ne.s32.totalorder %s44, %s46
    %p53 = scmp.eq.s32.totalorder %s15, 1
    %p54 = por %p52, %p53
    %p55 = scmp.ne.s32.totalorder %s46, %s47
    %p56 = scmp.eq.s32.totalorder %s15, 0
    %p57 = por %p55, %p56
    %p58 = scmp.ne.s32.totalorder %s46, %s47
    %p59 = scmp.eq.s32.totalorder %s16, 1
    %p60 = por %p58, %p59
    %p62 = scmp.ne.s32.totalorder %s47, %s61
    %p63 = scmp.eq.s32.totalorder %s16, 0
    %p64 = por %p62, %p63
    %s66 = sadd.s32 %s65, 1
    %p69 = scmp.eq.s32.totalorder %s10, 1
    %p70 = scmp.ne.s32.totalorder %s65, %s67
    %p71 = scmp.eq.s32.totalorder %s10, 0
    %p72 = por %p70, %p71
    %p73 = scmp.ne.s32.totalorder %s65, %s67
    %p74 = scmp.eq.s32.totalorder %s15, 1
    %p75 = por %p73, %p74
    %p76 = scmp.ne.s32.totalorder %s67, %s68
    %p77 = scmp.eq.s32.totalorder %s15, 0
    %p78 = por %p76, %p77
    %p79 = scmp.ne.s32.totalorder %s67, %s68
    %p80 = scmp.eq.s32.totalorder %s16, 1
    %p81 = por %p79, %p80
    %p83 = scmp.ne.s32.totalorder %s68, %s82
    %p84 = scmp.eq.s32.totalorder %s16, 0
    %p85 = por %p83, %p84
    %s87 = sadd.s32 %s86, 1
    %p90 = scmp.eq.s32.totalorder %s10, 1
    %p91 = scmp.ne.s32.totalorder %s86, %s88
    %p92 = scmp.eq.s32.totalorder %s10, 0
    %p93 = por %p91, %p92
    %p94 = scmp.ne.s32.totalorder %s86, %s88
    %p95 = scmp.eq.s32.totalorder %s15, 1
    %p96 = por %p94, %p95
    %p97 = scmp.ne.s32.totalorder %s88, %s89
    %p98 = scmp.eq.s32.totalorder %s15, 0
    %p99 = por %p97, %p98
    %p100 = scmp.ne.s32.totalorder %s88, %s89
    %p101 = scmp.eq.s32.totalorder %s16, 1
    %p102 = por %p100, %p101
    %p104 = scmp.ne.s32.totalorder %s89, %s103
    %p105 = scmp.eq.s32.totalorder %s16, 0
    %p106 = por %p104, %p105
    %s107 = ssub.s32 %s10, %s17
    %p108 = scmp.eq.s32.totalorder %s107, 0
    %s110 = sadd.s32 %s109, 1
    %s111 = scalar_select %p108, %s109, %s110
    %p114 = pneg %p108
    %p115 = scmp.eq.s32.totalorder %s10, 1
    %p116 = por %p114, %p115
    %p117 = scmp.ne.s32.totalorder %s109, %s112
    %p118 = scmp.eq.s32.totalorder %s10, 0
    %p119 = por %p117, %p118
    %p120 = scmp.ne.s32.totalorder %s109, %s112
    %p121 = scmp.eq.s32.totalorder %s15, 1
    %p122 = por %p120, %p121
    %p123 = scmp.ne.s32.totalorder %s112, %s113
    %p124 = scmp.eq.s32.totalorder %s15, 0
    %p125 = por %p123, %p124
    %p126 = scmp.ne.s32.totalorder %s112, %s113
    %p127 = scmp.eq.s32.totalorder %s16, 1
    %p128 = por %p126, %p127
    %p130 = scmp.ne.s32.totalorder %s113, %s129
    %p131 = scmp.eq.s32.totalorder %s16, 0
    %p132 = por %p130, %p131
    %p133 = scmp.le.s32.totalorder 1, %s10
    %p134 = scmp.lt.s32.totalorder %s10, 3
    %p135 = pnand %p133, %p134
    %p136 = pneg %p135
    // Predicated region
    $region9: #{elannet_tiny_forward.39} parent=5 // pred_check
      _
    $region10: #{elannet_tiny_forward.39} parent=5 // pred_check_branch
      %138 = sbr.rel (%p135) target = $region12
    $region11: #{elannet_tiny_forward.39} parent=5 // pred_region
      %s139 = ssub.s32 %s10, 1
      // Predicated region
      $region13: #{elannet_tiny_forward.39} parent=11 // pred_check
        %p140 = pneg %p57
      $region14: #{elannet_tiny_forward.39} parent=11 // pred_check_branch
        %142 = sbr.rel (%p140) target = $region16
      $region15: #{elannet_tiny_forward.39} parent=11 // pred_region
        _
      $region16: #{elannet_tiny_forward.39} parent=11 // pred_fallthru
        _
      // Predicated region
      $region17: #{elannet_tiny_forward.39} parent=11 // pred_check
        %p143 = pneg %p78
      $region18: #{elannet_tiny_forward.39} parent=11 // pred_check_branch
        %145 = sbr.rel (%p143) target = $region20
      $region19: #{elannet_tiny_forward.39} parent=11 // pred_region
        _
      $region20: #{elannet_tiny_forward.39} parent=11 // pred_fallthru
        _
      // Predicated region
      $region21: #{elannet_tiny_forward.39} parent=11 // pred_check
        %p146 = pneg %p99
      $region22: #{elannet_tiny_forward.39} parent=11 // pred_check_branch
        %148 = sbr.rel (%p146) target = $region24
      $region23: #{elannet_tiny_forward.39} parent=11 // pred_region
        _
      $region24: #{elannet_tiny_forward.39} parent=11 // pred_fallthru
        _
    $region12: #{elannet_tiny_forward.39} parent=5 // pred_fallthru
      _
    %p149 = scmp.lt.s32.totalorder %s10, 2
    // Predicated region
    $region25: #{elannet_tiny_forward.39} parent=5 // pred_check
      %p150 = pneg %p149
    $region26: #{elannet_tiny_forward.39} parent=5 // pred_check_branch
      %152 = sbr.rel (%p150) target = $region28
    $region27: #{elannet_tiny_forward.39} parent=5 // pred_region
      // Predicated region
      $region29: #{elannet_tiny_forward.39} parent=27 // pred_check
        %p153 = pneg %p30
      $region30: #{elannet_tiny_forward.39} parent=27 // pred_check_branch
        %155 = sbr.rel (%p153) target = $region32
      $region31: #{elannet_tiny_forward.39} parent=27 // pred_region
        %p156 = scmp.lt.s32.totalorder %s10, 1
        %s157 = scalar_select %p156, %s10, 1
        %s158 = smul.addr %s157, 2
        %s159 = smul.addr %s158, 4
        %s160 = scalar_lea.vmem %s0, %s159
      $region32: #{elannet_tiny_forward.39} parent=27 // pred_fallthru
        _
    $region28: #{elannet_tiny_forward.39} parent=5 // pred_fallthru
      _
    %p161 = scmp.le.s32.totalorder 1, %s10
    %p162 = scmp.lt.s32.totalorder %s10, 3
    %p163 = pnand %p161, %p162
    %p164 = pneg %p163
    // Predicated region
    $region33: #{elannet_tiny_forward.39} parent=5 // pred_check
      _
    $region34: #{elannet_tiny_forward.39} parent=5 // pred_check_branch
      %166 = sbr.rel (%p163) target = $region36
    $region35: #{elannet_tiny_forward.39} parent=5 // pred_region
      %s167 = ssub.s32 %s10, 1
      %p168 = scmp.lt.s32.totalorder %s15, 1
      %s169 = scalar_select %p168, %s15, 1
      %s170 = smul.addr %s169, 2
      %s171 = smul.addr %s170, 4
      %s172 = scalar_lea.vmem %s0, %s171
      %p173 = pneg %p36
      %p174 = pneg %p33
      %p175 = pneg %p57
      %p176 = pneg %p54
      %p177 = pneg %p78
      %p178 = pneg %p75
      %p179 = pneg %p99
      %p180 = pneg %p96
      %p181 = pneg %p125
      %p182 = pneg %p122
      %p183 = scmp.lt.s32.totalorder %s15, 1
      %s184 = scalar_select %p183, %s15, 1
      %s185 = smul.addr %s184, 2
      %s186 = scalar_lea.vmem %s4, %s185
      %p187 = scmp.lt.s32.totalorder %s15, 1
      %s188 = scalar_select %p187, %s15, 1
      %s189 = smul.addr %s188, 2
      %s190 = smul.addr %s189, 4
      %s191 = scalar_lea.vmem %s0, %s190
      %p192 = scmp.lt.s32.totalorder %s15, 1
      %s193 = scalar_select %p192, %s15, 1
      %s194 = smul.addr %s193, 2
      %s195 = scalar_lea.vmem %s4, %s194
      %v197 = vld [vmem:[%s191] sm:$0x3]
      %v198 = vld [vmem:[%s191] sm:$0x6]
      %v199 = vld [vmem:[%s191] sm:$0xc]
      %v200 = vld [vmem:[%s191] sm:$0x8]
      %v201 = vld [vmem:[%s191 + $0x4] sm:$0x1]
      %v202 = vld [vmem:[%s191 + $0x4] sm:$0x3]
      %v204 = vunpack.c.l.b16 %v197
      %v205 = vpack.c.b16 %v204, %v204
      %v207 = vshrl.u32 %v205, 16
      %v209 = vshll.u32 %v205, 16
      %v211 = vrot.slane %v209, 1
      %v212 = vor.u32 %v207, %v211
      %v215 = vunpack.c.l.b16 %v198
      %v216 = vpack.c.b16 %v215, %v215
      %v217 = vrot.slane %v216, 1
      %v220 = vshrl.u32 %v216, 16
      %v222 = vrot.slane %v220, 1
      %v223 = vshll.u32 %v216, 16
      %v225 = vrot.slane %v223, 2
      %v226 = vor.u32 %v222, %v225
      %v229 = vunpack.c.l.b16 %v199
      %v230 = vpack.c.b16 %v229, %v229
      %v231 = vrot.slane %v230, 2
      %v234 = vshrl.u32 %v230, 16
      %v236 = vrot.slane %v234, 2
      %v237 = vshll.u32 %v230, 16
      %v239 = vrot.slane %v237, 3
      %v240 = vor.u32 %v236, %v239
      %v244 = vunpack.c.l.b16 %v200
      %v245 = vunpack.c.l.b16 %v201
      %v246 = vpack.c.b16 %v245, %v244
      %v247 = vrot.slane %v246, 3
      %v250 = vshrl.u32 %v246, 16
      %v252 = vrot.slane %v250, 3
      %v253 = vshll.u32 %v246, 16
      %v255 = vrot.slane %v253, 4
      %v256 = vor.u32 %v252, %v255
      %v258 = vld [vmem:[%s1] sm:$0xf]
      %v259 = vld [vmem:[%s1 + $0x4] sm:$0xf]
      %v260 = vld [vmem:[%s1 + $0x8] sm:$0xf]
      %v261 = vld [vmem:[%s1 + $0xc] sm:$0xf]
      %v262 = vld [vmem:[%s1 + $0x10] sm:$0xf]
      %v263 = vld [vmem:[%s1 + $0x14] sm:$0xf]
      %v264 = vld [vmem:[%s1 + $0x18] sm:$0xf]
      %v265 = vld [vmem:[%s1 + $0x1c] sm:$0xf]
      %v266 = vld [vmem:[%s1 + $0x20] sm:$0xf]
      %v267 = vld [vmem:[%s1 + $0x24] sm:$0xf]
      %v268 = vld [vmem:[%s1 + $0x28] sm:$0xf]
      %v269 = vld [vmem:[%s1 + $0x2c] sm:$0xf]
      %v270 = vld [vmem:[%s1 + $0x30] sm:$0xf]
      %v271 = vld [vmem:[%s1 + $0x34] sm:$0xf]
      %v272 = vld [vmem:[%s1 + $0x38] sm:$0xf]
      %v273 = vld [vmem:[%s1 + $0x3c] sm:$0xf]
      %v274 = vld [vmem:[%s1 + $0x40] sm:$0xf]
      %v275 = vld [vmem:[%s1 + $0x44] sm:$0xf]
      %v276 = vld [vmem:[%s1 + $0x48] sm:$0xf]
      %v277 = vld [vmem:[%s1 + $0x4c] sm:$0xf]
      %v278 = vld [vmem:[%s1 + $0x50] sm:$0xf]
      %v279 = vld [vmem:[%s1 + $0x54] sm:$0xf]
      %v280 = vld [vmem:[%s1 + $0x58] sm:$0xf]
      %v281 = vld [vmem:[%s1 + $0x5c] sm:$0xf]
      %v282 = vld [vmem:[%s1 + $0x60] sm:$0xf]
      %v283 = vld [vmem:[%s1 + $0x64] sm:$0xf]
      %v284 = vld [vmem:[%s1 + $0x68] sm:$0xf]
      %v285 = vld [vmem:[%s1 + $0x6c] sm:$0xf]
      %v286 = vld [vmem:[%s1 + $0x70] sm:$0xf]
      %v287 = vld [vmem:[%s1 + $0x74] sm:$0xf]
      %v288 = vld [vmem:[%s1 + $0x78] sm:$0xf]
      %v289 = vld [vmem:[%s1 + $0x7c] sm:$0xf]
      %v290 = vld [vmem:[%s1 + $0x80] sm:$0xf]
      %v291 = vld [vmem:[%s1 + $0x84] sm:$0xf]
      %v292 = vld [vmem:[%s1 + $0x88] sm:$0xf]
      %v293 = vld [vmem:[%s1 + $0x8c] sm:$0xf]
      %v294 = vld [vmem:[%s1 + $0x90] sm:$0xf]
      %v295 = vld [vmem:[%s1 + $0x94] sm:$0xf]
      %v296 = vld [vmem:[%s1 + $0x98] sm:$0xf]
      %v297 = vld [vmem:[%s1 + $0x9c] sm:$0xf]
      %v298 = vld [vmem:[%s1 + $0xa0] sm:$0xf]
      %v299 = vld [vmem:[%s1 + $0xa4] sm:$0xf]
      %v300 = vld [vmem:[%s1 + $0xa8] sm:$0xf]
      %v301 = vld [vmem:[%s1 + $0xac] sm:$0xf]
      %v302 = vld [vmem:[%s1 + $0xb0] sm:$0xf]
      %v303 = vld [vmem:[%s1 + $0xb4] sm:$0xf]
      %v304 = vld [vmem:[%s1 + $0xb8] sm:$0xf]
      %v305 = vld [vmem:[%s1 + $0xbc] sm:$0xf]
      %v306 = vld [vmem:[%s1 + $0xc0] sm:$0xf]
      %v307 = vld [vmem:[%s1 + $0xc4] sm:$0xf]
      %v308 = vld [vmem:[%s1 + $0xc8] sm:$0xf]
      %v309 = vld [vmem:[%s1 + $0xcc] sm:$0xf]
      %v310 = vld [vmem:[%s1 + $0xd0] sm:$0xf]
      %v311 = vld [vmem:[%s1 + $0xd4] sm:$0xf]
      %v312 = vld [vmem:[%s1 + $0xd8] sm:$0xf]
      %v313 = vld [vmem:[%s1 + $0xdc] sm:$0xf]
      %v314 = vld [vmem:[%s1 + $0xe0] sm:$0xf]
      %v315 = vld [vmem:[%s1 + $0xe4] sm:$0xf]
      %v316 = vld [vmem:[%s1 + $0xe8] sm:$0xf]
      %v317 = vld [vmem:[%s1 + $0xec] sm:$0xf]
      %v318 = vld [vmem:[%s1 + $0xf0] sm:$0xf]
      %v319 = vld [vmem:[%s1 + $0xf4] sm:$0xf]
      %v320 = vld [vmem:[%s1 + $0xf8] sm:$0xf]
      %v321 = vld [vmem:[%s1 + $0xfc] sm:$0xf]
      %v322 = vld [vmem:[%s1 + $0x100] sm:$0xf]
      %v323 = vld [vmem:[%s1 + $0x104] sm:$0xf]
      %v324 = vld [vmem:[%s1 + $0x108] sm:$0xf]
      %v325 = vld [vmem:[%s1 + $0x10c] sm:$0xf]
      %v326 = vld [vmem:[%s1 + $0x110] sm:$0xf]
      %v327 = vld [vmem:[%s1 + $0x114] sm:$0xf]
      %v328 = vld [vmem:[%s1 + $0x118] sm:$0xf]
      %v329 = vld [vmem:[%s1 + $0x11c] sm:$0xf]
      %v330 = vld [vmem:[%s1 + $0x120] sm:$0xf]
      %v331 = vld [vmem:[%s1 + $0x124] sm:$0xf]
      %v332 = vld [vmem:[%s1 + $0x128] sm:$0xf]
      %v333 = vld [vmem:[%s1 + $0x12c] sm:$0xf]
      %v334 = vld [vmem:[%s1 + $0x130] sm:$0xf]
      %v335 = vld [vmem:[%s1 + $0x134] sm:$0xf]
      %v336 = vld [vmem:[%s1 + $0x138] sm:$0xf]
      %v337 = vld [vmem:[%s1 + $0x13c] sm:$0xf]
      %v338 = vld [vmem:[%s1 + $0x140] sm:$0xf]
      %v339 = vld [vmem:[%s1 + $0x144] sm:$0xf]
      %v340 = vld [vmem:[%s1 + $0x148] sm:$0xf]
      %v341 = vld [vmem:[%s1 + $0x14c] sm:$0xf]
      %v342 = vld [vmem:[%s1 + $0x150] sm:$0xf]
      %v343 = vld [vmem:[%s1 + $0x154] sm:$0xf]
      %v344 = vld [vmem:[%s1 + $0x158] sm:$0xf]
      %v345 = vld [vmem:[%s1 + $0x15c] sm:$0xf]
      %v346 = vld [vmem:[%s1 + $0x160] sm:$0xf]
      %v347 = vld [vmem:[%s1 + $0x164] sm:$0xf]
      %v348 = vld [vmem:[%s1 + $0x168] sm:$0xf]
      %v349 = vld [vmem:[%s1 + $0x16c] sm:$0xf]
      %v350 = vld [vmem:[%s1 + $0x170] sm:$0xf]
      %v351 = vld [vmem:[%s1 + $0x174] sm:$0xf]
      %v352 = vld [vmem:[%s1 + $0x178] sm:$0xf]
      %v353 = vld [vmem:[%s1 + $0x17c] sm:$0xf]
      %v354 = vld [vmem:[%s1 + $0x180] sm:$0xf]
      %v355 = vld [vmem:[%s1 + $0x184] sm:$0xf]
      %v356 = vld [vmem:[%s1 + $0x188] sm:$0xf]
      %v357 = vld [vmem:[%s1 + $0x18c] sm:$0xf]
      %v358 = vld [vmem:[%s1 + $0x190] sm:$0xf]
      %v359 = vld [vmem:[%s1 + $0x194] sm:$0xf]
      %v360 = vld [vmem:[%s1 + $0x198] sm:$0xf]
      %v361 = vld [vmem:[%s1 + $0x19c] sm:$0xf]
      %v362 = vld [vmem:[%s1 + $0x1a0] sm:$0xf]
      %v363 = vld [vmem:[%s1 + $0x1a4] sm:$0xf]
      %v364 = vld [vmem:[%s1 + $0x1a8] sm:$0xf]
      %v365 = vld [vmem:[%s1 + $0x1ac] sm:$0xf]
      %v366 = vld [vmem:[%s1 + $0x1b0] sm:$0xf]
      %v367 = vld [vmem:[%s1 + $0x1b4] sm:$0xf]
      %v368 = vld [vmem:[%s1 + $0x1b8] sm:$0xf]
      %v369 = vld [vmem:[%s1 + $0x1bc] sm:$0xf]
      %v370 = vld [vmem:[%s1 + $0x1c0] sm:$0xf]
      %v371 = vld [vmem:[%s1 + $0x1c4] sm:$0xf]
      %v372 = vld [vmem:[%s1 + $0x1c8] sm:$0xf]
      %v373 = vld [vmem:[%s1 + $0x1cc] sm:$0xf]
      %v374 = vld [vmem:[%s1 + $0x1d0] sm:$0xf]
      %v375 = vld [vmem:[%s1 + $0x1d4] sm:$0xf]
      %v376 = vld [vmem:[%s1 + $0x1d8] sm:$0xf]
      %v377 = vld [vmem:[%s1 + $0x1dc] sm:$0xf]
      %v378 = vld [vmem:[%s1 + $0x1e0] sm:$0xf]
      %v379 = vld [vmem:[%s1 + $0x1e4] sm:$0xf]
      %v380 = vld [vmem:[%s1 + $0x1e8] sm:$0xf]
      %v381 = vld [vmem:[%s1 + $0x1ec] sm:$0xf]
      %v382 = vld [vmem:[%s1 + $0x1f0] sm:$0xf]
      %v383 = vld [vmem:[%s1 + $0x1f4] sm:$0xf]
      %v384 = vld [vmem:[%s1 + $0x1f8] sm:$0xf]
      %v385 = vld [vmem:[%s1 + $0x1fc] sm:$0xf]
      %v386 = vld [vmem:[%s1 + $0x200] sm:$0xf]
      %v387 = vld [vmem:[%s1 + $0x204] sm:$0xf]
      %v388 = vld [vmem:[%s1 + $0x208] sm:$0xf]
      %v389 = vld [vmem:[%s1 + $0x20c] sm:$0xf]
      %v390 = vld [vmem:[%s1 + $0x210] sm:$0xf]
      %v391 = vld [vmem:[%s1 + $0x214] sm:$0xf]
      %v392 = vld [vmem:[%s1 + $0x218] sm:$0xf]
      %v393 = vld [vmem:[%s1 + $0x21c] sm:$0xf]
      %v394 = vld [vmem:[%s1 + $0x220] sm:$0xf]
      %v395 = vld [vmem:[%s1 + $0x224] sm:$0xf]
      %v396 = vld [vmem:[%s1 + $0x228] sm:$0xf]
      %v397 = vld [vmem:[%s1 + $0x22c] sm:$0xf]
      %v398 = vld [vmem:[%s1 + $0x230] sm:$0xf]
      %v399 = vld [vmem:[%s1 + $0x234] sm:$0xf]
      %v400 = vld [vmem:[%s1 + $0x238] sm:$0xf]
      %v401 = vld [vmem:[%s1 + $0x23c] sm:$0xf]
      %v546 = vunpack.c.l.b16 %v258
      %v547 = vunpack.c.l.b16 %v259
      %v548 = vunpack.c.l.b16 %v260
      %v549 = vunpack.c.l.b16 %v261
      %v550 = vunpack.c.l.b16 %v262
      %v551 = vunpack.c.l.b16 %v263
      %v552 = vunpack.c.l.b16 %v264
      %v553 = vunpack.c.l.b16 %v265
      %v554 = vunpack.c.l.b16 %v266
      %v555 = vunpack.c.l.b16 %v267
      %v556 = vunpack.c.l.b16 %v268
      %v557 = vunpack.c.l.b16 %v269
      %v558 = vunpack.c.l.b16 %v270
      %v559 = vunpack.c.l.b16 %v271
      %v560 = vunpack.c.l.b16 %v272
      %v561 = vunpack.c.l.b16 %v273
      %v562 = vunpack.c.l.b16 %v274
      %v563 = vunpack.c.l.b16 %v275
      %v564 = vunpack.c.l.b16 %v276
      %v565 = vunpack.c.l.b16 %v277
      %v566 = vunpack.c.l.b16 %v278
      %v567 = vunpack.c.l.b16 %v279
      %v568 = vunpack.c.l.b16 %v280
      %v569 = vunpack.c.l.b16 %v281
      %v570 = vunpack.c.l.b16 %v282
      %v571 = vunpack.c.l.b16 %v283
      %v572 = vunpack.c.l.b16 %v284
      %v573 = vunpack.c.l.b16 %v285
      %v574 = vunpack.c.l.b16 %v286
      %v575 = vunpack.c.l.b16 %v287
      %v576 = vunpack.c.l.b16 %v288
      %v577 = vunpack.c.l.b16 %v289
      %v578 = vunpack.c.l.b16 %v290
      %v579 = vunpack.c.l.b16 %v291
      %v580 = vunpack.c.l.b16 %v292
      %v581 = vunpack.c.l.b16 %v293
      %v582 = vunpack.c.l.b16 %v294
      %v583 = vunpack.c.l.b16 %v295
      %v584 = vunpack.c.l.b16 %v296
      %v585 = vunpack.c.l.b16 %v297
      %v586 = vunpack.c.l.b16 %v298
      %v587 = vunpack.c.l.b16 %v299
      %v588 = vunpack.c.l.b16 %v300
      %v589 = vunpack.c.l.b16 %v301
      %v590 = vunpack.c.l.b16 %v302
      %v591 = vunpack.c.l.b16 %v303
      %v592 = vunpack.c.l.b16 %v304
      %v593 = vunpack.c.l.b16 %v305
      %v594 = vunpack.c.l.b16 %v306
      %v595 = vunpack.c.l.b16 %v307
      %v596 = vunpack.c.l.b16 %v308
      %v597 = vunpack.c.l.b16 %v309
      %v598 = vunpack.c.l.b16 %v310
      %v599 = vunpack.c.l.b16 %v311
      %v600 = vunpack.c.l.b16 %v312
      %v601 = vunpack.c.l.b16 %v313
      %v602 = vunpack.c.l.b16 %v314
      %v603 = vunpack.c.l.b16 %v315
      %v604 = vunpack.c.l.b16 %v316
      %v605 = vunpack.c.l.b16 %v317
      %v606 = vunpack.c.l.b16 %v318
      %v607 = vunpack.c.l.b16 %v319
      %v608 = vunpack.c.l.b16 %v320
      %v609 = vunpack.c.l.b16 %v321
      %v610 = vunpack.c.l.b16 %v322
      %v611 = vunpack.c.l.b16 %v323
      %v612 = vunpack.c.l.b16 %v324
      %v613 = vunpack.c.l.b16 %v325
      %v614 = vunpack.c.l.b16 %v326
      %v615 = vunpack.c.l.b16 %v327
      %v616 = vunpack.c.l.b16 %v328
      %v617 = vunpack.c.l.b16 %v329
      %v618 = vunpack.c.l.b16 %v330
      %v619 = vunpack.c.l.b16 %v331
      %v620 = vunpack.c.l.b16 %v332
      %v621 = vunpack.c.l.b16 %v333
      %v622 = vunpack.c.l.b16 %v334
      %v623 = vunpack.c.l.b16 %v335
      %v624 = vunpack.c.l.b16 %v336
      %v625 = vunpack.c.l.b16 %v337
      %v626 = vunpack.c.l.b16 %v338
      %v627 = vunpack.c.l.b16 %v339
      %v628 = vunpack.c.l.b16 %v340
      %v629 = vunpack.c.l.b16 %v341
      %v630 = vunpack.c.l.b16 %v342
      %v631 = vunpack.c.l.b16 %v343
      %v632 = vunpack.c.l.b16 %v344
      %v633 = vunpack.c.l.b16 %v345
      %v634 = vunpack.c.l.b16 %v346
      %v635 = vunpack.c.l.b16 %v347
      %v636 = vunpack.c.l.b16 %v348
      %v637 = vunpack.c.l.b16 %v349
      %v638 = vunpack.c.l.b16 %v350
      %v639 = vunpack.c.l.b16 %v351
      %v640 = vunpack.c.l.b16 %v352
      %v641 = vunpack.c.l.b16 %v353
      %v642 = vunpack.c.l.b16 %v354
      %v643 = vunpack.c.l.b16 %v355
      %v644 = vunpack.c.l.b16 %v356
      %v645 = vunpack.c.l.b16 %v357
      %v646 = vunpack.c.l.b16 %v358
      %v647 = vunpack.c.l.b16 %v359
      %v648 = vunpack.c.l.b16 %v360
      %v649 = vunpack.c.l.b16 %v361
      %v650 = vunpack.c.l.b16 %v362
      %v651 = vunpack.c.l.b16 %v363
      %v652 = vunpack.c.l.b16 %v364
      %v653 = vunpack.c.l.b16 %v365
      %v654 = vunpack.c.l.b16 %v366
      %v655 = vunpack.c.l.b16 %v367
      %v656 = vunpack.c.l.b16 %v368
      %v657 = vunpack.c.l.b16 %v369
      %v658 = vunpack.c.l.b16 %v370
      %v659 = vunpack.c.l.b16 %v371
      %v660 = vunpack.c.l.b16 %v372
      %v661 = vunpack.c.l.b16 %v373
      %v662 = vunpack.c.l.b16 %v374
      %v663 = vunpack.c.l.b16 %v375
      %v664 = vunpack.c.l.b16 %v376
      %v665 = vunpack.c.l.b16 %v377
      %v666 = vunpack.c.l.b16 %v378
      %v667 = vunpack.c.l.b16 %v379
      %v668 = vunpack.c.l.b16 %v380
      %v669 = vunpack.c.l.b16 %v381
      %v670 = vunpack.c.l.b16 %v382
      %v671 = vunpack.c.l.b16 %v383
      %v672 = vunpack.c.l.b16 %v384
      %v673 = vunpack.c.l.b16 %v385
      %v674 = vunpack.c.l.b16 %v386
      %v675 = vunpack.c.l.b16 %v387
      %v676 = vunpack.c.l.b16 %v388
      %v677 = vunpack.c.l.b16 %v389
      %v678 = vunpack.c.l.b16 %v390
      %v679 = vunpack.c.l.b16 %v391
      %v680 = vunpack.c.l.b16 %v392
      %v681 = vunpack.c.l.b16 %v393
      %v682 = vunpack.c.l.b16 %v394
      %v683 = vunpack.c.l.b16 %v395
      %v684 = vunpack.c.l.b16 %v396
      %v685 = vunpack.c.l.b16 %v397
      %v686 = vunpack.c.l.b16 %v398
      %v687 = vunpack.c.l.b16 %v399
      %v688 = vunpack.c.l.b16 %v400
      %v689 = vunpack.c.l.b16 %v401
      %v690 = vpack.c.b16 %v547, %v546
      %v691 = vpack.c.b16 %v549, %v548
      %v692 = vpack.c.b16 %v551, %v550
      %v693 = vpack.c.b16 %v553, %v552
      %v694 = vpack.c.b16 %v555, %v554
      %v695 = vpack.c.b16 %v557, %v556
      %v696 = vpack.c.b16 %v559, %v558
      %v697 = vpack.c.b16 %v561, %v560
      %v698 = vpack.c.b16 %v563, %v562
      %v699 = vpack.c.b16 %v565, %v564
      %v700 = vpack.c.b16 %v567, %v566
      %v701 = vpack.c.b16 %v569, %v568
      %v702 = vpack.c.b16 %v571, %v570
      %v703 = vpack.c.b16 %v573, %v572
      %v704 = vpack.c.b16 %v575, %v574
      %v705 = vpack.c.b16 %v577, %v576
      %v706 = vpack.c.b16 %v579, %v578
      %v707 = vpack.c.b16 %v581, %v580
      %v708 = vpack.c.b16 %v583, %v582
      %v709 = vpack.c.b16 %v585, %v584
      %v710 = vpack.c.b16 %v587, %v586
      %v711 = vpack.c.b16 %v589, %v588
      %v712 = vpack.c.b16 %v591, %v590
      %v713 = vpack.c.b16 %v593, %v592
      %v714 = vpack.c.b16 %v595, %v594
      %v715 = vpack.c.b16 %v597, %v596
      %v716 = vpack.c.b16 %v599, %v598
      %v717 = vpack.c.b16 %v601, %v600
      %v718 = vpack.c.b16 %v603, %v602
      %v719 = vpack.c.b16 %v605, %v604
      %v720 = vpack.c.b16 %v607, %v606
      %v721 = vpack.c.b16 %v609, %v608
      %v722 = vpack.c.b16 %v611, %v610
      %v723 = vpack.c.b16 %v613, %v612
      %v724 = vpack.c.b16 %v615, %v614
      %v725 = vpack.c.b16 %v617, %v616
      %v726 = vpack.c.b16 %v619, %v618
      %v727 = vpack.c.b16 %v621, %v620
      %v728 = vpack.c.b16 %v623, %v622
      %v729 = vpack.c.b16 %v625, %v624
      %v730 = vpack.c.b16 %v627, %v626
      %v731 = vpack.c.b16 %v629, %v628
      %v732 = vpack.c.b16 %v631, %v630
      %v733 = vpack.c.b16 %v633, %v632
      %v734 = vpack.c.b16 %v635, %v634
      %v735 = vpack.c.b16 %v637, %v636
      %v736 = vpack.c.b16 %v639, %v638
      %v737 = vpack.c.b16 %v641, %v640
      %v738 = vpack.c.b16 %v643, %v642
      %v739 = vpack.c.b16 %v645, %v644
      %v740 = vpack.c.b16 %v647, %v646
      %v741 = vpack.c.b16 %v649, %v648
      %v742 = vpack.c.b16 %v651, %v650
      %v743 = vpack.c.b16 %v653, %v652
      %v744 = vpack.c.b16 %v655, %v654
      %v745 = vpack.c.b16 %v657, %v656
      %v746 = vpack.c.b16 %v659, %v658
      %v747 = vpack.c.b16 %v661, %v660
      %v748 = vpack.c.b16 %v663, %v662
      %v749 = vpack.c.b16 %v665, %v664
      %v750 = vpack.c.b16 %v667, %v666
      %v751 = vpack.c.b16 %v669, %v668
      %v752 = vpack.c.b16 %v671, %v670
      %v753 = vpack.c.b16 %v673, %v672
      %v754 = vpack.c.b16 %v675, %v674
      %v755 = vpack.c.b16 %v677, %v676
      %v756 = vpack.c.b16 %v679, %v678
      %v757 = vpack.c.b16 %v681, %v680
      %v758 = vpack.c.b16 %v683, %v682
      %v759 = vpack.c.b16 %v685, %v684
      %v760 = vpack.c.b16 %v687, %v686
      %v761 = vpack.c.b16 %v689, %v688
      %834 = vmatprep.subr.bf16.mxu0 0
      %835 = vmatpush1.bf16.msra.mxu0 %v690
      %836 = vmatprep.subr.bf16.mxu0 0
      %837 = vmatpush1.bf16.msra.mxu0 %v691
      %838 = vmatprep.subr.bf16.mxu0 0
      %839 = vmatpush1.bf16.msra.mxu0 %v692
      %840 = vmatprep.subr.bf16.mxu0 0
      %841 = vmatpush1.bf16.msra.mxu0 %v693
      %842 = vmatprep.subr.bf16.mxu0 0
      %843 = vmatpush1.bf16.msra.mxu0 %v694
      %844 = vmatprep.subr.bf16.mxu0 0
      %845 = vmatpush1.bf16.msra.mxu0 %v695
      %846 = vmatprep.subr.bf16.mxu0 0
      %847 = vmatpush1.bf16.msra.mxu0 %v696
      %848 = vmatprep.subr.bf16.mxu0 0
      %849 = vmatpush1.bf16.msra.mxu0 %v697
      %850 = vmatprep.subr.bf16.mxu0 0
      %851 = vmatpush1.bf16.msra.mxu0 %v698
      %852 = vmatprep.subr.bf16.mxu0 0
      %853 = vmatpush1.bf16.msra.mxu0 %v699
      %854 = vmatprep.subr.bf16.mxu0 0
      %855 = vmatpush1.bf16.msra.mxu0 %v700
      %856 = vmatprep.subr.bf16.mxu0 0
      %857 = vmatpush1.bf16.msra.mxu0 %v701
      %858 = vmatprep.subr.bf16.mxu0 0
      %859 = vmatpush1.bf16.msra.mxu0 %v702
      %860 = vmatprep.subr.bf16.mxu0 0
      %861 = vmatpush1.bf16.msra.mxu0 %v703
      %862 = vmatprep.subr.bf16.mxu0 0
      %863 = vmatpush1.bf16.msra.mxu0 %v704
      %864 = vmatprep.subr.bf16.mxu0 0
      %865 = vmatpush1.bf16.msra.mxu0 %v705
      %866 = vmatprep.mubr.bf16.mxu0 %v212
      %867 = vmatmul.mubr.bf16.gmra.mrb[0].mxu0 %v197
      %v868 = vpop.f32.mrb[0].mxu0
      %v869 = vadd.f32 0.0, %v868
      %v870 = vpop.f32.mrb[0].mxu0
      %v871 = vpop.f32.mrb[0].mxu0
      %v872 = vpop.f32.mrb[0].mxu0
      %873 = vdwg.mxu0
      %874 = vmatprep.subr.bf16.mxu0 0
      %875 = vmatpush1.bf16.msra.mxu0 %v706
      %876 = vmatprep.subr.bf16.mxu0 0
      %877 = vmatpush1.bf16.msra.mxu0 %v707
      %878 = vmatprep.subr.bf16.mxu0 0
      %879 = vmatpush1.bf16.msra.mxu0 %v708
      %880 = vmatprep.subr.bf16.mxu0 0
      %881 = vmatpush1.bf16.msra.mxu0 %v709
      %882 = vmatprep.subr.bf16.mxu0 0
      %883 = vmatpush1.bf16.msra.mxu0 %v710
      %884 = vmatprep.subr.bf16.mxu0 0
      %885 = vmatpush1.bf16.msra.mxu0 %v711
      %886 = vmatprep.subr.bf16.mxu0 0
      %887 = vmatpush1.bf16.msra.mxu0 %v712
      %888 = vmatprep.subr.bf16.mxu0 0
      %889 = vmatpush1.bf16.msra.mxu0 %v713
      %890 = vmatprep.subr.bf16.mxu0 0
      %891 = vmatpush1.bf16.msra.mxu0 %v714
      %892 = vmatprep.subr.bf16.mxu0 0
      %893 = vmatpush1.bf16.msra.mxu0 %v715
      %894 = vmatprep.subr.bf16.mxu0 0
      %895 = vmatpush1.bf16.msra.mxu0 %v716
      %896 = vmatprep.subr.bf16.mxu0 0
      %897 = vmatpush1.bf16.msra.mxu0 %v717
      %898 = vmatprep.subr.bf16.mxu0 0
      %899 = vmatpush1.bf16.msra.mxu0 %v718
      %900 = vmatprep.subr.bf16.mxu0 0
      %901 = vmatpush1.bf16.msra.mxu0 %v719
      %902 = vmatprep.subr.bf16.mxu0 0
      %903 = vmatpush1.bf16.msra.mxu0 %v720
      %904 = vmatprep.subr.bf16.mxu0 0
      %905 = vmatpush1.bf16.msra.mxu0 %v721
      %906 = vmatprep.mubr.bf16.mxu0 %v226
      %907 = vmatmul.mubr.bf16.gmra.mrb[0].mxu0 %v217
      %v908 = vpop.f32.mrb[0].mxu0
      %v909 = vadd.f32 %v869, %v908
      %v910 = vpop.f32.mrb[0].mxu0
      %v911 = vpop.f32.mrb[0].mxu0
      %v912 = vpop.f32.mrb[0].mxu0
      %913 = vdwg.mxu0
      %914 = vmatprep.subr.bf16.mxu0 0
      %915 = vmatpush1.bf16.msra.mxu0 %v722
      %916 = vmatprep.subr.bf16.mxu0 0
      %917 = vmatpush1.bf16.msra.mxu0 %v723
      %918 = vmatprep.subr.bf16.mxu0 0
      %919 = vmatpush1.bf16.msra.mxu0 %v724
      %920 = vmatprep.subr.bf16.mxu0 0
      %921 = vmatpush1.bf16.msra.mxu0 %v725
      %922 = vmatprep.subr.bf16.mxu0 0
      %923 = vmatpush1.bf16.msra.mxu0 %v726
      %924 = vmatprep.subr.bf16.mxu0 0
      %925 = vmatpush1.bf16.msra.mxu0 %v727
      %926 = vmatprep.subr.bf16.mxu0 0
      %927 = vmatpush1.bf16.msra.mxu0 %v728
      %928 = vmatprep.subr.bf16.mxu0 0
      %929 = vmatpush1.bf16.msra.mxu0 %v729
      %930 = vmatprep.subr.bf16.mxu0 0
      %931 = vmatpush1.bf16.msra.mxu0 %v730
      %932 = vmatprep.subr.bf16.mxu0 0
      %933 = vmatpush1.bf16.msra.mxu0 %v731
      %934 = vmatprep.subr.bf16.mxu0 0
      %935 = vmatpush1.bf16.msra.mxu0 %v732
      %936 = vmatprep.subr.bf16.mxu0 0
      %937 = vmatpush1.bf16.msra.mxu0 %v733
      %938 = vmatprep.subr.bf16.mxu0 0
      %939 = vmatpush1.bf16.msra.mxu0 %v734
      %940 = vmatprep.subr.bf16.mxu0 0
      %941 = vmatpush1.bf16.msra.mxu0 %v735
      %942 = vmatprep.subr.bf16.mxu0 0
      %943 = vmatpush1.bf16.msra.mxu0 %v736
      %944 = vmatprep.subr.bf16.mxu0 0
      %945 = vmatpush1.bf16.msra.mxu0 %v737
      %946 = vmatprep.mubr.bf16.mxu0 %v240
      %947 = vmatmul.mubr.bf16.gmra.mrb[0].mxu0 %v231
      %v948 = vpop.f32.mrb[0].mxu0
      %v949 = vadd.f32 %v909, %v948
      %v950 = vpop.f32.mrb[0].mxu0
      %v951 = vpop.f32.mrb[0].mxu0
      %v952 = vpop.f32.mrb[0].mxu0
      %953 = vdwg.mxu0
      %954 = vmatprep.subr.bf16.mxu0 0
      %955 = vmatpush1.bf16.msra.mxu0 %v738
      %956 = vmatprep.subr.bf16.mxu0 0
      %957 = vmatpush1.bf16.msra.mxu0 %v739
      %958 = vmatprep.subr.bf16.mxu0 0
      %959 = vmatpush1.bf16.msra.mxu0 %v740
      %960 = vmatprep.subr.bf16.mxu0 0
      %961 = vmatpush1.bf16.msra.mxu0 %v741
      %962 = vmatprep.subr.bf16.mxu0 0
      %963 = vmatpush1.bf16.msra.mxu0 %v742
      %964 = vmatprep.subr.bf16.mxu0 0
      %965 = vmatpush1.bf16.msra.mxu0 %v743
      %966 = vmatprep.subr.bf16.mxu0 0
      %967 = vmatpush1.bf16.msra.mxu0 %v744
      %968 = vmatprep.subr.bf16.mxu0 0
      %969 = vmatpush1.bf16.msra.mxu0 %v745
      %970 = vmatprep.subr.bf16.mxu0 0
      %971 = vmatpush1.bf16.msra.mxu0 %v746
      %972 = vmatprep.subr.bf16.mxu0 0
      %973 = vmatpush1.bf16.msra.mxu0 %v747
      %974 = vmatprep.subr.bf16.mxu0 0
      %975 = vmatpush1.bf16.msra.mxu0 %v748
      %976 = vmatprep.subr.bf16.mxu0 0
      %977 = vmatpush1.bf16.msra.mxu0 %v749
      %978 = vmatprep.subr.bf16.mxu0 0
      %979 = vmatpush1.bf16.msra.mxu0 %v750
      %980 = vmatprep.subr.bf16.mxu0 0
      %981 = vmatpush1.bf16.msra.mxu0 %v751
      %982 = vmatprep.subr.bf16.mxu0 0
      %983 = vmatpush1.bf16.msra.mxu0 %v752
      %984 = vmatprep.subr.bf16.mxu0 0
      %985 = vmatpush1.bf16.msra.mxu0 %v753
      %986 = vmatprep.mubr.bf16.mxu0 %v256
      %987 = vmatmul.mubr.bf16.gmra.mrb[0].mxu0 %v247
      %v988 = vpop.f32.mrb[0].mxu0
      %v989 = vadd.f32 %v949, %v988
      %v990 = vpop.f32.mrb[0].mxu0
      %v991 = vpop.f32.mrb[0].mxu0
      %v992 = vpop.f32.mrb[0].mxu0
      %993 = vdwg.mxu0
      %994 = vmatprep.subr.bf16.mxu0 0
      %995 = vmatpush1.bf16.msra.mxu0 %v754
      %996 = vmatprep.subr.bf16.mxu0 0
      %997 = vmatpush1.bf16.msra.mxu0 %v755
      %998 = vmatprep.subr.bf16.mxu0 0
      %999 = vmatpush1.bf16.msra.mxu0 %v756
      %1000 = vmatprep.subr.bf16.mxu0 0
      %1001 = vmatpush1.bf16.msra.mxu0 %v757
      %1002 = vmatprep.subr.bf16.mxu0 0
      %1003 = vmatpush1.bf16.msra.mxu0 %v758
      %1004 = vmatprep.subr.bf16.mxu0 0
      %1005 = vmatpush1.bf16.msra.mxu0 %v759
      %1006 = vmatprep.subr.bf16.mxu0 0
      %1007 = vmatpush1.bf16.msra.mxu0 %v760
      %1008 = vmatprep.subr.bf16.mxu0 0
      %1009 = vmatpush1.bf16.msra.mxu0 %v761
      %1010 = vmatprep.subr.bf16.mxu0 0
      %1011 = vmatpush1.bf16.msra.mxu0 0
      %1012 = vmatprep.subr.bf16.mxu0 0
      %1013 = vmatpush1.bf16.msra.mxu0 0
      %1014 = vmatprep.subr.bf16.mxu0 0
      %1015 = vmatpush1.bf16.msra.mxu0 0
      %1016 = vmatprep.subr.bf16.mxu0 0
      %1017 = vmatpush1.bf16.msra.mxu0 0
      %1018 = vmatprep.subr.bf16.mxu0 0
      %1019 = vmatpush1.bf16.msra.mxu0 0
      %1020 = vmatprep.subr.bf16.mxu0 0
      %1021 = vmatpush1.bf16.msra.mxu0 0
      %1022 = vmatprep.subr.bf16.mxu0 0
      %1023 = vmatpush1.bf16.msra.mxu0 0
      %1024 = vmatprep.subr.bf16.mxu0 0
      %1025 = vmatpush1.bf16.msra.mxu0 0
      %1026 = vmatprep.mubr.bf16.mxu0 0
      %1027 = vmatmul.mubr.bf16.gmra.mrb[0].mxu0 %v202
      %v1028 = vpop.f32.mrb[0].mxu0
      %v1029 = vadd.f32 %v989, %v1028
      %v1030 = vpop.f32.mrb[0].mxu0
      %v1031 = vpop.f32.mrb[0].mxu0
      %v1032 = vpop.f32.mrb[0].mxu0
      %1033 = vdwg.mxu0
      %v1034 = vld [vmem:[%s2] sm:$0x1]
      %v1036 = vlaneseq
      %v1037 = vshrl.u32 %v1036, 7
      %v1038 = vsub.s32 0, %v1037
      %v1039 = vrot.slane %v1034, %v1038
      %v1041 = vmul.f32 %v1029, %v1039
      %v1042 = vld [vmem:[%s3] sm:$0x1]
      %v1044 = vlaneseq
      %v1045 = vshrl.u32 %v1044, 7
      %v1046 = vsub.s32 0, %v1045
      %v1047 = vrot.slane %v1042, %v1046
      %v1049 = vadd.f32 %v1041, %v1047
      %vm1050 = vcmp.ge.f32.partialorder %v1049, 0.0
      %v1051 = vmul.f32 %v1049, 0.1
      %v1052 = vsel %vm1050, %v1049, %v1051
      %v1053 = vpack.c.bf16 %v1052, %v1052
      %vm1054 = vcmask 1041408
      %vm1055 = vsmask.f32 1280
      %vm1056 = vmand %vm1054, %vm1055
      %v1057 = vld [vmem:[%s195] sm:$0x3]
      %v1058 = vsel %vm1056, %v1053, %v1057
      %1059 = vst [vmem:[%s195] sm:$0x3] %v1058
      %p1060 = scmp.lt.s32.totalorder %s15, 1
      %s1061 = scalar_select %p1060, %s15, 1
      %s1062 = smul.addr %s1061, 2
      %s1063 = scalar_lea.vmem %s4, %s1062
      // Predicated region
      $region37: #{elannet_tiny_forward.39} parent=35 // pred_check
        %p1064 = pneg %p122
      $region38: #{elannet_tiny_forward.39} parent=35 // pred_check_branch
        %1066 = sbr.rel (%p1064) target = $region40
      $region39: #{elannet_tiny_forward.39} parent=35 // pred_region
        _
      $region40: #{elannet_tiny_forward.39} parent=35 // pred_fallthru
        _
    $region36: #{elannet_tiny_forward.39} parent=5 // pred_fallthru
      _
    %p1067 = scmp.le.s32.totalorder 2, %s10
    // Predicated region
    $region41: #{elannet_tiny_forward.39} parent=5 // pred_check
      %p1068 = pneg %p1067
    $region42: #{elannet_tiny_forward.39} parent=5 // pred_check_branch
      %1070 = sbr.rel (%p1068) target = $region44
    $region43: #{elannet_tiny_forward.39} parent=5 // pred_region
      %s1071 = ssub.s32 %s10, 2
      // Predicated region
      $region45: #{elannet_tiny_forward.39} parent=43 // pred_check
        %p1072 = pneg %p128
      $region46: #{elannet_tiny_forward.39} parent=43 // pred_check_branch
        %1074 = sbr.rel (%p1072) target = $region48
      $region47: #{elannet_tiny_forward.39} parent=43 // pred_region
        %p1075 = scmp.lt.s32.totalorder %s16, 1
        %s1076 = scalar_select %p1075, %s16, 1
        %s1077 = smul.addr %s1076, 2
        %s1078 = scalar_lea.vmem %s4, %s1077
      $region48: #{elannet_tiny_forward.39} parent=43 // pred_fallthru
        _
    $region44: #{elannet_tiny_forward.39} parent=5 // pred_fallthru
      _
  $region6: #{elannet_tiny_forward.39} parent=0 // loop_footer
    %s14 = sadd.s32 1, %s10
  $region7: #{elannet_tiny_forward.39} parent=0 // loop_footer_branch
    %9 = sbr.rel target = $region3
  $region8: #{elannet_tiny_forward.39} parent=0 // loop_exit
    _

// kernel: elannet_tiny_forward.41
$region0: #{elannet_tiny_forward.41}
  #allocation0 [shape = 'u32[]', space=smem, size = 0x4, offset = 0x4, fixed_abs, tag = 'smem constant byte address 0x4 - core index']
  #allocation1 [shape = 'u32[144,128]{1,0:T(1,128)}', space=vmem, size = 0x12000, scoped, tag = 'internal scratch']
  %s0 = inlined_call_operand.vmem [shape: bf16[2,128], index: 0, kind: input, shape index: {}]
  %s1 = inlined_call_operand.vmem [shape: bf16[2,128], index: 1, kind: input, shape index: {}]
  %s2 = inlined_call_operand.vmem [shape: bf16[2,128], index: 2, kind: input, shape index: {}]
  %s3 = inlined_call_operand.vmem [shape: bf16[2,128], index: 3, kind: input, shape index: {}]
  %s4 = inlined_call_operand.vmem [shape: bf16[512,512], index: 4, kind: input, shape index: {}]
  %s5 = inlined_call_operand.vmem [shape: f32[1,512], index: 5, kind: input, shape index: {}]
  %s6 = inlined_call_operand.vmem [shape: f32[1,512], index: 6, kind: input, shape index: {}]
  %s7 = inlined_call_operand.vmem [shape: bf16[2,512], index: 7, kind: output, shape index: {}]
  %s8 = sld [smem:[#allocation0]]
  $region38: #{elannet_tiny_forward.41} parent=0
    _
  %s10 = ssub.s32 1, %s8
  %s11 = scalar_select 0, %s10, %s8
  // Predicated region
  $region2: #{elannet_tiny_forward.41} parent=0 // pred_check
    _
  $region3: #{elannet_tiny_forward.41} parent=0 // pred_check_branch
    %13 = sbr.rel (0) target = $region5
  $region4: #{elannet_tiny_forward.41} parent=0 // pred_region
    _
  $region5: #{elannet_tiny_forward.41} parent=0 // pred_fallthru
    _
  // Predicated region
  $region6: #{elannet_tiny_forward.41} parent=0 // pred_check
    _
  $region7: #{elannet_tiny_forward.41} parent=0 // pred_check_branch
    %15 = sbr.rel (0) target = $region9
  $region8: #{elannet_tiny_forward.41} parent=0 // pred_region
    _
  $region9: #{elannet_tiny_forward.41} parent=0 // pred_fallthru
    _
  // Predicated region
  $region10: #{elannet_tiny_forward.41} parent=0 // pred_check
    _
  $region11: #{elannet_tiny_forward.41} parent=0 // pred_check_branch
    %17 = sbr.rel (0) target = $region13
  $region12: #{elannet_tiny_forward.41} parent=0 // pred_region
    _
  $region13: #{elannet_tiny_forward.41} parent=0 // pred_fallthru
    _
  // Predicated region
  $region14: #{elannet_tiny_forward.41} parent=0 // pred_check
    _
  $region15: #{elannet_tiny_forward.41} parent=0 // pred_check_branch
    %19 = sbr.rel (0) target = $region17
  $region16: #{elannet_tiny_forward.41} parent=0 // pred_region
    _
  $region17: #{elannet_tiny_forward.41} parent=0 // pred_fallthru
    _
  // Predicated region
  $region18: #{elannet_tiny_forward.41} parent=0 // pred_check
    _
  $region19: #{elannet_tiny_forward.41} parent=0 // pred_check_branch
    %21 = sbr.rel (0) target = $region21
  $region20: #{elannet_tiny_forward.41} parent=0 // pred_region
    _
  $region21: #{elannet_tiny_forward.41} parent=0 // pred_fallthru
    _
  // Predicated region
  $region22: #{elannet_tiny_forward.41} parent=0 // pred_check
    _
  $region23: #{elannet_tiny_forward.41} parent=0 // pred_check_branch
    %23 = sbr.rel (0) target = $region25
  $region24: #{elannet_tiny_forward.41} parent=0 // pred_region
    _
  $region25: #{elannet_tiny_forward.41} parent=0 // pred_fallthru
    _
  // Predicated region
  $region26: #{elannet_tiny_forward.41} parent=0 // pred_check
    _
  $region27: #{elannet_tiny_forward.41} parent=0 // pred_check_branch
    %25 = sbr.rel (0) target = $region29
  $region28: #{elannet_tiny_forward.41} parent=0 // pred_region
    _
  $region29: #{elannet_tiny_forward.41} parent=0 // pred_fallthru
    _
  %v26 = vld [vmem:[%s0] sm:$0x1]
  %v27 = vld [vmem:[%s1] sm:$0x1]
  %v28 = vld [vmem:[%s2] sm:$0x1]
  %v29 = vld [vmem:[%s3] sm:$0x1]
  %v30 = vld [vmem:[%s4] sm:$0xff]
  %v31 = vld [vmem:[%s4 + $0x8] sm:$0xff]
  %v32 = vld [vmem:[%s4 + $0x10] sm:$0xff]
  %v33 = vld [vmem:[%s4 + $0x18] sm:$0xff]
  %v34 = vld [vmem:[%s4 + $0x20] sm:$0xff]
  %v35 = vld [vmem:[%s4 + $0x28] sm:$0xff]
  %v36 = vld [vmem:[%s4 + $0x30] sm:$0xff]
  %v37 = vld [vmem:[%s4 + $0x38] sm:$0xff]
  %v38 = vld [vmem:[%s4 + $0x40] sm:$0xff]
  %v39 = vld [vmem:[%s4 + $0x48] sm:$0xff]
  %v40 = vld [vmem:[%s4 + $0x50] sm:$0xff]
  %v41 = vld [vmem:[%s4 + $0x58] sm:$0xff]
  %v42 = vld [vmem:[%s4 + $0x60] sm:$0xff]
  %v43 = vld [vmem:[%s4 + $0x68] sm:$0xff]
  %v44 = vld [vmem:[%s4 + $0x70] sm:$0xff]
  %v45 = vld [vmem:[%s4 + $0x78] sm:$0xff]
  %v46 = vld [vmem:[%s4 + $0x80] sm:$0xff]
  %v47 = vld [vmem:[%s4 + $0x88] sm:$0xff]
  %v48 = vld [vmem:[%s4 + $0x90] sm:$0xff]
  %v49 = vld [vmem:[%s4 + $0x98] sm:$0xff]
  %v50 = vld [vmem:[%s4 + $0xa0] sm:$0xff]
  %v51 = vld [vmem:[%s4 + $0xa8] sm:$0xff]
  %v52 = vld [vmem:[%s4 + $0xb0] sm:$0xff]
  %v53 = vld [vmem:[%s4 + $0xb8] sm:$0xff]
  %v54 = vld [vmem:[%s4 + $0xc0] sm:$0xff]
  %v55 = vld [vmem:[%s4 + $0xc8] sm:$0xff]
  %v56 = vld [vmem:[%s4 + $0xd0] sm:$0xff]
  %v57 = vld [vmem:[%s4 + $0xd8] sm:$0xff]
  %v58 = vld [vmem:[%s4 + $0xe0] sm:$0xff]
  %v59 = vld [vmem:[%s4 + $0xe8] sm:$0xff]
  %v60 = vld [vmem:[%s4 + $0xf0] sm:$0xff]
  %v61 = vld [vmem:[%s4 + $0xf8] sm:$0xff]
  %v62 = vld [vmem:[%s4 + $0x100] sm:$0xff]
  %v63 = vld [vmem:[%s4 + $0x108] sm:$0xff]
  %v64 = vld [vmem:[%s4 + $0x110] sm:$0xff]
  %v65 = vld [vmem:[%s4 + $0x118] sm:$0xff]
  %v66 = vld [vmem:[%s4 + $0x120] sm:$0xff]
  %v67 = vld [vmem:[%s4 + $0x128] sm:$0xff]
  %v68 = vld [vmem:[%s4 + $0x130] sm:$0xff]
  %v69 = vld [vmem:[%s4 + $0x138] sm:$0xff]
  %v70 = vld [vmem:[%s4 + $0x140] sm:$0xff]
  %v71 = vld [vmem:[%s4 + $0x148] sm:$0xff]
  %v72 = vld [vmem:[%s4 + $0x150] sm:$0xff]
  %v73 = vld [vmem:[%s4 + $0x158] sm:$0xff]
  %v74 = vld [vmem:[%s4 + $0x160] sm:$0xff]
  %v75 = vld [vmem:[%s4 + $0x168] sm:$0xff]
  %v76 = vld [vmem:[%s4 + $0x170] sm:$0xff]
  %v77 = vld [vmem:[%s4 + $0x178] sm:$0xff]
  %v78 = vld [vmem:[%s4 + $0x180] sm:$0xff]
  %v79 = vld [vmem:[%s4 + $0x188] sm:$0xff]
  %v80 = vld [vmem:[%s4 + $0x190] sm:$0xff]
  %v81 = vld [vmem:[%s4 + $0x198] sm:$0xff]
  %v82 = vld [vmem:[%s4 + $0x1a0] sm:$0xff]
  %v83 = vld [vmem:[%s4 + $0x1a8] sm:$0xff]
  %v84 = vld [vmem:[%s4 + $0x1b0] sm:$0xff]
  %v85 = vld [vmem:[%s4 + $0x1b8] sm:$0xff]
  %v86 = vld [vmem:[%s4 + $0x1c0] sm:$0xff]
  %v87 = vld [vmem:[%s4 + $0x1c8] sm:$0xff]
  %v88 = vld [vmem:[%s4 + $0x1d0] sm:$0xff]
  %v89 = vld [vmem:[%s4 + $0x1d8] sm:$0xff]
  %v90 = vld [vmem:[%s4 + $0x1e0] sm:$0xff]
  %v91 = vld [vmem:[%s4 + $0x1e8] sm:$0xff]
  %v92 = vld [vmem:[%s4 + $0x1f0] sm:$0xff]
  %v93 = vld [vmem:[%s4 + $0x1f8] sm:$0xff]
  %v94 = vld [vmem:[%s4 + $0x200] sm:$0xff]
  %v95 = vld [vmem:[%s4 + $0x208] sm:$0xff]
  %v96 = vld [vmem:[%s4 + $0x210] sm:$0xff]
  %v97 = vld [vmem:[%s4 + $0x218] sm:$0xff]
  %v98 = vld [vmem:[%s4 + $0x220] sm:$0xff]
  %v99 = vld [vmem:[%s4 + $0x228] sm:$0xff]
  %v100 = vld [vmem:[%s4 + $0x230] sm:$0xff]
  %v101 = vld [vmem:[%s4 + $0x238] sm:$0xff]
  %v102 = vld [vmem:[%s4 + $0x240] sm:$0xff]
  %v103 = vld [vmem:[%s4 + $0x248] sm:$0xff]
  %v104 = vld [vmem:[%s4 + $0x250] sm:$0xff]
  %v105 = vld [vmem:[%s4 + $0x258] sm:$0xff]
  %v106 = vld [vmem:[%s4 + $0x260] sm:$0xff]
  %v107 = vld [vmem:[%s4 + $0x268] sm:$0xff]
  %v108 = vld [vmem:[%s4 + $0x270] sm:$0xff]
  %v109 = vld [vmem:[%s4 + $0x278] sm:$0xff]
  %v110 = vld [vmem:[%s4 + $0x280] sm:$0xff]
  %v111 = vld [vmem:[%s4 + $0x288] sm:$0xff]
  %v112 = vld [vmem:[%s4 + $0x290] sm:$0xff]
  %v113 = vld [vmem:[%s4 + $0x298] sm:$0xff]
  %v114 = vld [vmem:[%s4 + $0x2a0] sm:$0xff]
  %v115 = vld [vmem:[%s4 + $0x2a8] sm:$0xff]
  %v116 = vld [vmem:[%s4 + $0x2b0] sm:$0xff]
  %v117 = vld [vmem:[%s4 + $0x2b8] sm:$0xff]
  %v118 = vld [vmem:[%s4 + $0x2c0] sm:$0xff]
  %v119 = vld [vmem:[%s4 + $0x2c8] sm:$0xff]
  %v120 = vld [vmem:[%s4 + $0x2d0] sm:$0xff]
  %v121 = vld [vmem:[%s4 + $0x2d8] sm:$0xff]
  %v122 = vld [vmem:[%s4 + $0x2e0] sm:$0xff]
  %v123 = vld [vmem:[%s4 + $0x2e8] sm:$0xff]
  %v124 = vld [vmem:[%s4 + $0x2f0] sm:$0xff]
  %v125 = vld [vmem:[%s4 + $0x2f8] sm:$0xff]
  %v126 = vld [vmem:[%s4 + $0x300] sm:$0xff]
  %v127 = vld [vmem:[%s4 + $0x308] sm:$0xff]
  %v128 = vld [vmem:[%s4 + $0x310] sm:$0xff]
  %v129 = vld [vmem:[%s4 + $0x318] sm:$0xff]
  %v130 = vld [vmem:[%s4 + $0x320] sm:$0xff]
  %v131 = vld [vmem:[%s4 + $0x328] sm:$0xff]
  %v132 = vld [vmem:[%s4 + $0x330] sm:$0xff]
  %v133 = vld [vmem:[%s4 + $0x338] sm:$0xff]
  %v134 = vld [vmem:[%s4 + $0x340] sm:$0xff]
  %v135 = vld [vmem:[%s4 + $0x348] sm:$0xff]
  %v136 = vld [vmem:[%s4 + $0x350] sm:$0xff]
  %v137 = vld [vmem:[%s4 + $0x358] sm:$0xff]
  %v138 = vld [vmem:[%s4 + $0x360] sm:$0xff]
  %v139 = vld [vmem:[%s4 + $0x368] sm:$0xff]
  %v140 = vld [vmem:[%s4 + $0x370] sm:$0xff]
  %v141 = vld [vmem:[%s4 + $0x378] sm:$0xff]
  %v142 = vld [vmem:[%s4 + $0x380] sm:$0xff]
  %v143 = vld [vmem:[%s4 + $0x388] sm:$0xff]
  %v144 = vld [vmem:[%s4 + $0x390] sm:$0xff]
  %v145 = vld [vmem:[%s4 + $0x398] sm:$0xff]
  %v146 = vld [vmem:[%s4 + $0x3a0] sm:$0xff]
  %v147 = vld [vmem:[%s4 + $0x3a8] sm:$0xff]
  %v148 = vld [vmem:[%s4 + $0x3b0] sm:$0xff]
  %v149 = vld [vmem:[%s4 + $0x3b8] sm:$0xff]
  %v150 = vld [vmem:[%s4 + $0x3c0] sm:$0xff]
  %v151 = vld [vmem:[%s4 + $0x3c8] sm:$0xff]
  %v152 = vld [vmem:[%s4 + $0x3d0] sm:$0xff]
  %v153 = vld [vmem:[%s4 + $0x3d8] sm:$0xff]
  %v154 = vld [vmem:[%s4 + $0x3e0] sm:$0xff]
  %v155 = vld [vmem:[%s4 + $0x3e8] sm:$0xff]
  %v156 = vld [vmem:[%s4 + $0x3f0] sm:$0xff]
  %v157 = vld [vmem:[%s4 + $0x3f8] sm:$0xff]
  %v286 = vunpack.c.l.b16 %v30
  %v287 = vunpack.c.h.b16 %v30
  %v288 = vunpack.c.l.b16 %v31
  %v289 = vunpack.c.h.b16 %v31
  %v290 = vunpack.c.l.b16 %v32
  %v291 = vunpack.c.h.b16 %v32
  %v292 = vunpack.c.l.b16 %v33
  %v293 = vunpack.c.h.b16 %v33
  %v294 = vunpack.c.l.b16 %v34
  %v295 = vunpack.c.h.b16 %v34
  %v296 = vunpack.c.l.b16 %v35
  %v297 = vunpack.c.h.b16 %v35
  %v298 = vunpack.c.l.b16 %v36
  %v299 = vunpack.c.h.b16 %v36
  %v300 = vunpack.c.l.b16 %v37
  %v301 = vunpack.c.h.b16 %v37
  %v302 = vunpack.c.l.b16 %v38
  %v303 = vunpack.c.h.b16 %v38
  %v304 = vunpack.c.l.b16 %v39
  %v305 = vunpack.c.h.b16 %v39
  %v306 = vunpack.c.l.b16 %v40
  %v307 = vunpack.c.h.b16 %v40
  %v308 = vunpack.c.l.b16 %v41
  %v309 = vunpack.c.h.b16 %v41
  %v310 = vunpack.c.l.b16 %v42
  %v311 = vunpack.c.h.b16 %v42
  %v312 = vunpack.c.l.b16 %v43
  %v313 = vunpack.c.h.b16 %v43
  %v314 = vunpack.c.l.b16 %v44
  %v315 = vunpack.c.h.b16 %v44
  %v316 = vunpack.c.l.b16 %v45
  %v317 = vunpack.c.h.b16 %v45
  %v318 = vunpack.c.l.b16 %v46
  %v319 = vunpack.c.h.b16 %v46
  %v320 = vunpack.c.l.b16 %v47
  %v321 = vunpack.c.h.b16 %v47
  %v322 = vunpack.c.l.b16 %v48
  %v323 = vunpack.c.h.b16 %v48
  %v324 = vunpack.c.l.b16 %v49
  %v325 = vunpack.c.h.b16 %v49
  %v326 = vunpack.c.l.b16 %v50
  %v327 = vunpack.c.h.b16 %v50
  %v328 = vunpack.c.l.b16 %v51
  %v329 = vunpack.c.h.b16 %v51
  %v330 = vunpack.c.l.b16 %v52
  %v331 = vunpack.c.h.b16 %v52
  %v332 = vunpack.c.l.b16 %v53
  %v333 = vunpack.c.h.b16 %v53
  %v334 = vunpack.c.l.b16 %v54
  %v335 = vunpack.c.h.b16 %v54
  %v336 = vunpack.c.l.b16 %v55
  %v337 = vunpack.c.h.b16 %v55
  %v338 = vunpack.c.l.b16 %v56
  %v339 = vunpack.c.h.b16 %v56
  %v340 = vunpack.c.l.b16 %v57
  %v341 = vunpack.c.h.b16 %v57
  %v342 = vunpack.c.l.b16 %v58
  %v343 = vunpack.c.h.b16 %v58
  %v344 = vunpack.c.l.b16 %v59
  %v345 = vunpack.c.h.b16 %v59
  %v346 = vunpack.c.l.b16 %v60
  %v347 = vunpack.c.h.b16 %v60
  %v348 = vunpack.c.l.b16 %v61
  %v349 = vunpack.c.h.b16 %v61
  %v350 = vunpack.c.l.b16 %v62
  %v351 = vunpack.c.h.b16 %v62
  %v352 = vunpack.c.l.b16 %v63
  %v353 = vunpack.c.h.b16 %v63
  %v354 = vunpack.c.l.b16 %v64
  %v355 = vunpack.c.h.b16 %v64
  %v356 = vunpack.c.l.b16 %v65
  %v357 = vunpack.c.h.b16 %v65
  %v358 = vunpack.c.l.b16 %v66
  %v359 = vunpack.c.h.b16 %v66
  %v360 = vunpack.c.l.b16 %v67
  %v361 = vunpack.c.h.b16 %v67
  %v362 = vunpack.c.l.b16 %v68
  %v363 = vunpack.c.h.b16 %v68
  %v364 = vunpack.c.l.b16 %v69
  %v365 = vunpack.c.h.b16 %v69
  %v366 = vunpack.c.l.b16 %v70
  %v367 = vunpack.c.h.b16 %v70
  %v368 = vunpack.c.l.b16 %v71
  %v369 = vunpack.c.h.b16 %v71
  %v370 = vunpack.c.l.b16 %v72
  %v371 = vunpack.c.h.b16 %v72
  %v372 = vunpack.c.l.b16 %v73
  %v373 = vunpack.c.h.b16 %v73
  %v374 = vunpack.c.l.b16 %v74
  %v375 = vunpack.c.h.b16 %v74
  %v376 = vunpack.c.l.b16 %v75
  %v377 = vunpack.c.h.b16 %v75
  %v378 = vunpack.c.l.b16 %v76
  %v379 = vunpack.c.h.b16 %v76
  %v380 = vunpack.c.l.b16 %v77
  %v381 = vunpack.c.h.b16 %v77
  %v382 = vunpack.c.l.b16 %v78
  %v383 = vunpack.c.h.b16 %v78
  %v384 = vunpack.c.l.b16 %v79
  %v385 = vunpack.c.h.b16 %v79
  %v386 = vunpack.c.l.b16 %v80
  %v387 = vunpack.c.h.b16 %v80
  %v388 = vunpack.c.l.b16 %v81
  %v389 = vunpack.c.h.b16 %v81
  %v390 = vunpack.c.l.b16 %v82
  %v391 = vunpack.c.h.b16 %v82
  %v392 = vunpack.c.l.b16 %v83
  %v393 = vunpack.c.h.b16 %v83
  %v394 = vunpack.c.l.b16 %v84
  %v395 = vunpack.c.h.b16 %v84
  %v396 = vunpack.c.l.b16 %v85
  %v397 = vunpack.c.h.b16 %v85
  %v398 = vunpack.c.l.b16 %v86
  %v399 = vunpack.c.h.b16 %v86
  %v400 = vunpack.c.l.b16 %v87
  %v401 = vunpack.c.h.b16 %v87
  %v402 = vunpack.c.l.b16 %v88
  %v403 = vunpack.c.h.b16 %v88
  %v404 = vunpack.c.l.b16 %v89
  %v405 = vunpack.c.h.b16 %v89
  %v406 = vunpack.c.l.b16 %v90
  %v407 = vunpack.c.h.b16 %v90
  %v408 = vunpack.c.l.b16 %v91
  %v409 = vunpack.c.h.b16 %v91
  %v410 = vunpack.c.l.b16 %v92
  %v411 = vunpack.c.h.b16 %v92
  %v412 = vunpack.c.l.b16 %v93
  %v413 = vunpack.c.h.b16 %v93
  %v414 = vunpack.c.l.b16 %v94
  %v415 = vunpack.c.h.b16 %v94
  %v416 = vunpack.c.l.b16 %v95
  %v417 = vunpack.c.h.b16 %v95
  %v418 = vunpack.c.l.b16 %v96
  %v419 = vunpack.c.h.b16 %v96
  %v420 = vunpack.c.l.b16 %v97
  %v421 = vunpack.c.h.b16 %v97
  %v422 = vunpack.c.l.b16 %v98
  %v423 = vunpack.c.h.b16 %v98
  %v424 = vunpack.c.l.b16 %v99
  %v425 = vunpack.c.h.b16 %v99
  %v426 = vunpack.c.l.b16 %v100
  %v427 = vunpack.c.h.b16 %v100
  %v428 = vunpack.c.l.b16 %v101
  %v429 = vunpack.c.h.b16 %v101
  %v430 = vunpack.c.l.b16 %v102
  %v431 = vunpack.c.h.b16 %v102
  %v432 = vunpack.c.l.b16 %v103
  %v433 = vunpack.c.h.b16 %v103
  %v434 = vunpack.c.l.b16 %v104
  %v435 = vunpack.c.h.b16 %v104
  %v436 = vunpack.c.l.b16 %v105
  %v437 = vunpack.c.h.b16 %v105
  %v438 = vunpack.c.l.b16 %v106
  %v439 = vunpack.c.h.b16 %v106
  %v440 = vunpack.c.l.b16 %v107
  %v441 = vunpack.c.h.b16 %v107
  %v442 = vunpack.c.l.b16 %v108
  %v443 = vunpack.c.h.b16 %v108
  %v444 = vunpack.c.l.b16 %v109
  %v445 = vunpack.c.h.b16 %v109
  %v446 = vunpack.c.l.b16 %v110
  %v447 = vunpack.c.h.b16 %v110
  %v448 = vunpack.c.l.b16 %v111
  %v449 = vunpack.c.h.b16 %v111
  %v450 = vunpack.c.l.b16 %v112
  %v451 = vunpack.c.h.b16 %v112
  %v452 = vunpack.c.l.b16 %v113
  %v453 = vunpack.c.h.b16 %v113
  %v454 = vunpack.c.l.b16 %v114
  %v455 = vunpack.c.h.b16 %v114
  %v456 = vunpack.c.l.b16 %v115
  %v457 = vunpack.c.h.b16 %v115
  %v458 = vunpack.c.l.b16 %v116
  %v459 = vunpack.c.h.b16 %v116
  %v460 = vunpack.c.l.b16 %v117
  %v461 = vunpack.c.h.b16 %v117
  %v462 = vunpack.c.l.b16 %v118
  %v463 = vunpack.c.h.b16 %v118
  %v464 = vunpack.c.l.b16 %v119
  %v465 = vunpack.c.h.b16 %v119
  %v466 = vunpack.c.l.b16 %v120
  %v467 = vunpack.c.h.b16 %v120
  %v468 = vunpack.c.l.b16 %v121
  %v469 = vunpack.c.h.b16 %v121
  %v470 = vunpack.c.l.b16 %v122
  %v471 = vunpack.c.h.b16 %v122
  %v472 = vunpack.c.l.b16 %v123
  %v473 = vunpack.c.h.b16 %v123
  %v474 = vunpack.c.l.b16 %v124
  %v475 = vunpack.c.h.b16 %v124
  %v476 = vunpack.c.l.b16 %v125
  %v477 = vunpack.c.h.b16 %v125
  %v478 = vunpack.c.l.b16 %v126
  %v479 = vunpack.c.h.b16 %v126
  %v480 = vunpack.c.l.b16 %v127
  %v481 = vunpack.c.h.b16 %v127
  %v482 = vunpack.c.l.b16 %v128
  %v483 = vunpack.c.h.b16 %v128
  %v484 = vunpack.c.l.b16 %v129
  %v485 = vunpack.c.h.b16 %v129
  %v486 = vunpack.c.l.b16 %v130
  %v487 = vunpack.c.h.b16 %v130
  %v488 = vunpack.c.l.b16 %v131
  %v489 = vunpack.c.h.b16 %v131
  %v490 = vunpack.c.l.b16 %v132
  %v491 = vunpack.c.h.b16 %v132
  %v492 = vunpack.c.l.b16 %v133
  %v493 = vunpack.c.h.b16 %v133
  %v494 = vunpack.c.l.b16 %v134
  %v495 = vunpack.c.h.b16 %v134
  %v496 = vunpack.c.l.b16 %v135
  %v497 = vunpack.c.h.b16 %v135
  %v498 = vunpack.c.l.b16 %v136
  %v499 = vunpack.c.h.b16 %v136
  %v500 = vunpack.c.l.b16 %v137
  %v501 = vunpack.c.h.b16 %v137
  %v502 = vunpack.c.l.b16 %v138
  %v503 = vunpack.c.h.b16 %v138
  %v504 = vunpack.c.l.b16 %v139
  %v505 = vunpack.c.h.b16 %v139
  %v506 = vunpack.c.l.b16 %v140
  %v507 = vunpack.c.h.b16 %v140
  %v508 = vunpack.c.l.b16 %v141
  %v509 = vunpack.c.h.b16 %v141
  %v510 = vunpack.c.l.b16 %v142
  %v511 = vunpack.c.h.b16 %v142
  %v512 = vunpack.c.l.b16 %v143
  %v513 = vunpack.c.h.b16 %v143
  %v514 = vunpack.c.l.b16 %v144
  %v515 = vunpack.c.h.b16 %v144
  %v516 = vunpack.c.l.b16 %v145
  %v517 = vunpack.c.h.b16 %v145
  %v518 = vunpack.c.l.b16 %v146
  %v519 = vunpack.c.h.b16 %v146
  %v520 = vunpack.c.l.b16 %v147
  %v521 = vunpack.c.h.b16 %v147
  %v522 = vunpack.c.l.b16 %v148
  %v523 = vunpack.c.h.b16 %v148
  %v524 = vunpack.c.l.b16 %v149
  %v525 = vunpack.c.h.b16 %v149
  %v526 = vunpack.c.l.b16 %v150
  %v527 = vunpack.c.h.b16 %v150
  %v528 = vunpack.c.l.b16 %v151
  %v529 = vunpack.c.h.b16 %v151
  %v530 = vunpack.c.l.b16 %v152
  %v531 = vunpack.c.h.b16 %v152
  %v532 = vunpack.c.l.b16 %v153
  %v533 = vunpack.c.h.b16 %v153
  %v534 = vunpack.c.l.b16 %v154
  %v535 = vunpack.c.h.b16 %v154
  %v536 = vunpack.c.l.b16 %v155
  %v537 = vunpack.c.h.b16 %v155
  %v538 = vunpack.c.l.b16 %v156
  %v539 = vunpack.c.h.b16 %v156
  %v540 = vunpack.c.l.b16 %v157
  %v541 = vunpack.c.h.b16 %v157
  %v542 = vpack.c.b16 %v290, %v286
  %v543 = vpack.c.b16 %v291, %v287
  %v544 = vpack.c.b16 %v292, %v288
  %v545 = vpack.c.b16 %v293, %v289
  %v546 = vpack.c.b16 %v298, %v294
  %v547 = vpack.c.b16 %v299, %v295
  %v548 = vpack.c.b16 %v300, %v296
  %v549 = vpack.c.b16 %v301, %v297
  %v550 = vpack.c.b16 %v306, %v302
  %v551 = vpack.c.b16 %v307, %v303
  %v552 = vpack.c.b16 %v308, %v304
  %v553 = vpack.c.b16 %v309, %v305
  %v554 = vpack.c.b16 %v314, %v310
  %v555 = vpack.c.b16 %v315, %v311
  %v556 = vpack.c.b16 %v316, %v312
  %v557 = vpack.c.b16 %v317, %v313
  %v558 = vpack.c.b16 %v322, %v318
  %v559 = vpack.c.b16 %v323, %v319
  %v560 = vpack.c.b16 %v324, %v320
  %v561 = vpack.c.b16 %v325, %v321
  %v562 = vpack.c.b16 %v330, %v326
  %v563 = vpack.c.b16 %v331, %v327
  %v564 = vpack.c.b16 %v332, %v328
  %v565 = vpack.c.b16 %v333, %v329
  %v566 = vpack.c.b16 %v338, %v334
  %v567 = vpack.c.b16 %v339, %v335
  %v568 = vpack.c.b16 %v340, %v336
  %v569 = vpack.c.b16 %v341, %v337
  %v570 = vpack.c.b16 %v346, %v342
  %v571 = vpack.c.b16 %v347, %v343
  %v572 = vpack.c.b16 %v348, %v344
  %v573 = vpack.c.b16 %v349, %v345
  %v574 = vpack.c.b16 %v354, %v350
  %v575 = vpack.c.b16 %v355, %v351
  %v576 = vpack.c.b16 %v356, %v352
  %v577 = vpack.c.b16 %v357, %v353
  %v578 = vpack.c.b16 %v362, %v358
  %v579 = vpack.c.b16 %v363, %v359
  %v580 = vpack.c.b16 %v364, %v360
  %v581 = vpack.c.b16 %v365, %v361
  %v582 = vpack.c.b16 %v370, %v366
  %v583 = vpack.c.b16 %v371, %v367
  %v584 = vpack.c.b16 %v372, %v368
  %v585 = vpack.c.b16 %v373, %v369
  %v586 = vpack.c.b16 %v378, %v374
  %v587 = vpack.c.b16 %v379, %v375
  %v588 = vpack.c.b16 %v380, %v376
  %v589 = vpack.c.b16 %v381, %v377
  %v590 = vpack.c.b16 %v386, %v382
  %v591 = vpack.c.b16 %v387, %v383
  %v592 = vpack.c.b16 %v388, %v384
  %v593 = vpack.c.b16 %v389, %v385
  %v594 = vpack.c.b16 %v394, %v390
  %v595 = vpack.c.b16 %v395, %v391
  %v596 = vpack.c.b16 %v396, %v392
  %v597 = vpack.c.b16 %v397, %v393
  %v598 = vpack.c.b16 %v402, %v398
  %v599 = vpack.c.b16 %v403, %v399
  %v600 = vpack.c.b16 %v404, %v400
  %v601 = vpack.c.b16 %v405, %v401
  %v602 = vpack.c.b16 %v410, %v406
  %v603 = vpack.c.b16 %v411, %v407
  %v604 = vpack.c.b16 %v412, %v408
  %v605 = vpack.c.b16 %v413, %v409
  %v606 = vpack.c.b16 %v418, %v414
  %v607 = vpack.c.b16 %v419, %v415
  %v608 = vpack.c.b16 %v420, %v416
  %v609 = vpack.c.b16 %v421, %v417
  %v610 = vpack.c.b16 %v426, %v422
  %v611 = vpack.c.b16 %v427, %v423
  %v612 = vpack.c.b16 %v428, %v424
  %v613 = vpack.c.b16 %v429, %v425
  %v614 = vpack.c.b16 %v434, %v430
  %v615 = vpack.c.b16 %v435, %v431
  %v616 = vpack.c.b16 %v436, %v432
  %v617 = vpack.c.b16 %v437, %v433
  %v618 = vpack.c.b16 %v442, %v438
  %v619 = vpack.c.b16 %v443, %v439
  %v620 = vpack.c.b16 %v444, %v440
  %v621 = vpack.c.b16 %v445, %v441
  %v622 = vpack.c.b16 %v450, %v446
  %v623 = vpack.c.b16 %v451, %v447
  %v624 = vpack.c.b16 %v452, %v448
  %v625 = vpack.c.b16 %v453, %v449
  %v626 = vpack.c.b16 %v458, %v454
  %v627 = vpack.c.b16 %v459, %v455
  %v628 = vpack.c.b16 %v460, %v456
  %v629 = vpack.c.b16 %v461, %v457
  %v630 = vpack.c.b16 %v466, %v462
  %v631 = vpack.c.b16 %v467, %v463
  %v632 = vpack.c.b16 %v468, %v464
  %v633 = vpack.c.b16 %v469, %v465
  %v634 = vpack.c.b16 %v474, %v470
  %v635 = vpack.c.b16 %v475, %v471
  %v636 = vpack.c.b16 %v476, %v472
  %v637 = vpack.c.b16 %v477, %v473
  %v638 = vpack.c.b16 %v482, %v478
  %v639 = vpack.c.b16 %v483, %v479
  %v640 = vpack.c.b16 %v484, %v480
  %v641 = vpack.c.b16 %v485, %v481
  %v642 = vpack.c.b16 %v490, %v486
  %v643 = vpack.c.b16 %v491, %v487
  %v644 = vpack.c.b16 %v492, %v488
  %v645 = vpack.c.b16 %v493, %v489
  %v646 = vpack.c.b16 %v498, %v494
  %v647 = vpack.c.b16 %v499, %v495
  %v648 = vpack.c.b16 %v500, %v496
  %v649 = vpack.c.b16 %v501, %v497
  %v650 = vpack.c.b16 %v506, %v502
  %v651 = vpack.c.b16 %v507, %v503
  %v652 = vpack.c.b16 %v508, %v504
  %v653 = vpack.c.b16 %v509, %v505
  %v654 = vpack.c.b16 %v514, %v510
  %v655 = vpack.c.b16 %v515, %v511
  %v656 = vpack.c.b16 %v516, %v512
  %v657 = vpack.c.b16 %v517, %v513
  %v658 = vpack.c.b16 %v522, %v518
  %v659 = vpack.c.b16 %v523, %v519
  %v660 = vpack.c.b16 %v524, %v520
  %v661 = vpack.c.b16 %v525, %v521
  %v662 = vpack.c.b16 %v530, %v526
  %v663 = vpack.c.b16 %v531, %v527
  %v664 = vpack.c.b16 %v532, %v528
  %v665 = vpack.c.b16 %v533, %v529
  %v666 = vpack.c.b16 %v538, %v534
  %v667 = vpack.c.b16 %v539, %v535
  %v668 = vpack.c.b16 %v540, %v536
  %v669 = vpack.c.b16 %v541, %v537
  %798 = vmatprep.subr.bf16.mxu0 %v543
  %799 = vmatpush1.bf16.msra.mxu0 %v542
  %800 = vmatprep.subr.bf16.mxu0 %v547
  %801 = vmatpush1.bf16.msra.mxu0 %v546
  %802 = vmatprep.subr.bf16.mxu0 %v551
  %803 = vmatpush1.bf16.msra.mxu0 %v550
  %804 = vmatprep.subr.bf16.mxu0 %v555
  %805 = vmatpush1.bf16.msra.mxu0 %v554
  %806 = vmatprep.subr.bf16.mxu0 %v559
  %807 = vmatpush1.bf16.msra.mxu0 %v558
  %808 = vmatprep.subr.bf16.mxu0 %v563
  %809 = vmatpush1.bf16.msra.mxu0 %v562
  %810 = vmatprep.subr.bf16.mxu0 %v567
  %811 = vmatpush1.bf16.msra.mxu0 %v566
  %812 = vmatprep.subr.bf16.mxu0 %v571
  %813 = vmatpush1.bf16.msra.mxu0 %v570
  %814 = vmatprep.subr.bf16.mxu0 %v575
  %815 = vmatpush1.bf16.msra.mxu0 %v574
  %816 = vmatprep.subr.bf16.mxu0 %v579
  %817 = vmatpush1.bf16.msra.mxu0 %v578
  %818 = vmatprep.subr.bf16.mxu0 %v583
  %819 = vmatpush1.bf16.msra.mxu0 %v582
  %820 = vmatprep.subr.bf16.mxu0 %v587
  %821 = vmatpush1.bf16.msra.mxu0 %v586
  %822 = vmatprep.subr.bf16.mxu0 %v591
  %823 = vmatpush1.bf16.msra.mxu0 %v590
  %824 = vmatprep.subr.bf16.mxu0 %v595
  %825 = vmatpush1.bf16.msra.mxu0 %v594
  %826 = vmatprep.subr.bf16.mxu0 %v599
  %827 = vmatpush1.bf16.msra.mxu0 %v598
  %828 = vmatprep.subr.bf16.mxu0 %v603
  %829 = vmatpush1.bf16.msra.mxu0 %v602
  %830 = vmatprep.mubr.bf16.mxu0 %v27
  %831 = vmatmul.mubr.bf16.gmra.mrb[0].mxu0 %v26
  %v832 = vpop.f32.mrb[0].mxu0
  %v833 = vadd.f32 0.0, %v832
  %v834 = vpop.f32.mrb[0].mxu0
  %v835 = vadd.f32 0.0, %v834
  %v836 = vpop.f32.mrb[0].mxu0
  %v837 = vpop.f32.mrb[0].mxu0
  %838 = vdwg.mxu0
  %839 = vmatprep.subr.bf16.mxu0 %v607
  %840 = vmatpush1.bf16.msra.mxu0 %v606
  %841 = vmatprep.subr.bf16.mxu0 %v611
  %842 = vmatpush1.bf16.msra.mxu0 %v610
  %843 = vmatprep.subr.bf16.mxu0 %v615
  %844 = vmatpush1.bf16.msra.mxu0 %v614
  %845 = vmatprep.subr.bf16.mxu0 %v619
  %846 = vmatpush1.bf16.msra.mxu0 %v618
  %847 = vmatprep.subr.bf16.mxu0 %v623
  %848 = vmatpush1.bf16.msra.mxu0 %v622
  %849 = vmatprep.subr.bf16.mxu0 %v627
  %850 = vmatpush1.bf16.msra.mxu0 %v626
  %851 = vmatprep.subr.bf16.mxu0 %v631
  %852 = vmatpush1.bf16.msra.mxu0 %v630
  %853 = vmatprep.subr.bf16.mxu0 %v635
  %854 = vmatpush1.bf16.msra.mxu0 %v634
  %855 = vmatprep.subr.bf16.mxu0 %v639
  %856 = vmatpush1.bf16.msra.mxu0 %v638
  %857 = vmatprep.subr.bf16.mxu0 %v643
  %858 = vmatpush1.bf16.msra.mxu0 %v642
  %859 = vmatprep.subr.bf16.mxu0 %v647
  %860 = vmatpush1.bf16.msra.mxu0 %v646
  %861 = vmatprep.subr.bf16.mxu0 %v651
  %862 = vmatpush1.bf16.msra.mxu0 %v650
  %863 = vmatprep.subr.bf16.mxu0 %v655
  %864 = vmatpush1.bf16.msra.mxu0 %v654
  %865 = vmatprep.subr.bf16.mxu0 %v659
  %866 = vmatpush1.bf16.msra.mxu0 %v658
  %867 = vmatprep.subr.bf16.mxu0 %v663
  %868 = vmatpush1.bf16.msra.mxu0 %v662
  %869 = vmatprep.subr.bf16.mxu0 %v667
  %870 = vmatpush1.bf16.msra.mxu0 %v666
  %871 = vmatprep.mubr.bf16.mxu0 %v29
  %872 = vmatmul.mubr.bf16.gmra.mrb[0].mxu0 %v28
  %v873 = vpop.f32.mrb[0].mxu0
  %v874 = vadd.f32 %v833, %v873
  %v875 = vpop.f32.mrb[0].mxu0
  %v876 = vadd.f32 %v835, %v875
  %v877 = vpop.f32.mrb[0].mxu0
  %v878 = vpop.f32.mrb[0].mxu0
  %879 = vdwg.mxu0
  %880 = vmatprep.subr.bf16.mxu0 %v545
  %881 = vmatpush1.bf16.msra.mxu0 %v544
  %882 = vmatprep.subr.bf16.mxu0 %v549
  %883 = vmatpush1.bf16.msra.mxu0 %v548
  %884 = vmatprep.subr.bf16.mxu0 %v553
  %885 = vmatpush1.bf16.msra.mxu0 %v552
  %886 = vmatprep.subr.bf16.mxu0 %v557
  %887 = vmatpush1.bf16.msra.mxu0 %v556
  %888 = vmatprep.subr.bf16.mxu0 %v561
  %889 = vmatpush1.bf16.msra.mxu0 %v560
  %890 = vmatprep.subr.bf16.mxu0 %v565
  %891 = vmatpush1.bf16.msra.mxu0 %v564
  %892 = vmatprep.subr.bf16.mxu0 %v569
  %893 = vmatpush1.bf16.msra.mxu0 %v568
  %894 = vmatprep.subr.bf16.mxu0 %v573
  %895 = vmatpush1.bf16.msra.mxu0 %v572
  %896 = vmatprep.subr.bf16.mxu0 %v577
  %897 = vmatpush1.bf16.msra.mxu0 %v576
  %898 = vmatprep.subr.bf16.mxu0 %v581
  %899 = vmatpush1.bf16.msra.mxu0 %v580
  %900 = vmatprep.subr.bf16.mxu0 %v585
  %901 = vmatpush1.bf16.msra.mxu0 %v584
  %902 = vmatprep.subr.bf16.mxu0 %v589
  %903 = vmatpush1.bf16.msra.mxu0 %v588
  %904 = vmatprep.subr.bf16.mxu0 %v593
  %905 = vmatpush1.bf16.msra.mxu0 %v592
  %906 = vmatprep.subr.bf16.mxu0 %v597
  %907 = vmatpush1.bf16.msra.mxu0 %v596
  %908 = vmatprep.subr.bf16.mxu0 %v601
  %909 = vmatpush1.bf16.msra.mxu0 %v600
  %910 = vmatprep.subr.bf16.mxu0 %v605
  %911 = vmatpush1.bf16.msra.mxu0 %v604
  %912 = vmatprep.mubr.bf16.mxu0 %v27
  %913 = vmatmul.mubr.bf16.gmra.mrb[0].mxu0 %v26
  %v914 = vpop.f32.mrb[0].mxu0
  %v915 = vadd.f32 0.0, %v914
  %v916 = vpop.f32.mrb[0].mxu0
  %v917 = vadd.f32 0.0, %v916
  %v918 = vpop.f32.mrb[0].mxu0
  %v919 = vpop.f32.mrb[0].mxu0
  %920 = vdwg.mxu0
  %921 = vmatprep.subr.bf16.mxu0 %v609
  %922 = vmatpush1.bf16.msra.mxu0 %v608
  %923 = vmatprep.subr.bf16.mxu0 %v613
  %924 = vmatpush1.bf16.msra.mxu0 %v612
  %925 = vmatprep.subr.bf16.mxu0 %v617
  %926 = vmatpush1.bf16.msra.mxu0 %v616
  %927 = vmatprep.subr.bf16.mxu0 %v621
  %928 = vmatpush1.bf16.msra.mxu0 %v620
  %929 = vmatprep.subr.bf16.mxu0 %v625
  %930 = vmatpush1.bf16.msra.mxu0 %v624
  %931 = vmatprep.subr.bf16.mxu0 %v629
  %932 = vmatpush1.bf16.msra.mxu0 %v628
  %933 = vmatprep.subr.bf16.mxu0 %v633
  %934 = vmatpush1.bf16.msra.mxu0 %v632
  %935 = vmatprep.subr.bf16.mxu0 %v637
  %936 = vmatpush1.bf16.msra.mxu0 %v636
  %937 = vmatprep.subr.bf16.mxu0 %v641
  %938 = vmatpush1.bf16.msra.mxu0 %v640
  %939 = vmatprep.subr.bf16.mxu0 %v645
  %940 = vmatpush1.bf16.msra.mxu0 %v644
  %941 = vmatprep.subr.bf16.mxu0 %v649
  %942 = vmatpush1.bf16.msra.mxu0 %v648
  %943 = vmatprep.subr.bf16.mxu0 %v653
  %944 = vmatpush1.bf16.msra.mxu0 %v652
  %945 = vmatprep.subr.bf16.mxu0 %v657
  %946 = vmatpush1.bf16.msra.mxu0 %v656
  %947 = vmatprep.subr.bf16.mxu0 %v661
  %948 = vmatpush1.bf16.msra.mxu0 %v660
  %949 = vmatprep.subr.bf16.mxu0 %v665
  %950 = vmatpush1.bf16.msra.mxu0 %v664
  %951 = vmatprep.subr.bf16.mxu0 %v669
  %952 = vmatpush1.bf16.msra.mxu0 %v668
  %953 = vmatprep.mubr.bf16.mxu0 %v29
  %954 = vmatmul.mubr.bf16.gmra.mrb[0].mxu0 %v28
  %v955 = vpop.f32.mrb[0].mxu0
  %v956 = vadd.f32 %v915, %v955
  %v957 = vpop.f32.mrb[0].mxu0
  %v958 = vadd.f32 %v917, %v957
  %v959 = vpop.f32.mrb[0].mxu0
  %v960 = vpop.f32.mrb[0].mxu0
  %961 = vdwg.mxu0
  %v962 = vld [vmem:[%s5] sm:$0xf]
  %v964 = vlaneseq
  %v965 = vshrl.u32 %v964, 7
  %v966 = vsub.s32 0, %v965
  %v967 = vrot.slane %v962, %v966
  %v968 = vlaneseq
  %v969 = vshrl.u32 %v968, 7
  %v970 = vsub.s32 1, %v969
  %v971 = vrot.slane %v962, %v970
  %v972 = vlaneseq
  %v973 = vshrl.u32 %v972, 7
  %v974 = vsub.s32 2, %v973
  %v975 = vrot.slane %v962, %v974
  %v976 = vlaneseq
  %v977 = vshrl.u32 %v976, 7
  %v978 = vsub.s32 3, %v977
  %v979 = vrot.slane %v962, %v978
  %v984 = vmul.f32 %v874, %v967
  %v985 = vmul.f32 %v876, %v971
  %v986 = vmul.f32 %v956, %v975
  %v987 = vmul.f32 %v958, %v979
  %v988 = vld [vmem:[%s6] sm:$0xf]
  %v990 = vlaneseq
  %v991 = vshrl.u32 %v990, 7
  %v992 = vsub.s32 0, %v991
  %v993 = vrot.slane %v988, %v992
  %v994 = vlaneseq
  %v995 = vshrl.u32 %v994, 7
  %v996 = vsub.s32 1, %v995
  %v997 = vrot.slane %v988, %v996
  %v998 = vlaneseq
  %v999 = vshrl.u32 %v998, 7
  %v1000 = vsub.s32 2, %v999
  %v1001 = vrot.slane %v988, %v1000
  %v1002 = vlaneseq
  %v1003 = vshrl.u32 %v1002, 7
  %v1004 = vsub.s32 3, %v1003
  %v1005 = vrot.slane %v988, %v1004
  %v1010 = vadd.f32 %v984, %v993
  %v1011 = vadd.f32 %v985, %v997
  %v1012 = vadd.f32 %v986, %v1001
  %v1013 = vadd.f32 %v987, %v1005
  %v1014 = vsub.f32 0.0, %v1010
  %v1015 = vsub.f32 0.0, %v1011
  %v1016 = vsub.f32 0.0, %v1012
  %v1017 = vsub.f32 0.0, %v1013
  %v1018 = vmul.f32 %v1014, 1.442695
  %v1019 = vpow.pop %v1018
  %v1020 = vmul.f32 %v1015, 1.442695
  %v1021 = vpow.pop %v1020
  %v1022 = vmul.f32 %v1016, 1.442695
  %v1023 = vpow.pop %v1022
  %v1024 = vmul.f32 %v1017, 1.442695
  %v1025 = vpow.pop %v1024
  %v1026 = vadd.f32 %v1019, 1.0
  %v1027 = vadd.f32 %v1021, 1.0
  %v1028 = vadd.f32 %v1023, 1.0
  %v1029 = vadd.f32 %v1025, 1.0
  %v1030 = vrcp.pop %v1026
  %v1031 = vrcp.pop %v1027
  %v1032 = vrcp.pop %v1028
  %v1033 = vrcp.pop %v1029
  %v1034 = vmul.f32 %v1010, %v1030
  %v1035 = vmul.f32 %v1011, %v1031
  %v1036 = vmul.f32 %v1012, %v1032
  %v1037 = vmul.f32 %v1013, %v1033
  %v1038 = vpack.c.bf16 %v1034, %v1034
  %v1039 = vpack.c.bf16 %v1035, %v1035
  %v1040 = vpack.c.bf16 %v1036, %v1036
  %v1041 = vpack.c.bf16 %v1037, %v1037
  %v1046 = vcombine.low %v1038, %v1039
  %v1047 = vcombine.low %v1040, %v1041
  %v1049 = vunpack.c.l.s4 1966171168
  %v1050 = vunpack.c.0.s8 %v1049
  %v1051 = vlaneseq
  %v1052 = vshrl.u32 %v1051, 7
  %v1053 = vsub.s32 %v1050, %v1052
  %v1054 = vrot.slane %v1046, %v1053
  %v1056 = vunpack.c.l.s4 1966171168
  %v1057 = vunpack.c.0.s8 %v1056
  %v1058 = vlaneseq
  %v1059 = vshrl.u32 %v1058, 7
  %v1060 = vsub.s32 %v1057, %v1059
  %v1061 = vrot.slane %v1047, %v1060
  %v1062 = vcombine.low %v1054, %v1061
  %v1064 = vunpack.c.l.s4 1966171168
  %v1065 = vunpack.c.0.s8 %v1064
  %v1066 = vlaneseq
  %v1067 = vshrl.u32 %v1066, 7
  %v1068 = vsub.s32 %v1065, %v1067
  %v1069 = vrot.slane %v1062, %v1068
  %1071 = vst [vmem:[%s7] sm:$0xf] %v1069
  // Predicated region
  $region30: #{elannet_tiny_forward.41} parent=0 // pred_check
    _
  $region31: #{elannet_tiny_forward.41} parent=0 // pred_check_branch
    %1073 = sbr.rel (0) target = $region33
  $region32: #{elannet_tiny_forward.41} parent=0 // pred_region
    _
  $region33: #{elannet_tiny_forward.41} parent=0 // pred_fallthru
    _
  // Predicated region
  $region34: #{elannet_tiny_forward.41} parent=0 // pred_check
    _
  $region35: #{elannet_tiny_forward.41} parent=0 // pred_check_branch
    %1075 = sbr.rel (0) target = $region37
  $region36: #{elannet_tiny_forward.41} parent=0 // pred_region
    _
  $region37: #{elannet_tiny_forward.41} parent=0 // pred_fallthru
    _

</llo_original>
